<compile_context>
chip_gen: v6e
topology: v6e:2x2x1
jax: 0.10.0
libtpu: 0.0.40
codegen_flags: <defaults>
</compile_context>

<pallas_src>
import functools
import math

import jax
import jax.numpy as jnp
from jax.experimental import pallas as pl
from jax.experimental.pallas import tpu as pltpu


_ARBITRARY = pltpu.CompilerParams(dimension_semantics=("arbitrary",))


def _full_spec(shape):
    zeros = (0,) * len(shape)
    return pl.BlockSpec(shape, lambda *_: zeros)


# ----------------------------- fused MHA kernel ------------------------------

def _mha_kernel(xq_ref, xkv_ref, wq_ref, bq_ref, wk_ref, bk_ref, wv_ref, bv_ref,
                wo_ref, bo_ref, o_ref, *, B, Tq, Tk, nhead, d, scale):
    """Fused nn.MultiheadAttention (batch_first, eval mode):
    QKV projection + per-head softmax(QK^T*scale)V + output projection."""
    F = o_ref.shape[-1]
    xq = xq_ref[...].astype(jnp.bfloat16)      # (B*Tq, F)
    xkv = xkv_ref[...].astype(jnp.bfloat16)    # (B*Tk, F)
    acc = jnp.zeros((B * Tq, F), jnp.float32)
    # Static (unrolled) loop over heads: stays inside one kernel launch.  The
    # per-head weights were pre-split outside the kernel (shape (H, F, d)), so
    # the head split needs no in-kernel lane slicing or minor-dim transposes.
    for h in range(nhead):
        q = (jnp.dot(xq, wq_ref[h], preferred_element_type=jnp.float32)
             + bq_ref[h]).reshape(B, Tq, d)
        k = (jnp.dot(xkv, wk_ref[h], preferred_element_type=jnp.float32)
             + bk_ref[h]).reshape(B, Tk, d)
        v = (jnp.dot(xkv, wv_ref[h], preferred_element_type=jnp.float32)
             + bv_ref[h]).reshape(B, Tk, d)
        s = jnp.einsum("bqd,bkd->bqk",
                       q.astype(jnp.bfloat16), k.astype(jnp.bfloat16),
                       preferred_element_type=jnp.float32) * scale
        m = jnp.max(s, axis=-1, keepdims=True)
        p = jnp.exp(s - m)
        l = jnp.sum(p, axis=-1, keepdims=True)
        p = p * pl.reciprocal(l, approx=True)
        oh = jnp.einsum("bqk,bkd->bqd",
                        p.astype(jnp.bfloat16), v.astype(jnp.bfloat16),
                        preferred_element_type=jnp.float32)
        acc = acc + jnp.dot(oh.reshape(B * Tq, d).astype(jnp.bfloat16),
                            wo_ref[h], preferred_element_type=jnp.float32)
    o_ref[...] = (acc + bo_ref[...]).astype(o_ref.dtype)


def pallas_mha(xq, xkv, p, *, nhead):
    """xq: (B, Tq, F) queries, xkv: (B, Tk, F) keys/values."""
    B, Tq, F = xq.shape
    Tk = xkv.shape[1]
    d = F // nhead
    kern = functools.partial(_mha_kernel, B=B, Tq=Tq, Tk=Tk, nhead=nhead, d=d,
                             scale=1.0 / math.sqrt(d))
    out = pl.pallas_call(
        kern,
        out_shape=jax.ShapeDtypeStruct((B * Tq, F), xq.dtype),
        grid=(1,),
        in_specs=[_full_spec((B * Tq, F)), _full_spec((B * Tk, F)),
                  _full_spec((nhead, F, d)), _full_spec((nhead, 1, d)),
                  _full_spec((nhead, F, d)), _full_spec((nhead, 1, d)),
                  _full_spec((nhead, F, d)), _full_spec((nhead, 1, d)),
                  _full_spec((nhead, d, F)), _full_spec((1, F))],
        out_specs=_full_spec((B * Tq, F)),
        compiler_params=_ARBITRARY,
    )(xq.reshape(B * Tq, F), xkv.reshape(B * Tk, F),
      p["wq"], p["bq"], p["wk"], p["bk"], p["wv"], p["bv"], p["wo"], p["bo"])
    return out.reshape(B, Tq, F)


# ----------------------------- fused FeedForward -----------------------------

def _ff_kernel(x_ref, w1_ref, b1_ref, w2_ref, b2_ref, g_ref, bln_ref, o_ref, *, eps):
    # linear1 -> ReLU -> linear2 -> LayerNorm, intermediate kept in VMEM/vregs.
    x = x_ref[...].astype(jnp.bfloat16)                              # (M, F)
    h = jnp.dot(x, w1_ref[...], preferred_element_type=jnp.float32) + b1_ref[...]
    h = jnp.maximum(h, 0.0)
    y = jnp.dot(h.astype(jnp.bfloat16), w2_ref[...],
                preferred_element_type=jnp.float32) + b2_ref[...]
    mu = jnp.mean(y, axis=-1, keepdims=True)
    var = jnp.mean(jnp.square(y - mu), axis=-1, keepdims=True)
    o_ref[...] = ((y - mu) * jax.lax.rsqrt(var + eps) * g_ref[...]
                  + bln_ref[...]).astype(o_ref.dtype)


def pallas_ff(x, p, eps=1e-5):
    B, T, F = x.shape
    M = B * T
    Nh = p["w1"].shape[1]
    kern = functools.partial(_ff_kernel, eps=eps)
    out = pl.pallas_call(
        kern,
        out_shape=jax.ShapeDtypeStruct((M, F), x.dtype),
        grid=(1,),
        in_specs=[_full_spec((M, F)), _full_spec((F, Nh)), _full_spec((1, Nh)),
                  _full_spec((Nh, F)), _full_spec((1, F)),
                  _full_spec((1, F)), _full_spec((1, F))],
        out_specs=_full_spec((M, F)),
        compiler_params=_ARBITRARY,
    )(x.reshape(M, F), p["w1"], p["b1"], p["w2"], p["b2"], p["ln_g"], p["ln_b"])
    return out.reshape(B, T, F)


# ----------------------------- fused fc + LayerNorm --------------------------

def _fc_ln_kernel(x_ref, w_ref, b_ref, g_ref, bln_ref, o_ref, *, eps):
    x = x_ref[...].astype(jnp.bfloat16)
    y = jnp.dot(x, w_ref[...], preferred_element_type=jnp.float32) + b_ref[...]
    mu = jnp.mean(y, axis=-1, keepdims=True)
    var = jnp.mean(jnp.square(y - mu), axis=-1, keepdims=True)
    o_ref[...] = ((y - mu) * jax.lax.rsqrt(var + eps) * g_ref[...]
                  + bln_ref[...]).astype(o_ref.dtype)


def pallas_fc_ln(x2d, w, b, g, bln, eps=1e-5):
    M, F = x2d.shape
    N = w.shape[1]
    kern = functools.partial(_fc_ln_kernel, eps=eps)
    return pl.pallas_call(
        kern,
        out_shape=jax.ShapeDtypeStruct((M, N), x2d.dtype),
        grid=(1,),
        in_specs=[_full_spec((M, F)), _full_spec((F, N)), _full_spec((1, N)),
                  _full_spec((1, N)), _full_spec((1, N))],
        out_specs=_full_spec((M, N)),
        compiler_params=_ARBITRARY,
    )(x2d, w, b, g, bln)


# ----------------------------- model (glue in JAX) ---------------------------

def positional_encoding(n_time, n_feature, dtype=jnp.float32):
    # Matches the torch code exactly: pe[t, f] = t / 10000**(2*f/F) for every
    # column f (the reference uses 2*f/F, not 2*(f//2)/F), then sin on even
    # feature columns and cos on odd feature columns.
    pos = jnp.arange(n_time, dtype=dtype).reshape(-1, 1)
    denom = jnp.power(jnp.asarray(10000.0, dtype),
                      2.0 * jnp.arange(n_feature, dtype=dtype) / n_feature)
    pe = pos / denom
    col = jnp.arange(n_feature)
    pe = jnp.where((col % 2) == 0, jnp.sin(pe), jnp.cos(pe))
    return pe  # (T, F); broadcast over batch by the caller (F.embedding equiv.)


def timbre_block_forward(kparams, x, x1, pe_x, pe_x1, *, nhead=8):
    B, T, F = x.shape
    x = x + pe_x[None, :, :]
    x1 = x1 + pe_x1[None, :, :]
    # TODO(synk): further fuse the whole layer stack into one pallas_call
    # (stacked (L, ...) weights + in-kernel layer loop with double-buffered
    # weight prefetch); per-op fusion kept here for lowering robustness.
    for lp in kparams["layers"]:
        x = pallas_mha(x, x, lp["attn1"], nhead=nhead)       # self-attn on x
        x1 = pallas_mha(x, x1, lp["attn2"], nhead=nhead)     # cross: query = new x
        x = pallas_ff(x, lp["ff1"])
        x1 = pallas_ff(x1, lp["ff2"])
    xs = jnp.stack([x, x1], axis=1)                          # (B, 2, T, F)
    # dropout: identity (eval mode)
    flat = xs.reshape(B * 2 * T, F)
    flat = pallas_fc_ln(flat, kparams["fc_w"], kparams["fc_b"],
                        kparams["ln_g"], kparams["ln_b"])
    xs = flat.reshape(B, 2, T, F)
    return xs[:, 0], xs[:, 1]


# ----------------------------- parameters ------------------------------------

def init_params(key, n_feat, n_layers, n_hidden=512):
    """Reference (PyTorch-like) layout: wq/wk/wv/wo (F,F) used as x @ w, b (F,)."""
    def dense(k, fan_in, fan_out):
        k1, k2 = jax.random.split(k)
        w = jax.random.normal(k1, (fan_in, fan_out), jnp.float32) * 0.02
        b = jax.random.normal(k2, (fan_out,), jnp.float32) * 0.02
        return w, b

    def attn_params(ks):
        wq, bq = dense(ks[0], n_feat, n_feat)
        wk, bk = dense(ks[1], n_feat, n_feat)
        wv, bv = dense(ks[2], n_feat, n_feat)
        wo, bo = dense(ks[3], n_feat, n_feat)
        return dict(wq=wq, bq=bq, wk=wk, bk=bk, wv=wv, bv=bv, wo=wo, bo=bo)

    def ff_params(ks):
        w1, b1 = dense(ks[0], n_feat, n_hidden)
        w2, b2 = dense(ks[1], n_hidden, n_feat)
        return dict(w1=w1, b1=b1, w2=w2, b2=b2,
                    ln_g=jnp.ones((n_feat,), jnp.float32),
                    ln_b=jnp.zeros((n_feat,), jnp.float32))

    keys = jax.random.split(key, n_layers + 1)
    layers = []
    for i in range(n_layers):
        ks = jax.random.split(keys[i], 12)
        layers.append(dict(attn1=attn_params(ks[0:4]),
                           attn2=attn_params(ks[4:8]),
                           ff1=ff_params(ks[8:10]),
                           ff2=ff_params(ks[10:12])))
    fc_w, fc_b = dense(keys[-1], n_feat, n_feat)
    return dict(layers=layers, fc_w=fc_w, fc_b=fc_b,
                ln_g=jnp.ones((n_feat,), jnp.float32),
                ln_b=jnp.zeros((n_feat,), jnp.float32))


def prepare_params(params, nhead):
    """Convert reference-layout params to kernel layout once (outside jit):
    per-head-split QKV/output-projection weights, bf16 matmul weights, 2-D biases."""
    def prep_attn(a):
        F = a["wq"].shape[0]
        d = F // nhead

        def heads_w(w):   # (F, F) -> (H, F, d), head h = columns [h*d,(h+1)*d)
            return w.reshape(F, nhead, d).transpose(1, 0, 2).astype(jnp.bfloat16)

        def heads_b(b):   # (F,) -> (H, 1, d)
            return b.reshape(nhead, 1, d).astype(jnp.float32)

        return dict(wq=heads_w(a["wq"]), bq=heads_b(a["bq"]),
                    wk=heads_w(a["wk"]), bk=heads_b(a["bk"]),
                    wv=heads_w(a["wv"]), bv=heads_b(a["bv"]),
                    wo=a["wo"].reshape(nhead, d, F).astype(jnp.bfloat16),
                    bo=a["bo"].reshape(1, F).astype(jnp.float32))

    def prep_ff(f):
        return dict(w1=f["w1"].astype(jnp.bfloat16), b1=f["b1"].reshape(1, -1),
                    w2=f["w2"].astype(jnp.bfloat16), b2=f["b2"].reshape(1, -1),
                    ln_g=f["ln_g"].reshape(1, -1), ln_b=f["ln_b"].reshape(1, -1))

    layers = [dict(attn1=prep_attn(lp["attn1"]), attn2=prep_attn(lp["attn2"]),
                   ff1=prep_ff(lp["ff1"]), ff2=prep_ff(lp["ff2"]))
              for lp in params["layers"]]
    return dict(layers=layers,
                fc_w=params["fc_w"].astype(jnp.bfloat16),
                fc_b=params["fc_b"].reshape(1, -1),
                ln_g=params["ln_g"].reshape(1, -1),
                ln_b=params["ln_b"].reshape(1, -1))


# ----------------------------- main -------------------------------------------

if __name__ == "__main__":
    n_feat, nhead, n_layers = 64, 8, 2   # head_dim = 8; module default n_layers is 5
    B, T, T1 = 2, 8, 16
    pr = 0.02

    key = jax.random.PRNGKey(0)
    kx, kx1, kp = jax.random.split(key, 3)
    x = jax.random.normal(kx, (B, T, n_feat), jnp.float32)
    x1 = jax.random.normal(kx1, (B, T1, n_feat), jnp.float32)

    params = init_params(kp, n_feat, n_layers)
    kparams = prepare_params(params, nhead)

    # Positional-encoding tables precomputed once outside the jitted forward.
    pe_x = positional_encoding(T, n_feat) * pr
    pe_x1 = positional_encoding(T1, n_feat) * pr

    fwd = jax.jit(functools.partial(timbre_block_forward, nhead=nhead))
    out_x, out_x1 = fwd(kparams, x, x1, pe_x, pe_x1)
    jax.block_until_ready((out_x, out_x1))

    assert out_x.shape == (B, T, n_feat)
    assert out_x1.shape == (B, T, n_feat)   # x1 inherits query length T (as in torch)
    assert bool(jnp.all(jnp.isfinite(out_x))) and bool(jnp.all(jnp.isfinite(out_x1)))
    print("KERNEL_OK")
</pallas_src>

<mosaic_0001>
module attributes {stable_mosaic.version = 11 : i64} {
  func.func @_mha_kernel(%arg0: i32, %arg1: memref<16x64xf32, #tpu.memory_space<vmem>>, %arg2: memref<16x64xf32, #tpu.memory_space<vmem>>, %arg3: memref<8x64x8xbf16, #tpu.memory_space<vmem>>, %arg4: memref<8x1x8xf32, #tpu.memory_space<vmem>>, %arg5: memref<8x64x8xbf16, #tpu.memory_space<vmem>>, %arg6: memref<8x1x8xf32, #tpu.memory_space<vmem>>, %arg7: memref<8x64x8xbf16, #tpu.memory_space<vmem>>, %arg8: memref<8x1x8xf32, #tpu.memory_space<vmem>>, %arg9: memref<8x8x64xbf16, #tpu.memory_space<vmem>>, %arg10: memref<1x64xf32, #tpu.memory_space<vmem>>, %arg11: memref<16x64xf32, #tpu.memory_space<vmem>>) attributes {dimension_semantics = [#tpu.dimension_semantics<arbitrary>], iteration_bounds = array<i64: 1>, scalar_prefetch = 0 : i64, scratch_operands = 0 : i64, tpu.core_type = #tpu.core_type<tc>, window_params = [{pipeline_mode = #tpu.pipeline_mode<synchronous>, transform_indices = @transform_0, window_bounds = array<i64: 16, 64>}, {pipeline_mode = #tpu.pipeline_mode<synchronous>, transform_indices = @transform_1, window_bounds = array<i64: 16, 64>}, {pipeline_mode = #tpu.pipeline_mode<synchronous>, transform_indices = @transform_2, window_bounds = array<i64: 8, 64, 8>}, {pipeline_mode = #tpu.pipeline_mode<synchronous>, transform_indices = @transform_3, window_bounds = array<i64: 8, 1, 8>}, {pipeline_mode = #tpu.pipeline_mode<synchronous>, transform_indices = @transform_4, window_bounds = array<i64: 8, 64, 8>}, {pipeline_mode = #tpu.pipeline_mode<synchronous>, transform_indices = @transform_5, window_bounds = array<i64: 8, 1, 8>}, {pipeline_mode = #tpu.pipeline_mode<synchronous>, transform_indices = @transform_6, window_bounds = array<i64: 8, 64, 8>}, {pipeline_mode = #tpu.pipeline_mode<synchronous>, transform_indices = @transform_7, window_bounds = array<i64: 8, 1, 8>}, {pipeline_mode = #tpu.pipeline_mode<synchronous>, transform_indices = @transform_8, window_bounds = array<i64: 8, 8, 64>}, {pipeline_mode = #tpu.pipeline_mode<synchronous>, transform_indices = @transform_9, window_bounds = array<i64: 1, 64>}, {pipeline_mode = #tpu.pipeline_mode<synchronous>, transform_indices = @transform_10, window_bounds = array<i64: 16, 64>}]} {
    %c0 = arith.constant 0 : index
    %c0_0 = arith.constant 0 : index
    %0 = vector.load %arg1[%c0, %c0_0] : memref<16x64xf32, #tpu.memory_space<vmem>>, vector<16x64xf32>
    %1 = arith.truncf %0 : vector<16x64xf32> to vector<16x64xbf16>
    %c0_1 = arith.constant 0 : index
    %c0_2 = arith.constant 0 : index
    %2 = vector.load %arg2[%c0_1, %c0_2] : memref<16x64xf32, #tpu.memory_space<vmem>>, vector<16x64xf32>
    %3 = arith.truncf %2 : vector<16x64xf32> to vector<16x64xbf16>
    %cst = arith.constant 0.000000e+00 : f32
    %4 = vector.broadcast %cst : f32 to vector<16x64xf32>
    %c0_3 = arith.constant 0 : index
    %c0_4 = arith.constant 0 : index
    %c0_5 = arith.constant 0 : index
    %5 = vector.load %arg3[%c0_3, %c0_4, %c0_5] : memref<8x64x8xbf16, #tpu.memory_space<vmem>>, vector<1x64x8xbf16>
    %6 = vector.shape_cast %5 : vector<1x64x8xbf16> to vector<64x8xbf16>
    %cst_6 = arith.constant dense<0.000000e+00> : vector<16x8xf32>
    %7 = tpu.matmul %1, %6, %cst_6 {dimension_numbers = #tpu.dot_dimension_numbers<[1], [0], [0], [1], [0, 0, 1, 1], [], []>} : vector<16x64xbf16>, vector<64x8xbf16>, vector<16x8xf32> -> vector<16x8xf32>
    %c0_7 = arith.constant 0 : index
    %c0_8 = arith.constant 0 : index
    %c0_9 = arith.constant 0 : index
    %8 = vector.load %arg4[%c0_7, %c0_8, %c0_9] : memref<8x1x8xf32, #tpu.memory_space<vmem>>, vector<1x1x8xf32>
    %9 = vector.shape_cast %8 : vector<1x1x8xf32> to vector<1x8xf32>
    %10 = vector.broadcast %9 : vector<1x8xf32> to vector<16x8xf32>
    %11 = arith.addf %7, %10 : vector<16x8xf32>
    %12 = vector.shape_cast %11 : vector<16x8xf32> to vector<2x8x8xf32>
    %c0_10 = arith.constant 0 : index
    %c0_11 = arith.constant 0 : index
    %c0_12 = arith.constant 0 : index
    %13 = vector.load %arg5[%c0_10, %c0_11, %c0_12] : memref<8x64x8xbf16, #tpu.memory_space<vmem>>, vector<1x64x8xbf16>
    %14 = vector.shape_cast %13 : vector<1x64x8xbf16> to vector<64x8xbf16>
    %cst_13 = arith.constant dense<0.000000e+00> : vector<16x8xf32>
    %15 = tpu.matmul %3, %14, %cst_13 {dimension_numbers = #tpu.dot_dimension_numbers<[1], [0], [0], [1], [0, 0, 1, 1], [], []>} : vector<16x64xbf16>, vector<64x8xbf16>, vector<16x8xf32> -> vector<16x8xf32>
    %c0_14 = arith.constant 0 : index
    %c0_15 = arith.constant 0 : index
    %c0_16 = arith.constant 0 : index
    %16 = vector.load %arg6[%c0_14, %c0_15, %c0_16] : memref<8x1x8xf32, #tpu.memory_space<vmem>>, vector<1x1x8xf32>
    %17 = vector.shape_cast %16 : vector<1x1x8xf32> to vector<1x8xf32>
    %18 = vector.broadcast %17 : vector<1x8xf32> to vector<16x8xf32>
    %19 = arith.addf %15, %18 : vector<16x8xf32>
    %20 = vector.shape_cast %19 : vector<16x8xf32> to vector<2x8x8xf32>
    %c0_17 = arith.constant 0 : index
    %c0_18 = arith.constant 0 : index
    %c0_19 = arith.constant 0 : index
    %21 = vector.load %arg7[%c0_17, %c0_18, %c0_19] : memref<8x64x8xbf16, #tpu.memory_space<vmem>>, vector<1x64x8xbf16>
    %22 = vector.shape_cast %21 : vector<1x64x8xbf16> to vector<64x8xbf16>
    %cst_20 = arith.constant dense<0.000000e+00> : vector<16x8xf32>
    %23 = tpu.matmul %3, %22, %cst_20 {dimension_numbers = #tpu.dot_dimension_numbers<[1], [0], [0], [1], [0, 0, 1, 1], [], []>} : vector<16x64xbf16>, vector<64x8xbf16>, vector<16x8xf32> -> vector<16x8xf32>
    %c0_21 = arith.constant 0 : index
    %c0_22 = arith.constant 0 : index
    %c0_23 = arith.constant 0 : index
    %24 = vector.load %arg8[%c0_21, %c0_22, %c0_23] : memref<8x1x8xf32, #tpu.memory_space<vmem>>, vector<1x1x8xf32>
    %25 = vector.shape_cast %24 : vector<1x1x8xf32> to vector<1x8xf32>
    %26 = vector.broadcast %25 : vector<1x8xf32> to vector<16x8xf32>
    %27 = arith.addf %23, %26 : vector<16x8xf32>
    %28 = vector.shape_cast %27 : vector<16x8xf32> to vector<2x8x8xf32>
    %29 = arith.truncf %12 : vector<2x8x8xf32> to vector<2x8x8xbf16>
    %30 = arith.truncf %20 : vector<2x8x8xf32> to vector<2x8x8xbf16>
    "tpu.trace_start"() <{level = 10 : i32, message = "bqd,bkd->bqk"}> : () -> ()
    %cst_24 = arith.constant dense<0.000000e+00> : vector<2x8x8xf32>
    %31 = tpu.matmul %29, %30, %cst_24 {dimension_numbers = #tpu.dot_dimension_numbers<[2], [2], [1], [1], [0, 0, 0, 1, 1, 1], [0], [0]>} : vector<2x8x8xbf16>, vector<2x8x8xbf16>, vector<2x8x8xf32> -> vector<2x8x8xf32>
    "tpu.trace_stop"() : () -> ()
    %cst_25 = arith.constant 0.353553385 : f32
    %32 = vector.broadcast %cst_25 : f32 to vector<2x8x8xf32>
    %33 = arith.mulf %31, %32 : vector<2x8x8xf32>
    %cst_26 = arith.constant dense<0xFF800000> : vector<2x8xf32>
    %34 = vector.multi_reduction <maximumf>, %33, %cst_26 [2] : vector<2x8x8xf32> to vector<2x8xf32>
    %35 = vector.shape_cast %34 : vector<2x8xf32> to vector<2x8x1xf32>
    %36 = vector.broadcast %35 : vector<2x8x1xf32> to vector<2x8x8xf32>
    %37 = arith.subf %33, %36 : vector<2x8x8xf32>
    %38 = math.exp %37 : vector<2x8x8xf32>
    %cst_27 = arith.constant dense<0.000000e+00> : vector<2x8xf32>
    %39 = vector.multi_reduction <add>, %38, %cst_27 [2] : vector<2x8x8xf32> to vector<2x8xf32>
    %40 = vector.shape_cast %39 : vector<2x8xf32> to vector<2x8x1xf32>
    %41 = tpu.reciprocal %40 {approx = true} : vector<2x8x1xf32> -> vector<2x8x1xf32>
    %42 = vector.broadcast %41 : vector<2x8x1xf32> to vector<2x8x8xf32>
    %43 = arith.mulf %38, %42 : vector<2x8x8xf32>
    %44 = arith.truncf %43 : vector<2x8x8xf32> to vector<2x8x8xbf16>
    %45 = arith.truncf %28 : vector<2x8x8xf32> to vector<2x8x8xbf16>
    "tpu.trace_start"() <{level = 10 : i32, message = "bqk,bkd->bqd"}> : () -> ()
    %cst_28 = arith.constant dense<0.000000e+00> : vector<2x8x8xf32>
    %46 = tpu.matmul %44, %45, %cst_28 {dimension_numbers = #tpu.dot_dimension_numbers<[2], [1], [1], [2], [0, 0, 0, 1, 1, 2], [0], [0]>} : vector<2x8x8xbf16>, vector<2x8x8xbf16>, vector<2x8x8xf32> -> vector<2x8x8xf32>
    "tpu.trace_stop"() : () -> ()
    %47 = vector.shape_cast %46 : vector<2x8x8xf32> to vector<16x8xf32>
    %48 = arith.truncf %47 : vector<16x8xf32> to vector<16x8xbf16>
    %c0_29 = arith.constant 0 : index
    %c0_30 = arith.constant 0 : index
    %c0_31 = arith.constant 0 : index
    %49 = vector.load %arg9[%c0_29, %c0_30, %c0_31] : memref<8x8x64xbf16, #tpu.memory_space<vmem>>, vector<1x8x64xbf16>
    %50 = vector.shape_cast %49 : vector<1x8x64xbf16> to vector<8x64xbf16>
    %cst_32 = arith.constant dense<0.000000e+00> : vector<16x64xf32>
    %51 = tpu.matmul %48, %50, %cst_32 {dimension_numbers = #tpu.dot_dimension_numbers<[1], [0], [0], [1], [0, 0, 1, 1], [], []>} : vector<16x8xbf16>, vector<8x64xbf16>, vector<16x64xf32> -> vector<16x64xf32>
    %52 = arith.addf %4, %51 : vector<16x64xf32>
    %c1 = arith.constant 1 : index
    %c0_33 = arith.constant 0 : index
    %c0_34 = arith.constant 0 : index
    %53 = vector.load %arg3[%c1, %c0_33, %c0_34] : memref<8x64x8xbf16, #tpu.memory_space<vmem>>, vector<1x64x8xbf16>
    %54 = vector.shape_cast %53 : vector<1x64x8xbf16> to vector<64x8xbf16>
    %cst_35 = arith.constant dense<0.000000e+00> : vector<16x8xf32>
    %55 = tpu.matmul %1, %54, %cst_35 {dimension_numbers = #tpu.dot_dimension_numbers<[1], [0], [0], [1], [0, 0, 1, 1], [], []>} : vector<16x64xbf16>, vector<64x8xbf16>, vector<16x8xf32> -> vector<16x8xf32>
    %c1_36 = arith.constant 1 : index
    %c0_37 = arith.constant 0 : index
    %c0_38 = arith.constant 0 : index
    %56 = vector.load %arg4[%c1_36, %c0_37, %c0_38] : memref<8x1x8xf32, #tpu.memory_space<vmem>>, vector<1x1x8xf32>
    %57 = vector.shape_cast %56 : vector<1x1x8xf32> to vector<1x8xf32>
    %58 = vector.broadcast %57 : vector<1x8xf32> to vector<16x8xf32>
    %59 = arith.addf %55, %58 : vector<16x8xf32>
    %60 = vector.shape_cast %59 : vector<16x8xf32> to vector<2x8x8xf32>
    %c1_39 = arith.constant 1 : index
    %c0_40 = arith.constant 0 : index
    %c0_41 = arith.constant 0 : index
    %61 = vector.load %arg5[%c1_39, %c0_40, %c0_41] : memref<8x64x8xbf16, #tpu.memory_space<vmem>>, vector<1x64x8xbf16>
    %62 = vector.shape_cast %61 : vector<1x64x8xbf16> to vector<64x8xbf16>
    %cst_42 = arith.constant dense<0.000000e+00> : vector<16x8xf32>
    %63 = tpu.matmul %3, %62, %cst_42 {dimension_numbers = #tpu.dot_dimension_numbers<[1], [0], [0], [1], [0, 0, 1, 1], [], []>} : vector<16x64xbf16>, vector<64x8xbf16>, vector<16x8xf32> -> vector<16x8xf32>
    %c1_43 = arith.constant 1 : index
    %c0_44 = arith.constant 0 : index
    %c0_45 = arith.constant 0 : index
    %64 = vector.load %arg6[%c1_43, %c0_44, %c0_45] : memref<8x1x8xf32, #tpu.memory_space<vmem>>, vector<1x1x8xf32>
    %65 = vector.shape_cast %64 : vector<1x1x8xf32> to vector<1x8xf32>
    %66 = vector.broadcast %65 : vector<1x8xf32> to vector<16x8xf32>
    %67 = arith.addf %63, %66 : vector<16x8xf32>
    %68 = vector.shape_cast %67 : vector<16x8xf32> to vector<2x8x8xf32>
    %c1_46 = arith.constant 1 : index
    %c0_47 = arith.constant 0 : index
    %c0_48 = arith.constant 0 : index
    %69 = vector.load %arg7[%c1_46, %c0_47, %c0_48] : memref<8x64x8xbf16, #tpu.memory_space<vmem>>, vector<1x64x8xbf16>
    %70 = vector.shape_cast %69 : vector<1x64x8xbf16> to vector<64x8xbf16>
    %cst_49 = arith.constant dense<0.000000e+00> : vector<16x8xf32>
    %71 = tpu.matmul %3, %70, %cst_49 {dimension_numbers = #tpu.dot_dimension_numbers<[1], [0], [0], [1], [0, 0, 1, 1], [], []>} : vector<16x64xbf16>, vector<64x8xbf16>, vector<16x8xf32> -> vector<16x8xf32>
    %c1_50 = arith.constant 1 : index
    %c0_51 = arith.constant 0 : index
    %c0_52 = arith.constant 0 : index
    %72 = vector.load %arg8[%c1_50, %c0_51, %c0_52] : memref<8x1x8xf32, #tpu.memory_space<vmem>>, vector<1x1x8xf32>
    %73 = vector.shape_cast %72 : vector<1x1x8xf32> to vector<1x8xf32>
    %74 = vector.broadcast %73 : vector<1x8xf32> to vector<16x8xf32>
    %75 = arith.addf %71, %74 : vector<16x8xf32>
    %76 = vector.shape_cast %75 : vector<16x8xf32> to vector<2x8x8xf32>
    %77 = arith.truncf %60 : vector<2x8x8xf32> to vector<2x8x8xbf16>
    %78 = arith.truncf %68 : vector<2x8x8xf32> to vector<2x8x8xbf16>
    "tpu.trace_start"() <{level = 10 : i32, message = "bqd,bkd->bqk"}> : () -> ()
    %cst_53 = arith.constant dense<0.000000e+00> : vector<2x8x8xf32>
    %79 = tpu.matmul %77, %78, %cst_53 {dimension_numbers = #tpu.dot_dimension_numbers<[2], [2], [1], [1], [0, 0, 0, 1, 1, 1], [0], [0]>} : vector<2x8x8xbf16>, vector<2x8x8xbf16>, vector<2x8x8xf32> -> vector<2x8x8xf32>
    "tpu.trace_stop"() : () -> ()
    %cst_54 = arith.constant 0.353553385 : f32
    %80 = vector.broadcast %cst_54 : f32 to vector<2x8x8xf32>
    %81 = arith.mulf %79, %80 : vector<2x8x8xf32>
    %cst_55 = arith.constant dense<0xFF800000> : vector<2x8xf32>
    %82 = vector.multi_reduction <maximumf>, %81, %cst_55 [2] : vector<2x8x8xf32> to vector<2x8xf32>
    %83 = vector.shape_cast %82 : vector<2x8xf32> to vector<2x8x1xf32>
    %84 = vector.broadcast %83 : vector<2x8x1xf32> to vector<2x8x8xf32>
    %85 = arith.subf %81, %84 : vector<2x8x8xf32>
    %86 = math.exp %85 : vector<2x8x8xf32>
    %cst_56 = arith.constant dense<0.000000e+00> : vector<2x8xf32>
    %87 = vector.multi_reduction <add>, %86, %cst_56 [2] : vector<2x8x8xf32> to vector<2x8xf32>
    %88 = vector.shape_cast %87 : vector<2x8xf32> to vector<2x8x1xf32>
    %89 = tpu.reciprocal %88 {approx = true} : vector<2x8x1xf32> -> vector<2x8x1xf32>
    %90 = vector.broadcast %89 : vector<2x8x1xf32> to vector<2x8x8xf32>
    %91 = arith.mulf %86, %90 : vector<2x8x8xf32>
    %92 = arith.truncf %91 : vector<2x8x8xf32> to vector<2x8x8xbf16>
    %93 = arith.truncf %76 : vector<2x8x8xf32> to vector<2x8x8xbf16>
    "tpu.trace_start"() <{level = 10 : i32, message = "bqk,bkd->bqd"}> : () -> ()
    %cst_57 = arith.constant dense<0.000000e+00> : vector<2x8x8xf32>
    %94 = tpu.matmul %92, %93, %cst_57 {dimension_numbers = #tpu.dot_dimension_numbers<[2], [1], [1], [2], [0, 0, 0, 1, 1, 2], [0], [0]>} : vector<2x8x8xbf16>, vector<2x8x8xbf16>, vector<2x8x8xf32> -> vector<2x8x8xf32>
    "tpu.trace_stop"() : () -> ()
    %95 = vector.shape_cast %94 : vector<2x8x8xf32> to vector<16x8xf32>
    %96 = arith.truncf %95 : vector<16x8xf32> to vector<16x8xbf16>
    %c1_58 = arith.constant 1 : index
    %c0_59 = arith.constant 0 : index
    %c0_60 = arith.constant 0 : index
    %97 = vector.load %arg9[%c1_58, %c0_59, %c0_60] : memref<8x8x64xbf16, #tpu.memory_space<vmem>>, vector<1x8x64xbf16>
    %98 = vector.shape_cast %97 : vector<1x8x64xbf16> to vector<8x64xbf16>
    %cst_61 = arith.constant dense<0.000000e+00> : vector<16x64xf32>
    %99 = tpu.matmul %96, %98, %cst_61 {dimension_numbers = #tpu.dot_dimension_numbers<[1], [0], [0], [1], [0, 0, 1, 1], [], []>} : vector<16x8xbf16>, vector<8x64xbf16>, vector<16x64xf32> -> vector<16x64xf32>
    %100 = arith.addf %52, %99 : vector<16x64xf32>
    %c2 = arith.constant 2 : index
    %c0_62 = arith.constant 0 : index
    %c0_63 = arith.constant 0 : index
    %101 = vector.load %arg3[%c2, %c0_62, %c0_63] : memref<8x64x8xbf16, #tpu.memory_space<vmem>>, vector<1x64x8xbf16>
    %102 = vector.shape_cast %101 : vector<1x64x8xbf16> to vector<64x8xbf16>
    %cst_64 = arith.constant dense<0.000000e+00> : vector<16x8xf32>
    %103 = tpu.matmul %1, %102, %cst_64 {dimension_numbers = #tpu.dot_dimension_numbers<[1], [0], [0], [1], [0, 0, 1, 1], [], []>} : vector<16x64xbf16>, vector<64x8xbf16>, vector<16x8xf32> -> vector<16x8xf32>
    %c2_65 = arith.constant 2 : index
    %c0_66 = arith.constant 0 : index
    %c0_67 = arith.constant 0 : index
    %104 = vector.load %arg4[%c2_65, %c0_66, %c0_67] : memref<8x1x8xf32, #tpu.memory_space<vmem>>, vector<1x1x8xf32>
    %105 = vector.shape_cast %104 : vector<1x1x8xf32> to vector<1x8xf32>
    %106 = vector.broadcast %105 : vector<1x8xf32> to vector<16x8xf32>
    %107 = arith.addf %103, %106 : vector<16x8xf32>
    %108 = vector.shape_cast %107 : vector<16x8xf32> to vector<2x8x8xf32>
    %c2_68 = arith.constant 2 : index
    %c0_69 = arith.constant 0 : index
    %c0_70 = arith.constant 0 : index
    %109 = vector.load %arg5[%c2_68, %c0_69, %c0_70] : memref<8x64x8xbf16, #tpu.memory_space<vmem>>, vector<1x64x8xbf16>
    %110 = vector.shape_cast %109 : vector<1x64x8xbf16> to vector<64x8xbf16>
    %cst_71 = arith.constant dense<0.000000e+00> : vector<16x8xf32>
    %111 = tpu.matmul %3, %110, %cst_71 {dimension_numbers = #tpu.dot_dimension_numbers<[1], [0], [0], [1], [0, 0, 1, 1], [], []>} : vector<16x64xbf16>, vector<64x8xbf16>, vector<16x8xf32> -> vector<16x8xf32>
    %c2_72 = arith.constant 2 : index
    %c0_73 = arith.constant 0 : index
    %c0_74 = arith.constant 0 : index
    %112 = vector.load %arg6[%c2_72, %c0_73, %c0_74] : memref<8x1x8xf32, #tpu.memory_space<vmem>>, vector<1x1x8xf32>
    %113 = vector.shape_cast %112 : vector<1x1x8xf32> to vector<1x8xf32>
    %114 = vector.broadcast %113 : vector<1x8xf32> to vector<16x8xf32>
    %115 = arith.addf %111, %114 : vector<16x8xf32>
    %116 = vector.shape_cast %115 : vector<16x8xf32> to vector<2x8x8xf32>
    %c2_75 = arith.constant 2 : index
    %c0_76 = arith.constant 0 : index
    %c0_77 = arith.constant 0 : index
    %117 = vector.load %arg7[%c2_75, %c0_76, %c0_77] : memref<8x64x8xbf16, #tpu.memory_space<vmem>>, vector<1x64x8xbf16>
    %118 = vector.shape_cast %117 : vector<1x64x8xbf16> to vector<64x8xbf16>
    %cst_78 = arith.constant dense<0.000000e+00> : vector<16x8xf32>
    %119 = tpu.matmul %3, %118, %cst_78 {dimension_numbers = #tpu.dot_dimension_numbers<[1], [0], [0], [1], [0, 0, 1, 1], [], []>} : vector<16x64xbf16>, vector<64x8xbf16>, vector<16x8xf32> -> vector<16x8xf32>
    %c2_79 = arith.constant 2 : index
    %c0_80 = arith.constant 0 : index
    %c0_81 = arith.constant 0 : index
    %120 = vector.load %arg8[%c2_79, %c0_80, %c0_81] : memref<8x1x8xf32, #tpu.memory_space<vmem>>, vector<1x1x8xf32>
    %121 = vector.shape_cast %120 : vector<1x1x8xf32> to vector<1x8xf32>
    %122 = vector.broadcast %121 : vector<1x8xf32> to vector<16x8xf32>
    %123 = arith.addf %119, %122 : vector<16x8xf32>
    %124 = vector.shape_cast %123 : vector<16x8xf32> to vector<2x8x8xf32>
    %125 = arith.truncf %108 : vector<2x8x8xf32> to vector<2x8x8xbf16>
    %126 = arith.truncf %116 : vector<2x8x8xf32> to vector<2x8x8xbf16>
    "tpu.trace_start"() <{level = 10 : i32, message = "bqd,bkd->bqk"}> : () -> ()
    %cst_82 = arith.constant dense<0.000000e+00> : vector<2x8x8xf32>
    %127 = tpu.matmul %125, %126, %cst_82 {dimension_numbers = #tpu.dot_dimension_numbers<[2], [2], [1], [1], [0, 0, 0, 1, 1, 1], [0], [0]>} : vector<2x8x8xbf16>, vector<2x8x8xbf16>, vector<2x8x8xf32> -> vector<2x8x8xf32>
    "tpu.trace_stop"() : () -> ()
    %cst_83 = arith.constant 0.353553385 : f32
    %128 = vector.broadcast %cst_83 : f32 to vector<2x8x8xf32>
    %129 = arith.mulf %127, %128 : vector<2x8x8xf32>
    %cst_84 = arith.constant dense<0xFF800000> : vector<2x8xf32>
    %130 = vector.multi_reduction <maximumf>, %129, %cst_84 [2] : vector<2x8x8xf32> to vector<2x8xf32>
    %131 = vector.shape_cast %130 : vector<2x8xf32> to vector<2x8x1xf32>
    %132 = vector.broadcast %131 : vector<2x8x1xf32> to vector<2x8x8xf32>
    %133 = arith.subf %129, %132 : vector<2x8x8xf32>
    %134 = math.exp %133 : vector<2x8x8xf32>
    %cst_85 = arith.constant dense<0.000000e+00> : vector<2x8xf32>
    %135 = vector.multi_reduction <add>, %134, %cst_85 [2] : vector<2x8x8xf32> to vector<2x8xf32>
    %136 = vector.shape_cast %135 : vector<2x8xf32> to vector<2x8x1xf32>
    %137 = tpu.reciprocal %136 {approx = true} : vector<2x8x1xf32> -> vector<2x8x1xf32>
    %138 = vector.broadcast %137 : vector<2x8x1xf32> to vector<2x8x8xf32>
    %139 = arith.mulf %134, %138 : vector<2x8x8xf32>
    %140 = arith.truncf %139 : vector<2x8x8xf32> to vector<2x8x8xbf16>
    %141 = arith.truncf %124 : vector<2x8x8xf32> to vector<2x8x8xbf16>
    "tpu.trace_start"() <{level = 10 : i32, message = "bqk,bkd->bqd"}> : () -> ()
    %cst_86 = arith.constant dense<0.000000e+00> : vector<2x8x8xf32>
    %142 = tpu.matmul %140, %141, %cst_86 {dimension_numbers = #tpu.dot_dimension_numbers<[2], [1], [1], [2], [0, 0, 0, 1, 1, 2], [0], [0]>} : vector<2x8x8xbf16>, vector<2x8x8xbf16>, vector<2x8x8xf32> -> vector<2x8x8xf32>
    "tpu.trace_stop"() : () -> ()
    %143 = vector.shape_cast %142 : vector<2x8x8xf32> to vector<16x8xf32>
    %144 = arith.truncf %143 : vector<16x8xf32> to vector<16x8xbf16>
    %c2_87 = arith.constant 2 : index
    %c0_88 = arith.constant 0 : index
    %c0_89 = arith.constant 0 : index
    %145 = vector.load %arg9[%c2_87, %c0_88, %c0_89] : memref<8x8x64xbf16, #tpu.memory_space<vmem>>, vector<1x8x64xbf16>
    %146 = vector.shape_cast %145 : vector<1x8x64xbf16> to vector<8x64xbf16>
    %cst_90 = arith.constant dense<0.000000e+00> : vector<16x64xf32>
    %147 = tpu.matmul %144, %146, %cst_90 {dimension_numbers = #tpu.dot_dimension_numbers<[1], [0], [0], [1], [0, 0, 1, 1], [], []>} : vector<16x8xbf16>, vector<8x64xbf16>, vector<16x64xf32> -> vector<16x64xf32>
    %148 = arith.addf %100, %147 : vector<16x64xf32>
    %c3 = arith.constant 3 : index
    %c0_91 = arith.constant 0 : index
    %c0_92 = arith.constant 0 : index
    %149 = vector.load %arg3[%c3, %c0_91, %c0_92] : memref<8x64x8xbf16, #tpu.memory_space<vmem>>, vector<1x64x8xbf16>
    %150 = vector.shape_cast %149 : vector<1x64x8xbf16> to vector<64x8xbf16>
    %cst_93 = arith.constant dense<0.000000e+00> : vector<16x8xf32>
    %151 = tpu.matmul %1, %150, %cst_93 {dimension_numbers = #tpu.dot_dimension_numbers<[1], [0], [0], [1], [0, 0, 1, 1], [], []>} : vector<16x64xbf16>, vector<64x8xbf16>, vector<16x8xf32> -> vector<16x8xf32>
    %c3_94 = arith.constant 3 : index
    %c0_95 = arith.constant 0 : index
    %c0_96 = arith.constant 0 : index
    %152 = vector.load %arg4[%c3_94, %c0_95, %c0_96] : memref<8x1x8xf32, #tpu.memory_space<vmem>>, vector<1x1x8xf32>
    %153 = vector.shape_cast %152 : vector<1x1x8xf32> to vector<1x8xf32>
    %154 = vector.broadcast %153 : vector<1x8xf32> to vector<16x8xf32>
    %155 = arith.addf %151, %154 : vector<16x8xf32>
    %156 = vector.shape_cast %155 : vector<16x8xf32> to vector<2x8x8xf32>
    %c3_97 = arith.constant 3 : index
    %c0_98 = arith.constant 0 : index
    %c0_99 = arith.constant 0 : index
    %157 = vector.load %arg5[%c3_97, %c0_98, %c0_99] : memref<8x64x8xbf16, #tpu.memory_space<vmem>>, vector<1x64x8xbf16>
    %158 = vector.shape_cast %157 : vector<1x64x8xbf16> to vector<64x8xbf16>
    %cst_100 = arith.constant dense<0.000000e+00> : vector<16x8xf32>
    %159 = tpu.matmul %3, %158, %cst_100 {dimension_numbers = #tpu.dot_dimension_numbers<[1], [0], [0], [1], [0, 0, 1, 1], [], []>} : vector<16x64xbf16>, vector<64x8xbf16>, vector<16x8xf32> -> vector<16x8xf32>
    %c3_101 = arith.constant 3 : index
    %c0_102 = arith.constant 0 : index
    %c0_103 = arith.constant 0 : index
    %160 = vector.load %arg6[%c3_101, %c0_102, %c0_103] : memref<8x1x8xf32, #tpu.memory_space<vmem>>, vector<1x1x8xf32>
    %161 = vector.shape_cast %160 : vector<1x1x8xf32> to vector<1x8xf32>
    %162 = vector.broadcast %161 : vector<1x8xf32> to vector<16x8xf32>
    %163 = arith.addf %159, %162 : vector<16x8xf32>
    %164 = vector.shape_cast %163 : vector<16x8xf32> to vector<2x8x8xf32>
    %c3_104 = arith.constant 3 : index
    %c0_105 = arith.constant 0 : index
    %c0_106 = arith.constant 0 : index
    %165 = vector.load %arg7[%c3_104, %c0_105, %c0_106] : memref<8x64x8xbf16, #tpu.memory_space<vmem>>, vector<1x64x8xbf16>
    %166 = vector.shape_cast %165 : vector<1x64x8xbf16> to vector<64x8xbf16>
    %cst_107 = arith.constant dense<0.000000e+00> : vector<16x8xf32>
    %167 = tpu.matmul %3, %166, %cst_107 {dimension_numbers = #tpu.dot_dimension_numbers<[1], [0], [0], [1], [0, 0, 1, 1], [], []>} : vector<16x64xbf16>, vector<64x8xbf16>, vector<16x8xf32> -> vector<16x8xf32>
    %c3_108 = arith.constant 3 : index
    %c0_109 = arith.constant 0 : index
    %c0_110 = arith.constant 0 : index
    %168 = vector.load %arg8[%c3_108, %c0_109, %c0_110] : memref<8x1x8xf32, #tpu.memory_space<vmem>>, vector<1x1x8xf32>
    %169 = vector.shape_cast %168 : vector<1x1x8xf32> to vector<1x8xf32>
    %170 = vector.broadcast %169 : vector<1x8xf32> to vector<16x8xf32>
    %171 = arith.addf %167, %170 : vector<16x8xf32>
    %172 = vector.shape_cast %171 : vector<16x8xf32> to vector<2x8x8xf32>
    %173 = arith.truncf %156 : vector<2x8x8xf32> to vector<2x8x8xbf16>
    %174 = arith.truncf %164 : vector<2x8x8xf32> to vector<2x8x8xbf16>
    "tpu.trace_start"() <{level = 10 : i32, message = "bqd,bkd->bqk"}> : () -> ()
    %cst_111 = arith.constant dense<0.000000e+00> : vector<2x8x8xf32>
    %175 = tpu.matmul %173, %174, %cst_111 {dimension_numbers = #tpu.dot_dimension_numbers<[2], [2], [1], [1], [0, 0, 0, 1, 1, 1], [0], [0]>} : vector<2x8x8xbf16>, vector<2x8x8xbf16>, vector<2x8x8xf32> -> vector<2x8x8xf32>
    "tpu.trace_stop"() : () -> ()
    %cst_112 = arith.constant 0.353553385 : f32
    %176 = vector.broadcast %cst_112 : f32 to vector<2x8x8xf32>
    %177 = arith.mulf %175, %176 : vector<2x8x8xf32>
    %cst_113 = arith.constant dense<0xFF800000> : vector<2x8xf32>
    %178 = vector.multi_reduction <maximumf>, %177, %cst_113 [2] : vector<2x8x8xf32> to vector<2x8xf32>
    %179 = vector.shape_cast %178 : vector<2x8xf32> to vector<2x8x1xf32>
    %180 = vector.broadcast %179 : vector<2x8x1xf32> to vector<2x8x8xf32>
    %181 = arith.subf %177, %180 : vector<2x8x8xf32>
    %182 = math.exp %181 : vector<2x8x8xf32>
    %cst_114 = arith.constant dense<0.000000e+00> : vector<2x8xf32>
    %183 = vector.multi_reduction <add>, %182, %cst_114 [2] : vector<2x8x8xf32> to vector<2x8xf32>
    %184 = vector.shape_cast %183 : vector<2x8xf32> to vector<2x8x1xf32>
    %185 = tpu.reciprocal %184 {approx = true} : vector<2x8x1xf32> -> vector<2x8x1xf32>
    %186 = vector.broadcast %185 : vector<2x8x1xf32> to vector<2x8x8xf32>
    %187 = arith.mulf %182, %186 : vector<2x8x8xf32>
    %188 = arith.truncf %187 : vector<2x8x8xf32> to vector<2x8x8xbf16>
    %189 = arith.truncf %172 : vector<2x8x8xf32> to vector<2x8x8xbf16>
    "tpu.trace_start"() <{level = 10 : i32, message = "bqk,bkd->bqd"}> : () -> ()
    %cst_115 = arith.constant dense<0.000000e+00> : vector<2x8x8xf32>
    %190 = tpu.matmul %188, %189, %cst_115 {dimension_numbers = #tpu.dot_dimension_numbers<[2], [1], [1], [2], [0, 0, 0, 1, 1, 2], [0], [0]>} : vector<2x8x8xbf16>, vector<2x8x8xbf16>, vector<2x8x8xf32> -> vector<2x8x8xf32>
    "tpu.trace_stop"() : () -> ()
    %191 = vector.shape_cast %190 : vector<2x8x8xf32> to vector<16x8xf32>
    %192 = arith.truncf %191 : vector<16x8xf32> to vector<16x8xbf16>
    %c3_116 = arith.constant 3 : index
    %c0_117 = arith.constant 0 : index
    %c0_118 = arith.constant 0 : index
    %193 = vector.load %arg9[%c3_116, %c0_117, %c0_118] : memref<8x8x64xbf16, #tpu.memory_space<vmem>>, vector<1x8x64xbf16>
    %194 = vector.shape_cast %193 : vector<1x8x64xbf16> to vector<8x64xbf16>
    %cst_119 = arith.constant dense<0.000000e+00> : vector<16x64xf32>
    %195 = tpu.matmul %192, %194, %cst_119 {dimension_numbers = #tpu.dot_dimension_numbers<[1], [0], [0], [1], [0, 0, 1, 1], [], []>} : vector<16x8xbf16>, vector<8x64xbf16>, vector<16x64xf32> -> vector<16x64xf32>
    %196 = arith.addf %148, %195 : vector<16x64xf32>
    %c4 = arith.constant 4 : index
    %c0_120 = arith.constant 0 : index
    %c0_121 = arith.constant 0 : index
    %197 = vector.load %arg3[%c4, %c0_120, %c0_121] : memref<8x64x8xbf16, #tpu.memory_space<vmem>>, vector<1x64x8xbf16>
    %198 = vector.shape_cast %197 : vector<1x64x8xbf16> to vector<64x8xbf16>
    %cst_122 = arith.constant dense<0.000000e+00> : vector<16x8xf32>
    %199 = tpu.matmul %1, %198, %cst_122 {dimension_numbers = #tpu.dot_dimension_numbers<[1], [0], [0], [1], [0, 0, 1, 1], [], []>} : vector<16x64xbf16>, vector<64x8xbf16>, vector<16x8xf32> -> vector<16x8xf32>
    %c4_123 = arith.constant 4 : index
    %c0_124 = arith.constant 0 : index
    %c0_125 = arith.constant 0 : index
    %200 = vector.load %arg4[%c4_123, %c0_124, %c0_125] : memref<8x1x8xf32, #tpu.memory_space<vmem>>, vector<1x1x8xf32>
    %201 = vector.shape_cast %200 : vector<1x1x8xf32> to vector<1x8xf32>
    %202 = vector.broadcast %201 : vector<1x8xf32> to vector<16x8xf32>
    %203 = arith.addf %199, %202 : vector<16x8xf32>
    %204 = vector.shape_cast %203 : vector<16x8xf32> to vector<2x8x8xf32>
    %c4_126 = arith.constant 4 : index
    %c0_127 = arith.constant 0 : index
    %c0_128 = arith.constant 0 : index
    %205 = vector.load %arg5[%c4_126, %c0_127, %c0_128] : memref<8x64x8xbf16, #tpu.memory_space<vmem>>, vector<1x64x8xbf16>
    %206 = vector.shape_cast %205 : vector<1x64x8xbf16> to vector<64x8xbf16>
    %cst_129 = arith.constant dense<0.000000e+00> : vector<16x8xf32>
    %207 = tpu.matmul %3, %206, %cst_129 {dimension_numbers = #tpu.dot_dimension_numbers<[1], [0], [0], [1], [0, 0, 1, 1], [], []>} : vector<16x64xbf16>, vector<64x8xbf16>, vector<16x8xf32> -> vector<16x8xf32>
    %c4_130 = arith.constant 4 : index
    %c0_131 = arith.constant 0 : index
    %c0_132 = arith.constant 0 : index
    %208 = vector.load %arg6[%c4_130, %c0_131, %c0_132] : memref<8x1x8xf32, #tpu.memory_space<vmem>>, vector<1x1x8xf32>
    %209 = vector.shape_cast %208 : vector<1x1x8xf32> to vector<1x8xf32>
    %210 = vector.broadcast %209 : vector<1x8xf32> to vector<16x8xf32>
    %211 = arith.addf %207, %210 : vector<16x8xf32>
    %212 = vector.shape_cast %211 : vector<16x8xf32> to vector<2x8x8xf32>
    %c4_133 = arith.constant 4 : index
    %c0_134 = arith.constant 0 : index
    %c0_135 = arith.constant 0 : index
    %213 = vector.load %arg7[%c4_133, %c0_134, %c0_135] : memref<8x64x8xbf16, #tpu.memory_space<vmem>>, vector<1x64x8xbf16>
    %214 = vector.shape_cast %213 : vector<1x64x8xbf16> to vector<64x8xbf16>
    %cst_136 = arith.constant dense<0.000000e+00> : vector<16x8xf32>
    %215 = tpu.matmul %3, %214, %cst_136 {dimension_numbers = #tpu.dot_dimension_numbers<[1], [0], [0], [1], [0, 0, 1, 1], [], []>} : vector<16x64xbf16>, vector<64x8xbf16>, vector<16x8xf32> -> vector<16x8xf32>
    %c4_137 = arith.constant 4 : index
    %c0_138 = arith.constant 0 : index
    %c0_139 = arith.constant 0 : index
    %216 = vector.load %arg8[%c4_137, %c0_138, %c0_139] : memref<8x1x8xf32, #tpu.memory_space<vmem>>, vector<1x1x8xf32>
    %217 = vector.shape_cast %216 : vector<1x1x8xf32> to vector<1x8xf32>
    %218 = vector.broadcast %217 : vector<1x8xf32> to vector<16x8xf32>
    %219 = arith.addf %215, %218 : vector<16x8xf32>
    %220 = vector.shape_cast %219 : vector<16x8xf32> to vector<2x8x8xf32>
    %221 = arith.truncf %204 : vector<2x8x8xf32> to vector<2x8x8xbf16>
    %222 = arith.truncf %212 : vector<2x8x8xf32> to vector<2x8x8xbf16>
    "tpu.trace_start"() <{level = 10 : i32, message = "bqd,bkd->bqk"}> : () -> ()
    %cst_140 = arith.constant dense<0.000000e+00> : vector<2x8x8xf32>
    %223 = tpu.matmul %221, %222, %cst_140 {dimension_numbers = #tpu.dot_dimension_numbers<[2], [2], [1], [1], [0, 0, 0, 1, 1, 1], [0], [0]>} : vector<2x8x8xbf16>, vector<2x8x8xbf16>, vector<2x8x8xf32> -> vector<2x8x8xf32>
    "tpu.trace_stop"() : () -> ()
    %cst_141 = arith.constant 0.353553385 : f32
    %224 = vector.broadcast %cst_141 : f32 to vector<2x8x8xf32>
    %225 = arith.mulf %223, %224 : vector<2x8x8xf32>
    %cst_142 = arith.constant dense<0xFF800000> : vector<2x8xf32>
    %226 = vector.multi_reduction <maximumf>, %225, %cst_142 [2] : vector<2x8x8xf32> to vector<2x8xf32>
    %227 = vector.shape_cast %226 : vector<2x8xf32> to vector<2x8x1xf32>
    %228 = vector.broadcast %227 : vector<2x8x1xf32> to vector<2x8x8xf32>
    %229 = arith.subf %225, %228 : vector<2x8x8xf32>
    %230 = math.exp %229 : vector<2x8x8xf32>
    %cst_143 = arith.constant dense<0.000000e+00> : vector<2x8xf32>
    %231 = vector.multi_reduction <add>, %230, %cst_143 [2] : vector<2x8x8xf32> to vector<2x8xf32>
    %232 = vector.shape_cast %231 : vector<2x8xf32> to vector<2x8x1xf32>
    %233 = tpu.reciprocal %232 {approx = true} : vector<2x8x1xf32> -> vector<2x8x1xf32>
    %234 = vector.broadcast %233 : vector<2x8x1xf32> to vector<2x8x8xf32>
    %235 = arith.mulf %230, %234 : vector<2x8x8xf32>
    %236 = arith.truncf %235 : vector<2x8x8xf32> to vector<2x8x8xbf16>
    %237 = arith.truncf %220 : vector<2x8x8xf32> to vector<2x8x8xbf16>
    "tpu.trace_start"() <{level = 10 : i32, message = "bqk,bkd->bqd"}> : () -> ()
    %cst_144 = arith.constant dense<0.000000e+00> : vector<2x8x8xf32>
    %238 = tpu.matmul %236, %237, %cst_144 {dimension_numbers = #tpu.dot_dimension_numbers<[2], [1], [1], [2], [0, 0, 0, 1, 1, 2], [0], [0]>} : vector<2x8x8xbf16>, vector<2x8x8xbf16>, vector<2x8x8xf32> -> vector<2x8x8xf32>
    "tpu.trace_stop"() : () -> ()
    %239 = vector.shape_cast %238 : vector<2x8x8xf32> to vector<16x8xf32>
    %240 = arith.truncf %239 : vector<16x8xf32> to vector<16x8xbf16>
    %c4_145 = arith.constant 4 : index
    %c0_146 = arith.constant 0 : index
    %c0_147 = arith.constant 0 : index
    %241 = vector.load %arg9[%c4_145, %c0_146, %c0_147] : memref<8x8x64xbf16, #tpu.memory_space<vmem>>, vector<1x8x64xbf16>
    %242 = vector.shape_cast %241 : vector<1x8x64xbf16> to vector<8x64xbf16>
    %cst_148 = arith.constant dense<0.000000e+00> : vector<16x64xf32>
    %243 = tpu.matmul %240, %242, %cst_148 {dimension_numbers = #tpu.dot_dimension_numbers<[1], [0], [0], [1], [0, 0, 1, 1], [], []>} : vector<16x8xbf16>, vector<8x64xbf16>, vector<16x64xf32> -> vector<16x64xf32>
    %244 = arith.addf %196, %243 : vector<16x64xf32>
    %c5 = arith.constant 5 : index
    %c0_149 = arith.constant 0 : index
    %c0_150 = arith.constant 0 : index
    %245 = vector.load %arg3[%c5, %c0_149, %c0_150] : memref<8x64x8xbf16, #tpu.memory_space<vmem>>, vector<1x64x8xbf16>
    %246 = vector.shape_cast %245 : vector<1x64x8xbf16> to vector<64x8xbf16>
    %cst_151 = arith.constant dense<0.000000e+00> : vector<16x8xf32>
    %247 = tpu.matmul %1, %246, %cst_151 {dimension_numbers = #tpu.dot_dimension_numbers<[1], [0], [0], [1], [0, 0, 1, 1], [], []>} : vector<16x64xbf16>, vector<64x8xbf16>, vector<16x8xf32> -> vector<16x8xf32>
    %c5_152 = arith.constant 5 : index
    %c0_153 = arith.constant 0 : index
    %c0_154 = arith.constant 0 : index
    %248 = vector.load %arg4[%c5_152, %c0_153, %c0_154] : memref<8x1x8xf32, #tpu.memory_space<vmem>>, vector<1x1x8xf32>
    %249 = vector.shape_cast %248 : vector<1x1x8xf32> to vector<1x8xf32>
    %250 = vector.broadcast %249 : vector<1x8xf32> to vector<16x8xf32>
    %251 = arith.addf %247, %250 : vector<16x8xf32>
    %252 = vector.shape_cast %251 : vector<16x8xf32> to vector<2x8x8xf32>
    %c5_155 = arith.constant 5 : index
    %c0_156 = arith.constant 0 : index
    %c0_157 = arith.constant 0 : index
    %253 = vector.load %arg5[%c5_155, %c0_156, %c0_157] : memref<8x64x8xbf16, #tpu.memory_space<vmem>>, vector<1x64x8xbf16>
    %254 = vector.shape_cast %253 : vector<1x64x8xbf16> to vector<64x8xbf16>
    %cst_158 = arith.constant dense<0.000000e+00> : vector<16x8xf32>
    %255 = tpu.matmul %3, %254, %cst_158 {dimension_numbers = #tpu.dot_dimension_numbers<[1], [0], [0], [1], [0, 0, 1, 1], [], []>} : vector<16x64xbf16>, vector<64x8xbf16>, vector<16x8xf32> -> vector<16x8xf32>
    %c5_159 = arith.constant 5 : index
    %c0_160 = arith.constant 0 : index
    %c0_161 = arith.constant 0 : index
    %256 = vector.load %arg6[%c5_159, %c0_160, %c0_161] : memref<8x1x8xf32, #tpu.memory_space<vmem>>, vector<1x1x8xf32>
    %257 = vector.shape_cast %256 : vector<1x1x8xf32> to vector<1x8xf32>
    %258 = vector.broadcast %257 : vector<1x8xf32> to vector<16x8xf32>
    %259 = arith.addf %255, %258 : vector<16x8xf32>
    %260 = vector.shape_cast %259 : vector<16x8xf32> to vector<2x8x8xf32>
    %c5_162 = arith.constant 5 : index
    %c0_163 = arith.constant 0 : index
    %c0_164 = arith.constant 0 : index
    %261 = vector.load %arg7[%c5_162, %c0_163, %c0_164] : memref<8x64x8xbf16, #tpu.memory_space<vmem>>, vector<1x64x8xbf16>
    %262 = vector.shape_cast %261 : vector<1x64x8xbf16> to vector<64x8xbf16>
    %cst_165 = arith.constant dense<0.000000e+00> : vector<16x8xf32>
    %263 = tpu.matmul %3, %262, %cst_165 {dimension_numbers = #tpu.dot_dimension_numbers<[1], [0], [0], [1], [0, 0, 1, 1], [], []>} : vector<16x64xbf16>, vector<64x8xbf16>, vector<16x8xf32> -> vector<16x8xf32>
    %c5_166 = arith.constant 5 : index
    %c0_167 = arith.constant 0 : index
    %c0_168 = arith.constant 0 : index
    %264 = vector.load %arg8[%c5_166, %c0_167, %c0_168] : memref<8x1x8xf32, #tpu.memory_space<vmem>>, vector<1x1x8xf32>
    %265 = vector.shape_cast %264 : vector<1x1x8xf32> to vector<1x8xf32>
    %266 = vector.broadcast %265 : vector<1x8xf32> to vector<16x8xf32>
    %267 = arith.addf %263, %266 : vector<16x8xf32>
    %268 = vector.shape_cast %267 : vector<16x8xf32> to vector<2x8x8xf32>
    %269 = arith.truncf %252 : vector<2x8x8xf32> to vector<2x8x8xbf16>
    %270 = arith.truncf %260 : vector<2x8x8xf32> to vector<2x8x8xbf16>
    "tpu.trace_start"() <{level = 10 : i32, message = "bqd,bkd->bqk"}> : () -> ()
    %cst_169 = arith.constant dense<0.000000e+00> : vector<2x8x8xf32>
    %271 = tpu.matmul %269, %270, %cst_169 {dimension_numbers = #tpu.dot_dimension_numbers<[2], [2], [1], [1], [0, 0, 0, 1, 1, 1], [0], [0]>} : vector<2x8x8xbf16>, vector<2x8x8xbf16>, vector<2x8x8xf32> -> vector<2x8x8xf32>
    "tpu.trace_stop"() : () -> ()
    %cst_170 = arith.constant 0.353553385 : f32
    %272 = vector.broadcast %cst_170 : f32 to vector<2x8x8xf32>
    %273 = arith.mulf %271, %272 : vector<2x8x8xf32>
    %cst_171 = arith.constant dense<0xFF800000> : vector<2x8xf32>
    %274 = vector.multi_reduction <maximumf>, %273, %cst_171 [2] : vector<2x8x8xf32> to vector<2x8xf32>
    %275 = vector.shape_cast %274 : vector<2x8xf32> to vector<2x8x1xf32>
    %276 = vector.broadcast %275 : vector<2x8x1xf32> to vector<2x8x8xf32>
    %277 = arith.subf %273, %276 : vector<2x8x8xf32>
    %278 = math.exp %277 : vector<2x8x8xf32>
    %cst_172 = arith.constant dense<0.000000e+00> : vector<2x8xf32>
    %279 = vector.multi_reduction <add>, %278, %cst_172 [2] : vector<2x8x8xf32> to vector<2x8xf32>
    %280 = vector.shape_cast %279 : vector<2x8xf32> to vector<2x8x1xf32>
    %281 = tpu.reciprocal %280 {approx = true} : vector<2x8x1xf32> -> vector<2x8x1xf32>
    %282 = vector.broadcast %281 : vector<2x8x1xf32> to vector<2x8x8xf32>
    %283 = arith.mulf %278, %282 : vector<2x8x8xf32>
    %284 = arith.truncf %283 : vector<2x8x8xf32> to vector<2x8x8xbf16>
    %285 = arith.truncf %268 : vector<2x8x8xf32> to vector<2x8x8xbf16>
    "tpu.trace_start"() <{level = 10 : i32, message = "bqk,bkd->bqd"}> : () -> ()
    %cst_173 = arith.constant dense<0.000000e+00> : vector<2x8x8xf32>
    %286 = tpu.matmul %284, %285, %cst_173 {dimension_numbers = #tpu.dot_dimension_numbers<[2], [1], [1], [2], [0, 0, 0, 1, 1, 2], [0], [0]>} : vector<2x8x8xbf16>, vector<2x8x8xbf16>, vector<2x8x8xf32> -> vector<2x8x8xf32>
    "tpu.trace_stop"() : () -> ()
    %287 = vector.shape_cast %286 : vector<2x8x8xf32> to vector<16x8xf32>
    %288 = arith.truncf %287 : vector<16x8xf32> to vector<16x8xbf16>
    %c5_174 = arith.constant 5 : index
    %c0_175 = arith.constant 0 : index
    %c0_176 = arith.constant 0 : index
    %289 = vector.load %arg9[%c5_174, %c0_175, %c0_176] : memref<8x8x64xbf16, #tpu.memory_space<vmem>>, vector<1x8x64xbf16>
    %290 = vector.shape_cast %289 : vector<1x8x64xbf16> to vector<8x64xbf16>
    %cst_177 = arith.constant dense<0.000000e+00> : vector<16x64xf32>
    %291 = tpu.matmul %288, %290, %cst_177 {dimension_numbers = #tpu.dot_dimension_numbers<[1], [0], [0], [1], [0, 0, 1, 1], [], []>} : vector<16x8xbf16>, vector<8x64xbf16>, vector<16x64xf32> -> vector<16x64xf32>
    %292 = arith.addf %244, %291 : vector<16x64xf32>
    %c6 = arith.constant 6 : index
    %c0_178 = arith.constant 0 : index
    %c0_179 = arith.constant 0 : index
    %293 = vector.load %arg3[%c6, %c0_178, %c0_179] : memref<8x64x8xbf16, #tpu.memory_space<vmem>>, vector<1x64x8xbf16>
    %294 = vector.shape_cast %293 : vector<1x64x8xbf16> to vector<64x8xbf16>
    %cst_180 = arith.constant dense<0.000000e+00> : vector<16x8xf32>
    %295 = tpu.matmul %1, %294, %cst_180 {dimension_numbers = #tpu.dot_dimension_numbers<[1], [0], [0], [1], [0, 0, 1, 1], [], []>} : vector<16x64xbf16>, vector<64x8xbf16>, vector<16x8xf32> -> vector<16x8xf32>
    %c6_181 = arith.constant 6 : index
    %c0_182 = arith.constant 0 : index
    %c0_183 = arith.constant 0 : index
    %296 = vector.load %arg4[%c6_181, %c0_182, %c0_183] : memref<8x1x8xf32, #tpu.memory_space<vmem>>, vector<1x1x8xf32>
    %297 = vector.shape_cast %296 : vector<1x1x8xf32> to vector<1x8xf32>
    %298 = vector.broadcast %297 : vector<1x8xf32> to vector<16x8xf32>
    %299 = arith.addf %295, %298 : vector<16x8xf32>
    %300 = vector.shape_cast %299 : vector<16x8xf32> to vector<2x8x8xf32>
    %c6_184 = arith.constant 6 : index
    %c0_185 = arith.constant 0 : index
    %c0_186 = arith.constant 0 : index
    %301 = vector.load %arg5[%c6_184, %c0_185, %c0_186] : memref<8x64x8xbf16, #tpu.memory_space<vmem>>, vector<1x64x8xbf16>
    %302 = vector.shape_cast %301 : vector<1x64x8xbf16> to vector<64x8xbf16>
    %cst_187 = arith.constant dense<0.000000e+00> : vector<16x8xf32>
    %303 = tpu.matmul %3, %302, %cst_187 {dimension_numbers = #tpu.dot_dimension_numbers<[1], [0], [0], [1], [0, 0, 1, 1], [], []>} : vector<16x64xbf16>, vector<64x8xbf16>, vector<16x8xf32> -> vector<16x8xf32>
    %c6_188 = arith.constant 6 : index
    %c0_189 = arith.constant 0 : index
    %c0_190 = arith.constant 0 : index
    %304 = vector.load %arg6[%c6_188, %c0_189, %c0_190] : memref<8x1x8xf32, #tpu.memory_space<vmem>>, vector<1x1x8xf32>
    %305 = vector.shape_cast %304 : vector<1x1x8xf32> to vector<1x8xf32>
    %306 = vector.broadcast %305 : vector<1x8xf32> to vector<16x8xf32>
    %307 = arith.addf %303, %306 : vector<16x8xf32>
    %308 = vector.shape_cast %307 : vector<16x8xf32> to vector<2x8x8xf32>
    %c6_191 = arith.constant 6 : index
    %c0_192 = arith.constant 0 : index
    %c0_193 = arith.constant 0 : index
    %309 = vector.load %arg7[%c6_191, %c0_192, %c0_193] : memref<8x64x8xbf16, #tpu.memory_space<vmem>>, vector<1x64x8xbf16>
    %310 = vector.shape_cast %309 : vector<1x64x8xbf16> to vector<64x8xbf16>
    %cst_194 = arith.constant dense<0.000000e+00> : vector<16x8xf32>
    %311 = tpu.matmul %3, %310, %cst_194 {dimension_numbers = #tpu.dot_dimension_numbers<[1], [0], [0], [1], [0, 0, 1, 1], [], []>} : vector<16x64xbf16>, vector<64x8xbf16>, vector<16x8xf32> -> vector<16x8xf32>
    %c6_195 = arith.constant 6 : index
    %c0_196 = arith.constant 0 : index
    %c0_197 = arith.constant 0 : index
    %312 = vector.load %arg8[%c6_195, %c0_196, %c0_197] : memref<8x1x8xf32, #tpu.memory_space<vmem>>, vector<1x1x8xf32>
    %313 = vector.shape_cast %312 : vector<1x1x8xf32> to vector<1x8xf32>
    %314 = vector.broadcast %313 : vector<1x8xf32> to vector<16x8xf32>
    %315 = arith.addf %311, %314 : vector<16x8xf32>
    %316 = vector.shape_cast %315 : vector<16x8xf32> to vector<2x8x8xf32>
    %317 = arith.truncf %300 : vector<2x8x8xf32> to vector<2x8x8xbf16>
    %318 = arith.truncf %308 : vector<2x8x8xf32> to vector<2x8x8xbf16>
    "tpu.trace_start"() <{level = 10 : i32, message = "bqd,bkd->bqk"}> : () -> ()
    %cst_198 = arith.constant dense<0.000000e+00> : vector<2x8x8xf32>
    %319 = tpu.matmul %317, %318, %cst_198 {dimension_numbers = #tpu.dot_dimension_numbers<[2], [2], [1], [1], [0, 0, 0, 1, 1, 1], [0], [0]>} : vector<2x8x8xbf16>, vector<2x8x8xbf16>, vector<2x8x8xf32> -> vector<2x8x8xf32>
    "tpu.trace_stop"() : () -> ()
    %cst_199 = arith.constant 0.353553385 : f32
    %320 = vector.broadcast %cst_199 : f32 to vector<2x8x8xf32>
    %321 = arith.mulf %319, %320 : vector<2x8x8xf32>
    %cst_200 = arith.constant dense<0xFF800000> : vector<2x8xf32>
    %322 = vector.multi_reduction <maximumf>, %321, %cst_200 [2] : vector<2x8x8xf32> to vector<2x8xf32>
    %323 = vector.shape_cast %322 : vector<2x8xf32> to vector<2x8x1xf32>
    %324 = vector.broadcast %323 : vector<2x8x1xf32> to vector<2x8x8xf32>
    %325 = arith.subf %321, %324 : vector<2x8x8xf32>
    %326 = math.exp %325 : vector<2x8x8xf32>
    %cst_201 = arith.constant dense<0.000000e+00> : vector<2x8xf32>
    %327 = vector.multi_reduction <add>, %326, %cst_201 [2] : vector<2x8x8xf32> to vector<2x8xf32>
    %328 = vector.shape_cast %327 : vector<2x8xf32> to vector<2x8x1xf32>
    %329 = tpu.reciprocal %328 {approx = true} : vector<2x8x1xf32> -> vector<2x8x1xf32>
    %330 = vector.broadcast %329 : vector<2x8x1xf32> to vector<2x8x8xf32>
    %331 = arith.mulf %326, %330 : vector<2x8x8xf32>
    %332 = arith.truncf %331 : vector<2x8x8xf32> to vector<2x8x8xbf16>
    %333 = arith.truncf %316 : vector<2x8x8xf32> to vector<2x8x8xbf16>
    "tpu.trace_start"() <{level = 10 : i32, message = "bqk,bkd->bqd"}> : () -> ()
    %cst_202 = arith.constant dense<0.000000e+00> : vector<2x8x8xf32>
    %334 = tpu.matmul %332, %333, %cst_202 {dimension_numbers = #tpu.dot_dimension_numbers<[2], [1], [1], [2], [0, 0, 0, 1, 1, 2], [0], [0]>} : vector<2x8x8xbf16>, vector<2x8x8xbf16>, vector<2x8x8xf32> -> vector<2x8x8xf32>
    "tpu.trace_stop"() : () -> ()
    %335 = vector.shape_cast %334 : vector<2x8x8xf32> to vector<16x8xf32>
    %336 = arith.truncf %335 : vector<16x8xf32> to vector<16x8xbf16>
    %c6_203 = arith.constant 6 : index
    %c0_204 = arith.constant 0 : index
    %c0_205 = arith.constant 0 : index
    %337 = vector.load %arg9[%c6_203, %c0_204, %c0_205] : memref<8x8x64xbf16, #tpu.memory_space<vmem>>, vector<1x8x64xbf16>
    %338 = vector.shape_cast %337 : vector<1x8x64xbf16> to vector<8x64xbf16>
    %cst_206 = arith.constant dense<0.000000e+00> : vector<16x64xf32>
    %339 = tpu.matmul %336, %338, %cst_206 {dimension_numbers = #tpu.dot_dimension_numbers<[1], [0], [0], [1], [0, 0, 1, 1], [], []>} : vector<16x8xbf16>, vector<8x64xbf16>, vector<16x64xf32> -> vector<16x64xf32>
    %340 = arith.addf %292, %339 : vector<16x64xf32>
    %c7 = arith.constant 7 : index
    %c0_207 = arith.constant 0 : index
    %c0_208 = arith.constant 0 : index
    %341 = vector.load %arg3[%c7, %c0_207, %c0_208] : memref<8x64x8xbf16, #tpu.memory_space<vmem>>, vector<1x64x8xbf16>
    %342 = vector.shape_cast %341 : vector<1x64x8xbf16> to vector<64x8xbf16>
    %cst_209 = arith.constant dense<0.000000e+00> : vector<16x8xf32>
    %343 = tpu.matmul %1, %342, %cst_209 {dimension_numbers = #tpu.dot_dimension_numbers<[1], [0], [0], [1], [0, 0, 1, 1], [], []>} : vector<16x64xbf16>, vector<64x8xbf16>, vector<16x8xf32> -> vector<16x8xf32>
    %c7_210 = arith.constant 7 : index
    %c0_211 = arith.constant 0 : index
    %c0_212 = arith.constant 0 : index
    %344 = vector.load %arg4[%c7_210, %c0_211, %c0_212] : memref<8x1x8xf32, #tpu.memory_space<vmem>>, vector<1x1x8xf32>
    %345 = vector.shape_cast %344 : vector<1x1x8xf32> to vector<1x8xf32>
    %346 = vector.broadcast %345 : vector<1x8xf32> to vector<16x8xf32>
    %347 = arith.addf %343, %346 : vector<16x8xf32>
    %348 = vector.shape_cast %347 : vector<16x8xf32> to vector<2x8x8xf32>
    %c7_213 = arith.constant 7 : index
    %c0_214 = arith.constant 0 : index
    %c0_215 = arith.constant 0 : index
    %349 = vector.load %arg5[%c7_213, %c0_214, %c0_215] : memref<8x64x8xbf16, #tpu.memory_space<vmem>>, vector<1x64x8xbf16>
    %350 = vector.shape_cast %349 : vector<1x64x8xbf16> to vector<64x8xbf16>
    %cst_216 = arith.constant dense<0.000000e+00> : vector<16x8xf32>
    %351 = tpu.matmul %3, %350, %cst_216 {dimension_numbers = #tpu.dot_dimension_numbers<[1], [0], [0], [1], [0, 0, 1, 1], [], []>} : vector<16x64xbf16>, vector<64x8xbf16>, vector<16x8xf32> -> vector<16x8xf32>
    %c7_217 = arith.constant 7 : index
    %c0_218 = arith.constant 0 : index
    %c0_219 = arith.constant 0 : index
    %352 = vector.load %arg6[%c7_217, %c0_218, %c0_219] : memref<8x1x8xf32, #tpu.memory_space<vmem>>, vector<1x1x8xf32>
    %353 = vector.shape_cast %352 : vector<1x1x8xf32> to vector<1x8xf32>
    %354 = vector.broadcast %353 : vector<1x8xf32> to vector<16x8xf32>
    %355 = arith.addf %351, %354 : vector<16x8xf32>
    %356 = vector.shape_cast %355 : vector<16x8xf32> to vector<2x8x8xf32>
    %c7_220 = arith.constant 7 : index
    %c0_221 = arith.constant 0 : index
    %c0_222 = arith.constant 0 : index
    %357 = vector.load %arg7[%c7_220, %c0_221, %c0_222] : memref<8x64x8xbf16, #tpu.memory_space<vmem>>, vector<1x64x8xbf16>
    %358 = vector.shape_cast %357 : vector<1x64x8xbf16> to vector<64x8xbf16>
    %cst_223 = arith.constant dense<0.000000e+00> : vector<16x8xf32>
    %359 = tpu.matmul %3, %358, %cst_223 {dimension_numbers = #tpu.dot_dimension_numbers<[1], [0], [0], [1], [0, 0, 1, 1], [], []>} : vector<16x64xbf16>, vector<64x8xbf16>, vector<16x8xf32> -> vector<16x8xf32>
    %c7_224 = arith.constant 7 : index
    %c0_225 = arith.constant 0 : index
    %c0_226 = arith.constant 0 : index
    %360 = vector.load %arg8[%c7_224, %c0_225, %c0_226] : memref<8x1x8xf32, #tpu.memory_space<vmem>>, vector<1x1x8xf32>
    %361 = vector.shape_cast %360 : vector<1x1x8xf32> to vector<1x8xf32>
    %362 = vector.broadcast %361 : vector<1x8xf32> to vector<16x8xf32>
    %363 = arith.addf %359, %362 : vector<16x8xf32>
    %364 = vector.shape_cast %363 : vector<16x8xf32> to vector<2x8x8xf32>
    %365 = arith.truncf %348 : vector<2x8x8xf32> to vector<2x8x8xbf16>
    %366 = arith.truncf %356 : vector<2x8x8xf32> to vector<2x8x8xbf16>
    "tpu.trace_start"() <{level = 10 : i32, message = "bqd,bkd->bqk"}> : () -> ()
    %cst_227 = arith.constant dense<0.000000e+00> : vector<2x8x8xf32>
    %367 = tpu.matmul %365, %366, %cst_227 {dimension_numbers = #tpu.dot_dimension_numbers<[2], [2], [1], [1], [0, 0, 0, 1, 1, 1], [0], [0]>} : vector<2x8x8xbf16>, vector<2x8x8xbf16>, vector<2x8x8xf32> -> vector<2x8x8xf32>
    "tpu.trace_stop"() : () -> ()
    %cst_228 = arith.constant 0.353553385 : f32
    %368 = vector.broadcast %cst_228 : f32 to vector<2x8x8xf32>
    %369 = arith.mulf %367, %368 : vector<2x8x8xf32>
    %cst_229 = arith.constant dense<0xFF800000> : vector<2x8xf32>
    %370 = vector.multi_reduction <maximumf>, %369, %cst_229 [2] : vector<2x8x8xf32> to vector<2x8xf32>
    %371 = vector.shape_cast %370 : vector<2x8xf32> to vector<2x8x1xf32>
    %372 = vector.broadcast %371 : vector<2x8x1xf32> to vector<2x8x8xf32>
    %373 = arith.subf %369, %372 : vector<2x8x8xf32>
    %374 = math.exp %373 : vector<2x8x8xf32>
    %cst_230 = arith.constant dense<0.000000e+00> : vector<2x8xf32>
    %375 = vector.multi_reduction <add>, %374, %cst_230 [2] : vector<2x8x8xf32> to vector<2x8xf32>
    %376 = vector.shape_cast %375 : vector<2x8xf32> to vector<2x8x1xf32>
    %377 = tpu.reciprocal %376 {approx = true} : vector<2x8x1xf32> -> vector<2x8x1xf32>
    %378 = vector.broadcast %377 : vector<2x8x1xf32> to vector<2x8x8xf32>
    %379 = arith.mulf %374, %378 : vector<2x8x8xf32>
    %380 = arith.truncf %379 : vector<2x8x8xf32> to vector<2x8x8xbf16>
    %381 = arith.truncf %364 : vector<2x8x8xf32> to vector<2x8x8xbf16>
    "tpu.trace_start"() <{level = 10 : i32, message = "bqk,bkd->bqd"}> : () -> ()
    %cst_231 = arith.constant dense<0.000000e+00> : vector<2x8x8xf32>
    %382 = tpu.matmul %380, %381, %cst_231 {dimension_numbers = #tpu.dot_dimension_numbers<[2], [1], [1], [2], [0, 0, 0, 1, 1, 2], [0], [0]>} : vector<2x8x8xbf16>, vector<2x8x8xbf16>, vector<2x8x8xf32> -> vector<2x8x8xf32>
    "tpu.trace_stop"() : () -> ()
    %383 = vector.shape_cast %382 : vector<2x8x8xf32> to vector<16x8xf32>
    %384 = arith.truncf %383 : vector<16x8xf32> to vector<16x8xbf16>
    %c7_232 = arith.constant 7 : index
    %c0_233 = arith.constant 0 : index
    %c0_234 = arith.constant 0 : index
    %385 = vector.load %arg9[%c7_232, %c0_233, %c0_234] : memref<8x8x64xbf16, #tpu.memory_space<vmem>>, vector<1x8x64xbf16>
    %386 = vector.shape_cast %385 : vector<1x8x64xbf16> to vector<8x64xbf16>
    %cst_235 = arith.constant dense<0.000000e+00> : vector<16x64xf32>
    %387 = tpu.matmul %384, %386, %cst_235 {dimension_numbers = #tpu.dot_dimension_numbers<[1], [0], [0], [1], [0, 0, 1, 1], [], []>} : vector<16x8xbf16>, vector<8x64xbf16>, vector<16x64xf32> -> vector<16x64xf32>
    %388 = arith.addf %340, %387 : vector<16x64xf32>
    %c0_236 = arith.constant 0 : index
    %c0_237 = arith.constant 0 : index
    %389 = vector.load %arg10[%c0_236, %c0_237] : memref<1x64xf32, #tpu.memory_space<vmem>>, vector<1x64xf32>
    %390 = vector.broadcast %389 : vector<1x64xf32> to vector<16x64xf32>
    %391 = arith.addf %388, %390 : vector<16x64xf32>
    %c0_238 = arith.constant 0 : index
    %c0_239 = arith.constant 0 : index
    %392 = vector.load %arg11[%c0_238, %c0_239] : memref<16x64xf32, #tpu.memory_space<vmem>>, vector<16x64xf32>
    tpu.vector_store %arg11[%c0_238, %c0_239], %391 {strides = array<i32>} : memref<16x64xf32, #tpu.memory_space<vmem>>, vector<16x64xf32>,
    return
  }
  func.func @transform_0(%arg0: i32) -> (i32, i32) {
    %c0_i32 = arith.constant 0 : i32
    %c0_i32_0 = arith.constant 0 : i32
    %c0_i32_1 = arith.constant 0 : i32
    return %c0_i32, %c0_i32_0 : i32, i32
  }
  func.func @transform_1(%arg0: i32) -> (i32, i32) {
    %c0_i32 = arith.constant 0 : i32
    %c0_i32_0 = arith.constant 0 : i32
    %c0_i32_1 = arith.constant 0 : i32
    return %c0_i32, %c0_i32_0 : i32, i32
  }
  func.func @transform_2(%arg0: i32) -> (i32, i32, i32) {
    %c0_i32 = arith.constant 0 : i32
    %c0_i32_0 = arith.constant 0 : i32
    %c0_i32_1 = arith.constant 0 : i32
    %c0_i32_2 = arith.constant 0 : i32
    return %c0_i32, %c0_i32_0, %c0_i32_1 : i32, i32, i32
  }
  func.func @transform_3(%arg0: i32) -> (i32, i32, i32) {
    %c0_i32 = arith.constant 0 : i32
    %c0_i32_0 = arith.constant 0 : i32
    %c0_i32_1 = arith.constant 0 : i32
    %c0_i32_2 = arith.constant 0 : i32
    return %c0_i32, %c0_i32_0, %c0_i32_1 : i32, i32, i32
  }
  func.func @transform_4(%arg0: i32) -> (i32, i32, i32) {
    %c0_i32 = arith.constant 0 : i32
    %c0_i32_0 = arith.constant 0 : i32
    %c0_i32_1 = arith.constant 0 : i32
    %c0_i32_2 = arith.constant 0 : i32
    return %c0_i32, %c0_i32_0, %c0_i32_1 : i32, i32, i32
  }
  func.func @transform_5(%arg0: i32) -> (i32, i32, i32) {
    %c0_i32 = arith.constant 0 : i32
    %c0_i32_0 = arith.constant 0 : i32
    %c0_i32_1 = arith.constant 0 : i32
    %c0_i32_2 = arith.constant 0 : i32
    return %c0_i32, %c0_i32_0, %c0_i32_1 : i32, i32, i32
  }
  func.func @transform_6(%arg0: i32) -> (i32, i32, i32) {
    %c0_i32 = arith.constant 0 : i32
    %c0_i32_0 = arith.constant 0 : i32
    %c0_i32_1 = arith.constant 0 : i32
    %c0_i32_2 = arith.constant 0 : i32
    return %c0_i32, %c0_i32_0, %c0_i32_1 : i32, i32, i32
  }
  func.func @transform_7(%arg0: i32) -> (i32, i32, i32) {
    %c0_i32 = arith.constant 0 : i32
    %c0_i32_0 = arith.constant 0 : i32
    %c0_i32_1 = arith.constant 0 : i32
    %c0_i32_2 = arith.constant 0 : i32
    return %c0_i32, %c0_i32_0, %c0_i32_1 : i32, i32, i32
  }
  func.func @transform_8(%arg0: i32) -> (i32, i32, i32) {
    %c0_i32 = arith.constant 0 : i32
    %c0_i32_0 = arith.constant 0 : i32
    %c0_i32_1 = arith.constant 0 : i32
    %c0_i32_2 = arith.constant 0 : i32
    return %c0_i32, %c0_i32_0, %c0_i32_1 : i32, i32, i32
  }
  func.func @transform_9(%arg0: i32) -> (i32, i32) {
    %c0_i32 = arith.constant 0 : i32
    %c0_i32_0 = arith.constant 0 : i32
    %c0_i32_1 = arith.constant 0 : i32
    return %c0_i32, %c0_i32_0 : i32, i32
  }
  func.func @transform_10(%arg0: i32) -> (i32, i32) {
    %c0_i32 = arith.constant 0 : i32
    %c0_i32_0 = arith.constant 0 : i32
    %c0_i32_1 = arith.constant 0 : i32
    return %c0_i32, %c0_i32_0 : i32, i32
  }
}

module attributes {stable_mosaic.version = 11 : i64} {
  func.func @_ff_kernel(%arg0: i32, %arg1: memref<16x64xf32, #tpu.memory_space<vmem>>, %arg2: memref<64x512xbf16, #tpu.memory_space<vmem>>, %arg3: memref<1x512xf32, #tpu.memory_space<vmem>>, %arg4: memref<512x64xbf16, #tpu.memory_space<vmem>>, %arg5: memref<1x64xf32, #tpu.memory_space<vmem>>, %arg6: memref<1x64xf32, #tpu.memory_space<vmem>>, %arg7: memref<1x64xf32, #tpu.memory_space<vmem>>, %arg8: memref<16x64xf32, #tpu.memory_space<vmem>>) attributes {dimension_semantics = [#tpu.dimension_semantics<arbitrary>], iteration_bounds = array<i64: 1>, scalar_prefetch = 0 : i64, scratch_operands = 0 : i64, tpu.core_type = #tpu.core_type<tc>, window_params = [{pipeline_mode = #tpu.pipeline_mode<synchronous>, transform_indices = @transform_0, window_bounds = array<i64: 16, 64>}, {pipeline_mode = #tpu.pipeline_mode<synchronous>, transform_indices = @transform_1, window_bounds = array<i64: 64, 512>}, {pipeline_mode = #tpu.pipeline_mode<synchronous>, transform_indices = @transform_2, window_bounds = array<i64: 1, 512>}, {pipeline_mode = #tpu.pipeline_mode<synchronous>, transform_indices = @transform_3, window_bounds = array<i64: 512, 64>}, {pipeline_mode = #tpu.pipeline_mode<synchronous>, transform_indices = @transform_4, window_bounds = array<i64: 1, 64>}, {pipeline_mode = #tpu.pipeline_mode<synchronous>, transform_indices = @transform_5, window_bounds = array<i64: 1, 64>}, {pipeline_mode = #tpu.pipeline_mode<synchronous>, transform_indices = @transform_6, window_bounds = array<i64: 1, 64>}, {pipeline_mode = #tpu.pipeline_mode<synchronous>, transform_indices = @transform_7, window_bounds = array<i64: 16, 64>}]} {
    %c0 = arith.constant 0 : index
    %c0_0 = arith.constant 0 : index
    %0 = vector.load %arg1[%c0, %c0_0] : memref<16x64xf32, #tpu.memory_space<vmem>>, vector<16x64xf32>
    %1 = arith.truncf %0 : vector<16x64xf32> to vector<16x64xbf16>
    %c0_1 = arith.constant 0 : index
    %c0_2 = arith.constant 0 : index
    %2 = vector.load %arg2[%c0_1, %c0_2] : memref<64x512xbf16, #tpu.memory_space<vmem>>, vector<64x512xbf16>
    %cst = arith.constant dense<0.000000e+00> : vector<16x512xf32>
    %3 = tpu.matmul %1, %2, %cst {dimension_numbers = #tpu.dot_dimension_numbers<[1], [0], [0], [1], [0, 0, 1, 1], [], []>} : vector<16x64xbf16>, vector<64x512xbf16>, vector<16x512xf32> -> vector<16x512xf32>
    %c0_3 = arith.constant 0 : index
    %c0_4 = arith.constant 0 : index
    %4 = vector.load %arg3[%c0_3, %c0_4] : memref<1x512xf32, #tpu.memory_space<vmem>>, vector<1x512xf32>
    %5 = vector.broadcast %4 : vector<1x512xf32> to vector<16x512xf32>
    %6 = arith.addf %3, %5 : vector<16x512xf32>
    %cst_5 = arith.constant 0.000000e+00 : f32
    %7 = vector.broadcast %cst_5 : f32 to vector<16x512xf32>
    %8 = arith.maximumf %6, %7 : vector<16x512xf32>
    %9 = arith.truncf %8 : vector<16x512xf32> to vector<16x512xbf16>
    %c0_6 = arith.constant 0 : index
    %c0_7 = arith.constant 0 : index
    %10 = vector.load %arg4[%c0_6, %c0_7] : memref<512x64xbf16, #tpu.memory_space<vmem>>, vector<512x64xbf16>
    %cst_8 = arith.constant dense<0.000000e+00> : vector<16x64xf32>
    %11 = tpu.matmul %9, %10, %cst_8 {dimension_numbers = #tpu.dot_dimension_numbers<[1], [0], [0], [1], [0, 0, 1, 1], [], []>} : vector<16x512xbf16>, vector<512x64xbf16>, vector<16x64xf32> -> vector<16x64xf32>
    %c0_9 = arith.constant 0 : index
    %c0_10 = arith.constant 0 : index
    %12 = vector.load %arg5[%c0_9, %c0_10] : memref<1x64xf32, #tpu.memory_space<vmem>>, vector<1x64xf32>
    %13 = vector.broadcast %12 : vector<1x64xf32> to vector<16x64xf32>
    %14 = arith.addf %11, %13 : vector<16x64xf32>
    %cst_11 = arith.constant dense<0.000000e+00> : vector<16xf32>
    %15 = vector.multi_reduction <add>, %14, %cst_11 [1] : vector<16x64xf32> to vector<16xf32>
    %16 = vector.shape_cast %15 : vector<16xf32> to vector<16x1xf32>
    %cst_12 = arith.constant 6.400000e+01 : f32
    %17 = vector.broadcast %cst_12 : f32 to vector<16x1xf32>
    %18 = arith.divf %16, %17 : vector<16x1xf32>
    %19 = vector.broadcast %18 : vector<16x1xf32> to vector<16x64xf32>
    %20 = arith.subf %14, %19 : vector<16x64xf32>
    %21 = arith.mulf %20, %20 : vector<16x64xf32>
    %cst_13 = arith.constant dense<0.000000e+00> : vector<16xf32>
    %22 = vector.multi_reduction <add>, %21, %cst_13 [1] : vector<16x64xf32> to vector<16xf32>
    %23 = vector.shape_cast %22 : vector<16xf32> to vector<16x1xf32>
    %cst_14 = arith.constant 6.400000e+01 : f32
    %24 = vector.broadcast %cst_14 : f32 to vector<16x1xf32>
    %25 = arith.divf %23, %24 : vector<16x1xf32>
    %26 = vector.broadcast %18 : vector<16x1xf32> to vector<16x64xf32>
    %27 = arith.subf %14, %26 : vector<16x64xf32>
    %cst_15 = arith.constant 9.99999974E-6 : f32
    %28 = vector.broadcast %cst_15 : f32 to vector<16x1xf32>
    %29 = arith.addf %25, %28 : vector<16x1xf32>
    %30 = math.rsqrt %29 : vector<16x1xf32>
    %31 = vector.broadcast %30 : vector<16x1xf32> to vector<16x64xf32>
    %32 = arith.mulf %27, %31 : vector<16x64xf32>
    %c0_16 = arith.constant 0 : index
    %c0_17 = arith.constant 0 : index
    %33 = vector.load %arg6[%c0_16, %c0_17] : memref<1x64xf32, #tpu.memory_space<vmem>>, vector<1x64xf32>
    %34 = vector.broadcast %33 : vector<1x64xf32> to vector<16x64xf32>
    %35 = arith.mulf %32, %34 : vector<16x64xf32>
    %c0_18 = arith.constant 0 : index
    %c0_19 = arith.constant 0 : index
    %36 = vector.load %arg7[%c0_18, %c0_19] : memref<1x64xf32, #tpu.memory_space<vmem>>, vector<1x64xf32>
    %37 = vector.broadcast %36 : vector<1x64xf32> to vector<16x64xf32>
    %38 = arith.addf %35, %37 : vector<16x64xf32>
    %c0_20 = arith.constant 0 : index
    %c0_21 = arith.constant 0 : index
    %39 = vector.load %arg8[%c0_20, %c0_21] : memref<16x64xf32, #tpu.memory_space<vmem>>, vector<16x64xf32>
    tpu.vector_store %arg8[%c0_20, %c0_21], %38 {strides = array<i32>} : memref<16x64xf32, #tpu.memory_space<vmem>>, vector<16x64xf32>,
    return
  }
  func.func @transform_0(%arg0: i32) -> (i32, i32) {
    %c0_i32 = arith.constant 0 : i32
    %c0_i32_0 = arith.constant 0 : i32
    %c0_i32_1 = arith.constant 0 : i32
    return %c0_i32, %c0_i32_0 : i32, i32
  }
  func.func @transform_1(%arg0: i32) -> (i32, i32) {
    %c0_i32 = arith.constant 0 : i32
    %c0_i32_0 = arith.constant 0 : i32
    %c0_i32_1 = arith.constant 0 : i32
    return %c0_i32, %c0_i32_0 : i32, i32
  }
  func.func @transform_2(%arg0: i32) -> (i32, i32) {
    %c0_i32 = arith.constant 0 : i32
    %c0_i32_0 = arith.constant 0 : i32
    %c0_i32_1 = arith.constant 0 : i32
    return %c0_i32, %c0_i32_0 : i32, i32
  }
  func.func @transform_3(%arg0: i32) -> (i32, i32) {
    %c0_i32 = arith.constant 0 : i32
    %c0_i32_0 = arith.constant 0 : i32
    %c0_i32_1 = arith.constant 0 : i32
    return %c0_i32, %c0_i32_0 : i32, i32
  }
  func.func @transform_4(%arg0: i32) -> (i32, i32) {
    %c0_i32 = arith.constant 0 : i32
    %c0_i32_0 = arith.constant 0 : i32
    %c0_i32_1 = arith.constant 0 : i32
    return %c0_i32, %c0_i32_0 : i32, i32
  }
  func.func @transform_5(%arg0: i32) -> (i32, i32) {
    %c0_i32 = arith.constant 0 : i32
    %c0_i32_0 = arith.constant 0 : i32
    %c0_i32_1 = arith.constant 0 : i32
    return %c0_i32, %c0_i32_0 : i32, i32
  }
  func.func @transform_6(%arg0: i32) -> (i32, i32) {
    %c0_i32 = arith.constant 0 : i32
    %c0_i32_0 = arith.constant 0 : i32
    %c0_i32_1 = arith.constant 0 : i32
    return %c0_i32, %c0_i32_0 : i32, i32
  }
  func.func @transform_7(%arg0: i32) -> (i32, i32) {
    %c0_i32 = arith.constant 0 : i32
    %c0_i32_0 = arith.constant 0 : i32
    %c0_i32_1 = arith.constant 0 : i32
    return %c0_i32, %c0_i32_0 : i32, i32
  }
}

module attributes {stable_mosaic.version = 11 : i64} {
  func.func @_mha_kernel(%arg0: i32, %arg1: memref<16x64xf32, #tpu.memory_space<vmem>>, %arg2: memref<32x64xf32, #tpu.memory_space<vmem>>, %arg3: memref<8x64x8xbf16, #tpu.memory_space<vmem>>, %arg4: memref<8x1x8xf32, #tpu.memory_space<vmem>>, %arg5: memref<8x64x8xbf16, #tpu.memory_space<vmem>>, %arg6: memref<8x1x8xf32, #tpu.memory_space<vmem>>, %arg7: memref<8x64x8xbf16, #tpu.memory_space<vmem>>, %arg8: memref<8x1x8xf32, #tpu.memory_space<vmem>>, %arg9: memref<8x8x64xbf16, #tpu.memory_space<vmem>>, %arg10: memref<1x64xf32, #tpu.memory_space<vmem>>, %arg11: memref<16x64xf32, #tpu.memory_space<vmem>>) attributes {dimension_semantics = [#tpu.dimension_semantics<arbitrary>], iteration_bounds = array<i64: 1>, scalar_prefetch = 0 : i64, scratch_operands = 0 : i64, tpu.core_type = #tpu.core_type<tc>, window_params = [{pipeline_mode = #tpu.pipeline_mode<synchronous>, transform_indices = @transform_0, window_bounds = array<i64: 16, 64>}, {pipeline_mode = #tpu.pipeline_mode<synchronous>, transform_indices = @transform_1, window_bounds = array<i64: 32, 64>}, {pipeline_mode = #tpu.pipeline_mode<synchronous>, transform_indices = @transform_2, window_bounds = array<i64: 8, 64, 8>}, {pipeline_mode = #tpu.pipeline_mode<synchronous>, transform_indices = @transform_3, window_bounds = array<i64: 8, 1, 8>}, {pipeline_mode = #tpu.pipeline_mode<synchronous>, transform_indices = @transform_4, window_bounds = array<i64: 8, 64, 8>}, {pipeline_mode = #tpu.pipeline_mode<synchronous>, transform_indices = @transform_5, window_bounds = array<i64: 8, 1, 8>}, {pipeline_mode = #tpu.pipeline_mode<synchronous>, transform_indices = @transform_6, window_bounds = array<i64: 8, 64, 8>}, {pipeline_mode = #tpu.pipeline_mode<synchronous>, transform_indices = @transform_7, window_bounds = array<i64: 8, 1, 8>}, {pipeline_mode = #tpu.pipeline_mode<synchronous>, transform_indices = @transform_8, window_bounds = array<i64: 8, 8, 64>}, {pipeline_mode = #tpu.pipeline_mode<synchronous>, transform_indices = @transform_9, window_bounds = array<i64: 1, 64>}, {pipeline_mode = #tpu.pipeline_mode<synchronous>, transform_indices = @transform_10, window_bounds = array<i64: 16, 64>}]} {
    %c0 = arith.constant 0 : index
    %c0_0 = arith.constant 0 : index
    %0 = vector.load %arg1[%c0, %c0_0] : memref<16x64xf32, #tpu.memory_space<vmem>>, vector<16x64xf32>
    %1 = arith.truncf %0 : vector<16x64xf32> to vector<16x64xbf16>
    %c0_1 = arith.constant 0 : index
    %c0_2 = arith.constant 0 : index
    %2 = vector.load %arg2[%c0_1, %c0_2] : memref<32x64xf32, #tpu.memory_space<vmem>>, vector<32x64xf32>
    %3 = arith.truncf %2 : vector<32x64xf32> to vector<32x64xbf16>
    %cst = arith.constant 0.000000e+00 : f32
    %4 = vector.broadcast %cst : f32 to vector<16x64xf32>
    %c0_3 = arith.constant 0 : index
    %c0_4 = arith.constant 0 : index
    %c0_5 = arith.constant 0 : index
    %5 = vector.load %arg3[%c0_3, %c0_4, %c0_5] : memref<8x64x8xbf16, #tpu.memory_space<vmem>>, vector<1x64x8xbf16>
    %6 = vector.shape_cast %5 : vector<1x64x8xbf16> to vector<64x8xbf16>
    %cst_6 = arith.constant dense<0.000000e+00> : vector<16x8xf32>
    %7 = tpu.matmul %1, %6, %cst_6 {dimension_numbers = #tpu.dot_dimension_numbers<[1], [0], [0], [1], [0, 0, 1, 1], [], []>} : vector<16x64xbf16>, vector<64x8xbf16>, vector<16x8xf32> -> vector<16x8xf32>
    %c0_7 = arith.constant 0 : index
    %c0_8 = arith.constant 0 : index
    %c0_9 = arith.constant 0 : index
    %8 = vector.load %arg4[%c0_7, %c0_8, %c0_9] : memref<8x1x8xf32, #tpu.memory_space<vmem>>, vector<1x1x8xf32>
    %9 = vector.shape_cast %8 : vector<1x1x8xf32> to vector<1x8xf32>
    %10 = vector.broadcast %9 : vector<1x8xf32> to vector<16x8xf32>
    %11 = arith.addf %7, %10 : vector<16x8xf32>
    %12 = vector.shape_cast %11 : vector<16x8xf32> to vector<2x8x8xf32>
    %c0_10 = arith.constant 0 : index
    %c0_11 = arith.constant 0 : index
    %c0_12 = arith.constant 0 : index
    %13 = vector.load %arg5[%c0_10, %c0_11, %c0_12] : memref<8x64x8xbf16, #tpu.memory_space<vmem>>, vector<1x64x8xbf16>
    %14 = vector.shape_cast %13 : vector<1x64x8xbf16> to vector<64x8xbf16>
    %cst_13 = arith.constant dense<0.000000e+00> : vector<32x8xf32>
    %15 = tpu.matmul %3, %14, %cst_13 {dimension_numbers = #tpu.dot_dimension_numbers<[1], [0], [0], [1], [0, 0, 1, 1], [], []>} : vector<32x64xbf16>, vector<64x8xbf16>, vector<32x8xf32> -> vector<32x8xf32>
    %c0_14 = arith.constant 0 : index
    %c0_15 = arith.constant 0 : index
    %c0_16 = arith.constant 0 : index
    %16 = vector.load %arg6[%c0_14, %c0_15, %c0_16] : memref<8x1x8xf32, #tpu.memory_space<vmem>>, vector<1x1x8xf32>
    %17 = vector.shape_cast %16 : vector<1x1x8xf32> to vector<1x8xf32>
    %18 = vector.broadcast %17 : vector<1x8xf32> to vector<32x8xf32>
    %19 = arith.addf %15, %18 : vector<32x8xf32>
    %20 = vector.shape_cast %19 : vector<32x8xf32> to vector<2x16x8xf32>
    %c0_17 = arith.constant 0 : index
    %c0_18 = arith.constant 0 : index
    %c0_19 = arith.constant 0 : index
    %21 = vector.load %arg7[%c0_17, %c0_18, %c0_19] : memref<8x64x8xbf16, #tpu.memory_space<vmem>>, vector<1x64x8xbf16>
    %22 = vector.shape_cast %21 : vector<1x64x8xbf16> to vector<64x8xbf16>
    %cst_20 = arith.constant dense<0.000000e+00> : vector<32x8xf32>
    %23 = tpu.matmul %3, %22, %cst_20 {dimension_numbers = #tpu.dot_dimension_numbers<[1], [0], [0], [1], [0, 0, 1, 1], [], []>} : vector<32x64xbf16>, vector<64x8xbf16>, vector<32x8xf32> -> vector<32x8xf32>
    %c0_21 = arith.constant 0 : index
    %c0_22 = arith.constant 0 : index
    %c0_23 = arith.constant 0 : index
    %24 = vector.load %arg8[%c0_21, %c0_22, %c0_23] : memref<8x1x8xf32, #tpu.memory_space<vmem>>, vector<1x1x8xf32>
    %25 = vector.shape_cast %24 : vector<1x1x8xf32> to vector<1x8xf32>
    %26 = vector.broadcast %25 : vector<1x8xf32> to vector<32x8xf32>
    %27 = arith.addf %23, %26 : vector<32x8xf32>
    %28 = vector.shape_cast %27 : vector<32x8xf32> to vector<2x16x8xf32>
    %29 = arith.truncf %12 : vector<2x8x8xf32> to vector<2x8x8xbf16>
    %30 = arith.truncf %20 : vector<2x16x8xf32> to vector<2x16x8xbf16>
    "tpu.trace_start"() <{level = 10 : i32, message = "bqd,bkd->bqk"}> : () -> ()
    %cst_24 = arith.constant dense<0.000000e+00> : vector<2x8x16xf32>
    %31 = tpu.matmul %29, %30, %cst_24 {dimension_numbers = #tpu.dot_dimension_numbers<[2], [2], [1], [1], [0, 0, 0, 1, 1, 1], [0], [0]>} : vector<2x8x8xbf16>, vector<2x16x8xbf16>, vector<2x8x16xf32> -> vector<2x8x16xf32>
    "tpu.trace_stop"() : () -> ()
    %cst_25 = arith.constant 0.353553385 : f32
    %32 = vector.broadcast %cst_25 : f32 to vector<2x8x16xf32>
    %33 = arith.mulf %31, %32 : vector<2x8x16xf32>
    %cst_26 = arith.constant dense<0xFF800000> : vector<2x8xf32>
    %34 = vector.multi_reduction <maximumf>, %33, %cst_26 [2] : vector<2x8x16xf32> to vector<2x8xf32>
    %35 = vector.shape_cast %34 : vector<2x8xf32> to vector<2x8x1xf32>
    %36 = vector.broadcast %35 : vector<2x8x1xf32> to vector<2x8x16xf32>
    %37 = arith.subf %33, %36 : vector<2x8x16xf32>
    %38 = math.exp %37 : vector<2x8x16xf32>
    %cst_27 = arith.constant dense<0.000000e+00> : vector<2x8xf32>
    %39 = vector.multi_reduction <add>, %38, %cst_27 [2] : vector<2x8x16xf32> to vector<2x8xf32>
    %40 = vector.shape_cast %39 : vector<2x8xf32> to vector<2x8x1xf32>
    %41 = tpu.reciprocal %40 {approx = true} : vector<2x8x1xf32> -> vector<2x8x1xf32>
    %42 = vector.broadcast %41 : vector<2x8x1xf32> to vector<2x8x16xf32>
    %43 = arith.mulf %38, %42 : vector<2x8x16xf32>
    %44 = arith.truncf %43 : vector<2x8x16xf32> to vector<2x8x16xbf16>
    %45 = arith.truncf %28 : vector<2x16x8xf32> to vector<2x16x8xbf16>
    "tpu.trace_start"() <{level = 10 : i32, message = "bqk,bkd->bqd"}> : () -> ()
    %cst_28 = arith.constant dense<0.000000e+00> : vector<2x8x8xf32>
    %46 = tpu.matmul %44, %45, %cst_28 {dimension_numbers = #tpu.dot_dimension_numbers<[2], [1], [1], [2], [0, 0, 0, 1, 1, 2], [0], [0]>} : vector<2x8x16xbf16>, vector<2x16x8xbf16>, vector<2x8x8xf32> -> vector<2x8x8xf32>
    "tpu.trace_stop"() : () -> ()
    %47 = vector.shape_cast %46 : vector<2x8x8xf32> to vector<16x8xf32>
    %48 = arith.truncf %47 : vector<16x8xf32> to vector<16x8xbf16>
    %c0_29 = arith.constant 0 : index
    %c0_30 = arith.constant 0 : index
    %c0_31 = arith.constant 0 : index
    %49 = vector.load %arg9[%c0_29, %c0_30, %c0_31] : memref<8x8x64xbf16, #tpu.memory_space<vmem>>, vector<1x8x64xbf16>
    %50 = vector.shape_cast %49 : vector<1x8x64xbf16> to vector<8x64xbf16>
    %cst_32 = arith.constant dense<0.000000e+00> : vector<16x64xf32>
    %51 = tpu.matmul %48, %50, %cst_32 {dimension_numbers = #tpu.dot_dimension_numbers<[1], [0], [0], [1], [0, 0, 1, 1], [], []>} : vector<16x8xbf16>, vector<8x64xbf16>, vector<16x64xf32> -> vector<16x64xf32>
    %52 = arith.addf %4, %51 : vector<16x64xf32>
    %c1 = arith.constant 1 : index
    %c0_33 = arith.constant 0 : index
    %c0_34 = arith.constant 0 : index
    %53 = vector.load %arg3[%c1, %c0_33, %c0_34] : memref<8x64x8xbf16, #tpu.memory_space<vmem>>, vector<1x64x8xbf16>
    %54 = vector.shape_cast %53 : vector<1x64x8xbf16> to vector<64x8xbf16>
    %cst_35 = arith.constant dense<0.000000e+00> : vector<16x8xf32>
    %55 = tpu.matmul %1, %54, %cst_35 {dimension_numbers = #tpu.dot_dimension_numbers<[1], [0], [0], [1], [0, 0, 1, 1], [], []>} : vector<16x64xbf16>, vector<64x8xbf16>, vector<16x8xf32> -> vector<16x8xf32>
    %c1_36 = arith.constant 1 : index
    %c0_37 = arith.constant 0 : index
    %c0_38 = arith.constant 0 : index
    %56 = vector.load %arg4[%c1_36, %c0_37, %c0_38] : memref<8x1x8xf32, #tpu.memory_space<vmem>>, vector<1x1x8xf32>
    %57 = vector.shape_cast %56 : vector<1x1x8xf32> to vector<1x8xf32>
    %58 = vector.broadcast %57 : vector<1x8xf32> to vector<16x8xf32>
    %59 = arith.addf %55, %58 : vector<16x8xf32>
    %60 = vector.shape_cast %59 : vector<16x8xf32> to vector<2x8x8xf32>
    %c1_39 = arith.constant 1 : index
    %c0_40 = arith.constant 0 : index
    %c0_41 = arith.constant 0 : index
    %61 = vector.load %arg5[%c1_39, %c0_40, %c0_41] : memref<8x64x8xbf16, #tpu.memory_space<vmem>>, vector<1x64x8xbf16>
    %62 = vector.shape_cast %61 : vector<1x64x8xbf16> to vector<64x8xbf16>
    %cst_42 = arith.constant dense<0.000000e+00> : vector<32x8xf32>
    %63 = tpu.matmul %3, %62, %cst_42 {dimension_numbers = #tpu.dot_dimension_numbers<[1], [0], [0], [1], [0, 0, 1, 1], [], []>} : vector<32x64xbf16>, vector<64x8xbf16>, vector<32x8xf32> -> vector<32x8xf32>
    %c1_43 = arith.constant 1 : index
    %c0_44 = arith.constant 0 : index
    %c0_45 = arith.constant 0 : index
    %64 = vector.load %arg6[%c1_43, %c0_44, %c0_45] : memref<8x1x8xf32, #tpu.memory_space<vmem>>, vector<1x1x8xf32>
    %65 = vector.shape_cast %64 : vector<1x1x8xf32> to vector<1x8xf32>
    %66 = vector.broadcast %65 : vector<1x8xf32> to vector<32x8xf32>
    %67 = arith.addf %63, %66 : vector<32x8xf32>
    %68 = vector.shape_cast %67 : vector<32x8xf32> to vector<2x16x8xf32>
    %c1_46 = arith.constant 1 : index
    %c0_47 = arith.constant 0 : index
    %c0_48 = arith.constant 0 : index
    %69 = vector.load %arg7[%c1_46, %c0_47, %c0_48] : memref<8x64x8xbf16, #tpu.memory_space<vmem>>, vector<1x64x8xbf16>
    %70 = vector.shape_cast %69 : vector<1x64x8xbf16> to vector<64x8xbf16>
    %cst_49 = arith.constant dense<0.000000e+00> : vector<32x8xf32>
    %71 = tpu.matmul %3, %70, %cst_49 {dimension_numbers = #tpu.dot_dimension_numbers<[1], [0], [0], [1], [0, 0, 1, 1], [], []>} : vector<32x64xbf16>, vector<64x8xbf16>, vector<32x8xf32> -> vector<32x8xf32>
    %c1_50 = arith.constant 1 : index
    %c0_51 = arith.constant 0 : index
    %c0_52 = arith.constant 0 : index
    %72 = vector.load %arg8[%c1_50, %c0_51, %c0_52] : memref<8x1x8xf32, #tpu.memory_space<vmem>>, vector<1x1x8xf32>
    %73 = vector.shape_cast %72 : vector<1x1x8xf32> to vector<1x8xf32>
    %74 = vector.broadcast %73 : vector<1x8xf32> to vector<32x8xf32>
    %75 = arith.addf %71, %74 : vector<32x8xf32>
    %76 = vector.shape_cast %75 : vector<32x8xf32> to vector<2x16x8xf32>
    %77 = arith.truncf %60 : vector<2x8x8xf32> to vector<2x8x8xbf16>
    %78 = arith.truncf %68 : vector<2x16x8xf32> to vector<2x16x8xbf16>
    "tpu.trace_start"() <{level = 10 : i32, message = "bqd,bkd->bqk"}> : () -> ()
    %cst_53 = arith.constant dense<0.000000e+00> : vector<2x8x16xf32>
    %79 = tpu.matmul %77, %78, %cst_53 {dimension_numbers = #tpu.dot_dimension_numbers<[2], [2], [1], [1], [0, 0, 0, 1, 1, 1], [0], [0]>} : vector<2x8x8xbf16>, vector<2x16x8xbf16>, vector<2x8x16xf32> -> vector<2x8x16xf32>
    "tpu.trace_stop"() : () -> ()
    %cst_54 = arith.constant 0.353553385 : f32
    %80 = vector.broadcast %cst_54 : f32 to vector<2x8x16xf32>
    %81 = arith.mulf %79, %80 : vector<2x8x16xf32>
    %cst_55 = arith.constant dense<0xFF800000> : vector<2x8xf32>
    %82 = vector.multi_reduction <maximumf>, %81, %cst_55 [2] : vector<2x8x16xf32> to vector<2x8xf32>
    %83 = vector.shape_cast %82 : vector<2x8xf32> to vector<2x8x1xf32>
    %84 = vector.broadcast %83 : vector<2x8x1xf32> to vector<2x8x16xf32>
    %85 = arith.subf %81, %84 : vector<2x8x16xf32>
    %86 = math.exp %85 : vector<2x8x16xf32>
    %cst_56 = arith.constant dense<0.000000e+00> : vector<2x8xf32>
    %87 = vector.multi_reduction <add>, %86, %cst_56 [2] : vector<2x8x16xf32> to vector<2x8xf32>
    %88 = vector.shape_cast %87 : vector<2x8xf32> to vector<2x8x1xf32>
    %89 = tpu.reciprocal %88 {approx = true} : vector<2x8x1xf32> -> vector<2x8x1xf32>
    %90 = vector.broadcast %89 : vector<2x8x1xf32> to vector<2x8x16xf32>
    %91 = arith.mulf %86, %90 : vector<2x8x16xf32>
    %92 = arith.truncf %91 : vector<2x8x16xf32> to vector<2x8x16xbf16>
    %93 = arith.truncf %76 : vector<2x16x8xf32> to vector<2x16x8xbf16>
    "tpu.trace_start"() <{level = 10 : i32, message = "bqk,bkd->bqd"}> : () -> ()
    %cst_57 = arith.constant dense<0.000000e+00> : vector<2x8x8xf32>
    %94 = tpu.matmul %92, %93, %cst_57 {dimension_numbers = #tpu.dot_dimension_numbers<[2], [1], [1], [2], [0, 0, 0, 1, 1, 2], [0], [0]>} : vector<2x8x16xbf16>, vector<2x16x8xbf16>, vector<2x8x8xf32> -> vector<2x8x8xf32>
    "tpu.trace_stop"() : () -> ()
    %95 = vector.shape_cast %94 : vector<2x8x8xf32> to vector<16x8xf32>
    %96 = arith.truncf %95 : vector<16x8xf32> to vector<16x8xbf16>
    %c1_58 = arith.constant 1 : index
    %c0_59 = arith.constant 0 : index
    %c0_60 = arith.constant 0 : index
    %97 = vector.load %arg9[%c1_58, %c0_59, %c0_60] : memref<8x8x64xbf16, #tpu.memory_space<vmem>>, vector<1x8x64xbf16>
    %98 = vector.shape_cast %97 : vector<1x8x64xbf16> to vector<8x64xbf16>
    %cst_61 = arith.constant dense<0.000000e+00> : vector<16x64xf32>
    %99 = tpu.matmul %96, %98, %cst_61 {dimension_numbers = #tpu.dot_dimension_numbers<[1], [0], [0], [1], [0, 0, 1, 1], [], []>} : vector<16x8xbf16>, vector<8x64xbf16>, vector<16x64xf32> -> vector<16x64xf32>
    %100 = arith.addf %52, %99 : vector<16x64xf32>
    %c2 = arith.constant 2 : index
    %c0_62 = arith.constant 0 : index
    %c0_63 = arith.constant 0 : index
    %101 = vector.load %arg3[%c2, %c0_62, %c0_63] : memref<8x64x8xbf16, #tpu.memory_space<vmem>>, vector<1x64x8xbf16>
    %102 = vector.shape_cast %101 : vector<1x64x8xbf16> to vector<64x8xbf16>
    %cst_64 = arith.constant dense<0.000000e+00> : vector<16x8xf32>
    %103 = tpu.matmul %1, %102, %cst_64 {dimension_numbers = #tpu.dot_dimension_numbers<[1], [0], [0], [1], [0, 0, 1, 1], [], []>} : vector<16x64xbf16>, vector<64x8xbf16>, vector<16x8xf32> -> vector<16x8xf32>
    %c2_65 = arith.constant 2 : index
    %c0_66 = arith.constant 0 : index
    %c0_67 = arith.constant 0 : index
    %104 = vector.load %arg4[%c2_65, %c0_66, %c0_67] : memref<8x1x8xf32, #tpu.memory_space<vmem>>, vector<1x1x8xf32>
    %105 = vector.shape_cast %104 : vector<1x1x8xf32> to vector<1x8xf32>
    %106 = vector.broadcast %105 : vector<1x8xf32> to vector<16x8xf32>
    %107 = arith.addf %103, %106 : vector<16x8xf32>
    %108 = vector.shape_cast %107 : vector<16x8xf32> to vector<2x8x8xf32>
    %c2_68 = arith.constant 2 : index
    %c0_69 = arith.constant 0 : index
    %c0_70 = arith.constant 0 : index
    %109 = vector.load %arg5[%c2_68, %c0_69, %c0_70] : memref<8x64x8xbf16, #tpu.memory_space<vmem>>, vector<1x64x8xbf16>
    %110 = vector.shape_cast %109 : vector<1x64x8xbf16> to vector<64x8xbf16>
    %cst_71 = arith.constant dense<0.000000e+00> : vector<32x8xf32>
    %111 = tpu.matmul %3, %110, %cst_71 {dimension_numbers = #tpu.dot_dimension_numbers<[1], [0], [0], [1], [0, 0, 1, 1], [], []>} : vector<32x64xbf16>, vector<64x8xbf16>, vector<32x8xf32> -> vector<32x8xf32>
    %c2_72 = arith.constant 2 : index
    %c0_73 = arith.constant 0 : index
    %c0_74 = arith.constant 0 : index
    %112 = vector.load %arg6[%c2_72, %c0_73, %c0_74] : memref<8x1x8xf32, #tpu.memory_space<vmem>>, vector<1x1x8xf32>
    %113 = vector.shape_cast %112 : vector<1x1x8xf32> to vector<1x8xf32>
    %114 = vector.broadcast %113 : vector<1x8xf32> to vector<32x8xf32>
    %115 = arith.addf %111, %114 : vector<32x8xf32>
    %116 = vector.shape_cast %115 : vector<32x8xf32> to vector<2x16x8xf32>
    %c2_75 = arith.constant 2 : index
    %c0_76 = arith.constant 0 : index
    %c0_77 = arith.constant 0 : index
    %117 = vector.load %arg7[%c2_75, %c0_76, %c0_77] : memref<8x64x8xbf16, #tpu.memory_space<vmem>>, vector<1x64x8xbf16>
    %118 = vector.shape_cast %117 : vector<1x64x8xbf16> to vector<64x8xbf16>
    %cst_78 = arith.constant dense<0.000000e+00> : vector<32x8xf32>
    %119 = tpu.matmul %3, %118, %cst_78 {dimension_numbers = #tpu.dot_dimension_numbers<[1], [0], [0], [1], [0, 0, 1, 1], [], []>} : vector<32x64xbf16>, vector<64x8xbf16>, vector<32x8xf32> -> vector<32x8xf32>
    %c2_79 = arith.constant 2 : index
    %c0_80 = arith.constant 0 : index
    %c0_81 = arith.constant 0 : index
    %120 = vector.load %arg8[%c2_79, %c0_80, %c0_81] : memref<8x1x8xf32, #tpu.memory_space<vmem>>, vector<1x1x8xf32>
    %121 = vector.shape_cast %120 : vector<1x1x8xf32> to vector<1x8xf32>
    %122 = vector.broadcast %121 : vector<1x8xf32> to vector<32x8xf32>
    %123 = arith.addf %119, %122 : vector<32x8xf32>
    %124 = vector.shape_cast %123 : vector<32x8xf32> to vector<2x16x8xf32>
    %125 = arith.truncf %108 : vector<2x8x8xf32> to vector<2x8x8xbf16>
    %126 = arith.truncf %116 : vector<2x16x8xf32> to vector<2x16x8xbf16>
    "tpu.trace_start"() <{level = 10 : i32, message = "bqd,bkd->bqk"}> : () -> ()
    %cst_82 = arith.constant dense<0.000000e+00> : vector<2x8x16xf32>
    %127 = tpu.matmul %125, %126, %cst_82 {dimension_numbers = #tpu.dot_dimension_numbers<[2], [2], [1], [1], [0, 0, 0, 1, 1, 1], [0], [0]>} : vector<2x8x8xbf16>, vector<2x16x8xbf16>, vector<2x8x16xf32> -> vector<2x8x16xf32>
    "tpu.trace_stop"() : () -> ()
    %cst_83 = arith.constant 0.353553385 : f32
    %128 = vector.broadcast %cst_83 : f32 to vector<2x8x16xf32>
    %129 = arith.mulf %127, %128 : vector<2x8x16xf32>
    %cst_84 = arith.constant dense<0xFF800000> : vector<2x8xf32>
    %130 = vector.multi_reduction <maximumf>, %129, %cst_84 [2] : vector<2x8x16xf32> to vector<2x8xf32>
    %131 = vector.shape_cast %130 : vector<2x8xf32> to vector<2x8x1xf32>
    %132 = vector.broadcast %131 : vector<2x8x1xf32> to vector<2x8x16xf32>
    %133 = arith.subf %129, %132 : vector<2x8x16xf32>
    %134 = math.exp %133 : vector<2x8x16xf32>
    %cst_85 = arith.constant dense<0.000000e+00> : vector<2x8xf32>
    %135 = vector.multi_reduction <add>, %134, %cst_85 [2] : vector<2x8x16xf32> to vector<2x8xf32>
    %136 = vector.shape_cast %135 : vector<2x8xf32> to vector<2x8x1xf32>
    %137 = tpu.reciprocal %136 {approx = true} : vector<2x8x1xf32> -> vector<2x8x1xf32>
    %138 = vector.broadcast %137 : vector<2x8x1xf32> to vector<2x8x16xf32>
    %139 = arith.mulf %134, %138 : vector<2x8x16xf32>
    %140 = arith.truncf %139 : vector<2x8x16xf32> to vector<2x8x16xbf16>
    %141 = arith.truncf %124 : vector<2x16x8xf32> to vector<2x16x8xbf16>
    "tpu.trace_start"() <{level = 10 : i32, message = "bqk,bkd->bqd"}> : () -> ()
    %cst_86 = arith.constant dense<0.000000e+00> : vector<2x8x8xf32>
    %142 = tpu.matmul %140, %141, %cst_86 {dimension_numbers = #tpu.dot_dimension_numbers<[2], [1], [1], [2], [0, 0, 0, 1, 1, 2], [0], [0]>} : vector<2x8x16xbf16>, vector<2x16x8xbf16>, vector<2x8x8xf32> -> vector<2x8x8xf32>
    "tpu.trace_stop"() : () -> ()
    %143 = vector.shape_cast %142 : vector<2x8x8xf32> to vector<16x8xf32>
    %144 = arith.truncf %143 : vector<16x8xf32> to vector<16x8xbf16>
    %c2_87 = arith.constant 2 : index
    %c0_88 = arith.constant 0 : index
    %c0_89 = arith.constant 0 : index
    %145 = vector.load %arg9[%c2_87, %c0_88, %c0_89] : memref<8x8x64xbf16, #tpu.memory_space<vmem>>, vector<1x8x64xbf16>
    %146 = vector.shape_cast %145 : vector<1x8x64xbf16> to vector<8x64xbf16>
    %cst_90 = arith.constant dense<0.000000e+00> : vector<16x64xf32>
    %147 = tpu.matmul %144, %146, %cst_90 {dimension_numbers = #tpu.dot_dimension_numbers<[1], [0], [0], [1], [0, 0, 1, 1], [], []>} : vector<16x8xbf16>, vector<8x64xbf16>, vector<16x64xf32> -> vector<16x64xf32>
    %148 = arith.addf %100, %147 : vector<16x64xf32>
    %c3 = arith.constant 3 : index
    %c0_91 = arith.constant 0 : index
    %c0_92 = arith.constant 0 : index
    %149 = vector.load %arg3[%c3, %c0_91, %c0_92] : memref<8x64x8xbf16, #tpu.memory_space<vmem>>, vector<1x64x8xbf16>
    %150 = vector.shape_cast %149 : vector<1x64x8xbf16> to vector<64x8xbf16>
    %cst_93 = arith.constant dense<0.000000e+00> : vector<16x8xf32>
    %151 = tpu.matmul %1, %150, %cst_93 {dimension_numbers = #tpu.dot_dimension_numbers<[1], [0], [0], [1], [0, 0, 1, 1], [], []>} : vector<16x64xbf16>, vector<64x8xbf16>, vector<16x8xf32> -> vector<16x8xf32>
    %c3_94 = arith.constant 3 : index
    %c0_95 = arith.constant 0 : index
    %c0_96 = arith.constant 0 : index
    %152 = vector.load %arg4[%c3_94, %c0_95, %c0_96] : memref<8x1x8xf32, #tpu.memory_space<vmem>>, vector<1x1x8xf32>
    %153 = vector.shape_cast %152 : vector<1x1x8xf32> to vector<1x8xf32>
    %154 = vector.broadcast %153 : vector<1x8xf32> to vector<16x8xf32>
    %155 = arith.addf %151, %154 : vector<16x8xf32>
    %156 = vector.shape_cast %155 : vector<16x8xf32> to vector<2x8x8xf32>
    %c3_97 = arith.constant 3 : index
    %c0_98 = arith.constant 0 : index
    %c0_99 = arith.constant 0 : index
    %157 = vector.load %arg5[%c3_97, %c0_98, %c0_99] : memref<8x64x8xbf16, #tpu.memory_space<vmem>>, vector<1x64x8xbf16>
    %158 = vector.shape_cast %157 : vector<1x64x8xbf16> to vector<64x8xbf16>
    %cst_100 = arith.constant dense<0.000000e+00> : vector<32x8xf32>
    %159 = tpu.matmul %3, %158, %cst_100 {dimension_numbers = #tpu.dot_dimension_numbers<[1], [0], [0], [1], [0, 0, 1, 1], [], []>} : vector<32x64xbf16>, vector<64x8xbf16>, vector<32x8xf32> -> vector<32x8xf32>
    %c3_101 = arith.constant 3 : index
    %c0_102 = arith.constant 0 : index
    %c0_103 = arith.constant 0 : index
    %160 = vector.load %arg6[%c3_101, %c0_102, %c0_103] : memref<8x1x8xf32, #tpu.memory_space<vmem>>, vector<1x1x8xf32>
    %161 = vector.shape_cast %160 : vector<1x1x8xf32> to vector<1x8xf32>
    %162 = vector.broadcast %161 : vector<1x8xf32> to vector<32x8xf32>
    %163 = arith.addf %159, %162 : vector<32x8xf32>
    %164 = vector.shape_cast %163 : vector<32x8xf32> to vector<2x16x8xf32>
    %c3_104 = arith.constant 3 : index
    %c0_105 = arith.constant 0 : index
    %c0_106 = arith.constant 0 : index
    %165 = vector.load %arg7[%c3_104, %c0_105, %c0_106] : memref<8x64x8xbf16, #tpu.memory_space<vmem>>, vector<1x64x8xbf16>
    %166 = vector.shape_cast %165 : vector<1x64x8xbf16> to vector<64x8xbf16>
    %cst_107 = arith.constant dense<0.000000e+00> : vector<32x8xf32>
    %167 = tpu.matmul %3, %166, %cst_107 {dimension_numbers = #tpu.dot_dimension_numbers<[1], [0], [0], [1], [0, 0, 1, 1], [], []>} : vector<32x64xbf16>, vector<64x8xbf16>, vector<32x8xf32> -> vector<32x8xf32>
    %c3_108 = arith.constant 3 : index
    %c0_109 = arith.constant 0 : index
    %c0_110 = arith.constant 0 : index
    %168 = vector.load %arg8[%c3_108, %c0_109, %c0_110] : memref<8x1x8xf32, #tpu.memory_space<vmem>>, vector<1x1x8xf32>
    %169 = vector.shape_cast %168 : vector<1x1x8xf32> to vector<1x8xf32>
    %170 = vector.broadcast %169 : vector<1x8xf32> to vector<32x8xf32>
    %171 = arith.addf %167, %170 : vector<32x8xf32>
    %172 = vector.shape_cast %171 : vector<32x8xf32> to vector<2x16x8xf32>
    %173 = arith.truncf %156 : vector<2x8x8xf32> to vector<2x8x8xbf16>
    %174 = arith.truncf %164 : vector<2x16x8xf32> to vector<2x16x8xbf16>
    "tpu.trace_start"() <{level = 10 : i32, message = "bqd,bkd->bqk"}> : () -> ()
    %cst_111 = arith.constant dense<0.000000e+00> : vector<2x8x16xf32>
    %175 = tpu.matmul %173, %174, %cst_111 {dimension_numbers = #tpu.dot_dimension_numbers<[2], [2], [1], [1], [0, 0, 0, 1, 1, 1], [0], [0]>} : vector<2x8x8xbf16>, vector<2x16x8xbf16>, vector<2x8x16xf32> -> vector<2x8x16xf32>
    "tpu.trace_stop"() : () -> ()
    %cst_112 = arith.constant 0.353553385 : f32
    %176 = vector.broadcast %cst_112 : f32 to vector<2x8x16xf32>
    %177 = arith.mulf %175, %176 : vector<2x8x16xf32>
    %cst_113 = arith.constant dense<0xFF800000> : vector<2x8xf32>
    %178 = vector.multi_reduction <maximumf>, %177, %cst_113 [2] : vector<2x8x16xf32> to vector<2x8xf32>
    %179 = vector.shape_cast %178 : vector<2x8xf32> to vector<2x8x1xf32>
    %180 = vector.broadcast %179 : vector<2x8x1xf32> to vector<2x8x16xf32>
    %181 = arith.subf %177, %180 : vector<2x8x16xf32>
    %182 = math.exp %181 : vector<2x8x16xf32>
    %cst_114 = arith.constant dense<0.000000e+00> : vector<2x8xf32>
    %183 = vector.multi_reduction <add>, %182, %cst_114 [2] : vector<2x8x16xf32> to vector<2x8xf32>
    %184 = vector.shape_cast %183 : vector<2x8xf32> to vector<2x8x1xf32>
    %185 = tpu.reciprocal %184 {approx = true} : vector<2x8x1xf32> -> vector<2x8x1xf32>
    %186 = vector.broadcast %185 : vector<2x8x1xf32> to vector<2x8x16xf32>
    %187 = arith.mulf %182, %186 : vector<2x8x16xf32>
    %188 = arith.truncf %187 : vector<2x8x16xf32> to vector<2x8x16xbf16>
    %189 = arith.truncf %172 : vector<2x16x8xf32> to vector<2x16x8xbf16>
    "tpu.trace_start"() <{level = 10 : i32, message = "bqk,bkd->bqd"}> : () -> ()
    %cst_115 = arith.constant dense<0.000000e+00> : vector<2x8x8xf32>
    %190 = tpu.matmul %188, %189, %cst_115 {dimension_numbers = #tpu.dot_dimension_numbers<[2], [1], [1], [2], [0, 0, 0, 1, 1, 2], [0], [0]>} : vector<2x8x16xbf16>, vector<2x16x8xbf16>, vector<2x8x8xf32> -> vector<2x8x8xf32>
    "tpu.trace_stop"() : () -> ()
    %191 = vector.shape_cast %190 : vector<2x8x8xf32> to vector<16x8xf32>
    %192 = arith.truncf %191 : vector<16x8xf32> to vector<16x8xbf16>
    %c3_116 = arith.constant 3 : index
    %c0_117 = arith.constant 0 : index
    %c0_118 = arith.constant 0 : index
    %193 = vector.load %arg9[%c3_116, %c0_117, %c0_118] : memref<8x8x64xbf16, #tpu.memory_space<vmem>>, vector<1x8x64xbf16>
    %194 = vector.shape_cast %193 : vector<1x8x64xbf16> to vector<8x64xbf16>
    %cst_119 = arith.constant dense<0.000000e+00> : vector<16x64xf32>
    %195 = tpu.matmul %192, %194, %cst_119 {dimension_numbers = #tpu.dot_dimension_numbers<[1], [0], [0], [1], [0, 0, 1, 1], [], []>} : vector<16x8xbf16>, vector<8x64xbf16>, vector<16x64xf32> -> vector<16x64xf32>
    %196 = arith.addf %148, %195 : vector<16x64xf32>
    %c4 = arith.constant 4 : index
    %c0_120 = arith.constant 0 : index
    %c0_121 = arith.constant 0 : index
    %197 = vector.load %arg3[%c4, %c0_120, %c0_121] : memref<8x64x8xbf16, #tpu.memory_space<vmem>>, vector<1x64x8xbf16>
    %198 = vector.shape_cast %197 : vector<1x64x8xbf16> to vector<64x8xbf16>
    %cst_122 = arith.constant dense<0.000000e+00> : vector<16x8xf32>
    %199 = tpu.matmul %1, %198, %cst_122 {dimension_numbers = #tpu.dot_dimension_numbers<[1], [0], [0], [1], [0, 0, 1, 1], [], []>} : vector<16x64xbf16>, vector<64x8xbf16>, vector<16x8xf32> -> vector<16x8xf32>
    %c4_123 = arith.constant 4 : index
    %c0_124 = arith.constant 0 : index
    %c0_125 = arith.constant 0 : index
    %200 = vector.load %arg4[%c4_123, %c0_124, %c0_125] : memref<8x1x8xf32, #tpu.memory_space<vmem>>, vector<1x1x8xf32>
    %201 = vector.shape_cast %200 : vector<1x1x8xf32> to vector<1x8xf32>
    %202 = vector.broadcast %201 : vector<1x8xf32> to vector<16x8xf32>
    %203 = arith.addf %199, %202 : vector<16x8xf32>
    %204 = vector.shape_cast %203 : vector<16x8xf32> to vector<2x8x8xf32>
    %c4_126 = arith.constant 4 : index
    %c0_127 = arith.constant 0 : index
    %c0_128 = arith.constant 0 : index
    %205 = vector.load %arg5[%c4_126, %c0_127, %c0_128] : memref<8x64x8xbf16, #tpu.memory_space<vmem>>, vector<1x64x8xbf16>
    %206 = vector.shape_cast %205 : vector<1x64x8xbf16> to vector<64x8xbf16>
    %cst_129 = arith.constant dense<0.000000e+00> : vector<32x8xf32>
    %207 = tpu.matmul %3, %206, %cst_129 {dimension_numbers = #tpu.dot_dimension_numbers<[1], [0], [0], [1], [0, 0, 1, 1], [], []>} : vector<32x64xbf16>, vector<64x8xbf16>, vector<32x8xf32> -> vector<32x8xf32>
    %c4_130 = arith.constant 4 : index
    %c0_131 = arith.constant 0 : index
    %c0_132 = arith.constant 0 : index
    %208 = vector.load %arg6[%c4_130, %c0_131, %c0_132] : memref<8x1x8xf32, #tpu.memory_space<vmem>>, vector<1x1x8xf32>
    %209 = vector.shape_cast %208 : vector<1x1x8xf32> to vector<1x8xf32>
    %210 = vector.broadcast %209 : vector<1x8xf32> to vector<32x8xf32>
    %211 = arith.addf %207, %210 : vector<32x8xf32>
    %212 = vector.shape_cast %211 : vector<32x8xf32> to vector<2x16x8xf32>
    %c4_133 = arith.constant 4 : index
    %c0_134 = arith.constant 0 : index
    %c0_135 = arith.constant 0 : index
    %213 = vector.load %arg7[%c4_133, %c0_134, %c0_135] : memref<8x64x8xbf16, #tpu.memory_space<vmem>>, vector<1x64x8xbf16>
    %214 = vector.shape_cast %213 : vector<1x64x8xbf16> to vector<64x8xbf16>
    %cst_136 = arith.constant dense<0.000000e+00> : vector<32x8xf32>
    %215 = tpu.matmul %3, %214, %cst_136 {dimension_numbers = #tpu.dot_dimension_numbers<[1], [0], [0], [1], [0, 0, 1, 1], [], []>} : vector<32x64xbf16>, vector<64x8xbf16>, vector<32x8xf32> -> vector<32x8xf32>
    %c4_137 = arith.constant 4 : index
    %c0_138 = arith.constant 0 : index
    %c0_139 = arith.constant 0 : index
    %216 = vector.load %arg8[%c4_137, %c0_138, %c0_139] : memref<8x1x8xf32, #tpu.memory_space<vmem>>, vector<1x1x8xf32>
    %217 = vector.shape_cast %216 : vector<1x1x8xf32> to vector<1x8xf32>
    %218 = vector.broadcast %217 : vector<1x8xf32> to vector<32x8xf32>
    %219 = arith.addf %215, %218 : vector<32x8xf32>
    %220 = vector.shape_cast %219 : vector<32x8xf32> to vector<2x16x8xf32>
    %221 = arith.truncf %204 : vector<2x8x8xf32> to vector<2x8x8xbf16>
    %222 = arith.truncf %212 : vector<2x16x8xf32> to vector<2x16x8xbf16>
    "tpu.trace_start"() <{level = 10 : i32, message = "bqd,bkd->bqk"}> : () -> ()
    %cst_140 = arith.constant dense<0.000000e+00> : vector<2x8x16xf32>
    %223 = tpu.matmul %221, %222, %cst_140 {dimension_numbers = #tpu.dot_dimension_numbers<[2], [2], [1], [1], [0, 0, 0, 1, 1, 1], [0], [0]>} : vector<2x8x8xbf16>, vector<2x16x8xbf16>, vector<2x8x16xf32> -> vector<2x8x16xf32>
    "tpu.trace_stop"() : () -> ()
    %cst_141 = arith.constant 0.353553385 : f32
    %224 = vector.broadcast %cst_141 : f32 to vector<2x8x16xf32>
    %225 = arith.mulf %223, %224 : vector<2x8x16xf32>
    %cst_142 = arith.constant dense<0xFF800000> : vector<2x8xf32>
    %226 = vector.multi_reduction <maximumf>, %225, %cst_142 [2] : vector<2x8x16xf32> to vector<2x8xf32>
    %227 = vector.shape_cast %226 : vector<2x8xf32> to vector<2x8x1xf32>
    %228 = vector.broadcast %227 : vector<2x8x1xf32> to vector<2x8x16xf32>
    %229 = arith.subf %225, %228 : vector<2x8x16xf32>
    %230 = math.exp %229 : vector<2x8x16xf32>
    %cst_143 = arith.constant dense<0.000000e+00> : vector<2x8xf32>
    %231 = vector.multi_reduction <add>, %230, %cst_143 [2] : vector<2x8x16xf32> to vector<2x8xf32>
    %232 = vector.shape_cast %231 : vector<2x8xf32> to vector<2x8x1xf32>
    %233 = tpu.reciprocal %232 {approx = true} : vector<2x8x1xf32> -> vector<2x8x1xf32>
    %234 = vector.broadcast %233 : vector<2x8x1xf32> to vector<2x8x16xf32>
    %235 = arith.mulf %230, %234 : vector<2x8x16xf32>
    %236 = arith.truncf %235 : vector<2x8x16xf32> to vector<2x8x16xbf16>
    %237 = arith.truncf %220 : vector<2x16x8xf32> to vector<2x16x8xbf16>
    "tpu.trace_start"() <{level = 10 : i32, message = "bqk,bkd->bqd"}> : () -> ()
    %cst_144 = arith.constant dense<0.000000e+00> : vector<2x8x8xf32>
    %238 = tpu.matmul %236, %237, %cst_144 {dimension_numbers = #tpu.dot_dimension_numbers<[2], [1], [1], [2], [0, 0, 0, 1, 1, 2], [0], [0]>} : vector<2x8x16xbf16>, vector<2x16x8xbf16>, vector<2x8x8xf32> -> vector<2x8x8xf32>
    "tpu.trace_stop"() : () -> ()
    %239 = vector.shape_cast %238 : vector<2x8x8xf32> to vector<16x8xf32>
    %240 = arith.truncf %239 : vector<16x8xf32> to vector<16x8xbf16>
    %c4_145 = arith.constant 4 : index
    %c0_146 = arith.constant 0 : index
    %c0_147 = arith.constant 0 : index
    %241 = vector.load %arg9[%c4_145, %c0_146, %c0_147] : memref<8x8x64xbf16, #tpu.memory_space<vmem>>, vector<1x8x64xbf16>
    %242 = vector.shape_cast %241 : vector<1x8x64xbf16> to vector<8x64xbf16>
    %cst_148 = arith.constant dense<0.000000e+00> : vector<16x64xf32>
    %243 = tpu.matmul %240, %242, %cst_148 {dimension_numbers = #tpu.dot_dimension_numbers<[1], [0], [0], [1], [0, 0, 1, 1], [], []>} : vector<16x8xbf16>, vector<8x64xbf16>, vector<16x64xf32> -> vector<16x64xf32>
    %244 = arith.addf %196, %243 : vector<16x64xf32>
    %c5 = arith.constant 5 : index
    %c0_149 = arith.constant 0 : index
    %c0_150 = arith.constant 0 : index
    %245 = vector.load %arg3[%c5, %c0_149, %c0_150] : memref<8x64x8xbf16, #tpu.memory_space<vmem>>, vector<1x64x8xbf16>
    %246 = vector.shape_cast %245 : vector<1x64x8xbf16> to vector<64x8xbf16>
    %cst_151 = arith.constant dense<0.000000e+00> : vector<16x8xf32>
    %247 = tpu.matmul %1, %246, %cst_151 {dimension_numbers = #tpu.dot_dimension_numbers<[1], [0], [0], [1], [0, 0, 1, 1], [], []>} : vector<16x64xbf16>, vector<64x8xbf16>, vector<16x8xf32> -> vector<16x8xf32>
    %c5_152 = arith.constant 5 : index
    %c0_153 = arith.constant 0 : index
    %c0_154 = arith.constant 0 : index
    %248 = vector.load %arg4[%c5_152, %c0_153, %c0_154] : memref<8x1x8xf32, #tpu.memory_space<vmem>>, vector<1x1x8xf32>
    %249 = vector.shape_cast %248 : vector<1x1x8xf32> to vector<1x8xf32>
    %250 = vector.broadcast %249 : vector<1x8xf32> to vector<16x8xf32>
    %251 = arith.addf %247, %250 : vector<16x8xf32>
    %252 = vector.shape_cast %251 : vector<16x8xf32> to vector<2x8x8xf32>
    %c5_155 = arith.constant 5 : index
    %c0_156 = arith.constant 0 : index
    %c0_157 = arith.constant 0 : index
    %253 = vector.load %arg5[%c5_155, %c0_156, %c0_157] : memref<8x64x8xbf16, #tpu.memory_space<vmem>>, vector<1x64x8xbf16>
    %254 = vector.shape_cast %253 : vector<1x64x8xbf16> to vector<64x8xbf16>
    %cst_158 = arith.constant dense<0.000000e+00> : vector<32x8xf32>
    %255 = tpu.matmul %3, %254, %cst_158 {dimension_numbers = #tpu.dot_dimension_numbers<[1], [0], [0], [1], [0, 0, 1, 1], [], []>} : vector<32x64xbf16>, vector<64x8xbf16>, vector<32x8xf32> -> vector<32x8xf32>
    %c5_159 = arith.constant 5 : index
    %c0_160 = arith.constant 0 : index
    %c0_161 = arith.constant 0 : index
    %256 = vector.load %arg6[%c5_159, %c0_160, %c0_161] : memref<8x1x8xf32, #tpu.memory_space<vmem>>, vector<1x1x8xf32>
    %257 = vector.shape_cast %256 : vector<1x1x8xf32> to vector<1x8xf32>
    %258 = vector.broadcast %257 : vector<1x8xf32> to vector<32x8xf32>
    %259 = arith.addf %255, %258 : vector<32x8xf32>
    %260 = vector.shape_cast %259 : vector<32x8xf32> to vector<2x16x8xf32>
    %c5_162 = arith.constant 5 : index
    %c0_163 = arith.constant 0 : index
    %c0_164 = arith.constant 0 : index
    %261 = vector.load %arg7[%c5_162, %c0_163, %c0_164] : memref<8x64x8xbf16, #tpu.memory_space<vmem>>, vector<1x64x8xbf16>
    %262 = vector.shape_cast %261 : vector<1x64x8xbf16> to vector<64x8xbf16>
    %cst_165 = arith.constant dense<0.000000e+00> : vector<32x8xf32>
    %263 = tpu.matmul %3, %262, %cst_165 {dimension_numbers = #tpu.dot_dimension_numbers<[1], [0], [0], [1], [0, 0, 1, 1], [], []>} : vector<32x64xbf16>, vector<64x8xbf16>, vector<32x8xf32> -> vector<32x8xf32>
    %c5_166 = arith.constant 5 : index
    %c0_167 = arith.constant 0 : index
    %c0_168 = arith.constant 0 : index
    %264 = vector.load %arg8[%c5_166, %c0_167, %c0_168] : memref<8x1x8xf32, #tpu.memory_space<vmem>>, vector<1x1x8xf32>
    %265 = vector.shape_cast %264 : vector<1x1x8xf32> to vector<1x8xf32>
    %266 = vector.broadcast %265 : vector<1x8xf32> to vector<32x8xf32>
    %267 = arith.addf %263, %266 : vector<32x8xf32>
    %268 = vector.shape_cast %267 : vector<32x8xf32> to vector<2x16x8xf32>
    %269 = arith.truncf %252 : vector<2x8x8xf32> to vector<2x8x8xbf16>
    %270 = arith.truncf %260 : vector<2x16x8xf32> to vector<2x16x8xbf16>
    "tpu.trace_start"() <{level = 10 : i32, message = "bqd,bkd->bqk"}> : () -> ()
    %cst_169 = arith.constant dense<0.000000e+00> : vector<2x8x16xf32>
    %271 = tpu.matmul %269, %270, %cst_169 {dimension_numbers = #tpu.dot_dimension_numbers<[2], [2], [1], [1], [0, 0, 0, 1, 1, 1], [0], [0]>} : vector<2x8x8xbf16>, vector<2x16x8xbf16>, vector<2x8x16xf32> -> vector<2x8x16xf32>
    "tpu.trace_stop"() : () -> ()
    %cst_170 = arith.constant 0.353553385 : f32
    %272 = vector.broadcast %cst_170 : f32 to vector<2x8x16xf32>
    %273 = arith.mulf %271, %272 : vector<2x8x16xf32>
    %cst_171 = arith.constant dense<0xFF800000> : vector<2x8xf32>
    %274 = vector.multi_reduction <maximumf>, %273, %cst_171 [2] : vector<2x8x16xf32> to vector<2x8xf32>
    %275 = vector.shape_cast %274 : vector<2x8xf32> to vector<2x8x1xf32>
    %276 = vector.broadcast %275 : vector<2x8x1xf32> to vector<2x8x16xf32>
    %277 = arith.subf %273, %276 : vector<2x8x16xf32>
    %278 = math.exp %277 : vector<2x8x16xf32>
    %cst_172 = arith.constant dense<0.000000e+00> : vector<2x8xf32>
    %279 = vector.multi_reduction <add>, %278, %cst_172 [2] : vector<2x8x16xf32> to vector<2x8xf32>
    %280 = vector.shape_cast %279 : vector<2x8xf32> to vector<2x8x1xf32>
    %281 = tpu.reciprocal %280 {approx = true} : vector<2x8x1xf32> -> vector<2x8x1xf32>
    %282 = vector.broadcast %281 : vector<2x8x1xf32> to vector<2x8x16xf32>
    %283 = arith.mulf %278, %282 : vector<2x8x16xf32>
    %284 = arith.truncf %283 : vector<2x8x16xf32> to vector<2x8x16xbf16>
    %285 = arith.truncf %268 : vector<2x16x8xf32> to vector<2x16x8xbf16>
    "tpu.trace_start"() <{level = 10 : i32, message = "bqk,bkd->bqd"}> : () -> ()
    %cst_173 = arith.constant dense<0.000000e+00> : vector<2x8x8xf32>
    %286 = tpu.matmul %284, %285, %cst_173 {dimension_numbers = #tpu.dot_dimension_numbers<[2], [1], [1], [2], [0, 0, 0, 1, 1, 2], [0], [0]>} : vector<2x8x16xbf16>, vector<2x16x8xbf16>, vector<2x8x8xf32> -> vector<2x8x8xf32>
    "tpu.trace_stop"() : () -> ()
    %287 = vector.shape_cast %286 : vector<2x8x8xf32> to vector<16x8xf32>
    %288 = arith.truncf %287 : vector<16x8xf32> to vector<16x8xbf16>
    %c5_174 = arith.constant 5 : index
    %c0_175 = arith.constant 0 : index
    %c0_176 = arith.constant 0 : index
    %289 = vector.load %arg9[%c5_174, %c0_175, %c0_176] : memref<8x8x64xbf16, #tpu.memory_space<vmem>>, vector<1x8x64xbf16>
    %290 = vector.shape_cast %289 : vector<1x8x64xbf16> to vector<8x64xbf16>
    %cst_177 = arith.constant dense<0.000000e+00> : vector<16x64xf32>
    %291 = tpu.matmul %288, %290, %cst_177 {dimension_numbers = #tpu.dot_dimension_numbers<[1], [0], [0], [1], [0, 0, 1, 1], [], []>} : vector<16x8xbf16>, vector<8x64xbf16>, vector<16x64xf32> -> vector<16x64xf32>
    %292 = arith.addf %244, %291 : vector<16x64xf32>
    %c6 = arith.constant 6 : index
    %c0_178 = arith.constant 0 : index
    %c0_179 = arith.constant 0 : index
    %293 = vector.load %arg3[%c6, %c0_178, %c0_179] : memref<8x64x8xbf16, #tpu.memory_space<vmem>>, vector<1x64x8xbf16>
    %294 = vector.shape_cast %293 : vector<1x64x8xbf16> to vector<64x8xbf16>
    %cst_180 = arith.constant dense<0.000000e+00> : vector<16x8xf32>
    %295 = tpu.matmul %1, %294, %cst_180 {dimension_numbers = #tpu.dot_dimension_numbers<[1], [0], [0], [1], [0, 0, 1, 1], [], []>} : vector<16x64xbf16>, vector<64x8xbf16>, vector<16x8xf32> -> vector<16x8xf32>
    %c6_181 = arith.constant 6 : index
    %c0_182 = arith.constant 0 : index
    %c0_183 = arith.constant 0 : index
    %296 = vector.load %arg4[%c6_181, %c0_182, %c0_183] : memref<8x1x8xf32, #tpu.memory_space<vmem>>, vector<1x1x8xf32>
    %297 = vector.shape_cast %296 : vector<1x1x8xf32> to vector<1x8xf32>
    %298 = vector.broadcast %297 : vector<1x8xf32> to vector<16x8xf32>
    %299 = arith.addf %295, %298 : vector<16x8xf32>
    %300 = vector.shape_cast %299 : vector<16x8xf32> to vector<2x8x8xf32>
    %c6_184 = arith.constant 6 : index
    %c0_185 = arith.constant 0 : index
    %c0_186 = arith.constant 0 : index
    %301 = vector.load %arg5[%c6_184, %c0_185, %c0_186] : memref<8x64x8xbf16, #tpu.memory_space<vmem>>, vector<1x64x8xbf16>
    %302 = vector.shape_cast %301 : vector<1x64x8xbf16> to vector<64x8xbf16>
    %cst_187 = arith.constant dense<0.000000e+00> : vector<32x8xf32>
    %303 = tpu.matmul %3, %302, %cst_187 {dimension_numbers = #tpu.dot_dimension_numbers<[1], [0], [0], [1], [0, 0, 1, 1], [], []>} : vector<32x64xbf16>, vector<64x8xbf16>, vector<32x8xf32> -> vector<32x8xf32>
    %c6_188 = arith.constant 6 : index
    %c0_189 = arith.constant 0 : index
    %c0_190 = arith.constant 0 : index
    %304 = vector.load %arg6[%c6_188, %c0_189, %c0_190] : memref<8x1x8xf32, #tpu.memory_space<vmem>>, vector<1x1x8xf32>
    %305 = vector.shape_cast %304 : vector<1x1x8xf32> to vector<1x8xf32>
    %306 = vector.broadcast %305 : vector<1x8xf32> to vector<32x8xf32>
    %307 = arith.addf %303, %306 : vector<32x8xf32>
    %308 = vector.shape_cast %307 : vector<32x8xf32> to vector<2x16x8xf32>
    %c6_191 = arith.constant 6 : index
    %c0_192 = arith.constant 0 : index
    %c0_193 = arith.constant 0 : index
    %309 = vector.load %arg7[%c6_191, %c0_192, %c0_193] : memref<8x64x8xbf16, #tpu.memory_space<vmem>>, vector<1x64x8xbf16>
    %310 = vector.shape_cast %309 : vector<1x64x8xbf16> to vector<64x8xbf16>
    %cst_194 = arith.constant dense<0.000000e+00> : vector<32x8xf32>
    %311 = tpu.matmul %3, %310, %cst_194 {dimension_numbers = #tpu.dot_dimension_numbers<[1], [0], [0], [1], [0, 0, 1, 1], [], []>} : vector<32x64xbf16>, vector<64x8xbf16>, vector<32x8xf32> -> vector<32x8xf32>
    %c6_195 = arith.constant 6 : index
    %c0_196 = arith.constant 0 : index
    %c0_197 = arith.constant 0 : index
    %312 = vector.load %arg8[%c6_195, %c0_196, %c0_197] : memref<8x1x8xf32, #tpu.memory_space<vmem>>, vector<1x1x8xf32>
    %313 = vector.shape_cast %312 : vector<1x1x8xf32> to vector<1x8xf32>
    %314 = vector.broadcast %313 : vector<1x8xf32> to vector<32x8xf32>
    %315 = arith.addf %311, %314 : vector<32x8xf32>
    %316 = vector.shape_cast %315 : vector<32x8xf32> to vector<2x16x8xf32>
    %317 = arith.truncf %300 : vector<2x8x8xf32> to vector<2x8x8xbf16>
    %318 = arith.truncf %308 : vector<2x16x8xf32> to vector<2x16x8xbf16>
    "tpu.trace_start"() <{level = 10 : i32, message = "bqd,bkd->bqk"}> : () -> ()
    %cst_198 = arith.constant dense<0.000000e+00> : vector<2x8x16xf32>
    %319 = tpu.matmul %317, %318, %cst_198 {dimension_numbers = #tpu.dot_dimension_numbers<[2], [2], [1], [1], [0, 0, 0, 1, 1, 1], [0], [0]>} : vector<2x8x8xbf16>, vector<2x16x8xbf16>, vector<2x8x16xf32> -> vector<2x8x16xf32>
    "tpu.trace_stop"() : () -> ()
    %cst_199 = arith.constant 0.353553385 : f32
    %320 = vector.broadcast %cst_199 : f32 to vector<2x8x16xf32>
    %321 = arith.mulf %319, %320 : vector<2x8x16xf32>
    %cst_200 = arith.constant dense<0xFF800000> : vector<2x8xf32>
    %322 = vector.multi_reduction <maximumf>, %321, %cst_200 [2] : vector<2x8x16xf32> to vector<2x8xf32>
    %323 = vector.shape_cast %322 : vector<2x8xf32> to vector<2x8x1xf32>
    %324 = vector.broadcast %323 : vector<2x8x1xf32> to vector<2x8x16xf32>
    %325 = arith.subf %321, %324 : vector<2x8x16xf32>
    %326 = math.exp %325 : vector<2x8x16xf32>
    %cst_201 = arith.constant dense<0.000000e+00> : vector<2x8xf32>
    %327 = vector.multi_reduction <add>, %326, %cst_201 [2] : vector<2x8x16xf32> to vector<2x8xf32>
    %328 = vector.shape_cast %327 : vector<2x8xf32> to vector<2x8x1xf32>
    %329 = tpu.reciprocal %328 {approx = true} : vector<2x8x1xf32> -> vector<2x8x1xf32>
    %330 = vector.broadcast %329 : vector<2x8x1xf32> to vector<2x8x16xf32>
    %331 = arith.mulf %326, %330 : vector<2x8x16xf32>
    %332 = arith.truncf %331 : vector<2x8x16xf32> to vector<2x8x16xbf16>
    %333 = arith.truncf %316 : vector<2x16x8xf32> to vector<2x16x8xbf16>
    "tpu.trace_start"() <{level = 10 : i32, message = "bqk,bkd->bqd"}> : () -> ()
    %cst_202 = arith.constant dense<0.000000e+00> : vector<2x8x8xf32>
    %334 = tpu.matmul %332, %333, %cst_202 {dimension_numbers = #tpu.dot_dimension_numbers<[2], [1], [1], [2], [0, 0, 0, 1, 1, 2], [0], [0]>} : vector<2x8x16xbf16>, vector<2x16x8xbf16>, vector<2x8x8xf32> -> vector<2x8x8xf32>
    "tpu.trace_stop"() : () -> ()
    %335 = vector.shape_cast %334 : vector<2x8x8xf32> to vector<16x8xf32>
    %336 = arith.truncf %335 : vector<16x8xf32> to vector<16x8xbf16>
    %c6_203 = arith.constant 6 : index
    %c0_204 = arith.constant 0 : index
    %c0_205 = arith.constant 0 : index
    %337 = vector.load %arg9[%c6_203, %c0_204, %c0_205] : memref<8x8x64xbf16, #tpu.memory_space<vmem>>, vector<1x8x64xbf16>
    %338 = vector.shape_cast %337 : vector<1x8x64xbf16> to vector<8x64xbf16>
    %cst_206 = arith.constant dense<0.000000e+00> : vector<16x64xf32>
    %339 = tpu.matmul %336, %338, %cst_206 {dimension_numbers = #tpu.dot_dimension_numbers<[1], [0], [0], [1], [0, 0, 1, 1], [], []>} : vector<16x8xbf16>, vector<8x64xbf16>, vector<16x64xf32> -> vector<16x64xf32>
    %340 = arith.addf %292, %339 : vector<16x64xf32>
    %c7 = arith.constant 7 : index
    %c0_207 = arith.constant 0 : index
    %c0_208 = arith.constant 0 : index
    %341 = vector.load %arg3[%c7, %c0_207, %c0_208] : memref<8x64x8xbf16, #tpu.memory_space<vmem>>, vector<1x64x8xbf16>
    %342 = vector.shape_cast %341 : vector<1x64x8xbf16> to vector<64x8xbf16>
    %cst_209 = arith.constant dense<0.000000e+00> : vector<16x8xf32>
    %343 = tpu.matmul %1, %342, %cst_209 {dimension_numbers = #tpu.dot_dimension_numbers<[1], [0], [0], [1], [0, 0, 1, 1], [], []>} : vector<16x64xbf16>, vector<64x8xbf16>, vector<16x8xf32> -> vector<16x8xf32>
    %c7_210 = arith.constant 7 : index
    %c0_211 = arith.constant 0 : index
    %c0_212 = arith.constant 0 : index
    %344 = vector.load %arg4[%c7_210, %c0_211, %c0_212] : memref<8x1x8xf32, #tpu.memory_space<vmem>>, vector<1x1x8xf32>
    %345 = vector.shape_cast %344 : vector<1x1x8xf32> to vector<1x8xf32>
    %346 = vector.broadcast %345 : vector<1x8xf32> to vector<16x8xf32>
    %347 = arith.addf %343, %346 : vector<16x8xf32>
    %348 = vector.shape_cast %347 : vector<16x8xf32> to vector<2x8x8xf32>
    %c7_213 = arith.constant 7 : index
    %c0_214 = arith.constant 0 : index
    %c0_215 = arith.constant 0 : index
    %349 = vector.load %arg5[%c7_213, %c0_214, %c0_215] : memref<8x64x8xbf16, #tpu.memory_space<vmem>>, vector<1x64x8xbf16>
    %350 = vector.shape_cast %349 : vector<1x64x8xbf16> to vector<64x8xbf16>
    %cst_216 = arith.constant dense<0.000000e+00> : vector<32x8xf32>
    %351 = tpu.matmul %3, %350, %cst_216 {dimension_numbers = #tpu.dot_dimension_numbers<[1], [0], [0], [1], [0, 0, 1, 1], [], []>} : vector<32x64xbf16>, vector<64x8xbf16>, vector<32x8xf32> -> vector<32x8xf32>
    %c7_217 = arith.constant 7 : index
    %c0_218 = arith.constant 0 : index
    %c0_219 = arith.constant 0 : index
    %352 = vector.load %arg6[%c7_217, %c0_218, %c0_219] : memref<8x1x8xf32, #tpu.memory_space<vmem>>, vector<1x1x8xf32>
    %353 = vector.shape_cast %352 : vector<1x1x8xf32> to vector<1x8xf32>
    %354 = vector.broadcast %353 : vector<1x8xf32> to vector<32x8xf32>
    %355 = arith.addf %351, %354 : vector<32x8xf32>
    %356 = vector.shape_cast %355 : vector<32x8xf32> to vector<2x16x8xf32>
    %c7_220 = arith.constant 7 : index
    %c0_221 = arith.constant 0 : index
    %c0_222 = arith.constant 0 : index
    %357 = vector.load %arg7[%c7_220, %c0_221, %c0_222] : memref<8x64x8xbf16, #tpu.memory_space<vmem>>, vector<1x64x8xbf16>
    %358 = vector.shape_cast %357 : vector<1x64x8xbf16> to vector<64x8xbf16>
    %cst_223 = arith.constant dense<0.000000e+00> : vector<32x8xf32>
    %359 = tpu.matmul %3, %358, %cst_223 {dimension_numbers = #tpu.dot_dimension_numbers<[1], [0], [0], [1], [0, 0, 1, 1], [], []>} : vector<32x64xbf16>, vector<64x8xbf16>, vector<32x8xf32> -> vector<32x8xf32>
    %c7_224 = arith.constant 7 : index
    %c0_225 = arith.constant 0 : index
    %c0_226 = arith.constant 0 : index
    %360 = vector.load %arg8[%c7_224, %c0_225, %c0_226] : memref<8x1x8xf32, #tpu.memory_space<vmem>>, vector<1x1x8xf32>
    %361 = vector.shape_cast %360 : vector<1x1x8xf32> to vector<1x8xf32>
    %362 = vector.broadcast %361 : vector<1x8xf32> to vector<32x8xf32>
    %363 = arith.addf %359, %362 : vector<32x8xf32>
    %364 = vector.shape_cast %363 : vector<32x8xf32> to vector<2x16x8xf32>
    %365 = arith.truncf %348 : vector<2x8x8xf32> to vector<2x8x8xbf16>
    %366 = arith.truncf %356 : vector<2x16x8xf32> to vector<2x16x8xbf16>
    "tpu.trace_start"() <{level = 10 : i32, message = "bqd,bkd->bqk"}> : () -> ()
    %cst_227 = arith.constant dense<0.000000e+00> : vector<2x8x16xf32>
    %367 = tpu.matmul %365, %366, %cst_227 {dimension_numbers = #tpu.dot_dimension_numbers<[2], [2], [1], [1], [0, 0, 0, 1, 1, 1], [0], [0]>} : vector<2x8x8xbf16>, vector<2x16x8xbf16>, vector<2x8x16xf32> -> vector<2x8x16xf32>
    "tpu.trace_stop"() : () -> ()
    %cst_228 = arith.constant 0.353553385 : f32
    %368 = vector.broadcast %cst_228 : f32 to vector<2x8x16xf32>
    %369 = arith.mulf %367, %368 : vector<2x8x16xf32>
    %cst_229 = arith.constant dense<0xFF800000> : vector<2x8xf32>
    %370 = vector.multi_reduction <maximumf>, %369, %cst_229 [2] : vector<2x8x16xf32> to vector<2x8xf32>
    %371 = vector.shape_cast %370 : vector<2x8xf32> to vector<2x8x1xf32>
    %372 = vector.broadcast %371 : vector<2x8x1xf32> to vector<2x8x16xf32>
    %373 = arith.subf %369, %372 : vector<2x8x16xf32>
    %374 = math.exp %373 : vector<2x8x16xf32>
    %cst_230 = arith.constant dense<0.000000e+00> : vector<2x8xf32>
    %375 = vector.multi_reduction <add>, %374, %cst_230 [2] : vector<2x8x16xf32> to vector<2x8xf32>
    %376 = vector.shape_cast %375 : vector<2x8xf32> to vector<2x8x1xf32>
    %377 = tpu.reciprocal %376 {approx = true} : vector<2x8x1xf32> -> vector<2x8x1xf32>
    %378 = vector.broadcast %377 : vector<2x8x1xf32> to vector<2x8x16xf32>
    %379 = arith.mulf %374, %378 : vector<2x8x16xf32>
    %380 = arith.truncf %379 : vector<2x8x16xf32> to vector<2x8x16xbf16>
    %381 = arith.truncf %364 : vector<2x16x8xf32> to vector<2x16x8xbf16>
    "tpu.trace_start"() <{level = 10 : i32, message = "bqk,bkd->bqd"}> : () -> ()
    %cst_231 = arith.constant dense<0.000000e+00> : vector<2x8x8xf32>
    %382 = tpu.matmul %380, %381, %cst_231 {dimension_numbers = #tpu.dot_dimension_numbers<[2], [1], [1], [2], [0, 0, 0, 1, 1, 2], [0], [0]>} : vector<2x8x16xbf16>, vector<2x16x8xbf16>, vector<2x8x8xf32> -> vector<2x8x8xf32>
    "tpu.trace_stop"() : () -> ()
    %383 = vector.shape_cast %382 : vector<2x8x8xf32> to vector<16x8xf32>
    %384 = arith.truncf %383 : vector<16x8xf32> to vector<16x8xbf16>
    %c7_232 = arith.constant 7 : index
    %c0_233 = arith.constant 0 : index
    %c0_234 = arith.constant 0 : index
    %385 = vector.load %arg9[%c7_232, %c0_233, %c0_234] : memref<8x8x64xbf16, #tpu.memory_space<vmem>>, vector<1x8x64xbf16>
    %386 = vector.shape_cast %385 : vector<1x8x64xbf16> to vector<8x64xbf16>
    %cst_235 = arith.constant dense<0.000000e+00> : vector<16x64xf32>
    %387 = tpu.matmul %384, %386, %cst_235 {dimension_numbers = #tpu.dot_dimension_numbers<[1], [0], [0], [1], [0, 0, 1, 1], [], []>} : vector<16x8xbf16>, vector<8x64xbf16>, vector<16x64xf32> -> vector<16x64xf32>
    %388 = arith.addf %340, %387 : vector<16x64xf32>
    %c0_236 = arith.constant 0 : index
    %c0_237 = arith.constant 0 : index
    %389 = vector.load %arg10[%c0_236, %c0_237] : memref<1x64xf32, #tpu.memory_space<vmem>>, vector<1x64xf32>
    %390 = vector.broadcast %389 : vector<1x64xf32> to vector<16x64xf32>
    %391 = arith.addf %388, %390 : vector<16x64xf32>
    %c0_238 = arith.constant 0 : index
    %c0_239 = arith.constant 0 : index
    %392 = vector.load %arg11[%c0_238, %c0_239] : memref<16x64xf32, #tpu.memory_space<vmem>>, vector<16x64xf32>
    tpu.vector_store %arg11[%c0_238, %c0_239], %391 {strides = array<i32>} : memref<16x64xf32, #tpu.memory_space<vmem>>, vector<16x64xf32>,
    return
  }
  func.func @transform_0(%arg0: i32) -> (i32, i32) {
    %c0_i32 = arith.constant 0 : i32
    %c0_i32_0 = arith.constant 0 : i32
    %c0_i32_1 = arith.constant 0 : i32
    return %c0_i32, %c0_i32_0 : i32, i32
  }
  func.func @transform_1(%arg0: i32) -> (i32, i32) {
    %c0_i32 = arith.constant 0 : i32
    %c0_i32_0 = arith.constant 0 : i32
    %c0_i32_1 = arith.constant 0 : i32
    return %c0_i32, %c0_i32_0 : i32, i32
  }
  func.func @transform_2(%arg0: i32) -> (i32, i32, i32) {
    %c0_i32 = arith.constant 0 : i32
    %c0_i32_0 = arith.constant 0 : i32
    %c0_i32_1 = arith.constant 0 : i32
    %c0_i32_2 = arith.constant 0 : i32
    return %c0_i32, %c0_i32_0, %c0_i32_1 : i32, i32, i32
  }
  func.func @transform_3(%arg0: i32) -> (i32, i32, i32) {
    %c0_i32 = arith.constant 0 : i32
    %c0_i32_0 = arith.constant 0 : i32
    %c0_i32_1 = arith.constant 0 : i32
    %c0_i32_2 = arith.constant 0 : i32
    return %c0_i32, %c0_i32_0, %c0_i32_1 : i32, i32, i32
  }
  func.func @transform_4(%arg0: i32) -> (i32, i32, i32) {
    %c0_i32 = arith.constant 0 : i32
    %c0_i32_0 = arith.constant 0 : i32
    %c0_i32_1 = arith.constant 0 : i32
    %c0_i32_2 = arith.constant 0 : i32
    return %c0_i32, %c0_i32_0, %c0_i32_1 : i32, i32, i32
  }
  func.func @transform_5(%arg0: i32) -> (i32, i32, i32) {
    %c0_i32 = arith.constant 0 : i32
    %c0_i32_0 = arith.constant 0 : i32
    %c0_i32_1 = arith.constant 0 : i32
    %c0_i32_2 = arith.constant 0 : i32
    return %c0_i32, %c0_i32_0, %c0_i32_1 : i32, i32, i32
  }
  func.func @transform_6(%arg0: i32) -> (i32, i32, i32) {
    %c0_i32 = arith.constant 0 : i32
    %c0_i32_0 = arith.constant 0 : i32
    %c0_i32_1 = arith.constant 0 : i32
    %c0_i32_2 = arith.constant 0 : i32
    return %c0_i32, %c0_i32_0, %c0_i32_1 : i32, i32, i32
  }
  func.func @transform_7(%arg0: i32) -> (i32, i32, i32) {
    %c0_i32 = arith.constant 0 : i32
    %c0_i32_0 = arith.constant 0 : i32
    %c0_i32_1 = arith.constant 0 : i32
    %c0_i32_2 = arith.constant 0 : i32
    return %c0_i32, %c0_i32_0, %c0_i32_1 : i32, i32, i32
  }
  func.func @transform_8(%arg0: i32) -> (i32, i32, i32) {
    %c0_i32 = arith.constant 0 : i32
    %c0_i32_0 = arith.constant 0 : i32
    %c0_i32_1 = arith.constant 0 : i32
    %c0_i32_2 = arith.constant 0 : i32
    return %c0_i32, %c0_i32_0, %c0_i32_1 : i32, i32, i32
  }
  func.func @transform_9(%arg0: i32) -> (i32, i32) {
    %c0_i32 = arith.constant 0 : i32
    %c0_i32_0 = arith.constant 0 : i32
    %c0_i32_1 = arith.constant 0 : i32
    return %c0_i32, %c0_i32_0 : i32, i32
  }
  func.func @transform_10(%arg0: i32) -> (i32, i32) {
    %c0_i32 = arith.constant 0 : i32
    %c0_i32_0 = arith.constant 0 : i32
    %c0_i32_1 = arith.constant 0 : i32
    return %c0_i32, %c0_i32_0 : i32, i32
  }
}

module attributes {stable_mosaic.version = 11 : i64} {
  func.func @_fc_ln_kernel(%arg0: i32, %arg1: memref<32x64xf32, #tpu.memory_space<vmem>>, %arg2: memref<64x64xbf16, #tpu.memory_space<vmem>>, %arg3: memref<1x64xf32, #tpu.memory_space<vmem>>, %arg4: memref<1x64xf32, #tpu.memory_space<vmem>>, %arg5: memref<1x64xf32, #tpu.memory_space<vmem>>, %arg6: memref<32x64xf32, #tpu.memory_space<vmem>>) attributes {dimension_semantics = [#tpu.dimension_semantics<arbitrary>], iteration_bounds = array<i64: 1>, scalar_prefetch = 0 : i64, scratch_operands = 0 : i64, tpu.core_type = #tpu.core_type<tc>, window_params = [{pipeline_mode = #tpu.pipeline_mode<synchronous>, transform_indices = @transform_0, window_bounds = array<i64: 32, 64>}, {pipeline_mode = #tpu.pipeline_mode<synchronous>, transform_indices = @transform_1, window_bounds = array<i64: 64, 64>}, {pipeline_mode = #tpu.pipeline_mode<synchronous>, transform_indices = @transform_2, window_bounds = array<i64: 1, 64>}, {pipeline_mode = #tpu.pipeline_mode<synchronous>, transform_indices = @transform_3, window_bounds = array<i64: 1, 64>}, {pipeline_mode = #tpu.pipeline_mode<synchronous>, transform_indices = @transform_4, window_bounds = array<i64: 1, 64>}, {pipeline_mode = #tpu.pipeline_mode<synchronous>, transform_indices = @transform_5, window_bounds = array<i64: 32, 64>}]} {
    %c0 = arith.constant 0 : index
    %c0_0 = arith.constant 0 : index
    %0 = vector.load %arg1[%c0, %c0_0] : memref<32x64xf32, #tpu.memory_space<vmem>>, vector<32x64xf32>
    %1 = arith.truncf %0 : vector<32x64xf32> to vector<32x64xbf16>
    %c0_1 = arith.constant 0 : index
    %c0_2 = arith.constant 0 : index
    %2 = vector.load %arg2[%c0_1, %c0_2] : memref<64x64xbf16, #tpu.memory_space<vmem>>, vector<64x64xbf16>
    %cst = arith.constant dense<0.000000e+00> : vector<32x64xf32>
    %3 = tpu.matmul %1, %2, %cst {dimension_numbers = #tpu.dot_dimension_numbers<[1], [0], [0], [1], [0, 0, 1, 1], [], []>} : vector<32x64xbf16>, vector<64x64xbf16>, vector<32x64xf32> -> vector<32x64xf32>
    %c0_3 = arith.constant 0 : index
    %c0_4 = arith.constant 0 : index
    %4 = vector.load %arg3[%c0_3, %c0_4] : memref<1x64xf32, #tpu.memory_space<vmem>>, vector<1x64xf32>
    %5 = vector.broadcast %4 : vector<1x64xf32> to vector<32x64xf32>
    %6 = arith.addf %3, %5 : vector<32x64xf32>
    %cst_5 = arith.constant dense<0.000000e+00> : vector<32xf32>
    %7 = vector.multi_reduction <add>, %6, %cst_5 [1] : vector<32x64xf32> to vector<32xf32>
    %8 = vector.shape_cast %7 : vector<32xf32> to vector<32x1xf32>
    %cst_6 = arith.constant 6.400000e+01 : f32
    %9 = vector.broadcast %cst_6 : f32 to vector<32x1xf32>
    %10 = arith.divf %8, %9 : vector<32x1xf32>
    %11 = vector.broadcast %10 : vector<32x1xf32> to vector<32x64xf32>
    %12 = arith.subf %6, %11 : vector<32x64xf32>
    %13 = arith.mulf %12, %12 : vector<32x64xf32>
    %cst_7 = arith.constant dense<0.000000e+00> : vector<32xf32>
    %14 = vector.multi_reduction <add>, %13, %cst_7 [1] : vector<32x64xf32> to vector<32xf32>
    %15 = vector.shape_cast %14 : vector<32xf32> to vector<32x1xf32>
    %cst_8 = arith.constant 6.400000e+01 : f32
    %16 = vector.broadcast %cst_8 : f32 to vector<32x1xf32>
    %17 = arith.divf %15, %16 : vector<32x1xf32>
    %18 = vector.broadcast %10 : vector<32x1xf32> to vector<32x64xf32>
    %19 = arith.subf %6, %18 : vector<32x64xf32>
    %cst_9 = arith.constant 9.99999974E-6 : f32
    %20 = vector.broadcast %cst_9 : f32 to vector<32x1xf32>
    %21 = arith.addf %17, %20 : vector<32x1xf32>
    %22 = math.rsqrt %21 : vector<32x1xf32>
    %23 = vector.broadcast %22 : vector<32x1xf32> to vector<32x64xf32>
    %24 = arith.mulf %19, %23 : vector<32x64xf32>
    %c0_10 = arith.constant 0 : index
    %c0_11 = arith.constant 0 : index
    %25 = vector.load %arg4[%c0_10, %c0_11] : memref<1x64xf32, #tpu.memory_space<vmem>>, vector<1x64xf32>
    %26 = vector.broadcast %25 : vector<1x64xf32> to vector<32x64xf32>
    %27 = arith.mulf %24, %26 : vector<32x64xf32>
    %c0_12 = arith.constant 0 : index
    %c0_13 = arith.constant 0 : index
    %28 = vector.load %arg5[%c0_12, %c0_13] : memref<1x64xf32, #tpu.memory_space<vmem>>, vector<1x64xf32>
    %29 = vector.broadcast %28 : vector<1x64xf32> to vector<32x64xf32>
    %30 = arith.addf %27, %29 : vector<32x64xf32>
    %c0_14 = arith.constant 0 : index
    %c0_15 = arith.constant 0 : index
    %31 = vector.load %arg6[%c0_14, %c0_15] : memref<32x64xf32, #tpu.memory_space<vmem>>, vector<32x64xf32>
    tpu.vector_store %arg6[%c0_14, %c0_15], %30 {strides = array<i32>} : memref<32x64xf32, #tpu.memory_space<vmem>>, vector<32x64xf32>,
    return
  }
  func.func @transform_0(%arg0: i32) -> (i32, i32) {
    %c0_i32 = arith.constant 0 : i32
    %c0_i32_0 = arith.constant 0 : i32
    %c0_i32_1 = arith.constant 0 : i32
    return %c0_i32, %c0_i32_0 : i32, i32
  }
  func.func @transform_1(%arg0: i32) -> (i32, i32) {
    %c0_i32 = arith.constant 0 : i32
    %c0_i32_0 = arith.constant 0 : i32
    %c0_i32_1 = arith.constant 0 : i32
    return %c0_i32, %c0_i32_0 : i32, i32
  }
  func.func @transform_2(%arg0: i32) -> (i32, i32) {
    %c0_i32 = arith.constant 0 : i32
    %c0_i32_0 = arith.constant 0 : i32
    %c0_i32_1 = arith.constant 0 : i32
    return %c0_i32, %c0_i32_0 : i32, i32
  }
  func.func @transform_3(%arg0: i32) -> (i32, i32) {
    %c0_i32 = arith.constant 0 : i32
    %c0_i32_0 = arith.constant 0 : i32
    %c0_i32_1 = arith.constant 0 : i32
    return %c0_i32, %c0_i32_0 : i32, i32
  }
  func.func @transform_4(%arg0: i32) -> (i32, i32) {
    %c0_i32 = arith.constant 0 : i32
    %c0_i32_0 = arith.constant 0 : i32
    %c0_i32_1 = arith.constant 0 : i32
    return %c0_i32, %c0_i32_0 : i32, i32
  }
  func.func @transform_5(%arg0: i32) -> (i32, i32) {
    %c0_i32 = arith.constant 0 : i32
    %c0_i32_0 = arith.constant 0 : i32
    %c0_i32_1 = arith.constant 0 : i32
    return %c0_i32, %c0_i32_0 : i32, i32
  }
}

</mosaic_0001>

<llo_original>
// kernel: timbre_block_forward.17
$region0: #{timbre_block_forward.17}
  #allocation0 [shape = 'u32[]', space=smem, size = 0x4, offset = 0x4, fixed_abs, tag = 'smem constant byte address 0x4 - core index']
  #allocation1 [shape = 'u32[144,128]{1,0:T(1,128)}', space=vmem, size = 0x12000, scoped, tag = 'internal scratch']
  %s0 = inlined_call_operand.vmem [shape: f32[32,64], index: 0, kind: input, shape index: {}]
  %s1 = inlined_call_operand.vmem [shape: bf16[64,64], index: 1, kind: input, shape index: {}]
  %s2 = inlined_call_operand.vmem [shape: f32[1,64], index: 2, kind: input, shape index: {}]
  %s3 = inlined_call_operand.vmem [shape: f32[1,64], index: 3, kind: input, shape index: {}]
  %s4 = inlined_call_operand.vmem [shape: f32[1,64], index: 4, kind: input, shape index: {}]
  %s5 = inlined_call_operand.vmem [shape: f32[32,64], index: 5, kind: output, shape index: {}]
  %s6 = sld [smem:[#allocation0]]
  $region30: #{timbre_block_forward.17} parent=0
    _
  %s8 = ssub.s32 1, %s6
  %s9 = scalar_select 0, %s8, %s6
  // Predicated region
  $region2: #{timbre_block_forward.17} parent=0 // pred_check
    _
  $region3: #{timbre_block_forward.17} parent=0 // pred_check_branch
    %11 = sbr.rel (0) target = $region5
  $region4: #{timbre_block_forward.17} parent=0 // pred_region
    _
  $region5: #{timbre_block_forward.17} parent=0 // pred_fallthru
    _
  // Predicated region
  $region6: #{timbre_block_forward.17} parent=0 // pred_check
    _
  $region7: #{timbre_block_forward.17} parent=0 // pred_check_branch
    %13 = sbr.rel (0) target = $region9
  $region8: #{timbre_block_forward.17} parent=0 // pred_region
    _
  $region9: #{timbre_block_forward.17} parent=0 // pred_fallthru
    _
  // Predicated region
  $region10: #{timbre_block_forward.17} parent=0 // pred_check
    _
  $region11: #{timbre_block_forward.17} parent=0 // pred_check_branch
    %15 = sbr.rel (0) target = $region13
  $region12: #{timbre_block_forward.17} parent=0 // pred_region
    _
  $region13: #{timbre_block_forward.17} parent=0 // pred_fallthru
    _
  // Predicated region
  $region14: #{timbre_block_forward.17} parent=0 // pred_check
    _
  $region15: #{timbre_block_forward.17} parent=0 // pred_check_branch
    %17 = sbr.rel (0) target = $region17
  $region16: #{timbre_block_forward.17} parent=0 // pred_region
    _
  $region17: #{timbre_block_forward.17} parent=0 // pred_fallthru
    _
  // Predicated region
  $region18: #{timbre_block_forward.17} parent=0 // pred_check
    _
  $region19: #{timbre_block_forward.17} parent=0 // pred_check_branch
    %19 = sbr.rel (0) target = $region21
  $region20: #{timbre_block_forward.17} parent=0 // pred_region
    _
  $region21: #{timbre_block_forward.17} parent=0 // pred_fallthru
    _
  %v21 = vld [vmem:[%s0] sm:$0xff]
  %v22 = vld [vmem:[%s0 + $0x8] sm:$0xff]
  %v23 = vld [vmem:[%s0 + $0x10] sm:$0xff]
  %v24 = vld [vmem:[%s0 + $0x18] sm:$0xff]
  %v25 = vpack.c.bf16 %v22, %v21
  %v26 = vpack.c.bf16 %v24, %v23
  %v27 = vld [vmem:[%s1] sm:$0xf]
  %v28 = vld [vmem:[%s1 + $0x4] sm:$0xf]
  %v29 = vld [vmem:[%s1 + $0x8] sm:$0xf]
  %v30 = vld [vmem:[%s1 + $0xc] sm:$0xf]
  %v31 = vld [vmem:[%s1 + $0x10] sm:$0xf]
  %v32 = vld [vmem:[%s1 + $0x14] sm:$0xf]
  %v33 = vld [vmem:[%s1 + $0x18] sm:$0xf]
  %v34 = vld [vmem:[%s1 + $0x1c] sm:$0xf]
  %v35 = vld [vmem:[%s2] sm:$0x1]
  %v37 = vlaneseq
  %v38 = vshrl.u32 %v37, 7
  %v39 = vsub.s32 0, %v38
  %v40 = vrot.slane %v35, %v39
  %v50 = vunpack.c.l.b16 %v27
  %v51 = vunpack.c.l.b16 %v28
  %v52 = vunpack.c.l.b16 %v29
  %v53 = vunpack.c.l.b16 %v30
  %v54 = vunpack.c.l.b16 %v31
  %v55 = vunpack.c.l.b16 %v32
  %v56 = vunpack.c.l.b16 %v33
  %v57 = vunpack.c.l.b16 %v34
  %v58 = vpack.c.b16 %v51, %v50
  %v59 = vpack.c.b16 %v53, %v52
  %v60 = vpack.c.b16 %v55, %v54
  %v61 = vpack.c.b16 %v57, %v56
  %vm66 = vcmask 523264
  %v68 = vsel %vm66, %v25, 0
  %v71 = vsel %vm66, %v26, 0
  %73 = vmatprep.subr.bf16.mxu0 0
  %74 = vmatpush1.bf16.msra.mxu0 0
  %75 = vmatprep.subr.bf16.mxu0 0
  %76 = vmatpush1.bf16.msra.mxu0 0
  %77 = vmatprep.subr.bf16.mxu0 0
  %78 = vmatpush1.bf16.msra.mxu0 0
  %79 = vmatprep.subr.bf16.mxu0 0
  %80 = vmatpush1.bf16.msra.mxu0 0
  %81 = vmatprep.subr.bf16.mxu0 0
  %82 = vmatpush1.bf16.msra.mxu0 %v61
  %83 = vmatprep.subr.bf16.mxu0 0
  %84 = vmatpush1.bf16.msra.mxu0 %v60
  %85 = vmatprep.subr.bf16.mxu0 0
  %86 = vmatpush1.bf16.msra.mxu0 %v59
  %87 = vmatprep.subr.bf16.mxu0 0
  %88 = vmatpush1.bf16.msra.mxu0 %v58
  %89 = vmatprep.subr.bf16.mxu0 0
  %90 = vmatpush2.bf16.msra.mxu0 0
  %91 = vmatprep.subr.bf16.mxu0 0
  %92 = vmatpush2.bf16.msra.mxu0 0
  %93 = vmatprep.subr.bf16.mxu0 0
  %94 = vmatpush2.bf16.msra.mxu0 0
  %95 = vmatprep.subr.bf16.mxu0 0
  %96 = vmatpush2.bf16.msra.mxu0 0
  %97 = vmatprep.subr.bf16.mxu0 0
  %98 = vmatpush2.bf16.msra.mxu0 0
  %99 = vmatprep.subr.bf16.mxu0 0
  %100 = vmatpush2.bf16.msra.mxu0 0
  %101 = vmatprep.subr.bf16.mxu0 0
  %102 = vmatpush2.bf16.msra.mxu0 0
  %103 = vmatprep.subr.bf16.mxu0 0
  %104 = vmatpush2.bf16.msra.mxu0 0
  %105 = vmatprep.mubr.bf16.mxu0 0
  %106 = vmatmul.mubr.bf16.gmra.mxu0 %v68
  %v107 = vpop.f32.mrf.mxu0
  %v108 = vadd.f32 %v40, %v107
  %v109 = vpop.f32.mrf.mxu0
  %v110 = vpop.f32.mrf.mxu0
  %v111 = vadd.f32 %v40, %v110
  %v112 = vpop.f32.mrf.mxu0
  %113 = vmatprep.mubr.bf16.mxu0 0
  %114 = vmatmul.mubr.bf16.gmra.mxu0 %v71
  %v115 = vpop.f32.mrf.mxu0
  %v116 = vadd.f32 %v40, %v115
  %v117 = vpop.f32.mrf.mxu0
  %v118 = vpop.f32.mrf.mxu0
  %v119 = vadd.f32 %v40, %v118
  %v120 = vpop.f32.mrf.mxu0
  %121 = vdwg.mxu0
  %v122 = vsel %vm66, %v108, 0.0
  %123 = vadd.xlane.f32.xlu0 %v122
  %v124 = vpop.xlane.xlu0 %123
  %v125 = vsel %vm66, %v111, 0.0
  %126 = vadd.xlane.f32.xlu0 %v125
  %v127 = vpop.xlane.xlu0 %126
  %v128 = vsel %vm66, %v116, 0.0
  %129 = vadd.xlane.f32.xlu0 %v128
  %v130 = vpop.xlane.xlu0 %129
  %v131 = vsel %vm66, %v119, 0.0
  %132 = vadd.xlane.f32.xlu0 %v131
  %v133 = vpop.xlane.xlu0 %132
  %v134 = vrcp.pop 64.0
  %v135 = vmul.f32 %v124, %v134
  %v136 = vmul.f32 %v127, %v134
  %v137 = vmul.f32 %v130, %v134
  %v138 = vmul.f32 %v133, %v134
  %v139 = vsub.f32 %v108, %v135
  %v140 = vsub.f32 %v111, %v136
  %v141 = vsub.f32 %v116, %v137
  %v142 = vsub.f32 %v119, %v138
  %v143 = vmul.f32 %v139, %v139
  %v144 = vmul.f32 %v140, %v140
  %v145 = vmul.f32 %v141, %v141
  %v146 = vmul.f32 %v142, %v142
  %v147 = vsel %vm66, %v143, 0.0
  %148 = vadd.xlane.f32.xlu0 %v147
  %v149 = vpop.xlane.xlu0 %148
  %v150 = vsel %vm66, %v144, 0.0
  %151 = vadd.xlane.f32.xlu0 %v150
  %v152 = vpop.xlane.xlu0 %151
  %v153 = vsel %vm66, %v145, 0.0
  %154 = vadd.xlane.f32.xlu0 %v153
  %v155 = vpop.xlane.xlu0 %154
  %v156 = vsel %vm66, %v146, 0.0
  %157 = vadd.xlane.f32.xlu0 %v156
  %v158 = vpop.xlane.xlu0 %157
  %v159 = vmul.f32 %v149, %v134
  %v160 = vmul.f32 %v152, %v134
  %v161 = vmul.f32 %v155, %v134
  %v162 = vmul.f32 %v158, %v134
  %v163 = vadd.f32 %v159, 1e-05
  %v164 = vadd.f32 %v160, 1e-05
  %v165 = vadd.f32 %v161, 1e-05
  %v166 = vadd.f32 %v162, 1e-05
  %v167 = vrsqrt.pop %v163
  %v168 = vrsqrt.pop %v164
  %v169 = vrsqrt.pop %v165
  %v170 = vrsqrt.pop %v166
  %v171 = vmul.f32 %v139, %v167
  %v172 = vmul.f32 %v140, %v168
  %v173 = vmul.f32 %v141, %v169
  %v174 = vmul.f32 %v142, %v170
  %v175 = vld [vmem:[%s3] sm:$0x1]
  %v177 = vlaneseq
  %v178 = vshrl.u32 %v177, 7
  %v179 = vsub.s32 0, %v178
  %v180 = vrot.slane %v175, %v179
  %v182 = vmul.f32 %v171, %v180
  %v183 = vmul.f32 %v172, %v180
  %v184 = vmul.f32 %v173, %v180
  %v185 = vmul.f32 %v174, %v180
  %v186 = vld [vmem:[%s4] sm:$0x1]
  %v188 = vlaneseq
  %v189 = vshrl.u32 %v188, 7
  %v190 = vsub.s32 0, %v189
  %v191 = vrot.slane %v186, %v190
  %v193 = vadd.f32 %v182, %v191
  %v194 = vadd.f32 %v183, %v191
  %v195 = vadd.f32 %v184, %v191
  %v196 = vadd.f32 %v185, %v191
  %197 = vst.msk [vmem:[%s5] sm:$0xff] %vm66, %v193
  %198 = vst.msk [vmem:[%s5 + $0x8] sm:$0xff] %vm66, %v194
  %199 = vst.msk [vmem:[%s5 + $0x10] sm:$0xff] %vm66, %v195
  %200 = vst.msk [vmem:[%s5 + $0x18] sm:$0xff] %vm66, %v196
  // Predicated region
  $region22: #{timbre_block_forward.17} parent=0 // pred_check
    _
  $region23: #{timbre_block_forward.17} parent=0 // pred_check_branch
    %202 = sbr.rel (0) target = $region25
  $region24: #{timbre_block_forward.17} parent=0 // pred_region
    _
  $region25: #{timbre_block_forward.17} parent=0 // pred_fallthru
    _
  // Predicated region
  $region26: #{timbre_block_forward.17} parent=0 // pred_check
    _
  $region27: #{timbre_block_forward.17} parent=0 // pred_check_branch
    %204 = sbr.rel (0) target = $region29
  $region28: #{timbre_block_forward.17} parent=0 // pred_region
    _
  $region29: #{timbre_block_forward.17} parent=0 // pred_fallthru
    _

// kernel: timbre_block_forward.11
$region0: #{timbre_block_forward.11}
  #allocation0 [shape = 'u32[]', space=smem, size = 0x4, offset = 0x4, fixed_abs, tag = 'smem constant byte address 0x4 - core index']
  #allocation1 [shape = 'u32[144,128]{1,0:T(1,128)}', space=vmem, size = 0x12000, scoped, tag = 'internal scratch']
  %s0 = inlined_call_operand.vmem [shape: f32[16,64], index: 0, kind: input, shape index: {}]
  %s1 = inlined_call_operand.vmem [shape: bf16[64,512], index: 1, kind: input, shape index: {}]
  %s2 = inlined_call_operand.vmem [shape: f32[1,512], index: 2, kind: input, shape index: {}]
  %s3 = inlined_call_operand.vmem [shape: bf16[512,64], index: 3, kind: input, shape index: {}]
  %s4 = inlined_call_operand.vmem [shape: f32[1,64], index: 4, kind: input, shape index: {}]
  %s5 = inlined_call_operand.vmem [shape: f32[1,64], index: 5, kind: input, shape index: {}]
  %s6 = inlined_call_operand.vmem [shape: f32[1,64], index: 6, kind: input, shape index: {}]
  %s7 = inlined_call_operand.vmem [shape: f32[16,64], index: 7, kind: output, shape index: {}]
  %s8 = sld [smem:[#allocation0]]
  $region38: #{timbre_block_forward.11} parent=0
    _
  %s10 = ssub.s32 1, %s8
  %s11 = scalar_select 0, %s10, %s8
  // Predicated region
  $region2: #{timbre_block_forward.11} parent=0 // pred_check
    _
  $region3: #{timbre_block_forward.11} parent=0 // pred_check_branch
    %13 = sbr.rel (0) target = $region5
  $region4: #{timbre_block_forward.11} parent=0 // pred_region
    _
  $region5: #{timbre_block_forward.11} parent=0 // pred_fallthru
    _
  // Predicated region
  $region6: #{timbre_block_forward.11} parent=0 // pred_check
    _
  $region7: #{timbre_block_forward.11} parent=0 // pred_check_branch
    %15 = sbr.rel (0) target = $region9
  $region8: #{timbre_block_forward.11} parent=0 // pred_region
    _
  $region9: #{timbre_block_forward.11} parent=0 // pred_fallthru
    _
  // Predicated region
  $region10: #{timbre_block_forward.11} parent=0 // pred_check
    _
  $region11: #{timbre_block_forward.11} parent=0 // pred_check_branch
    %17 = sbr.rel (0) target = $region13
  $region12: #{timbre_block_forward.11} parent=0 // pred_region
    _
  $region13: #{timbre_block_forward.11} parent=0 // pred_fallthru
    _
  // Predicated region
  $region14: #{timbre_block_forward.11} parent=0 // pred_check
    _
  $region15: #{timbre_block_forward.11} parent=0 // pred_check_branch
    %19 = sbr.rel (0) target = $region17
  $region16: #{timbre_block_forward.11} parent=0 // pred_region
    _
  $region17: #{timbre_block_forward.11} parent=0 // pred_fallthru
    _
  // Predicated region
  $region18: #{timbre_block_forward.11} parent=0 // pred_check
    _
  $region19: #{timbre_block_forward.11} parent=0 // pred_check_branch
    %21 = sbr.rel (0) target = $region21
  $region20: #{timbre_block_forward.11} parent=0 // pred_region
    _
  $region21: #{timbre_block_forward.11} parent=0 // pred_fallthru
    _
  // Predicated region
  $region22: #{timbre_block_forward.11} parent=0 // pred_check
    _
  $region23: #{timbre_block_forward.11} parent=0 // pred_check_branch
    %23 = sbr.rel (0) target = $region25
  $region24: #{timbre_block_forward.11} parent=0 // pred_region
    _
  $region25: #{timbre_block_forward.11} parent=0 // pred_fallthru
    _
  // Predicated region
  $region26: #{timbre_block_forward.11} parent=0 // pred_check
    _
  $region27: #{timbre_block_forward.11} parent=0 // pred_check_branch
    %25 = sbr.rel (0) target = $region29
  $region28: #{timbre_block_forward.11} parent=0 // pred_region
    _
  $region29: #{timbre_block_forward.11} parent=0 // pred_fallthru
    _
  %v27 = vld [vmem:[%s0] sm:$0xff]
  %v28 = vld [vmem:[%s0 + $0x8] sm:$0xff]
  %v29 = vpack.c.bf16 %v28, %v27
  %v30 = vld [vmem:[%s1] sm:$0xff]
  %v31 = vld [vmem:[%s1 + $0x8] sm:$0xff]
  %v32 = vld [vmem:[%s1 + $0x10] sm:$0xff]
  %v33 = vld [vmem:[%s1 + $0x18] sm:$0xff]
  %v34 = vld [vmem:[%s1 + $0x20] sm:$0xff]
  %v35 = vld [vmem:[%s1 + $0x28] sm:$0xff]
  %v36 = vld [vmem:[%s1 + $0x30] sm:$0xff]
  %v37 = vld [vmem:[%s1 + $0x38] sm:$0xff]
  %v38 = vld [vmem:[%s1 + $0x40] sm:$0xff]
  %v39 = vld [vmem:[%s1 + $0x48] sm:$0xff]
  %v40 = vld [vmem:[%s1 + $0x50] sm:$0xff]
  %v41 = vld [vmem:[%s1 + $0x58] sm:$0xff]
  %v42 = vld [vmem:[%s1 + $0x60] sm:$0xff]
  %v43 = vld [vmem:[%s1 + $0x68] sm:$0xff]
  %v44 = vld [vmem:[%s1 + $0x70] sm:$0xff]
  %v45 = vld [vmem:[%s1 + $0x78] sm:$0xff]
  %v46 = vld [vmem:[%s2] sm:$0xf]
  %v48 = vlaneseq
  %v49 = vshrl.u32 %v48, 7
  %v50 = vsub.s32 0, %v49
  %v51 = vrot.slane %v46, %v50
  %v52 = vlaneseq
  %v53 = vshrl.u32 %v52, 7
  %v54 = vsub.s32 1, %v53
  %v55 = vrot.slane %v46, %v54
  %v56 = vlaneseq
  %v57 = vshrl.u32 %v56, 7
  %v58 = vsub.s32 2, %v57
  %v59 = vrot.slane %v46, %v58
  %v60 = vlaneseq
  %v61 = vshrl.u32 %v60, 7
  %v62 = vsub.s32 3, %v61
  %v63 = vrot.slane %v46, %v62
  %v84 = vunpack.c.l.b16 %v30
  %v85 = vunpack.c.h.b16 %v30
  %v86 = vunpack.c.l.b16 %v31
  %v87 = vunpack.c.h.b16 %v31
  %v88 = vunpack.c.l.b16 %v32
  %v89 = vunpack.c.h.b16 %v32
  %v90 = vunpack.c.l.b16 %v33
  %v91 = vunpack.c.h.b16 %v33
  %v92 = vunpack.c.l.b16 %v34
  %v93 = vunpack.c.h.b16 %v34
  %v94 = vunpack.c.l.b16 %v35
  %v95 = vunpack.c.h.b16 %v35
  %v96 = vunpack.c.l.b16 %v36
  %v97 = vunpack.c.h.b16 %v36
  %v98 = vunpack.c.l.b16 %v37
  %v99 = vunpack.c.h.b16 %v37
  %v100 = vunpack.c.l.b16 %v38
  %v101 = vunpack.c.h.b16 %v38
  %v102 = vunpack.c.l.b16 %v39
  %v103 = vunpack.c.h.b16 %v39
  %v104 = vunpack.c.l.b16 %v40
  %v105 = vunpack.c.h.b16 %v40
  %v106 = vunpack.c.l.b16 %v41
  %v107 = vunpack.c.h.b16 %v41
  %v108 = vunpack.c.l.b16 %v42
  %v109 = vunpack.c.h.b16 %v42
  %v110 = vunpack.c.l.b16 %v43
  %v111 = vunpack.c.h.b16 %v43
  %v112 = vunpack.c.l.b16 %v44
  %v113 = vunpack.c.h.b16 %v44
  %v114 = vunpack.c.l.b16 %v45
  %v115 = vunpack.c.h.b16 %v45
  %v116 = vpack.c.b16 %v88, %v84
  %v117 = vpack.c.b16 %v89, %v85
  %v118 = vpack.c.b16 %v90, %v86
  %v119 = vpack.c.b16 %v91, %v87
  %v120 = vpack.c.b16 %v96, %v92
  %v121 = vpack.c.b16 %v97, %v93
  %v122 = vpack.c.b16 %v98, %v94
  %v123 = vpack.c.b16 %v99, %v95
  %v124 = vpack.c.b16 %v104, %v100
  %v125 = vpack.c.b16 %v105, %v101
  %v126 = vpack.c.b16 %v106, %v102
  %v127 = vpack.c.b16 %v107, %v103
  %v128 = vpack.c.b16 %v112, %v108
  %v129 = vpack.c.b16 %v113, %v109
  %v130 = vpack.c.b16 %v114, %v110
  %v131 = vpack.c.b16 %v115, %v111
  %vm148 = vcmask 523264
  %v150 = vsel %vm148, %v29, 0
  %152 = vmatprep.subr.bf16.mxu0 0
  %153 = vmatpush1.bf16.msra.mxu0 0
  %154 = vmatprep.subr.bf16.mxu0 0
  %155 = vmatpush1.bf16.msra.mxu0 0
  %156 = vmatprep.subr.bf16.mxu0 0
  %157 = vmatpush1.bf16.msra.mxu0 0
  %158 = vmatprep.subr.bf16.mxu0 0
  %159 = vmatpush1.bf16.msra.mxu0 0
  %160 = vmatprep.subr.bf16.mxu0 %v129
  %161 = vmatpush1.bf16.msra.mxu0 %v128
  %162 = vmatprep.subr.bf16.mxu0 %v125
  %163 = vmatpush1.bf16.msra.mxu0 %v124
  %164 = vmatprep.subr.bf16.mxu0 %v121
  %165 = vmatpush1.bf16.msra.mxu0 %v120
  %166 = vmatprep.subr.bf16.mxu0 %v117
  %167 = vmatpush1.bf16.msra.mxu0 %v116
  %168 = vmatprep.subr.bf16.mxu0 0
  %169 = vmatpush2.bf16.msra.mxu0 0
  %170 = vmatprep.subr.bf16.mxu0 0
  %171 = vmatpush2.bf16.msra.mxu0 0
  %172 = vmatprep.subr.bf16.mxu0 0
  %173 = vmatpush2.bf16.msra.mxu0 0
  %174 = vmatprep.subr.bf16.mxu0 0
  %175 = vmatpush2.bf16.msra.mxu0 0
  %176 = vmatprep.subr.bf16.mxu0 0
  %177 = vmatpush2.bf16.msra.mxu0 0
  %178 = vmatprep.subr.bf16.mxu0 0
  %179 = vmatpush2.bf16.msra.mxu0 0
  %180 = vmatprep.subr.bf16.mxu0 0
  %181 = vmatpush2.bf16.msra.mxu0 0
  %182 = vmatprep.subr.bf16.mxu0 0
  %183 = vmatpush2.bf16.msra.mxu0 0
  %184 = vmatprep.mubr.bf16.mxu0 0
  %185 = vmatmul.mubr.bf16.gmra.mxu0 %v150
  %v186 = vpop.f32.mrf.mxu0
  %v187 = vadd.f32 %v51, %v186
  %v188 = vpop.f32.mrf.mxu0
  %v189 = vadd.f32 %v55, %v188
  %v190 = vpop.f32.mrf.mxu0
  %v191 = vadd.f32 %v51, %v190
  %v192 = vpop.f32.mrf.mxu0
  %v193 = vadd.f32 %v55, %v192
  %194 = vdwg.mxu0
  %195 = vmatprep.subr.bf16.mxu0 0
  %196 = vmatpush1.bf16.msra.mxu0 0
  %197 = vmatprep.subr.bf16.mxu0 0
  %198 = vmatpush1.bf16.msra.mxu0 0
  %199 = vmatprep.subr.bf16.mxu0 0
  %200 = vmatpush1.bf16.msra.mxu0 0
  %201 = vmatprep.subr.bf16.mxu0 0
  %202 = vmatpush1.bf16.msra.mxu0 0
  %203 = vmatprep.subr.bf16.mxu0 %v131
  %204 = vmatpush1.bf16.msra.mxu0 %v130
  %205 = vmatprep.subr.bf16.mxu0 %v127
  %206 = vmatpush1.bf16.msra.mxu0 %v126
  %207 = vmatprep.subr.bf16.mxu0 %v123
  %208 = vmatpush1.bf16.msra.mxu0 %v122
  %209 = vmatprep.subr.bf16.mxu0 %v119
  %210 = vmatpush1.bf16.msra.mxu0 %v118
  %211 = vmatprep.subr.bf16.mxu0 0
  %212 = vmatpush2.bf16.msra.mxu0 0
  %213 = vmatprep.subr.bf16.mxu0 0
  %214 = vmatpush2.bf16.msra.mxu0 0
  %215 = vmatprep.subr.bf16.mxu0 0
  %216 = vmatpush2.bf16.msra.mxu0 0
  %217 = vmatprep.subr.bf16.mxu0 0
  %218 = vmatpush2.bf16.msra.mxu0 0
  %219 = vmatprep.subr.bf16.mxu0 0
  %220 = vmatpush2.bf16.msra.mxu0 0
  %221 = vmatprep.subr.bf16.mxu0 0
  %222 = vmatpush2.bf16.msra.mxu0 0
  %223 = vmatprep.subr.bf16.mxu0 0
  %224 = vmatpush2.bf16.msra.mxu0 0
  %225 = vmatprep.subr.bf16.mxu0 0
  %226 = vmatpush2.bf16.msra.mxu0 0
  %227 = vmatprep.mubr.bf16.mxu0 0
  %228 = vmatmul.mubr.bf16.gmra.mxu0 %v150
  %v229 = vpop.f32.mrf.mxu0
  %v230 = vadd.f32 %v59, %v229
  %v231 = vpop.f32.mrf.mxu0
  %v232 = vadd.f32 %v63, %v231
  %v233 = vpop.f32.mrf.mxu0
  %v234 = vadd.f32 %v59, %v233
  %v235 = vpop.f32.mrf.mxu0
  %v236 = vadd.f32 %v63, %v235
  %237 = vdwg.mxu0
  %v238 = vmax.f32 %v187, 0.0
  %v239 = vmax.f32 %v189, 0.0
  %v240 = vmax.f32 %v230, 0.0
  %v241 = vmax.f32 %v232, 0.0
  %v242 = vmax.f32 %v191, 0.0
  %v243 = vmax.f32 %v193, 0.0
  %v244 = vmax.f32 %v234, 0.0
  %v245 = vmax.f32 %v236, 0.0
  %v246 = vpack.c.bf16 %v242, %v238
  %v247 = vpack.c.bf16 %v243, %v239
  %v248 = vpack.c.bf16 %v244, %v240
  %v249 = vpack.c.bf16 %v245, %v241
  %v250 = vld [vmem:[%s3] sm:$0xf]
  %v251 = vld [vmem:[%s3 + $0x4] sm:$0xf]
  %v252 = vld [vmem:[%s3 + $0x8] sm:$0xf]
  %v253 = vld [vmem:[%s3 + $0xc] sm:$0xf]
  %v254 = vld [vmem:[%s3 + $0x10] sm:$0xf]
  %v255 = vld [vmem:[%s3 + $0x14] sm:$0xf]
  %v256 = vld [vmem:[%s3 + $0x18] sm:$0xf]
  %v257 = vld [vmem:[%s3 + $0x1c] sm:$0xf]
  %v258 = vld [vmem:[%s3 + $0x20] sm:$0xf]
  %v259 = vld [vmem:[%s3 + $0x24] sm:$0xf]
  %v260 = vld [vmem:[%s3 + $0x28] sm:$0xf]
  %v261 = vld [vmem:[%s3 + $0x2c] sm:$0xf]
  %v262 = vld [vmem:[%s3 + $0x30] sm:$0xf]
  %v263 = vld [vmem:[%s3 + $0x34] sm:$0xf]
  %v264 = vld [vmem:[%s3 + $0x38] sm:$0xf]
  %v265 = vld [vmem:[%s3 + $0x3c] sm:$0xf]
  %v266 = vld [vmem:[%s3 + $0x40] sm:$0xf]
  %v267 = vld [vmem:[%s3 + $0x44] sm:$0xf]
  %v268 = vld [vmem:[%s3 + $0x48] sm:$0xf]
  %v269 = vld [vmem:[%s3 + $0x4c] sm:$0xf]
  %v270 = vld [vmem:[%s3 + $0x50] sm:$0xf]
  %v271 = vld [vmem:[%s3 + $0x54] sm:$0xf]
  %v272 = vld [vmem:[%s3 + $0x58] sm:$0xf]
  %v273 = vld [vmem:[%s3 + $0x5c] sm:$0xf]
  %v274 = vld [vmem:[%s3 + $0x60] sm:$0xf]
  %v275 = vld [vmem:[%s3 + $0x64] sm:$0xf]
  %v276 = vld [vmem:[%s3 + $0x68] sm:$0xf]
  %v277 = vld [vmem:[%s3 + $0x6c] sm:$0xf]
  %v278 = vld [vmem:[%s3 + $0x70] sm:$0xf]
  %v279 = vld [vmem:[%s3 + $0x74] sm:$0xf]
  %v280 = vld [vmem:[%s3 + $0x78] sm:$0xf]
  %v281 = vld [vmem:[%s3 + $0x7c] sm:$0xf]
  %v282 = vld [vmem:[%s3 + $0x80] sm:$0xf]
  %v283 = vld [vmem:[%s3 + $0x84] sm:$0xf]
  %v284 = vld [vmem:[%s3 + $0x88] sm:$0xf]
  %v285 = vld [vmem:[%s3 + $0x8c] sm:$0xf]
  %v286 = vld [vmem:[%s3 + $0x90] sm:$0xf]
  %v287 = vld [vmem:[%s3 + $0x94] sm:$0xf]
  %v288 = vld [vmem:[%s3 + $0x98] sm:$0xf]
  %v289 = vld [vmem:[%s3 + $0x9c] sm:$0xf]
  %v290 = vld [vmem:[%s3 + $0xa0] sm:$0xf]
  %v291 = vld [vmem:[%s3 + $0xa4] sm:$0xf]
  %v292 = vld [vmem:[%s3 + $0xa8] sm:$0xf]
  %v293 = vld [vmem:[%s3 + $0xac] sm:$0xf]
  %v294 = vld [vmem:[%s3 + $0xb0] sm:$0xf]
  %v295 = vld [vmem:[%s3 + $0xb4] sm:$0xf]
  %v296 = vld [vmem:[%s3 + $0xb8] sm:$0xf]
  %v297 = vld [vmem:[%s3 + $0xbc] sm:$0xf]
  %v298 = vld [vmem:[%s3 + $0xc0] sm:$0xf]
  %v299 = vld [vmem:[%s3 + $0xc4] sm:$0xf]
  %v300 = vld [vmem:[%s3 + $0xc8] sm:$0xf]
  %v301 = vld [vmem:[%s3 + $0xcc] sm:$0xf]
  %v302 = vld [vmem:[%s3 + $0xd0] sm:$0xf]
  %v303 = vld [vmem:[%s3 + $0xd4] sm:$0xf]
  %v304 = vld [vmem:[%s3 + $0xd8] sm:$0xf]
  %v305 = vld [vmem:[%s3 + $0xdc] sm:$0xf]
  %v306 = vld [vmem:[%s3 + $0xe0] sm:$0xf]
  %v307 = vld [vmem:[%s3 + $0xe4] sm:$0xf]
  %v308 = vld [vmem:[%s3 + $0xe8] sm:$0xf]
  %v309 = vld [vmem:[%s3 + $0xec] sm:$0xf]
  %v310 = vld [vmem:[%s3 + $0xf0] sm:$0xf]
  %v311 = vld [vmem:[%s3 + $0xf4] sm:$0xf]
  %v312 = vld [vmem:[%s3 + $0xf8] sm:$0xf]
  %v313 = vld [vmem:[%s3 + $0xfc] sm:$0xf]
  %v314 = vld [vmem:[%s4] sm:$0x1]
  %v316 = vlaneseq
  %v317 = vshrl.u32 %v316, 7
  %v318 = vsub.s32 0, %v317
  %v319 = vrot.slane %v314, %v318
  %v385 = vunpack.c.l.b16 %v250
  %v386 = vunpack.c.l.b16 %v251
  %v387 = vunpack.c.l.b16 %v252
  %v388 = vunpack.c.l.b16 %v253
  %v389 = vunpack.c.l.b16 %v254
  %v390 = vunpack.c.l.b16 %v255
  %v391 = vunpack.c.l.b16 %v256
  %v392 = vunpack.c.l.b16 %v257
  %v393 = vunpack.c.l.b16 %v258
  %v394 = vunpack.c.l.b16 %v259
  %v395 = vunpack.c.l.b16 %v260
  %v396 = vunpack.c.l.b16 %v261
  %v397 = vunpack.c.l.b16 %v262
  %v398 = vunpack.c.l.b16 %v263
  %v399 = vunpack.c.l.b16 %v264
  %v400 = vunpack.c.l.b16 %v265
  %v401 = vunpack.c.l.b16 %v266
  %v402 = vunpack.c.l.b16 %v267
  %v403 = vunpack.c.l.b16 %v268
  %v404 = vunpack.c.l.b16 %v269
  %v405 = vunpack.c.l.b16 %v270
  %v406 = vunpack.c.l.b16 %v271
  %v407 = vunpack.c.l.b16 %v272
  %v408 = vunpack.c.l.b16 %v273
  %v409 = vunpack.c.l.b16 %v274
  %v410 = vunpack.c.l.b16 %v275
  %v411 = vunpack.c.l.b16 %v276
  %v412 = vunpack.c.l.b16 %v277
  %v413 = vunpack.c.l.b16 %v278
  %v414 = vunpack.c.l.b16 %v279
  %v415 = vunpack.c.l.b16 %v280
  %v416 = vunpack.c.l.b16 %v281
  %v417 = vunpack.c.l.b16 %v282
  %v418 = vunpack.c.l.b16 %v283
  %v419 = vunpack.c.l.b16 %v284
  %v420 = vunpack.c.l.b16 %v285
  %v421 = vunpack.c.l.b16 %v286
  %v422 = vunpack.c.l.b16 %v287
  %v423 = vunpack.c.l.b16 %v288
  %v424 = vunpack.c.l.b16 %v289
  %v425 = vunpack.c.l.b16 %v290
  %v426 = vunpack.c.l.b16 %v291
  %v427 = vunpack.c.l.b16 %v292
  %v428 = vunpack.c.l.b16 %v293
  %v429 = vunpack.c.l.b16 %v294
  %v430 = vunpack.c.l.b16 %v295
  %v431 = vunpack.c.l.b16 %v296
  %v432 = vunpack.c.l.b16 %v297
  %v433 = vunpack.c.l.b16 %v298
  %v434 = vunpack.c.l.b16 %v299
  %v435 = vunpack.c.l.b16 %v300
  %v436 = vunpack.c.l.b16 %v301
  %v437 = vunpack.c.l.b16 %v302
  %v438 = vunpack.c.l.b16 %v303
  %v439 = vunpack.c.l.b16 %v304
  %v440 = vunpack.c.l.b16 %v305
  %v441 = vunpack.c.l.b16 %v306
  %v442 = vunpack.c.l.b16 %v307
  %v443 = vunpack.c.l.b16 %v308
  %v444 = vunpack.c.l.b16 %v309
  %v445 = vunpack.c.l.b16 %v310
  %v446 = vunpack.c.l.b16 %v311
  %v447 = vunpack.c.l.b16 %v312
  %v448 = vunpack.c.l.b16 %v313
  %v449 = vpack.c.b16 %v386, %v385
  %v450 = vpack.c.b16 %v388, %v387
  %v451 = vpack.c.b16 %v390, %v389
  %v452 = vpack.c.b16 %v392, %v391
  %v453 = vpack.c.b16 %v394, %v393
  %v454 = vpack.c.b16 %v396, %v395
  %v455 = vpack.c.b16 %v398, %v397
  %v456 = vpack.c.b16 %v400, %v399
  %v457 = vpack.c.b16 %v402, %v401
  %v458 = vpack.c.b16 %v404, %v403
  %v459 = vpack.c.b16 %v406, %v405
  %v460 = vpack.c.b16 %v408, %v407
  %v461 = vpack.c.b16 %v410, %v409
  %v462 = vpack.c.b16 %v412, %v411
  %v463 = vpack.c.b16 %v414, %v413
  %v464 = vpack.c.b16 %v416, %v415
  %v465 = vpack.c.b16 %v418, %v417
  %v466 = vpack.c.b16 %v420, %v419
  %v467 = vpack.c.b16 %v422, %v421
  %v468 = vpack.c.b16 %v424, %v423
  %v469 = vpack.c.b16 %v426, %v425
  %v470 = vpack.c.b16 %v428, %v427
  %v471 = vpack.c.b16 %v430, %v429
  %v472 = vpack.c.b16 %v432, %v431
  %v473 = vpack.c.b16 %v434, %v433
  %v474 = vpack.c.b16 %v436, %v435
  %v475 = vpack.c.b16 %v438, %v437
  %v476 = vpack.c.b16 %v440, %v439
  %v477 = vpack.c.b16 %v442, %v441
  %v478 = vpack.c.b16 %v444, %v443
  %v479 = vpack.c.b16 %v446, %v445
  %v480 = vpack.c.b16 %v448, %v447
  %513 = vmatprep.subr.bf16.mxu0 0
  %514 = vmatpush1.bf16.msra.mxu0 %v456
  %515 = vmatprep.subr.bf16.mxu0 0
  %516 = vmatpush1.bf16.msra.mxu0 %v455
  %517 = vmatprep.subr.bf16.mxu0 0
  %518 = vmatpush1.bf16.msra.mxu0 %v454
  %519 = vmatprep.subr.bf16.mxu0 0
  %520 = vmatpush1.bf16.msra.mxu0 %v453
  %521 = vmatprep.subr.bf16.mxu0 0
  %522 = vmatpush1.bf16.msra.mxu0 %v452
  %523 = vmatprep.subr.bf16.mxu0 0
  %524 = vmatpush1.bf16.msra.mxu0 %v451
  %525 = vmatprep.subr.bf16.mxu0 0
  %526 = vmatpush1.bf16.msra.mxu0 %v450
  %527 = vmatprep.subr.bf16.mxu0 0
  %528 = vmatpush1.bf16.msra.mxu0 %v449
  %529 = vmatprep.subr.bf16.mxu0 0
  %530 = vmatpush2.bf16.msra.mxu0 %v464
  %531 = vmatprep.subr.bf16.mxu0 0
  %532 = vmatpush2.bf16.msra.mxu0 %v463
  %533 = vmatprep.subr.bf16.mxu0 0
  %534 = vmatpush2.bf16.msra.mxu0 %v462
  %535 = vmatprep.subr.bf16.mxu0 0
  %536 = vmatpush2.bf16.msra.mxu0 %v461
  %537 = vmatprep.subr.bf16.mxu0 0
  %538 = vmatpush2.bf16.msra.mxu0 %v460
  %539 = vmatprep.subr.bf16.mxu0 0
  %540 = vmatpush2.bf16.msra.mxu0 %v459
  %541 = vmatprep.subr.bf16.mxu0 0
  %542 = vmatpush2.bf16.msra.mxu0 %v458
  %543 = vmatprep.subr.bf16.mxu0 0
  %544 = vmatpush2.bf16.msra.mxu0 %v457
  %545 = vmatprep.mubr.bf16.mxu0 %v247
  %546 = vmatmul.mubr.bf16.gmra.mxu0 %v246
  %v547 = vpop.f32.mrf.mxu0
  %v548 = vadd.f32 %v319, %v547
  %v549 = vpop.f32.mrf.mxu0
  %v550 = vpop.f32.mrf.mxu0
  %v551 = vadd.f32 %v319, %v550
  %v552 = vpop.f32.mrf.mxu0
  %553 = vdwg.mxu0
  %554 = vmatprep.subr.bf16.mxu0 0
  %555 = vmatpush1.bf16.msra.mxu0 %v472
  %556 = vmatprep.subr.bf16.mxu0 0
  %557 = vmatpush1.bf16.msra.mxu0 %v471
  %558 = vmatprep.subr.bf16.mxu0 0
  %559 = vmatpush1.bf16.msra.mxu0 %v470
  %560 = vmatprep.subr.bf16.mxu0 0
  %561 = vmatpush1.bf16.msra.mxu0 %v469
  %562 = vmatprep.subr.bf16.mxu0 0
  %563 = vmatpush1.bf16.msra.mxu0 %v468
  %564 = vmatprep.subr.bf16.mxu0 0
  %565 = vmatpush1.bf16.msra.mxu0 %v467
  %566 = vmatprep.subr.bf16.mxu0 0
  %567 = vmatpush1.bf16.msra.mxu0 %v466
  %568 = vmatprep.subr.bf16.mxu0 0
  %569 = vmatpush1.bf16.msra.mxu0 %v465
  %570 = vmatprep.subr.bf16.mxu0 0
  %571 = vmatpush2.bf16.msra.mxu0 %v480
  %572 = vmatprep.subr.bf16.mxu0 0
  %573 = vmatpush2.bf16.msra.mxu0 %v479
  %574 = vmatprep.subr.bf16.mxu0 0
  %575 = vmatpush2.bf16.msra.mxu0 %v478
  %576 = vmatprep.subr.bf16.mxu0 0
  %577 = vmatpush2.bf16.msra.mxu0 %v477
  %578 = vmatprep.subr.bf16.mxu0 0
  %579 = vmatpush2.bf16.msra.mxu0 %v476
  %580 = vmatprep.subr.bf16.mxu0 0
  %581 = vmatpush2.bf16.msra.mxu0 %v475
  %582 = vmatprep.subr.bf16.mxu0 0
  %583 = vmatpush2.bf16.msra.mxu0 %v474
  %584 = vmatprep.subr.bf16.mxu0 0
  %585 = vmatpush2.bf16.msra.mxu0 %v473
  %586 = vmatprep.mubr.bf16.mxu0 %v249
  %587 = vmatmul.mubr.bf16.gmra.mxu0 %v248
  %v588 = vpop.f32.mrf.mxu0
  %v589 = vadd.f32 %v548, %v588
  %v590 = vpop.f32.mrf.mxu0
  %v591 = vpop.f32.mrf.mxu0
  %v592 = vadd.f32 %v551, %v591
  %v593 = vpop.f32.mrf.mxu0
  %594 = vdwg.mxu0
  %v595 = vsel %vm148, %v589, 0.0
  %596 = vadd.xlane.f32.xlu0 %v595
  %v597 = vpop.xlane.xlu0 %596
  %v598 = vsel %vm148, %v592, 0.0
  %599 = vadd.xlane.f32.xlu0 %v598
  %v600 = vpop.xlane.xlu0 %599
  %v601 = vrcp.pop 64.0
  %v602 = vmul.f32 %v597, %v601
  %v603 = vmul.f32 %v600, %v601
  %v604 = vsub.f32 %v589, %v602
  %v605 = vsub.f32 %v592, %v603
  %v606 = vmul.f32 %v604, %v604
  %v607 = vmul.f32 %v605, %v605
  %v608 = vsel %vm148, %v606, 0.0
  %609 = vadd.xlane.f32.xlu0 %v608
  %v610 = vpop.xlane.xlu0 %609
  %v611 = vsel %vm148, %v607, 0.0
  %612 = vadd.xlane.f32.xlu0 %v611
  %v613 = vpop.xlane.xlu0 %612
  %v614 = vmul.f32 %v610, %v601
  %v615 = vmul.f32 %v613, %v601
  %v616 = vadd.f32 %v614, 1e-05
  %v617 = vadd.f32 %v615, 1e-05
  %v618 = vrsqrt.pop %v616
  %v619 = vrsqrt.pop %v617
  %v620 = vmul.f32 %v604, %v618
  %v621 = vmul.f32 %v605, %v619
  %v622 = vld [vmem:[%s5] sm:$0x1]
  %v624 = vlaneseq
  %v625 = vshrl.u32 %v624, 7
  %v626 = vsub.s32 0, %v625
  %v627 = vrot.slane %v622, %v626
  %v629 = vmul.f32 %v620, %v627
  %v630 = vmul.f32 %v621, %v627
  %v631 = vld [vmem:[%s6] sm:$0x1]
  %v633 = vlaneseq
  %v634 = vshrl.u32 %v633, 7
  %v635 = vsub.s32 0, %v634
  %v636 = vrot.slane %v631, %v635
  %v638 = vadd.f32 %v629, %v636
  %v639 = vadd.f32 %v630, %v636
  %640 = vst.msk [vmem:[%s7] sm:$0xff] %vm148, %v638
  %641 = vst.msk [vmem:[%s7 + $0x8] sm:$0xff] %vm148, %v639
  // Predicated region
  $region30: #{timbre_block_forward.11} parent=0 // pred_check
    _
  $region31: #{timbre_block_forward.11} parent=0 // pred_check_branch
    %643 = sbr.rel (0) target = $region33
  $region32: #{timbre_block_forward.11} parent=0 // pred_region
    _
  $region33: #{timbre_block_forward.11} parent=0 // pred_fallthru
    _
  // Predicated region
  $region34: #{timbre_block_forward.11} parent=0 // pred_check
    _
  $region35: #{timbre_block_forward.11} parent=0 // pred_check_branch
    %645 = sbr.rel (0) target = $region37
  $region36: #{timbre_block_forward.11} parent=0 // pred_region
    _
  $region37: #{timbre_block_forward.11} parent=0 // pred_fallthru
    _

// kernel: timbre_block_forward.9
$region0: #{timbre_block_forward.9}
  #allocation0 [shape = 'u32[]', space=smem, size = 0x4, offset = 0x4, fixed_abs, tag = 'smem constant byte address 0x4 - core index']
  #allocation1 [shape = 'u32[144,128]{1,0:T(1,128)}', space=vmem, size = 0x12000, scoped, tag = 'internal scratch']
  %s0 = inlined_call_operand.vmem [shape: f32[16,64], index: 0, kind: input, shape index: {}, may-alias: {0,1}]
  %s1 = inlined_call_operand.vmem [shape: f32[16,64], index: 1, kind: input, shape index: {}, may-alias: {0,1}]
  %s2 = inlined_call_operand.vmem [shape: bf16[8,64,8], index: 2, kind: input, shape index: {}]
  %s3 = inlined_call_operand.vmem [shape: f32[8,1,8], index: 3, kind: input, shape index: {}]
  %s4 = inlined_call_operand.vmem [shape: bf16[8,64,8], index: 4, kind: input, shape index: {}]
  %s5 = inlined_call_operand.vmem [shape: f32[8,1,8], index: 5, kind: input, shape index: {}]
  %s6 = inlined_call_operand.vmem [shape: bf16[8,64,8], index: 6, kind: input, shape index: {}]
  %s7 = inlined_call_operand.vmem [shape: f32[8,1,8], index: 7, kind: input, shape index: {}]
  %s8 = inlined_call_operand.vmem [shape: bf16[8,8,64], index: 8, kind: input, shape index: {}]
  %s9 = inlined_call_operand.vmem [shape: f32[1,64], index: 9, kind: input, shape index: {}]
  %s10 = inlined_call_operand.vmem [shape: f32[16,64], index: 10, kind: output, shape index: {}]
  %s11 = sld [smem:[#allocation0]]
  $region50: #{timbre_block_forward.9} parent=0
    _
  %s13 = ssub.s32 1, %s11
  %s14 = scalar_select 0, %s13, %s11
  // Predicated region
  $region2: #{timbre_block_forward.9} parent=0 // pred_check
    _
  $region3: #{timbre_block_forward.9} parent=0 // pred_check_branch
    %16 = sbr.rel (0) target = $region5
  $region4: #{timbre_block_forward.9} parent=0 // pred_region
    _
  $region5: #{timbre_block_forward.9} parent=0 // pred_fallthru
    _
  // Predicated region
  $region6: #{timbre_block_forward.9} parent=0 // pred_check
    _
  $region7: #{timbre_block_forward.9} parent=0 // pred_check_branch
    %18 = sbr.rel (0) target = $region9
  $region8: #{timbre_block_forward.9} parent=0 // pred_region
    _
  $region9: #{timbre_block_forward.9} parent=0 // pred_fallthru
    _
  // Predicated region
  $region10: #{timbre_block_forward.9} parent=0 // pred_check
    _
  $region11: #{timbre_block_forward.9} parent=0 // pred_check_branch
    %20 = sbr.rel (0) target = $region13
  $region12: #{timbre_block_forward.9} parent=0 // pred_region
    _
  $region13: #{timbre_block_forward.9} parent=0 // pred_fallthru
    _
  // Predicated region
  $region14: #{timbre_block_forward.9} parent=0 // pred_check
    _
  $region15: #{timbre_block_forward.9} parent=0 // pred_check_branch
    %22 = sbr.rel (0) target = $region17
  $region16: #{timbre_block_forward.9} parent=0 // pred_region
    _
  $region17: #{timbre_block_forward.9} parent=0 // pred_fallthru
    _
  // Predicated region
  $region18: #{timbre_block_forward.9} parent=0 // pred_check
    _
  $region19: #{timbre_block_forward.9} parent=0 // pred_check_branch
    %24 = sbr.rel (0) target = $region21
  $region20: #{timbre_block_forward.9} parent=0 // pred_region
    _
  $region21: #{timbre_block_forward.9} parent=0 // pred_fallthru
    _
  // Predicated region
  $region22: #{timbre_block_forward.9} parent=0 // pred_check
    _
  $region23: #{timbre_block_forward.9} parent=0 // pred_check_branch
    %26 = sbr.rel (0) target = $region25
  $region24: #{timbre_block_forward.9} parent=0 // pred_region
    _
  $region25: #{timbre_block_forward.9} parent=0 // pred_fallthru
    _
  // Predicated region
  $region26: #{timbre_block_forward.9} parent=0 // pred_check
    _
  $region27: #{timbre_block_forward.9} parent=0 // pred_check_branch
    %28 = sbr.rel (0) target = $region29
  $region28: #{timbre_block_forward.9} parent=0 // pred_region
    _
  $region29: #{timbre_block_forward.9} parent=0 // pred_fallthru
    _
  // Predicated region
  $region30: #{timbre_block_forward.9} parent=0 // pred_check
    _
  $region31: #{timbre_block_forward.9} parent=0 // pred_check_branch
    %30 = sbr.rel (0) target = $region33
  $region32: #{timbre_block_forward.9} parent=0 // pred_region
    _
  $region33: #{timbre_block_forward.9} parent=0 // pred_fallthru
    _
  // Predicated region
  $region34: #{timbre_block_forward.9} parent=0 // pred_check
    _
  $region35: #{timbre_block_forward.9} parent=0 // pred_check_branch
    %32 = sbr.rel (0) target = $region37
  $region36: #{timbre_block_forward.9} parent=0 // pred_region
    _
  $region37: #{timbre_block_forward.9} parent=0 // pred_fallthru
    _
  // Predicated region
  $region38: #{timbre_block_forward.9} parent=0 // pred_check
    _
  $region39: #{timbre_block_forward.9} parent=0 // pred_check_branch
    %34 = sbr.rel (0) target = $region41
  $region40: #{timbre_block_forward.9} parent=0 // pred_region
    _
  $region41: #{timbre_block_forward.9} parent=0 // pred_fallthru
    _
  %v36 = vld [vmem:[%s0] sm:$0xff]
  %v37 = vld [vmem:[%s0 + $0x8] sm:$0xff]
  %v38 = vpack.c.bf16 %v37, %v36
  %v39 = vld [vmem:[%s1] sm:$0xff]
  %v40 = vld [vmem:[%s1 + $0x8] sm:$0xff]
  %v41 = vpack.c.bf16 %v40, %v39
  %v42 = vld [vmem:[%s2] sm:$0xf]
  %v43 = vld [vmem:[%s2 + $0x4] sm:$0xf]
  %v44 = vld [vmem:[%s2 + $0x8] sm:$0xf]
  %v45 = vld [vmem:[%s2 + $0xc] sm:$0xf]
  %v46 = vld [vmem:[%s2 + $0x10] sm:$0xf]
  %v47 = vld [vmem:[%s2 + $0x14] sm:$0xf]
  %v48 = vld [vmem:[%s2 + $0x18] sm:$0xf]
  %v49 = vld [vmem:[%s2 + $0x1c] sm:$0xf]
  %v50 = vld [vmem:[%s3] sm:$0x1]
  %v52 = vlaneseq
  %v53 = vshrl.u32 %v52, 7
  %v54 = vsub.s32 0, %v53
  %v55 = vrot.slane %v50, %v54
  %v65 = vunpack.c.l.b16 %v42
  %v66 = vunpack.c.l.b16 %v43
  %v67 = vunpack.c.l.b16 %v44
  %v68 = vunpack.c.l.b16 %v45
  %v69 = vunpack.c.l.b16 %v46
  %v70 = vunpack.c.l.b16 %v47
  %v71 = vunpack.c.l.b16 %v48
  %v72 = vunpack.c.l.b16 %v49
  %v73 = vpack.c.b16 %v66, %v65
  %v74 = vpack.c.b16 %v68, %v67
  %v75 = vpack.c.b16 %v70, %v69
  %v76 = vpack.c.b16 %v72, %v71
  %vm81 = vcmask 523264
  %v83 = vsel %vm81, %v38, 0
  %85 = vmatprep.subr.bf16.mxu0 0
  %86 = vmatpush1.bf16.msra.mxu0 0
  %87 = vmatprep.subr.bf16.mxu0 0
  %88 = vmatpush1.bf16.msra.mxu0 0
  %89 = vmatprep.subr.bf16.mxu0 0
  %90 = vmatpush1.bf16.msra.mxu0 0
  %91 = vmatprep.subr.bf16.mxu0 0
  %92 = vmatpush1.bf16.msra.mxu0 0
  %93 = vmatprep.subr.bf16.mxu0 0
  %94 = vmatpush1.bf16.msra.mxu0 %v76
  %95 = vmatprep.subr.bf16.mxu0 0
  %96 = vmatpush1.bf16.msra.mxu0 %v75
  %97 = vmatprep.subr.bf16.mxu0 0
  %98 = vmatpush1.bf16.msra.mxu0 %v74
  %99 = vmatprep.subr.bf16.mxu0 0
  %100 = vmatpush1.bf16.msra.mxu0 %v73
  %101 = vmatprep.subr.bf16.mxu0 0
  %102 = vmatpush2.bf16.msra.mxu0 0
  %103 = vmatprep.subr.bf16.mxu0 0
  %104 = vmatpush2.bf16.msra.mxu0 0
  %105 = vmatprep.subr.bf16.mxu0 0
  %106 = vmatpush2.bf16.msra.mxu0 0
  %107 = vmatprep.subr.bf16.mxu0 0
  %108 = vmatpush2.bf16.msra.mxu0 0
  %109 = vmatprep.subr.bf16.mxu0 0
  %110 = vmatpush2.bf16.msra.mxu0 0
  %111 = vmatprep.subr.bf16.mxu0 0
  %112 = vmatpush2.bf16.msra.mxu0 0
  %113 = vmatprep.subr.bf16.mxu0 0
  %114 = vmatpush2.bf16.msra.mxu0 0
  %115 = vmatprep.subr.bf16.mxu0 0
  %116 = vmatpush2.bf16.msra.mxu0 0
  %117 = vmatprep.mubr.bf16.mxu0 0
  %118 = vmatmul.mubr.bf16.gmra.mxu0 %v83
  %v119 = vpop.f32.mrf.mxu0
  %v120 = vadd.f32 %v55, %v119
  %v121 = vpop.f32.mrf.mxu0
  %v122 = vpop.f32.mrf.mxu0
  %v123 = vadd.f32 %v55, %v122
  %v124 = vpop.f32.mrf.mxu0
  %125 = vdwg.mxu0
  %v126 = vld [vmem:[%s4] sm:$0xf]
  %v127 = vld [vmem:[%s4 + $0x4] sm:$0xf]
  %v128 = vld [vmem:[%s4 + $0x8] sm:$0xf]
  %v129 = vld [vmem:[%s4 + $0xc] sm:$0xf]
  %v130 = vld [vmem:[%s4 + $0x10] sm:$0xf]
  %v131 = vld [vmem:[%s4 + $0x14] sm:$0xf]
  %v132 = vld [vmem:[%s4 + $0x18] sm:$0xf]
  %v133 = vld [vmem:[%s4 + $0x1c] sm:$0xf]
  %v134 = vld [vmem:[%s5] sm:$0x1]
  %v136 = vlaneseq
  %v137 = vshrl.u32 %v136, 7
  %v138 = vsub.s32 0, %v137
  %v139 = vrot.slane %v134, %v138
  %v149 = vunpack.c.l.b16 %v126
  %v150 = vunpack.c.l.b16 %v127
  %v151 = vunpack.c.l.b16 %v128
  %v152 = vunpack.c.l.b16 %v129
  %v153 = vunpack.c.l.b16 %v130
  %v154 = vunpack.c.l.b16 %v131
  %v155 = vunpack.c.l.b16 %v132
  %v156 = vunpack.c.l.b16 %v133
  %v157 = vpack.c.b16 %v150, %v149
  %v158 = vpack.c.b16 %v152, %v151
  %v159 = vpack.c.b16 %v154, %v153
  %v160 = vpack.c.b16 %v156, %v155
  %v166 = vsel %vm81, %v41, 0
  %168 = vmatprep.subr.bf16.mxu0 0
  %169 = vmatpush1.bf16.msra.mxu0 0
  %170 = vmatprep.subr.bf16.mxu0 0
  %171 = vmatpush1.bf16.msra.mxu0 0
  %172 = vmatprep.subr.bf16.mxu0 0
  %173 = vmatpush1.bf16.msra.mxu0 0
  %174 = vmatprep.subr.bf16.mxu0 0
  %175 = vmatpush1.bf16.msra.mxu0 0
  %176 = vmatprep.subr.bf16.mxu0 0
  %177 = vmatpush1.bf16.msra.mxu0 %v160
  %178 = vmatprep.subr.bf16.mxu0 0
  %179 = vmatpush1.bf16.msra.mxu0 %v159
  %180 = vmatprep.subr.bf16.mxu0 0
  %181 = vmatpush1.bf16.msra.mxu0 %v158
  %182 = vmatprep.subr.bf16.mxu0 0
  %183 = vmatpush1.bf16.msra.mxu0 %v157
  %184 = vmatprep.subr.bf16.mxu0 0
  %185 = vmatpush2.bf16.msra.mxu0 0
  %186 = vmatprep.subr.bf16.mxu0 0
  %187 = vmatpush2.bf16.msra.mxu0 0
  %188 = vmatprep.subr.bf16.mxu0 0
  %189 = vmatpush2.bf16.msra.mxu0 0
  %190 = vmatprep.subr.bf16.mxu0 0
  %191 = vmatpush2.bf16.msra.mxu0 0
  %192 = vmatprep.subr.bf16.mxu0 0
  %193 = vmatpush2.bf16.msra.mxu0 0
  %194 = vmatprep.subr.bf16.mxu0 0
  %195 = vmatpush2.bf16.msra.mxu0 0
  %196 = vmatprep.subr.bf16.mxu0 0
  %197 = vmatpush2.bf16.msra.mxu0 0
  %198 = vmatprep.subr.bf16.mxu0 0
  %199 = vmatpush2.bf16.msra.mxu0 0
  %200 = vmatprep.mubr.bf16.mxu0 0
  %201 = vmatmul.mubr.bf16.gmra.mxu0 %v166
  %v202 = vpop.f32.mrf.mxu0
  %v203 = vadd.f32 %v139, %v202
  %v204 = vpop.f32.mrf.mxu0
  %v205 = vpop.f32.mrf.mxu0
  %v206 = vadd.f32 %v139, %v205
  %v207 = vpop.f32.mrf.mxu0
  %208 = vdwg.mxu0
  %v209 = vld [vmem:[%s6] sm:$0xf]
  %v210 = vld [vmem:[%s6 + $0x4] sm:$0xf]
  %v211 = vld [vmem:[%s6 + $0x8] sm:$0xf]
  %v212 = vld [vmem:[%s6 + $0xc] sm:$0xf]
  %v213 = vld [vmem:[%s6 + $0x10] sm:$0xf]
  %v214 = vld [vmem:[%s6 + $0x14] sm:$0xf]
  %v215 = vld [vmem:[%s6 + $0x18] sm:$0xf]
  %v216 = vld [vmem:[%s6 + $0x1c] sm:$0xf]
  %v217 = vld [vmem:[%s7] sm:$0x1]
  %v219 = vlaneseq
  %v220 = vshrl.u32 %v219, 7
  %v221 = vsub.s32 0, %v220
  %v222 = vrot.slane %v217, %v221
  %v232 = vunpack.c.l.b16 %v209
  %v233 = vunpack.c.l.b16 %v210
  %v234 = vunpack.c.l.b16 %v211
  %v235 = vunpack.c.l.b16 %v212
  %v236 = vunpack.c.l.b16 %v213
  %v237 = vunpack.c.l.b16 %v214
  %v238 = vunpack.c.l.b16 %v215
  %v239 = vunpack.c.l.b16 %v216
  %v240 = vpack.c.b16 %v233, %v232
  %v241 = vpack.c.b16 %v235, %v234
  %v242 = vpack.c.b16 %v237, %v236
  %v243 = vpack.c.b16 %v239, %v238
  %248 = vmatprep.subr.bf16.mxu0 0
  %249 = vmatpush1.bf16.msra.mxu0 0
  %250 = vmatprep.subr.bf16.mxu0 0
  %251 = vmatpush1.bf16.msra.mxu0 0
  %252 = vmatprep.subr.bf16.mxu0 0
  %253 = vmatpush1.bf16.msra.mxu0 0
  %254 = vmatprep.subr.bf16.mxu0 0
  %255 = vmatpush1.bf16.msra.mxu0 0
  %256 = vmatprep.subr.bf16.mxu0 0
  %257 = vmatpush1.bf16.msra.mxu0 %v243
  %258 = vmatprep.subr.bf16.mxu0 0
  %259 = vmatpush1.bf16.msra.mxu0 %v242
  %260 = vmatprep.subr.bf16.mxu0 0
  %261 = vmatpush1.bf16.msra.mxu0 %v241
  %262 = vmatprep.subr.bf16.mxu0 0
  %263 = vmatpush1.bf16.msra.mxu0 %v240
  %264 = vmatprep.subr.bf16.mxu0 0
  %265 = vmatpush2.bf16.msra.mxu0 0
  %266 = vmatprep.subr.bf16.mxu0 0
  %267 = vmatpush2.bf16.msra.mxu0 0
  %268 = vmatprep.subr.bf16.mxu0 0
  %269 = vmatpush2.bf16.msra.mxu0 0
  %270 = vmatprep.subr.bf16.mxu0 0
  %271 = vmatpush2.bf16.msra.mxu0 0
  %272 = vmatprep.subr.bf16.mxu0 0
  %273 = vmatpush2.bf16.msra.mxu0 0
  %274 = vmatprep.subr.bf16.mxu0 0
  %275 = vmatpush2.bf16.msra.mxu0 0
  %276 = vmatprep.subr.bf16.mxu0 0
  %277 = vmatpush2.bf16.msra.mxu0 0
  %278 = vmatprep.subr.bf16.mxu0 0
  %279 = vmatpush2.bf16.msra.mxu0 0
  %280 = vmatprep.mubr.bf16.mxu0 0
  %281 = vmatmul.mubr.bf16.gmra.mxu0 %v166
  %v282 = vpop.f32.mrf.mxu0
  %v283 = vadd.f32 %v222, %v282
  %v284 = vpop.f32.mrf.mxu0
  %v285 = vpop.f32.mrf.mxu0
  %v286 = vadd.f32 %v222, %v285
  %v287 = vpop.f32.mrf.mxu0
  %288 = vdwg.mxu0
  %v289 = vpack.c.bf16 %v120, %v120
  %v290 = vpack.c.bf16 %v123, %v123
  %v291 = vpack.c.bf16 %v203, %v203
  %v292 = vpack.c.bf16 %v206, %v206
  %vm293 = vcmask 64512
  %v295 = vsel %vm293, %v289, 0
  %v298 = vsel %vm293, %v291, 0
  %300 = vmatprep.subr.bf16.mxu0 0
  %301 = vmatpush1.bf16.xpose.msra.mxu0 0
  %302 = vmatprep.subr.bf16.mxu0 0
  %303 = vmatpush1.bf16.xpose.msra.mxu0 0
  %304 = vmatprep.subr.bf16.mxu0 0
  %305 = vmatpush1.bf16.xpose.msra.mxu0 0
  %306 = vmatprep.subr.bf16.mxu0 0
  %307 = vmatpush1.bf16.xpose.msra.mxu0 0
  %308 = vmatprep.subr.bf16.mxu0 0
  %309 = vmatpush1.bf16.xpose.msra.mxu0 0
  %310 = vmatprep.subr.bf16.mxu0 0
  %311 = vmatpush1.bf16.xpose.msra.mxu0 0
  %312 = vmatprep.subr.bf16.mxu0 0
  %313 = vmatpush1.bf16.xpose.msra.mxu0 0
  %314 = vmatprep.subr.bf16.mxu0 0
  %315 = vmatpush1.bf16.xpose.msra.mxu0 %v298
  %316 = vmatprep.subr.bf16.mxu0 0
  %317 = vmatpush2.bf16.xpose.msra.mxu0 0
  %318 = vmatprep.subr.bf16.mxu0 0
  %319 = vmatpush2.bf16.xpose.msra.mxu0 0
  %320 = vmatprep.subr.bf16.mxu0 0
  %321 = vmatpush2.bf16.xpose.msra.mxu0 0
  %322 = vmatprep.subr.bf16.mxu0 0
  %323 = vmatpush2.bf16.xpose.msra.mxu0 0
  %324 = vmatprep.subr.bf16.mxu0 0
  %325 = vmatpush2.bf16.xpose.msra.mxu0 0
  %326 = vmatprep.subr.bf16.mxu0 0
  %327 = vmatpush2.bf16.xpose.msra.mxu0 0
  %328 = vmatprep.subr.bf16.mxu0 0
  %329 = vmatpush2.bf16.xpose.msra.mxu0 0
  %330 = vmatprep.subr.bf16.mxu0 0
  %331 = vmatpush2.bf16.xpose.msra.mxu0 0
  %332 = vmatprep.mubr.bf16.mxu0 0
  %333 = vmatmul.mubr.bf16.gmra.mxu0 %v295
  %v334 = vpop.f32.mrf.mxu0
  %v335 = vadd.f32 0.0, %v334
  %v336 = vpop.f32.mrf.mxu0
  %v337 = vpop.f32.mrf.mxu0
  %v338 = vpop.f32.mrf.mxu0
  %339 = vdwg.mxu0
  %v341 = vsel %vm293, %v290, 0
  %v344 = vsel %vm293, %v292, 0
  %346 = vmatprep.subr.bf16.mxu0 0
  %347 = vmatpush1.bf16.xpose.msra.mxu0 0
  %348 = vmatprep.subr.bf16.mxu0 0
  %349 = vmatpush1.bf16.xpose.msra.mxu0 0
  %350 = vmatprep.subr.bf16.mxu0 0
  %351 = vmatpush1.bf16.xpose.msra.mxu0 0
  %352 = vmatprep.subr.bf16.mxu0 0
  %353 = vmatpush1.bf16.xpose.msra.mxu0 0
  %354 = vmatprep.subr.bf16.mxu0 0
  %355 = vmatpush1.bf16.xpose.msra.mxu0 0
  %356 = vmatprep.subr.bf16.mxu0 0
  %357 = vmatpush1.bf16.xpose.msra.mxu0 0
  %358 = vmatprep.subr.bf16.mxu0 0
  %359 = vmatpush1.bf16.xpose.msra.mxu0 0
  %360 = vmatprep.subr.bf16.mxu0 0
  %361 = vmatpush1.bf16.xpose.msra.mxu0 %v344
  %362 = vmatprep.subr.bf16.mxu0 0
  %363 = vmatpush2.bf16.xpose.msra.mxu0 0
  %364 = vmatprep.subr.bf16.mxu0 0
  %365 = vmatpush2.bf16.xpose.msra.mxu0 0
  %366 = vmatprep.subr.bf16.mxu0 0
  %367 = vmatpush2.bf16.xpose.msra.mxu0 0
  %368 = vmatprep.subr.bf16.mxu0 0
  %369 = vmatpush2.bf16.xpose.msra.mxu0 0
  %370 = vmatprep.subr.bf16.mxu0 0
  %371 = vmatpush2.bf16.xpose.msra.mxu0 0
  %372 = vmatprep.subr.bf16.mxu0 0
  %373 = vmatpush2.bf16.xpose.msra.mxu0 0
  %374 = vmatprep.subr.bf16.mxu0 0
  %375 = vmatpush2.bf16.xpose.msra.mxu0 0
  %376 = vmatprep.subr.bf16.mxu0 0
  %377 = vmatpush2.bf16.xpose.msra.mxu0 0
  %378 = vmatprep.mubr.bf16.mxu0 0
  %379 = vmatmul.mubr.bf16.gmra.mxu0 %v341
  %v380 = vpop.f32.mrf.mxu0
  %v381 = vadd.f32 0.0, %v380
  %v382 = vpop.f32.mrf.mxu0
  %v383 = vpop.f32.mrf.mxu0
  %v384 = vpop.f32.mrf.mxu0
  %385 = vdwg.mxu0
  %v386 = vmul.f32 %v335, 0.35355338
  %v387 = vmul.f32 %v381, 0.35355338
  %v388 = vsel %vm293, %v386, -inf
  %389 = vmax.xlane.f32.xlu0 %v388
  %v390 = vpop.xlane.xlu0 %389
  %v391 = vsel %vm293, %v387, -inf
  %392 = vmax.xlane.f32.xlu0 %v391
  %v393 = vpop.xlane.xlu0 %392
  %v394 = vsub.f32 %v386, %v390
  %v395 = vsub.f32 %v387, %v393
  %v396 = vmul.f32 %v394, 1.442695
  %v397 = vpow.pop %v396
  %v398 = vmul.f32 %v395, 1.442695
  %v399 = vpow.pop %v398
  %v400 = vsel %vm293, %v397, 0.0
  %401 = vadd.xlane.f32.xlu0 %v400
  %v402 = vpop.xlane.xlu0 %401
  %v403 = vsel %vm293, %v399, 0.0
  %404 = vadd.xlane.f32.xlu0 %v403
  %v405 = vpop.xlane.xlu0 %404
  %v406 = vrcp.pop %v402
  %v407 = vrcp.pop %v405
  %v408 = vmul.f32 %v397, %v406
  %v409 = vmul.f32 %v399, %v407
  %v410 = vpack.c.bf16 %v408, %v408
  %v411 = vpack.c.bf16 %v409, %v409
  %v412 = vpack.c.bf16 %v283, %v283
  %v413 = vpack.c.bf16 %v286, %v286
  %v415 = vsel %vm293, %v410, 0
  %vm417 = vcmask 1043456
  %v419 = vsel %vm417, %v412, 0
  %421 = vmatprep.subr.bf16.mxu0 0
  %422 = vmatpush1.bf16.msra.mxu0 0
  %423 = vmatprep.subr.bf16.mxu0 0
  %424 = vmatpush1.bf16.msra.mxu0 0
  %425 = vmatprep.subr.bf16.mxu0 0
  %426 = vmatpush1.bf16.msra.mxu0 0
  %427 = vmatprep.subr.bf16.mxu0 0
  %428 = vmatpush1.bf16.msra.mxu0 0
  %429 = vmatprep.subr.bf16.mxu0 0
  %430 = vmatpush1.bf16.msra.mxu0 0
  %431 = vmatprep.subr.bf16.mxu0 0
  %432 = vmatpush1.bf16.msra.mxu0 0
  %433 = vmatprep.subr.bf16.mxu0 0
  %434 = vmatpush1.bf16.msra.mxu0 0
  %435 = vmatprep.subr.bf16.mxu0 0
  %436 = vmatpush1.bf16.msra.mxu0 %v419
  %437 = vmatprep.subr.bf16.mxu0 0
  %438 = vmatpush2.bf16.msra.mxu0 0
  %439 = vmatprep.subr.bf16.mxu0 0
  %440 = vmatpush2.bf16.msra.mxu0 0
  %441 = vmatprep.subr.bf16.mxu0 0
  %442 = vmatpush2.bf16.msra.mxu0 0
  %443 = vmatprep.subr.bf16.mxu0 0
  %444 = vmatpush2.bf16.msra.mxu0 0
  %445 = vmatprep.subr.bf16.mxu0 0
  %446 = vmatpush2.bf16.msra.mxu0 0
  %447 = vmatprep.subr.bf16.mxu0 0
  %448 = vmatpush2.bf16.msra.mxu0 0
  %449 = vmatprep.subr.bf16.mxu0 0
  %450 = vmatpush2.bf16.msra.mxu0 0
  %451 = vmatprep.subr.bf16.mxu0 0
  %452 = vmatpush2.bf16.msra.mxu0 0
  %453 = vmatprep.mubr.bf16.mxu0 0
  %454 = vmatmul.mubr.bf16.gmra.mxu0 %v415
  %v455 = vpop.f32.mrf.mxu0
  %v456 = vadd.f32 0.0, %v455
  %v457 = vpop.f32.mrf.mxu0
  %v458 = vpop.f32.mrf.mxu0
  %v459 = vpop.f32.mrf.mxu0
  %460 = vdwg.mxu0
  %v462 = vsel %vm293, %v411, 0
  %v465 = vsel %vm417, %v413, 0
  %467 = vmatprep.subr.bf16.mxu0 0
  %468 = vmatpush1.bf16.msra.mxu0 0
  %469 = vmatprep.subr.bf16.mxu0 0
  %470 = vmatpush1.bf16.msra.mxu0 0
  %471 = vmatprep.subr.bf16.mxu0 0
  %472 = vmatpush1.bf16.msra.mxu0 0
  %473 = vmatprep.subr.bf16.mxu0 0
  %474 = vmatpush1.bf16.msra.mxu0 0
  %475 = vmatprep.subr.bf16.mxu0 0
  %476 = vmatpush1.bf16.msra.mxu0 0
  %477 = vmatprep.subr.bf16.mxu0 0
  %478 = vmatpush1.bf16.msra.mxu0 0
  %479 = vmatprep.subr.bf16.mxu0 0
  %480 = vmatpush1.bf16.msra.mxu0 0
  %481 = vmatprep.subr.bf16.mxu0 0
  %482 = vmatpush1.bf16.msra.mxu0 %v465
  %483 = vmatprep.subr.bf16.mxu0 0
  %484 = vmatpush2.bf16.msra.mxu0 0
  %485 = vmatprep.subr.bf16.mxu0 0
  %486 = vmatpush2.bf16.msra.mxu0 0
  %487 = vmatprep.subr.bf16.mxu0 0
  %488 = vmatpush2.bf16.msra.mxu0 0
  %489 = vmatprep.subr.bf16.mxu0 0
  %490 = vmatpush2.bf16.msra.mxu0 0
  %491 = vmatprep.subr.bf16.mxu0 0
  %492 = vmatpush2.bf16.msra.mxu0 0
  %493 = vmatprep.subr.bf16.mxu0 0
  %494 = vmatpush2.bf16.msra.mxu0 0
  %495 = vmatprep.subr.bf16.mxu0 0
  %496 = vmatpush2.bf16.msra.mxu0 0
  %497 = vmatprep.subr.bf16.mxu0 0
  %498 = vmatpush2.bf16.msra.mxu0 0
  %499 = vmatprep.mubr.bf16.mxu0 0
  %500 = vmatmul.mubr.bf16.gmra.mxu0 %v462
  %v501 = vpop.f32.mrf.mxu0
  %v502 = vadd.f32 0.0, %v501
  %v503 = vpop.f32.mrf.mxu0
  %v504 = vpop.f32.mrf.mxu0
  %v505 = vpop.f32.mrf.mxu0
  %506 = vdwg.mxu0
  %v507 = vpack.c.bf16 %v502, %v456
  %v508 = vld [vmem:[%s8] sm:$0xf]
  %s509 = scalar_lea.vmem %s2, 32
  %v510 = vld [vmem:[%s509] sm:$0xf]
  %v511 = vld [vmem:[%s509 + $0x4] sm:$0xf]
  %v512 = vld [vmem:[%s509 + $0x8] sm:$0xf]
  %v513 = vld [vmem:[%s509 + $0xc] sm:$0xf]
  %v514 = vld [vmem:[%s509 + $0x10] sm:$0xf]
  %v515 = vld [vmem:[%s509 + $0x14] sm:$0xf]
  %v516 = vld [vmem:[%s509 + $0x18] sm:$0xf]
  %v517 = vld [vmem:[%s509 + $0x1c] sm:$0xf]
  %s518 = scalar_lea.vmem %s3, 1
  %v519 = vld [vmem:[%s518] sm:$0x1]
  %v521 = vlaneseq
  %v522 = vshrl.u32 %v521, 7
  %v523 = vsub.s32 0, %v522
  %v524 = vrot.slane %v519, %v523
  %v534 = vunpack.c.l.b16 %v510
  %v535 = vunpack.c.l.b16 %v511
  %v536 = vunpack.c.l.b16 %v512
  %v537 = vunpack.c.l.b16 %v513
  %v538 = vunpack.c.l.b16 %v514
  %v539 = vunpack.c.l.b16 %v515
  %v540 = vunpack.c.l.b16 %v516
  %v541 = vunpack.c.l.b16 %v517
  %v542 = vpack.c.b16 %v535, %v534
  %v543 = vpack.c.b16 %v537, %v536
  %v544 = vpack.c.b16 %v539, %v538
  %v545 = vpack.c.b16 %v541, %v540
  %550 = vmatprep.subr.bf16.mxu0 0
  %551 = vmatpush1.bf16.msra.mxu0 0
  %552 = vmatprep.subr.bf16.mxu0 0
  %553 = vmatpush1.bf16.msra.mxu0 0
  %554 = vmatprep.subr.bf16.mxu0 0
  %555 = vmatpush1.bf16.msra.mxu0 0
  %556 = vmatprep.subr.bf16.mxu0 0
  %557 = vmatpush1.bf16.msra.mxu0 0
  %558 = vmatprep.subr.bf16.mxu0 0
  %559 = vmatpush1.bf16.msra.mxu0 %v545
  %560 = vmatprep.subr.bf16.mxu0 0
  %561 = vmatpush1.bf16.msra.mxu0 %v544
  %562 = vmatprep.subr.bf16.mxu0 0
  %563 = vmatpush1.bf16.msra.mxu0 %v543
  %564 = vmatprep.subr.bf16.mxu0 0
  %565 = vmatpush1.bf16.msra.mxu0 %v542
  %566 = vmatprep.subr.bf16.mxu0 0
  %567 = vmatpush2.bf16.msra.mxu0 0
  %568 = vmatprep.subr.bf16.mxu0 0
  %569 = vmatpush2.bf16.msra.mxu0 0
  %570 = vmatprep.subr.bf16.mxu0 0
  %571 = vmatpush2.bf16.msra.mxu0 0
  %572 = vmatprep.subr.bf16.mxu0 0
  %573 = vmatpush2.bf16.msra.mxu0 0
  %574 = vmatprep.subr.bf16.mxu0 0
  %575 = vmatpush2.bf16.msra.mxu0 0
  %576 = vmatprep.subr.bf16.mxu0 0
  %577 = vmatpush2.bf16.msra.mxu0 0
  %578 = vmatprep.subr.bf16.mxu0 0
  %579 = vmatpush2.bf16.msra.mxu0 0
  %580 = vmatprep.subr.bf16.mxu0 0
  %581 = vmatpush2.bf16.msra.mxu0 0
  %582 = vmatprep.mubr.bf16.mxu0 0
  %583 = vmatmul.mubr.bf16.gmra.mxu0 %v83
  %v584 = vpop.f32.mrf.mxu0
  %v585 = vadd.f32 %v524, %v584
  %v586 = vpop.f32.mrf.mxu0
  %v587 = vpop.f32.mrf.mxu0
  %v588 = vadd.f32 %v524, %v587
  %v589 = vpop.f32.mrf.mxu0
  %590 = vdwg.mxu0
  %s591 = scalar_lea.vmem %s4, 32
  %v592 = vld [vmem:[%s591] sm:$0xf]
  %v593 = vld [vmem:[%s591 + $0x4] sm:$0xf]
  %v594 = vld [vmem:[%s591 + $0x8] sm:$0xf]
  %v595 = vld [vmem:[%s591 + $0xc] sm:$0xf]
  %v596 = vld [vmem:[%s591 + $0x10] sm:$0xf]
  %v597 = vld [vmem:[%s591 + $0x14] sm:$0xf]
  %v598 = vld [vmem:[%s591 + $0x18] sm:$0xf]
  %v599 = vld [vmem:[%s591 + $0x1c] sm:$0xf]
  %s600 = scalar_lea.vmem %s5, 1
  %v601 = vld [vmem:[%s600] sm:$0x1]
  %v603 = vlaneseq
  %v604 = vshrl.u32 %v603, 7
  %v605 = vsub.s32 0, %v604
  %v606 = vrot.slane %v601, %v605
  %v616 = vunpack.c.l.b16 %v592
  %v617 = vunpack.c.l.b16 %v593
  %v618 = vunpack.c.l.b16 %v594
  %v619 = vunpack.c.l.b16 %v595
  %v620 = vunpack.c.l.b16 %v596
  %v621 = vunpack.c.l.b16 %v597
  %v622 = vunpack.c.l.b16 %v598
  %v623 = vunpack.c.l.b16 %v599
  %v624 = vpack.c.b16 %v617, %v616
  %v625 = vpack.c.b16 %v619, %v618
  %v626 = vpack.c.b16 %v621, %v620
  %v627 = vpack.c.b16 %v623, %v622
  %632 = vmatprep.subr.bf16.mxu0 0
  %633 = vmatpush1.bf16.msra.mxu0 0
  %634 = vmatprep.subr.bf16.mxu0 0
  %635 = vmatpush1.bf16.msra.mxu0 0
  %636 = vmatprep.subr.bf16.mxu0 0
  %637 = vmatpush1.bf16.msra.mxu0 0
  %638 = vmatprep.subr.bf16.mxu0 0
  %639 = vmatpush1.bf16.msra.mxu0 0
  %640 = vmatprep.subr.bf16.mxu0 0
  %641 = vmatpush1.bf16.msra.mxu0 %v627
  %642 = vmatprep.subr.bf16.mxu0 0
  %643 = vmatpush1.bf16.msra.mxu0 %v626
  %644 = vmatprep.subr.bf16.mxu0 0
  %645 = vmatpush1.bf16.msra.mxu0 %v625
  %646 = vmatprep.subr.bf16.mxu0 0
  %647 = vmatpush1.bf16.msra.mxu0 %v624
  %648 = vmatprep.subr.bf16.mxu0 0
  %649 = vmatpush2.bf16.msra.mxu0 0
  %650 = vmatprep.subr.bf16.mxu0 0
  %651 = vmatpush2.bf16.msra.mxu0 0
  %652 = vmatprep.subr.bf16.mxu0 0
  %653 = vmatpush2.bf16.msra.mxu0 0
  %654 = vmatprep.subr.bf16.mxu0 0
  %655 = vmatpush2.bf16.msra.mxu0 0
  %656 = vmatprep.subr.bf16.mxu0 0
  %657 = vmatpush2.bf16.msra.mxu0 0
  %658 = vmatprep.subr.bf16.mxu0 0
  %659 = vmatpush2.bf16.msra.mxu0 0
  %660 = vmatprep.subr.bf16.mxu0 0
  %661 = vmatpush2.bf16.msra.mxu0 0
  %662 = vmatprep.subr.bf16.mxu0 0
  %663 = vmatpush2.bf16.msra.mxu0 0
  %664 = vmatprep.mubr.bf16.mxu0 0
  %665 = vmatmul.mubr.bf16.gmra.mxu0 %v166
  %v666 = vpop.f32.mrf.mxu0
  %v667 = vadd.f32 %v606, %v666
  %v668 = vpop.f32.mrf.mxu0
  %v669 = vpop.f32.mrf.mxu0
  %v670 = vadd.f32 %v606, %v669
  %v671 = vpop.f32.mrf.mxu0
  %672 = vdwg.mxu0
  %s673 = scalar_lea.vmem %s6, 32
  %v674 = vld [vmem:[%s673] sm:$0xf]
  %v675 = vld [vmem:[%s673 + $0x4] sm:$0xf]
  %v676 = vld [vmem:[%s673 + $0x8] sm:$0xf]
  %v677 = vld [vmem:[%s673 + $0xc] sm:$0xf]
  %v678 = vld [vmem:[%s673 + $0x10] sm:$0xf]
  %v679 = vld [vmem:[%s673 + $0x14] sm:$0xf]
  %v680 = vld [vmem:[%s673 + $0x18] sm:$0xf]
  %v681 = vld [vmem:[%s673 + $0x1c] sm:$0xf]
  %s682 = scalar_lea.vmem %s7, 1
  %v683 = vld [vmem:[%s682] sm:$0x1]
  %v685 = vlaneseq
  %v686 = vshrl.u32 %v685, 7
  %v687 = vsub.s32 0, %v686
  %v688 = vrot.slane %v683, %v687
  %v698 = vunpack.c.l.b16 %v674
  %v699 = vunpack.c.l.b16 %v675
  %v700 = vunpack.c.l.b16 %v676
  %v701 = vunpack.c.l.b16 %v677
  %v702 = vunpack.c.l.b16 %v678
  %v703 = vunpack.c.l.b16 %v679
  %v704 = vunpack.c.l.b16 %v680
  %v705 = vunpack.c.l.b16 %v681
  %v706 = vpack.c.b16 %v699, %v698
  %v707 = vpack.c.b16 %v701, %v700
  %v708 = vpack.c.b16 %v703, %v702
  %v709 = vpack.c.b16 %v705, %v704
  %714 = vmatprep.subr.bf16.mxu0 0
  %715 = vmatpush1.bf16.msra.mxu0 0
  %716 = vmatprep.subr.bf16.mxu0 0
  %717 = vmatpush1.bf16.msra.mxu0 0
  %718 = vmatprep.subr.bf16.mxu0 0
  %719 = vmatpush1.bf16.msra.mxu0 0
  %720 = vmatprep.subr.bf16.mxu0 0
  %721 = vmatpush1.bf16.msra.mxu0 0
  %722 = vmatprep.subr.bf16.mxu0 0
  %723 = vmatpush1.bf16.msra.mxu0 %v709
  %724 = vmatprep.subr.bf16.mxu0 0
  %725 = vmatpush1.bf16.msra.mxu0 %v708
  %726 = vmatprep.subr.bf16.mxu0 0
  %727 = vmatpush1.bf16.msra.mxu0 %v707
  %728 = vmatprep.subr.bf16.mxu0 0
  %729 = vmatpush1.bf16.msra.mxu0 %v706
  %730 = vmatprep.subr.bf16.mxu0 0
  %731 = vmatpush2.bf16.msra.mxu0 0
  %732 = vmatprep.subr.bf16.mxu0 0
  %733 = vmatpush2.bf16.msra.mxu0 0
  %734 = vmatprep.subr.bf16.mxu0 0
  %735 = vmatpush2.bf16.msra.mxu0 0
  %736 = vmatprep.subr.bf16.mxu0 0
  %737 = vmatpush2.bf16.msra.mxu0 0
  %738 = vmatprep.subr.bf16.mxu0 0
  %739 = vmatpush2.bf16.msra.mxu0 0
  %740 = vmatprep.subr.bf16.mxu0 0
  %741 = vmatpush2.bf16.msra.mxu0 0
  %742 = vmatprep.subr.bf16.mxu0 0
  %743 = vmatpush2.bf16.msra.mxu0 0
  %744 = vmatprep.subr.bf16.mxu0 0
  %745 = vmatpush2.bf16.msra.mxu0 0
  %746 = vmatprep.mubr.bf16.mxu0 0
  %747 = vmatmul.mubr.bf16.gmra.mxu0 %v166
  %v748 = vpop.f32.mrf.mxu0
  %v749 = vadd.f32 %v688, %v748
  %v750 = vpop.f32.mrf.mxu0
  %v751 = vpop.f32.mrf.mxu0
  %v752 = vadd.f32 %v688, %v751
  %v753 = vpop.f32.mrf.mxu0
  %754 = vdwg.mxu0
  %v755 = vpack.c.bf16 %v585, %v585
  %v756 = vpack.c.bf16 %v588, %v588
  %v757 = vpack.c.bf16 %v667, %v667
  %v758 = vpack.c.bf16 %v670, %v670
  %v760 = vsel %vm293, %v755, 0
  %v763 = vsel %vm293, %v757, 0
  %765 = vmatprep.subr.bf16.mxu0 0
  %766 = vmatpush1.bf16.xpose.msra.mxu0 0
  %767 = vmatprep.subr.bf16.mxu0 0
  %768 = vmatpush1.bf16.xpose.msra.mxu0 0
  %769 = vmatprep.subr.bf16.mxu0 0
  %770 = vmatpush1.bf16.xpose.msra.mxu0 0
  %771 = vmatprep.subr.bf16.mxu0 0
  %772 = vmatpush1.bf16.xpose.msra.mxu0 0
  %773 = vmatprep.subr.bf16.mxu0 0
  %774 = vmatpush1.bf16.xpose.msra.mxu0 0
  %775 = vmatprep.subr.bf16.mxu0 0
  %776 = vmatpush1.bf16.xpose.msra.mxu0 0
  %777 = vmatprep.subr.bf16.mxu0 0
  %778 = vmatpush1.bf16.xpose.msra.mxu0 0
  %779 = vmatprep.subr.bf16.mxu0 0
  %780 = vmatpush1.bf16.xpose.msra.mxu0 %v763
  %781 = vmatprep.subr.bf16.mxu0 0
  %782 = vmatpush2.bf16.xpose.msra.mxu0 0
  %783 = vmatprep.subr.bf16.mxu0 0
  %784 = vmatpush2.bf16.xpose.msra.mxu0 0
  %785 = vmatprep.subr.bf16.mxu0 0
  %786 = vmatpush2.bf16.xpose.msra.mxu0 0
  %787 = vmatprep.subr.bf16.mxu0 0
  %788 = vmatpush2.bf16.xpose.msra.mxu0 0
  %789 = vmatprep.subr.bf16.mxu0 0
  %790 = vmatpush2.bf16.xpose.msra.mxu0 0
  %791 = vmatprep.subr.bf16.mxu0 0
  %792 = vmatpush2.bf16.xpose.msra.mxu0 0
  %793 = vmatprep.subr.bf16.mxu0 0
  %794 = vmatpush2.bf16.xpose.msra.mxu0 0
  %795 = vmatprep.subr.bf16.mxu0 0
  %796 = vmatpush2.bf16.xpose.msra.mxu0 0
  %797 = vmatprep.mubr.bf16.mxu0 0
  %798 = vmatmul.mubr.bf16.gmra.mxu0 %v760
  %v799 = vpop.f32.mrf.mxu0
  %v800 = vadd.f32 0.0, %v799
  %v801 = vpop.f32.mrf.mxu0
  %v802 = vpop.f32.mrf.mxu0
  %v803 = vpop.f32.mrf.mxu0
  %804 = vdwg.mxu0
  %v806 = vsel %vm293, %v756, 0
  %v809 = vsel %vm293, %v758, 0
  %811 = vmatprep.subr.bf16.mxu0 0
  %812 = vmatpush1.bf16.xpose.msra.mxu0 0
  %813 = vmatprep.subr.bf16.mxu0 0
  %814 = vmatpush1.bf16.xpose.msra.mxu0 0
  %815 = vmatprep.subr.bf16.mxu0 0
  %816 = vmatpush1.bf16.xpose.msra.mxu0 0
  %817 = vmatprep.subr.bf16.mxu0 0
  %818 = vmatpush1.bf16.xpose.msra.mxu0 0
  %819 = vmatprep.subr.bf16.mxu0 0
  %820 = vmatpush1.bf16.xpose.msra.mxu0 0
  %821 = vmatprep.subr.bf16.mxu0 0
  %822 = vmatpush1.bf16.xpose.msra.mxu0 0
  %823 = vmatprep.subr.bf16.mxu0 0
  %824 = vmatpush1.bf16.xpose.msra.mxu0 0
  %825 = vmatprep.subr.bf16.mxu0 0
  %826 = vmatpush1.bf16.xpose.msra.mxu0 %v809
  %827 = vmatprep.subr.bf16.mxu0 0
  %828 = vmatpush2.bf16.xpose.msra.mxu0 0
  %829 = vmatprep.subr.bf16.mxu0 0
  %830 = vmatpush2.bf16.xpose.msra.mxu0 0
  %831 = vmatprep.subr.bf16.mxu0 0
  %832 = vmatpush2.bf16.xpose.msra.mxu0 0
  %833 = vmatprep.subr.bf16.mxu0 0
  %834 = vmatpush2.bf16.xpose.msra.mxu0 0
  %835 = vmatprep.subr.bf16.mxu0 0
  %836 = vmatpush2.bf16.xpose.msra.mxu0 0
  %837 = vmatprep.subr.bf16.mxu0 0
  %838 = vmatpush2.bf16.xpose.msra.mxu0 0
  %839 = vmatprep.subr.bf16.mxu0 0
  %840 = vmatpush2.bf16.xpose.msra.mxu0 0
  %841 = vmatprep.subr.bf16.mxu0 0
  %842 = vmatpush2.bf16.xpose.msra.mxu0 0
  %843 = vmatprep.mubr.bf16.mxu0 0
  %844 = vmatmul.mubr.bf16.gmra.mxu0 %v806
  %v845 = vpop.f32.mrf.mxu0
  %v846 = vadd.f32 0.0, %v845
  %v847 = vpop.f32.mrf.mxu0
  %v848 = vpop.f32.mrf.mxu0
  %v849 = vpop.f32.mrf.mxu0
  %850 = vdwg.mxu0
  %v851 = vmul.f32 %v800, 0.35355338
  %v852 = vmul.f32 %v846, 0.35355338
  %v853 = vsel %vm293, %v851, -inf
  %854 = vmax.xlane.f32.xlu0 %v853
  %v855 = vpop.xlane.xlu0 %854
  %v856 = vsel %vm293, %v852, -inf
  %857 = vmax.xlane.f32.xlu0 %v856
  %v858 = vpop.xlane.xlu0 %857
  %v859 = vsub.f32 %v851, %v855
  %v860 = vsub.f32 %v852, %v858
  %v861 = vmul.f32 %v859, 1.442695
  %v862 = vpow.pop %v861
  %v863 = vmul.f32 %v860, 1.442695
  %v864 = vpow.pop %v863
  %v865 = vsel %vm293, %v862, 0.0
  %866 = vadd.xlane.f32.xlu0 %v865
  %v867 = vpop.xlane.xlu0 %866
  %v868 = vsel %vm293, %v864, 0.0
  %869 = vadd.xlane.f32.xlu0 %v868
  %v870 = vpop.xlane.xlu0 %869
  %v871 = vrcp.pop %v867
  %v872 = vrcp.pop %v870
  %v873 = vmul.f32 %v862, %v871
  %v874 = vmul.f32 %v864, %v872
  %v875 = vpack.c.bf16 %v873, %v873
  %v876 = vpack.c.bf16 %v874, %v874
  %v877 = vpack.c.bf16 %v749, %v749
  %v878 = vpack.c.bf16 %v752, %v752
  %v880 = vsel %vm293, %v875, 0
  %v883 = vsel %vm417, %v877, 0
  %885 = vmatprep.subr.bf16.mxu0 0
  %886 = vmatpush1.bf16.msra.mxu0 0
  %887 = vmatprep.subr.bf16.mxu0 0
  %888 = vmatpush1.bf16.msra.mxu0 0
  %889 = vmatprep.subr.bf16.mxu0 0
  %890 = vmatpush1.bf16.msra.mxu0 0
  %891 = vmatprep.subr.bf16.mxu0 0
  %892 = vmatpush1.bf16.msra.mxu0 0
  %893 = vmatprep.subr.bf16.mxu0 0
  %894 = vmatpush1.bf16.msra.mxu0 0
  %895 = vmatprep.subr.bf16.mxu0 0
  %896 = vmatpush1.bf16.msra.mxu0 0
  %897 = vmatprep.subr.bf16.mxu0 0
  %898 = vmatpush1.bf16.msra.mxu0 0
  %899 = vmatprep.subr.bf16.mxu0 0
  %900 = vmatpush1.bf16.msra.mxu0 %v883
  %901 = vmatprep.subr.bf16.mxu0 0
  %902 = vmatpush2.bf16.msra.mxu0 0
  %903 = vmatprep.subr.bf16.mxu0 0
  %904 = vmatpush2.bf16.msra.mxu0 0
  %905 = vmatprep.subr.bf16.mxu0 0
  %906 = vmatpush2.bf16.msra.mxu0 0
  %907 = vmatprep.subr.bf16.mxu0 0
  %908 = vmatpush2.bf16.msra.mxu0 0
  %909 = vmatprep.subr.bf16.mxu0 0
  %910 = vmatpush2.bf16.msra.mxu0 0
  %911 = vmatprep.subr.bf16.mxu0 0
  %912 = vmatpush2.bf16.msra.mxu0 0
  %913 = vmatprep.subr.bf16.mxu0 0
  %914 = vmatpush2.bf16.msra.mxu0 0
  %915 = vmatprep.subr.bf16.mxu0 0
  %916 = vmatpush2.bf16.msra.mxu0 0
  %917 = vmatprep.mubr.bf16.mxu0 0
  %918 = vmatmul.mubr.bf16.gmra.mxu0 %v880
  %v919 = vpop.f32.mrf.mxu0
  %v920 = vadd.f32 0.0, %v919
  %v921 = vpop.f32.mrf.mxu0
  %v922 = vpop.f32.mrf.mxu0
  %v923 = vpop.f32.mrf.mxu0
  %924 = vdwg.mxu0
  %v926 = vsel %vm293, %v876, 0
  %v929 = vsel %vm417, %v878, 0
  %931 = vmatprep.subr.bf16.mxu0 0
  %932 = vmatpush1.bf16.msra.mxu0 0
  %933 = vmatprep.subr.bf16.mxu0 0
  %934 = vmatpush1.bf16.msra.mxu0 0
  %935 = vmatprep.subr.bf16.mxu0 0
  %936 = vmatpush1.bf16.msra.mxu0 0
  %937 = vmatprep.subr.bf16.mxu0 0
  %938 = vmatpush1.bf16.msra.mxu0 0
  %939 = vmatprep.subr.bf16.mxu0 0
  %940 = vmatpush1.bf16.msra.mxu0 0
  %941 = vmatprep.subr.bf16.mxu0 0
  %942 = vmatpush1.bf16.msra.mxu0 0
  %943 = vmatprep.subr.bf16.mxu0 0
  %944 = vmatpush1.bf16.msra.mxu0 0
  %945 = vmatprep.subr.bf16.mxu0 0
  %946 = vmatpush1.bf16.msra.mxu0 %v929
  %947 = vmatprep.subr.bf16.mxu0 0
  %948 = vmatpush2.bf16.msra.mxu0 0
  %949 = vmatprep.subr.bf16.mxu0 0
  %950 = vmatpush2.bf16.msra.mxu0 0
  %951 = vmatprep.subr.bf16.mxu0 0
  %952 = vmatpush2.bf16.msra.mxu0 0
  %953 = vmatprep.subr.bf16.mxu0 0
  %954 = vmatpush2.bf16.msra.mxu0 0
  %955 = vmatprep.subr.bf16.mxu0 0
  %956 = vmatpush2.bf16.msra.mxu0 0
  %957 = vmatprep.subr.bf16.mxu0 0
  %958 = vmatpush2.bf16.msra.mxu0 0
  %959 = vmatprep.subr.bf16.mxu0 0
  %960 = vmatpush2.bf16.msra.mxu0 0
  %961 = vmatprep.subr.bf16.mxu0 0
  %962 = vmatpush2.bf16.msra.mxu0 0
  %963 = vmatprep.mubr.bf16.mxu0 0
  %964 = vmatmul.mubr.bf16.gmra.mxu0 %v926
  %v965 = vpop.f32.mrf.mxu0
  %v966 = vadd.f32 0.0, %v965
  %v967 = vpop.f32.mrf.mxu0
  %v968 = vpop.f32.mrf.mxu0
  %v969 = vpop.f32.mrf.mxu0
  %970 = vdwg.mxu0
  %v971 = vpack.c.bf16 %v966, %v920
  %s972 = scalar_lea.vmem %s8, 4
  %v973 = vld [vmem:[%s972] sm:$0xf]
  %v975 = vsel %vm293, %v971, 0
  %v978 = vsel %vm417, %v973, 0
  %980 = vmatprep.subr.bf16.mxu0 0
  %981 = vmatpush1.bf16.msra.mxu0 0
  %982 = vmatprep.subr.bf16.mxu0 0
  %983 = vmatpush1.bf16.msra.mxu0 0
  %984 = vmatprep.subr.bf16.mxu0 0
  %985 = vmatpush1.bf16.msra.mxu0 0
  %986 = vmatprep.subr.bf16.mxu0 0
  %987 = vmatpush1.bf16.msra.mxu0 0
  %988 = vmatprep.subr.bf16.mxu0 0
  %989 = vmatpush1.bf16.msra.mxu0 0
  %990 = vmatprep.subr.bf16.mxu0 0
  %991 = vmatpush1.bf16.msra.mxu0 0
  %992 = vmatprep.subr.bf16.mxu0 0
  %993 = vmatpush1.bf16.msra.mxu0 0
  %994 = vmatprep.subr.bf16.mxu0 0
  %995 = vmatpush1.bf16.msra.mxu0 %v978
  %996 = vmatprep.subr.bf16.mxu0 0
  %997 = vmatpush2.bf16.msra.mxu0 0
  %998 = vmatprep.subr.bf16.mxu0 0
  %999 = vmatpush2.bf16.msra.mxu0 0
  %1000 = vmatprep.subr.bf16.mxu0 0
  %1001 = vmatpush2.bf16.msra.mxu0 0
  %1002 = vmatprep.subr.bf16.mxu0 0
  %1003 = vmatpush2.bf16.msra.mxu0 0
  %1004 = vmatprep.subr.bf16.mxu0 0
  %1005 = vmatpush2.bf16.msra.mxu0 0
  %1006 = vmatprep.subr.bf16.mxu0 0
  %1007 = vmatpush2.bf16.msra.mxu0 0
  %1008 = vmatprep.subr.bf16.mxu0 0
  %1009 = vmatpush2.bf16.msra.mxu0 0
  %1010 = vmatprep.subr.bf16.mxu0 0
  %1011 = vmatpush2.bf16.msra.mxu0 0
  %1012 = vmatprep.mubr.bf16.mxu0 0
  %1013 = vmatmul.mubr.bf16.gmra.mxu0 %v975
  %v1014 = vpop.f32.mrf.mxu0
  %v1015 = vadd.f32 0.0, %v1014
  %v1016 = vpop.f32.mrf.mxu0
  %v1017 = vpop.f32.mrf.mxu0
  %v1018 = vadd.f32 0.0, %v1017
  %v1019 = vpop.f32.mrf.mxu0
  %1020 = vdwg.mxu0
  %v1022 = vsel %vm293, %v507, 0
  %v1025 = vsel %vm417, %v508, 0
  %1027 = vmatprep.subr.bf16.mxu0 0
  %1028 = vmatpush1.bf16.msra.mxu0 0
  %1029 = vmatprep.subr.bf16.mxu0 0
  %1030 = vmatpush1.bf16.msra.mxu0 0
  %1031 = vmatprep.subr.bf16.mxu0 0
  %1032 = vmatpush1.bf16.msra.mxu0 0
  %1033 = vmatprep.subr.bf16.mxu0 0
  %1034 = vmatpush1.bf16.msra.mxu0 0
  %1035 = vmatprep.subr.bf16.mxu0 0
  %1036 = vmatpush1.bf16.msra.mxu0 0
  %1037 = vmatprep.subr.bf16.mxu0 0
  %1038 = vmatpush1.bf16.msra.mxu0 0
  %1039 = vmatprep.subr.bf16.mxu0 0
  %1040 = vmatpush1.bf16.msra.mxu0 0
  %1041 = vmatprep.subr.bf16.mxu0 0
  %1042 = vmatpush1.bf16.msra.mxu0 %v1025
  %1043 = vmatprep.subr.bf16.mxu0 0
  %1044 = vmatpush2.bf16.msra.mxu0 0
  %1045 = vmatprep.subr.bf16.mxu0 0
  %1046 = vmatpush2.bf16.msra.mxu0 0
  %1047 = vmatprep.subr.bf16.mxu0 0
  %1048 = vmatpush2.bf16.msra.mxu0 0
  %1049 = vmatprep.subr.bf16.mxu0 0
  %1050 = vmatpush2.bf16.msra.mxu0 0
  %1051 = vmatprep.subr.bf16.mxu0 0
  %1052 = vmatpush2.bf16.msra.mxu0 0
  %1053 = vmatprep.subr.bf16.mxu0 0
  %1054 = vmatpush2.bf16.msra.mxu0 0
  %1055 = vmatprep.subr.bf16.mxu0 0
  %1056 = vmatpush2.bf16.msra.mxu0 0
  %1057 = vmatprep.subr.bf16.mxu0 0
  %1058 = vmatpush2.bf16.msra.mxu0 0
  %1059 = vmatprep.mubr.bf16.mxu0 0
  %1060 = vmatmul.mubr.bf16.gmra.mxu0 %v1022
  %v1061 = vpop.f32.mrf.mxu0
  %v1062 = vadd.f32 %v1015, %v1061
  %v1063 = vpop.f32.mrf.mxu0
  %v1064 = vpop.f32.mrf.mxu0
  %v1065 = vadd.f32 %v1018, %v1064
  %v1066 = vpop.f32.mrf.mxu0
  %1067 = vdwg.mxu0
  %s1068 = scalar_lea.vmem %s2, 64
  %v1069 = vld [vmem:[%s1068] sm:$0xf]
  %v1070 = vld [vmem:[%s1068 + $0x4] sm:$0xf]
  %v1071 = vld [vmem:[%s1068 + $0x8] sm:$0xf]
  %v1072 = vld [vmem:[%s1068 + $0xc] sm:$0xf]
  %v1073 = vld [vmem:[%s1068 + $0x10] sm:$0xf]
  %v1074 = vld [vmem:[%s1068 + $0x14] sm:$0xf]
  %v1075 = vld [vmem:[%s1068 + $0x18] sm:$0xf]
  %v1076 = vld [vmem:[%s1068 + $0x1c] sm:$0xf]
  %s1077 = scalar_lea.vmem %s3, 2
  %v1078 = vld [vmem:[%s1077] sm:$0x1]
  %v1080 = vlaneseq
  %v1081 = vshrl.u32 %v1080, 7
  %v1082 = vsub.s32 0, %v1081
  %v1083 = vrot.slane %v1078, %v1082
  %v1093 = vunpack.c.l.b16 %v1069
  %v1094 = vunpack.c.l.b16 %v1070
  %v1095 = vunpack.c.l.b16 %v1071
  %v1096 = vunpack.c.l.b16 %v1072
  %v1097 = vunpack.c.l.b16 %v1073
  %v1098 = vunpack.c.l.b16 %v1074
  %v1099 = vunpack.c.l.b16 %v1075
  %v1100 = vunpack.c.l.b16 %v1076
  %v1101 = vpack.c.b16 %v1094, %v1093
  %v1102 = vpack.c.b16 %v1096, %v1095
  %v1103 = vpack.c.b16 %v1098, %v1097
  %v1104 = vpack.c.b16 %v1100, %v1099
  %1109 = vmatprep.subr.bf16.mxu0 0
  %1110 = vmatpush1.bf16.msra.mxu0 0
  %1111 = vmatprep.subr.bf16.mxu0 0
  %1112 = vmatpush1.bf16.msra.mxu0 0
  %1113 = vmatprep.subr.bf16.mxu0 0
  %1114 = vmatpush1.bf16.msra.mxu0 0
  %1115 = vmatprep.subr.bf16.mxu0 0
  %1116 = vmatpush1.bf16.msra.mxu0 0
  %1117 = vmatprep.subr.bf16.mxu0 0
  %1118 = vmatpush1.bf16.msra.mxu0 %v1104
  %1119 = vmatprep.subr.bf16.mxu0 0
  %1120 = vmatpush1.bf16.msra.mxu0 %v1103
  %1121 = vmatprep.subr.bf16.mxu0 0
  %1122 = vmatpush1.bf16.msra.mxu0 %v1102
  %1123 = vmatprep.subr.bf16.mxu0 0
  %1124 = vmatpush1.bf16.msra.mxu0 %v1101
  %1125 = vmatprep.subr.bf16.mxu0 0
  %1126 = vmatpush2.bf16.msra.mxu0 0
  %1127 = vmatprep.subr.bf16.mxu0 0
  %1128 = vmatpush2.bf16.msra.mxu0 0
  %1129 = vmatprep.subr.bf16.mxu0 0
  %1130 = vmatpush2.bf16.msra.mxu0 0
  %1131 = vmatprep.subr.bf16.mxu0 0
  %1132 = vmatpush2.bf16.msra.mxu0 0
  %1133 = vmatprep.subr.bf16.mxu0 0
  %1134 = vmatpush2.bf16.msra.mxu0 0
  %1135 = vmatprep.subr.bf16.mxu0 0
  %1136 = vmatpush2.bf16.msra.mxu0 0
  %1137 = vmatprep.subr.bf16.mxu0 0
  %1138 = vmatpush2.bf16.msra.mxu0 0
  %1139 = vmatprep.subr.bf16.mxu0 0
  %1140 = vmatpush2.bf16.msra.mxu0 0
  %1141 = vmatprep.mubr.bf16.mxu0 0
  %1142 = vmatmul.mubr.bf16.gmra.mxu0 %v83
  %v1143 = vpop.f32.mrf.mxu0
  %v1144 = vadd.f32 %v1083, %v1143
  %v1145 = vpop.f32.mrf.mxu0
  %v1146 = vpop.f32.mrf.mxu0
  %v1147 = vadd.f32 %v1083, %v1146
  %v1148 = vpop.f32.mrf.mxu0
  %1149 = vdwg.mxu0
  %s1150 = scalar_lea.vmem %s4, 64
  %v1151 = vld [vmem:[%s1150] sm:$0xf]
  %v1152 = vld [vmem:[%s1150 + $0x4] sm:$0xf]
  %v1153 = vld [vmem:[%s1150 + $0x8] sm:$0xf]
  %v1154 = vld [vmem:[%s1150 + $0xc] sm:$0xf]
  %v1155 = vld [vmem:[%s1150 + $0x10] sm:$0xf]
  %v1156 = vld [vmem:[%s1150 + $0x14] sm:$0xf]
  %v1157 = vld [vmem:[%s1150 + $0x18] sm:$0xf]
  %v1158 = vld [vmem:[%s1150 + $0x1c] sm:$0xf]
  %s1159 = scalar_lea.vmem %s5, 2
  %v1160 = vld [vmem:[%s1159] sm:$0x1]
  %v1162 = vlaneseq
  %v1163 = vshrl.u32 %v1162, 7
  %v1164 = vsub.s32 0, %v1163
  %v1165 = vrot.slane %v1160, %v1164
  %v1175 = vunpack.c.l.b16 %v1151
  %v1176 = vunpack.c.l.b16 %v1152
  %v1177 = vunpack.c.l.b16 %v1153
  %v1178 = vunpack.c.l.b16 %v1154
  %v1179 = vunpack.c.l.b16 %v1155
  %v1180 = vunpack.c.l.b16 %v1156
  %v1181 = vunpack.c.l.b16 %v1157
  %v1182 = vunpack.c.l.b16 %v1158
  %v1183 = vpack.c.b16 %v1176, %v1175
  %v1184 = vpack.c.b16 %v1178, %v1177
  %v1185 = vpack.c.b16 %v1180, %v1179
  %v1186 = vpack.c.b16 %v1182, %v1181
  %1191 = vmatprep.subr.bf16.mxu0 0
  %1192 = vmatpush1.bf16.msra.mxu0 0
  %1193 = vmatprep.subr.bf16.mxu0 0
  %1194 = vmatpush1.bf16.msra.mxu0 0
  %1195 = vmatprep.subr.bf16.mxu0 0
  %1196 = vmatpush1.bf16.msra.mxu0 0
  %1197 = vmatprep.subr.bf16.mxu0 0
  %1198 = vmatpush1.bf16.msra.mxu0 0
  %1199 = vmatprep.subr.bf16.mxu0 0
  %1200 = vmatpush1.bf16.msra.mxu0 %v1186
  %1201 = vmatprep.subr.bf16.mxu0 0
  %1202 = vmatpush1.bf16.msra.mxu0 %v1185
  %1203 = vmatprep.subr.bf16.mxu0 0
  %1204 = vmatpush1.bf16.msra.mxu0 %v1184
  %1205 = vmatprep.subr.bf16.mxu0 0
  %1206 = vmatpush1.bf16.msra.mxu0 %v1183
  %1207 = vmatprep.subr.bf16.mxu0 0
  %1208 = vmatpush2.bf16.msra.mxu0 0
  %1209 = vmatprep.subr.bf16.mxu0 0
  %1210 = vmatpush2.bf16.msra.mxu0 0
  %1211 = vmatprep.subr.bf16.mxu0 0
  %1212 = vmatpush2.bf16.msra.mxu0 0
  %1213 = vmatprep.subr.bf16.mxu0 0
  %1214 = vmatpush2.bf16.msra.mxu0 0
  %1215 = vmatprep.subr.bf16.mxu0 0
  %1216 = vmatpush2.bf16.msra.mxu0 0
  %1217 = vmatprep.subr.bf16.mxu0 0
  %1218 = vmatpush2.bf16.msra.mxu0 0
  %1219 = vmatprep.subr.bf16.mxu0 0
  %1220 = vmatpush2.bf16.msra.mxu0 0
  %1221 = vmatprep.subr.bf16.mxu0 0
  %1222 = vmatpush2.bf16.msra.mxu0 0
  %1223 = vmatprep.mubr.bf16.mxu0 0
  %1224 = vmatmul.mubr.bf16.gmra.mxu0 %v166
  %v1225 = vpop.f32.mrf.mxu0
  %v1226 = vadd.f32 %v1165, %v1225
  %v1227 = vpop.f32.mrf.mxu0
  %v1228 = vpop.f32.mrf.mxu0
  %v1229 = vadd.f32 %v1165, %v1228
  %v1230 = vpop.f32.mrf.mxu0
  %1231 = vdwg.mxu0
  %s1232 = scalar_lea.vmem %s6, 64
  %v1233 = vld [vmem:[%s1232] sm:$0xf]
  %v1234 = vld [vmem:[%s1232 + $0x4] sm:$0xf]
  %v1235 = vld [vmem:[%s1232 + $0x8] sm:$0xf]
  %v1236 = vld [vmem:[%s1232 + $0xc] sm:$0xf]
  %v1237 = vld [vmem:[%s1232 + $0x10] sm:$0xf]
  %v1238 = vld [vmem:[%s1232 + $0x14] sm:$0xf]
  %v1239 = vld [vmem:[%s1232 + $0x18] sm:$0xf]
  %v1240 = vld [vmem:[%s1232 + $0x1c] sm:$0xf]
  %s1241 = scalar_lea.vmem %s7, 2
  %v1242 = vld [vmem:[%s1241] sm:$0x1]
  %v1244 = vlaneseq
  %v1245 = vshrl.u32 %v1244, 7
  %v1246 = vsub.s32 0, %v1245
  %v1247 = vrot.slane %v1242, %v1246
  %v1257 = vunpack.c.l.b16 %v1233
  %v1258 = vunpack.c.l.b16 %v1234
  %v1259 = vunpack.c.l.b16 %v1235
  %v1260 = vunpack.c.l.b16 %v1236
  %v1261 = vunpack.c.l.b16 %v1237
  %v1262 = vunpack.c.l.b16 %v1238
  %v1263 = vunpack.c.l.b16 %v1239
  %v1264 = vunpack.c.l.b16 %v1240
  %v1265 = vpack.c.b16 %v1258, %v1257
  %v1266 = vpack.c.b16 %v1260, %v1259
  %v1267 = vpack.c.b16 %v1262, %v1261
  %v1268 = vpack.c.b16 %v1264, %v1263
  %1273 = vmatprep.subr.bf16.mxu0 0
  %1274 = vmatpush1.bf16.msra.mxu0 0
  %1275 = vmatprep.subr.bf16.mxu0 0
  %1276 = vmatpush1.bf16.msra.mxu0 0
  %1277 = vmatprep.subr.bf16.mxu0 0
  %1278 = vmatpush1.bf16.msra.mxu0 0
  %1279 = vmatprep.subr.bf16.mxu0 0
  %1280 = vmatpush1.bf16.msra.mxu0 0
  %1281 = vmatprep.subr.bf16.mxu0 0
  %1282 = vmatpush1.bf16.msra.mxu0 %v1268
  %1283 = vmatprep.subr.bf16.mxu0 0
  %1284 = vmatpush1.bf16.msra.mxu0 %v1267
  %1285 = vmatprep.subr.bf16.mxu0 0
  %1286 = vmatpush1.bf16.msra.mxu0 %v1266
  %1287 = vmatprep.subr.bf16.mxu0 0
  %1288 = vmatpush1.bf16.msra.mxu0 %v1265
  %1289 = vmatprep.subr.bf16.mxu0 0
  %1290 = vmatpush2.bf16.msra.mxu0 0
  %1291 = vmatprep.subr.bf16.mxu0 0
  %1292 = vmatpush2.bf16.msra.mxu0 0
  %1293 = vmatprep.subr.bf16.mxu0 0
  %1294 = vmatpush2.bf16.msra.mxu0 0
  %1295 = vmatprep.subr.bf16.mxu0 0
  %1296 = vmatpush2.bf16.msra.mxu0 0
  %1297 = vmatprep.subr.bf16.mxu0 0
  %1298 = vmatpush2.bf16.msra.mxu0 0
  %1299 = vmatprep.subr.bf16.mxu0 0
  %1300 = vmatpush2.bf16.msra.mxu0 0
  %1301 = vmatprep.subr.bf16.mxu0 0
  %1302 = vmatpush2.bf16.msra.mxu0 0
  %1303 = vmatprep.subr.bf16.mxu0 0
  %1304 = vmatpush2.bf16.msra.mxu0 0
  %1305 = vmatprep.mubr.bf16.mxu0 0
  %1306 = vmatmul.mubr.bf16.gmra.mxu0 %v166
  %v1307 = vpop.f32.mrf.mxu0
  %v1308 = vadd.f32 %v1247, %v1307
  %v1309 = vpop.f32.mrf.mxu0
  %v1310 = vpop.f32.mrf.mxu0
  %v1311 = vadd.f32 %v1247, %v1310
  %v1312 = vpop.f32.mrf.mxu0
  %1313 = vdwg.mxu0
  %v1314 = vpack.c.bf16 %v1144, %v1144
  %v1315 = vpack.c.bf16 %v1147, %v1147
  %v1316 = vpack.c.bf16 %v1226, %v1226
  %v1317 = vpack.c.bf16 %v1229, %v1229
  %v1319 = vsel %vm293, %v1314, 0
  %v1322 = vsel %vm293, %v1316, 0
  %1324 = vmatprep.subr.bf16.mxu0 0
  %1325 = vmatpush1.bf16.xpose.msra.mxu0 0
  %1326 = vmatprep.subr.bf16.mxu0 0
  %1327 = vmatpush1.bf16.xpose.msra.mxu0 0
  %1328 = vmatprep.subr.bf16.mxu0 0
  %1329 = vmatpush1.bf16.xpose.msra.mxu0 0
  %1330 = vmatprep.subr.bf16.mxu0 0
  %1331 = vmatpush1.bf16.xpose.msra.mxu0 0
  %1332 = vmatprep.subr.bf16.mxu0 0
  %1333 = vmatpush1.bf16.xpose.msra.mxu0 0
  %1334 = vmatprep.subr.bf16.mxu0 0
  %1335 = vmatpush1.bf16.xpose.msra.mxu0 0
  %1336 = vmatprep.subr.bf16.mxu0 0
  %1337 = vmatpush1.bf16.xpose.msra.mxu0 0
  %1338 = vmatprep.subr.bf16.mxu0 0
  %1339 = vmatpush1.bf16.xpose.msra.mxu0 %v1322
  %1340 = vmatprep.subr.bf16.mxu0 0
  %1341 = vmatpush2.bf16.xpose.msra.mxu0 0
  %1342 = vmatprep.subr.bf16.mxu0 0
  %1343 = vmatpush2.bf16.xpose.msra.mxu0 0
  %1344 = vmatprep.subr.bf16.mxu0 0
  %1345 = vmatpush2.bf16.xpose.msra.mxu0 0
  %1346 = vmatprep.subr.bf16.mxu0 0
  %1347 = vmatpush2.bf16.xpose.msra.mxu0 0
  %1348 = vmatprep.subr.bf16.mxu0 0
  %1349 = vmatpush2.bf16.xpose.msra.mxu0 0
  %1350 = vmatprep.subr.bf16.mxu0 0
  %1351 = vmatpush2.bf16.xpose.msra.mxu0 0
  %1352 = vmatprep.subr.bf16.mxu0 0
  %1353 = vmatpush2.bf16.xpose.msra.mxu0 0
  %1354 = vmatprep.subr.bf16.mxu0 0
  %1355 = vmatpush2.bf16.xpose.msra.mxu0 0
  %1356 = vmatprep.mubr.bf16.mxu0 0
  %1357 = vmatmul.mubr.bf16.gmra.mxu0 %v1319
  %v1358 = vpop.f32.mrf.mxu0
  %v1359 = vadd.f32 0.0, %v1358
  %v1360 = vpop.f32.mrf.mxu0
  %v1361 = vpop.f32.mrf.mxu0
  %v1362 = vpop.f32.mrf.mxu0
  %1363 = vdwg.mxu0
  %v1365 = vsel %vm293, %v1315, 0
  %v1368 = vsel %vm293, %v1317, 0
  %1370 = vmatprep.subr.bf16.mxu0 0
  %1371 = vmatpush1.bf16.xpose.msra.mxu0 0
  %1372 = vmatprep.subr.bf16.mxu0 0
  %1373 = vmatpush1.bf16.xpose.msra.mxu0 0
  %1374 = vmatprep.subr.bf16.mxu0 0
  %1375 = vmatpush1.bf16.xpose.msra.mxu0 0
  %1376 = vmatprep.subr.bf16.mxu0 0
  %1377 = vmatpush1.bf16.xpose.msra.mxu0 0
  %1378 = vmatprep.subr.bf16.mxu0 0
  %1379 = vmatpush1.bf16.xpose.msra.mxu0 0
  %1380 = vmatprep.subr.bf16.mxu0 0
  %1381 = vmatpush1.bf16.xpose.msra.mxu0 0
  %1382 = vmatprep.subr.bf16.mxu0 0
  %1383 = vmatpush1.bf16.xpose.msra.mxu0 0
  %1384 = vmatprep.subr.bf16.mxu0 0
  %1385 = vmatpush1.bf16.xpose.msra.mxu0 %v1368
  %1386 = vmatprep.subr.bf16.mxu0 0
  %1387 = vmatpush2.bf16.xpose.msra.mxu0 0
  %1388 = vmatprep.subr.bf16.mxu0 0
  %1389 = vmatpush2.bf16.xpose.msra.mxu0 0
  %1390 = vmatprep.subr.bf16.mxu0 0
  %1391 = vmatpush2.bf16.xpose.msra.mxu0 0
  %1392 = vmatprep.subr.bf16.mxu0 0
  %1393 = vmatpush2.bf16.xpose.msra.mxu0 0
  %1394 = vmatprep.subr.bf16.mxu0 0
  %1395 = vmatpush2.bf16.xpose.msra.mxu0 0
  %1396 = vmatprep.subr.bf16.mxu0 0
  %1397 = vmatpush2.bf16.xpose.msra.mxu0 0
  %1398 = vmatprep.subr.bf16.mxu0 0
  %1399 = vmatpush2.bf16.xpose.msra.mxu0 0
  %1400 = vmatprep.subr.bf16.mxu0 0
  %1401 = vmatpush2.bf16.xpose.msra.mxu0 0
  %1402 = vmatprep.mubr.bf16.mxu0 0
  %1403 = vmatmul.mubr.bf16.gmra.mxu0 %v1365
  %v1404 = vpop.f32.mrf.mxu0
  %v1405 = vadd.f32 0.0, %v1404
  %v1406 = vpop.f32.mrf.mxu0
  %v1407 = vpop.f32.mrf.mxu0
  %v1408 = vpop.f32.mrf.mxu0
  %1409 = vdwg.mxu0
  %v1410 = vmul.f32 %v1359, 0.35355338
  %v1411 = vmul.f32 %v1405, 0.35355338
  %v1412 = vsel %vm293, %v1410, -inf
  %1413 = vmax.xlane.f32.xlu0 %v1412
  %v1414 = vpop.xlane.xlu0 %1413
  %v1415 = vsel %vm293, %v1411, -inf
  %1416 = vmax.xlane.f32.xlu0 %v1415
  %v1417 = vpop.xlane.xlu0 %1416
  %v1418 = vsub.f32 %v1410, %v1414
  %v1419 = vsub.f32 %v1411, %v1417
  %v1420 = vmul.f32 %v1418, 1.442695
  %v1421 = vpow.pop %v1420
  %v1422 = vmul.f32 %v1419, 1.442695
  %v1423 = vpow.pop %v1422
  %v1424 = vsel %vm293, %v1421, 0.0
  %1425 = vadd.xlane.f32.xlu0 %v1424
  %v1426 = vpop.xlane.xlu0 %1425
  %v1427 = vsel %vm293, %v1423, 0.0
  %1428 = vadd.xlane.f32.xlu0 %v1427
  %v1429 = vpop.xlane.xlu0 %1428
  %v1430 = vrcp.pop %v1426
  %v1431 = vrcp.pop %v1429
  %v1432 = vmul.f32 %v1421, %v1430
  %v1433 = vmul.f32 %v1423, %v1431
  %v1434 = vpack.c.bf16 %v1432, %v1432
  %v1435 = vpack.c.bf16 %v1433, %v1433
  %v1436 = vpack.c.bf16 %v1308, %v1308
  %v1437 = vpack.c.bf16 %v1311, %v1311
  %v1439 = vsel %vm293, %v1434, 0
  %v1442 = vsel %vm417, %v1436, 0
  %1444 = vmatprep.subr.bf16.mxu0 0
  %1445 = vmatpush1.bf16.msra.mxu0 0
  %1446 = vmatprep.subr.bf16.mxu0 0
  %1447 = vmatpush1.bf16.msra.mxu0 0
  %1448 = vmatprep.subr.bf16.mxu0 0
  %1449 = vmatpush1.bf16.msra.mxu0 0
  %1450 = vmatprep.subr.bf16.mxu0 0
  %1451 = vmatpush1.bf16.msra.mxu0 0
  %1452 = vmatprep.subr.bf16.mxu0 0
  %1453 = vmatpush1.bf16.msra.mxu0 0
  %1454 = vmatprep.subr.bf16.mxu0 0
  %1455 = vmatpush1.bf16.msra.mxu0 0
  %1456 = vmatprep.subr.bf16.mxu0 0
  %1457 = vmatpush1.bf16.msra.mxu0 0
  %1458 = vmatprep.subr.bf16.mxu0 0
  %1459 = vmatpush1.bf16.msra.mxu0 %v1442
  %1460 = vmatprep.subr.bf16.mxu0 0
  %1461 = vmatpush2.bf16.msra.mxu0 0
  %1462 = vmatprep.subr.bf16.mxu0 0
  %1463 = vmatpush2.bf16.msra.mxu0 0
  %1464 = vmatprep.subr.bf16.mxu0 0
  %1465 = vmatpush2.bf16.msra.mxu0 0
  %1466 = vmatprep.subr.bf16.mxu0 0
  %1467 = vmatpush2.bf16.msra.mxu0 0
  %1468 = vmatprep.subr.bf16.mxu0 0
  %1469 = vmatpush2.bf16.msra.mxu0 0
  %1470 = vmatprep.subr.bf16.mxu0 0
  %1471 = vmatpush2.bf16.msra.mxu0 0
  %1472 = vmatprep.subr.bf16.mxu0 0
  %1473 = vmatpush2.bf16.msra.mxu0 0
  %1474 = vmatprep.subr.bf16.mxu0 0
  %1475 = vmatpush2.bf16.msra.mxu0 0
  %1476 = vmatprep.mubr.bf16.mxu0 0
  %1477 = vmatmul.mubr.bf16.gmra.mxu0 %v1439
  %v1478 = vpop.f32.mrf.mxu0
  %v1479 = vadd.f32 0.0, %v1478
  %v1480 = vpop.f32.mrf.mxu0
  %v1481 = vpop.f32.mrf.mxu0
  %v1482 = vpop.f32.mrf.mxu0
  %1483 = vdwg.mxu0
  %v1485 = vsel %vm293, %v1435, 0
  %v1488 = vsel %vm417, %v1437, 0
  %1490 = vmatprep.subr.bf16.mxu0 0
  %1491 = vmatpush1.bf16.msra.mxu0 0
  %1492 = vmatprep.subr.bf16.mxu0 0
  %1493 = vmatpush1.bf16.msra.mxu0 0
  %1494 = vmatprep.subr.bf16.mxu0 0
  %1495 = vmatpush1.bf16.msra.mxu0 0
  %1496 = vmatprep.subr.bf16.mxu0 0
  %1497 = vmatpush1.bf16.msra.mxu0 0
  %1498 = vmatprep.subr.bf16.mxu0 0
  %1499 = vmatpush1.bf16.msra.mxu0 0
  %1500 = vmatprep.subr.bf16.mxu0 0
  %1501 = vmatpush1.bf16.msra.mxu0 0
  %1502 = vmatprep.subr.bf16.mxu0 0
  %1503 = vmatpush1.bf16.msra.mxu0 0
  %1504 = vmatprep.subr.bf16.mxu0 0
  %1505 = vmatpush1.bf16.msra.mxu0 %v1488
  %1506 = vmatprep.subr.bf16.mxu0 0
  %1507 = vmatpush2.bf16.msra.mxu0 0
  %1508 = vmatprep.subr.bf16.mxu0 0
  %1509 = vmatpush2.bf16.msra.mxu0 0
  %1510 = vmatprep.subr.bf16.mxu0 0
  %1511 = vmatpush2.bf16.msra.mxu0 0
  %1512 = vmatprep.subr.bf16.mxu0 0
  %1513 = vmatpush2.bf16.msra.mxu0 0
  %1514 = vmatprep.subr.bf16.mxu0 0
  %1515 = vmatpush2.bf16.msra.mxu0 0
  %1516 = vmatprep.subr.bf16.mxu0 0
  %1517 = vmatpush2.bf16.msra.mxu0 0
  %1518 = vmatprep.subr.bf16.mxu0 0
  %1519 = vmatpush2.bf16.msra.mxu0 0
  %1520 = vmatprep.subr.bf16.mxu0 0
  %1521 = vmatpush2.bf16.msra.mxu0 0
  %1522 = vmatprep.mubr.bf16.mxu0 0
  %1523 = vmatmul.mubr.bf16.gmra.mxu0 %v1485
  %v1524 = vpop.f32.mrf.mxu0
  %v1525 = vadd.f32 0.0, %v1524
  %v1526 = vpop.f32.mrf.mxu0
  %v1527 = vpop.f32.mrf.mxu0
  %v1528 = vpop.f32.mrf.mxu0
  %1529 = vdwg.mxu0
  %v1530 = vpack.c.bf16 %v1525, %v1479
  %s1531 = scalar_lea.vmem %s8, 8
  %v1532 = vld [vmem:[%s1531] sm:$0xf]
  %v1534 = vsel %vm293, %v1530, 0
  %v1537 = vsel %vm417, %v1532, 0
  %1539 = vmatprep.subr.bf16.mxu0 0
  %1540 = vmatpush1.bf16.msra.mxu0 0
  %1541 = vmatprep.subr.bf16.mxu0 0
  %1542 = vmatpush1.bf16.msra.mxu0 0
  %1543 = vmatprep.subr.bf16.mxu0 0
  %1544 = vmatpush1.bf16.msra.mxu0 0
  %1545 = vmatprep.subr.bf16.mxu0 0
  %1546 = vmatpush1.bf16.msra.mxu0 0
  %1547 = vmatprep.subr.bf16.mxu0 0
  %1548 = vmatpush1.bf16.msra.mxu0 0
  %1549 = vmatprep.subr.bf16.mxu0 0
  %1550 = vmatpush1.bf16.msra.mxu0 0
  %1551 = vmatprep.subr.bf16.mxu0 0
  %1552 = vmatpush1.bf16.msra.mxu0 0
  %1553 = vmatprep.subr.bf16.mxu0 0
  %1554 = vmatpush1.bf16.msra.mxu0 %v1537
  %1555 = vmatprep.subr.bf16.mxu0 0
  %1556 = vmatpush2.bf16.msra.mxu0 0
  %1557 = vmatprep.subr.bf16.mxu0 0
  %1558 = vmatpush2.bf16.msra.mxu0 0
  %1559 = vmatprep.subr.bf16.mxu0 0
  %1560 = vmatpush2.bf16.msra.mxu0 0
  %1561 = vmatprep.subr.bf16.mxu0 0
  %1562 = vmatpush2.bf16.msra.mxu0 0
  %1563 = vmatprep.subr.bf16.mxu0 0
  %1564 = vmatpush2.bf16.msra.mxu0 0
  %1565 = vmatprep.subr.bf16.mxu0 0
  %1566 = vmatpush2.bf16.msra.mxu0 0
  %1567 = vmatprep.subr.bf16.mxu0 0
  %1568 = vmatpush2.bf16.msra.mxu0 0
  %1569 = vmatprep.subr.bf16.mxu0 0
  %1570 = vmatpush2.bf16.msra.mxu0 0
  %1571 = vmatprep.mubr.bf16.mxu0 0
  %1572 = vmatmul.mubr.bf16.gmra.mxu0 %v1534
  %v1573 = vpop.f32.mrf.mxu0
  %v1574 = vadd.f32 0.0, %v1573
  %v1575 = vpop.f32.mrf.mxu0
  %v1576 = vpop.f32.mrf.mxu0
  %v1577 = vadd.f32 0.0, %v1576
  %v1578 = vpop.f32.mrf.mxu0
  %1579 = vdwg.mxu0
  %v1580 = vadd.f32 %v1062, %v1574
  %v1581 = vadd.f32 %v1065, %v1577
  %s1582 = scalar_lea.vmem %s2, 96
  %v1583 = vld [vmem:[%s1582] sm:$0xf]
  %v1584 = vld [vmem:[%s1582 + $0x4] sm:$0xf]
  %v1585 = vld [vmem:[%s1582 + $0x8] sm:$0xf]
  %v1586 = vld [vmem:[%s1582 + $0xc] sm:$0xf]
  %v1587 = vld [vmem:[%s1582 + $0x10] sm:$0xf]
  %v1588 = vld [vmem:[%s1582 + $0x14] sm:$0xf]
  %v1589 = vld [vmem:[%s1582 + $0x18] sm:$0xf]
  %v1590 = vld [vmem:[%s1582 + $0x1c] sm:$0xf]
  %s1591 = scalar_lea.vmem %s3, 3
  %v1592 = vld [vmem:[%s1591] sm:$0x1]
  %v1594 = vlaneseq
  %v1595 = vshrl.u32 %v1594, 7
  %v1596 = vsub.s32 0, %v1595
  %v1597 = vrot.slane %v1592, %v1596
  %v1607 = vunpack.c.l.b16 %v1583
  %v1608 = vunpack.c.l.b16 %v1584
  %v1609 = vunpack.c.l.b16 %v1585
  %v1610 = vunpack.c.l.b16 %v1586
  %v1611 = vunpack.c.l.b16 %v1587
  %v1612 = vunpack.c.l.b16 %v1588
  %v1613 = vunpack.c.l.b16 %v1589
  %v1614 = vunpack.c.l.b16 %v1590
  %v1615 = vpack.c.b16 %v1608, %v1607
  %v1616 = vpack.c.b16 %v1610, %v1609
  %v1617 = vpack.c.b16 %v1612, %v1611
  %v1618 = vpack.c.b16 %v1614, %v1613
  %1623 = vmatprep.subr.bf16.mxu0 0
  %1624 = vmatpush1.bf16.msra.mxu0 0
  %1625 = vmatprep.subr.bf16.mxu0 0
  %1626 = vmatpush1.bf16.msra.mxu0 0
  %1627 = vmatprep.subr.bf16.mxu0 0
  %1628 = vmatpush1.bf16.msra.mxu0 0
  %1629 = vmatprep.subr.bf16.mxu0 0
  %1630 = vmatpush1.bf16.msra.mxu0 0
  %1631 = vmatprep.subr.bf16.mxu0 0
  %1632 = vmatpush1.bf16.msra.mxu0 %v1618
  %1633 = vmatprep.subr.bf16.mxu0 0
  %1634 = vmatpush1.bf16.msra.mxu0 %v1617
  %1635 = vmatprep.subr.bf16.mxu0 0
  %1636 = vmatpush1.bf16.msra.mxu0 %v1616
  %1637 = vmatprep.subr.bf16.mxu0 0
  %1638 = vmatpush1.bf16.msra.mxu0 %v1615
  %1639 = vmatprep.subr.bf16.mxu0 0
  %1640 = vmatpush2.bf16.msra.mxu0 0
  %1641 = vmatprep.subr.bf16.mxu0 0
  %1642 = vmatpush2.bf16.msra.mxu0 0
  %1643 = vmatprep.subr.bf16.mxu0 0
  %1644 = vmatpush2.bf16.msra.mxu0 0
  %1645 = vmatprep.subr.bf16.mxu0 0
  %1646 = vmatpush2.bf16.msra.mxu0 0
  %1647 = vmatprep.subr.bf16.mxu0 0
  %1648 = vmatpush2.bf16.msra.mxu0 0
  %1649 = vmatprep.subr.bf16.mxu0 0
  %1650 = vmatpush2.bf16.msra.mxu0 0
  %1651 = vmatprep.subr.bf16.mxu0 0
  %1652 = vmatpush2.bf16.msra.mxu0 0
  %1653 = vmatprep.subr.bf16.mxu0 0
  %1654 = vmatpush2.bf16.msra.mxu0 0
  %1655 = vmatprep.mubr.bf16.mxu0 0
  %1656 = vmatmul.mubr.bf16.gmra.mxu0 %v83
  %v1657 = vpop.f32.mrf.mxu0
  %v1658 = vadd.f32 %v1597, %v1657
  %v1659 = vpop.f32.mrf.mxu0
  %v1660 = vpop.f32.mrf.mxu0
  %v1661 = vadd.f32 %v1597, %v1660
  %v1662 = vpop.f32.mrf.mxu0
  %1663 = vdwg.mxu0
  %s1664 = scalar_lea.vmem %s4, 96
  %v1665 = vld [vmem:[%s1664] sm:$0xf]
  %v1666 = vld [vmem:[%s1664 + $0x4] sm:$0xf]
  %v1667 = vld [vmem:[%s1664 + $0x8] sm:$0xf]
  %v1668 = vld [vmem:[%s1664 + $0xc] sm:$0xf]
  %v1669 = vld [vmem:[%s1664 + $0x10] sm:$0xf]
  %v1670 = vld [vmem:[%s1664 + $0x14] sm:$0xf]
  %v1671 = vld [vmem:[%s1664 + $0x18] sm:$0xf]
  %v1672 = vld [vmem:[%s1664 + $0x1c] sm:$0xf]
  %s1673 = scalar_lea.vmem %s5, 3
  %v1674 = vld [vmem:[%s1673] sm:$0x1]
  %v1676 = vlaneseq
  %v1677 = vshrl.u32 %v1676, 7
  %v1678 = vsub.s32 0, %v1677
  %v1679 = vrot.slane %v1674, %v1678
  %v1689 = vunpack.c.l.b16 %v1665
  %v1690 = vunpack.c.l.b16 %v1666
  %v1691 = vunpack.c.l.b16 %v1667
  %v1692 = vunpack.c.l.b16 %v1668
  %v1693 = vunpack.c.l.b16 %v1669
  %v1694 = vunpack.c.l.b16 %v1670
  %v1695 = vunpack.c.l.b16 %v1671
  %v1696 = vunpack.c.l.b16 %v1672
  %v1697 = vpack.c.b16 %v1690, %v1689
  %v1698 = vpack.c.b16 %v1692, %v1691
  %v1699 = vpack.c.b16 %v1694, %v1693
  %v1700 = vpack.c.b16 %v1696, %v1695
  %1705 = vmatprep.subr.bf16.mxu0 0
  %1706 = vmatpush1.bf16.msra.mxu0 0
  %1707 = vmatprep.subr.bf16.mxu0 0
  %1708 = vmatpush1.bf16.msra.mxu0 0
  %1709 = vmatprep.subr.bf16.mxu0 0
  %1710 = vmatpush1.bf16.msra.mxu0 0
  %1711 = vmatprep.subr.bf16.mxu0 0
  %1712 = vmatpush1.bf16.msra.mxu0 0
  %1713 = vmatprep.subr.bf16.mxu0 0
  %1714 = vmatpush1.bf16.msra.mxu0 %v1700
  %1715 = vmatprep.subr.bf16.mxu0 0
  %1716 = vmatpush1.bf16.msra.mxu0 %v1699
  %1717 = vmatprep.subr.bf16.mxu0 0
  %1718 = vmatpush1.bf16.msra.mxu0 %v1698
  %1719 = vmatprep.subr.bf16.mxu0 0
  %1720 = vmatpush1.bf16.msra.mxu0 %v1697
  %1721 = vmatprep.subr.bf16.mxu0 0
  %1722 = vmatpush2.bf16.msra.mxu0 0
  %1723 = vmatprep.subr.bf16.mxu0 0
  %1724 = vmatpush2.bf16.msra.mxu0 0
  %1725 = vmatprep.subr.bf16.mxu0 0
  %1726 = vmatpush2.bf16.msra.mxu0 0
  %1727 = vmatprep.subr.bf16.mxu0 0
  %1728 = vmatpush2.bf16.msra.mxu0 0
  %1729 = vmatprep.subr.bf16.mxu0 0
  %1730 = vmatpush2.bf16.msra.mxu0 0
  %1731 = vmatprep.subr.bf16.mxu0 0
  %1732 = vmatpush2.bf16.msra.mxu0 0
  %1733 = vmatprep.subr.bf16.mxu0 0
  %1734 = vmatpush2.bf16.msra.mxu0 0
  %1735 = vmatprep.subr.bf16.mxu0 0
  %1736 = vmatpush2.bf16.msra.mxu0 0
  %1737 = vmatprep.mubr.bf16.mxu0 0
  %1738 = vmatmul.mubr.bf16.gmra.mxu0 %v166
  %v1739 = vpop.f32.mrf.mxu0
  %v1740 = vadd.f32 %v1679, %v1739
  %v1741 = vpop.f32.mrf.mxu0
  %v1742 = vpop.f32.mrf.mxu0
  %v1743 = vadd.f32 %v1679, %v1742
  %v1744 = vpop.f32.mrf.mxu0
  %1745 = vdwg.mxu0
  %s1746 = scalar_lea.vmem %s6, 96
  %v1747 = vld [vmem:[%s1746] sm:$0xf]
  %v1748 = vld [vmem:[%s1746 + $0x4] sm:$0xf]
  %v1749 = vld [vmem:[%s1746 + $0x8] sm:$0xf]
  %v1750 = vld [vmem:[%s1746 + $0xc] sm:$0xf]
  %v1751 = vld [vmem:[%s1746 + $0x10] sm:$0xf]
  %v1752 = vld [vmem:[%s1746 + $0x14] sm:$0xf]
  %v1753 = vld [vmem:[%s1746 + $0x18] sm:$0xf]
  %v1754 = vld [vmem:[%s1746 + $0x1c] sm:$0xf]
  %s1755 = scalar_lea.vmem %s7, 3
  %v1756 = vld [vmem:[%s1755] sm:$0x1]
  %v1758 = vlaneseq
  %v1759 = vshrl.u32 %v1758, 7
  %v1760 = vsub.s32 0, %v1759
  %v1761 = vrot.slane %v1756, %v1760
  %v1771 = vunpack.c.l.b16 %v1747
  %v1772 = vunpack.c.l.b16 %v1748
  %v1773 = vunpack.c.l.b16 %v1749
  %v1774 = vunpack.c.l.b16 %v1750
  %v1775 = vunpack.c.l.b16 %v1751
  %v1776 = vunpack.c.l.b16 %v1752
  %v1777 = vunpack.c.l.b16 %v1753
  %v1778 = vunpack.c.l.b16 %v1754
  %v1779 = vpack.c.b16 %v1772, %v1771
  %v1780 = vpack.c.b16 %v1774, %v1773
  %v1781 = vpack.c.b16 %v1776, %v1775
  %v1782 = vpack.c.b16 %v1778, %v1777
  %1787 = vmatprep.subr.bf16.mxu0 0
  %1788 = vmatpush1.bf16.msra.mxu0 0
  %1789 = vmatprep.subr.bf16.mxu0 0
  %1790 = vmatpush1.bf16.msra.mxu0 0
  %1791 = vmatprep.subr.bf16.mxu0 0
  %1792 = vmatpush1.bf16.msra.mxu0 0
  %1793 = vmatprep.subr.bf16.mxu0 0
  %1794 = vmatpush1.bf16.msra.mxu0 0
  %1795 = vmatprep.subr.bf16.mxu0 0
  %1796 = vmatpush1.bf16.msra.mxu0 %v1782
  %1797 = vmatprep.subr.bf16.mxu0 0
  %1798 = vmatpush1.bf16.msra.mxu0 %v1781
  %1799 = vmatprep.subr.bf16.mxu0 0
  %1800 = vmatpush1.bf16.msra.mxu0 %v1780
  %1801 = vmatprep.subr.bf16.mxu0 0
  %1802 = vmatpush1.bf16.msra.mxu0 %v1779
  %1803 = vmatprep.subr.bf16.mxu0 0
  %1804 = vmatpush2.bf16.msra.mxu0 0
  %1805 = vmatprep.subr.bf16.mxu0 0
  %1806 = vmatpush2.bf16.msra.mxu0 0
  %1807 = vmatprep.subr.bf16.mxu0 0
  %1808 = vmatpush2.bf16.msra.mxu0 0
  %1809 = vmatprep.subr.bf16.mxu0 0
  %1810 = vmatpush2.bf16.msra.mxu0 0
  %1811 = vmatprep.subr.bf16.mxu0 0
  %1812 = vmatpush2.bf16.msra.mxu0 0
  %1813 = vmatprep.subr.bf16.mxu0 0
  %1814 = vmatpush2.bf16.msra.mxu0 0
  %1815 = vmatprep.subr.bf16.mxu0 0
  %1816 = vmatpush2.bf16.msra.mxu0 0
  %1817 = vmatprep.subr.bf16.mxu0 0
  %1818 = vmatpush2.bf16.msra.mxu0 0
  %1819 = vmatprep.mubr.bf16.mxu0 0
  %1820 = vmatmul.mubr.bf16.gmra.mxu0 %v166
  %v1821 = vpop.f32.mrf.mxu0
  %v1822 = vadd.f32 %v1761, %v1821
  %v1823 = vpop.f32.mrf.mxu0
  %v1824 = vpop.f32.mrf.mxu0
  %v1825 = vadd.f32 %v1761, %v1824
  %v1826 = vpop.f32.mrf.mxu0
  %1827 = vdwg.mxu0
  %v1828 = vpack.c.bf16 %v1658, %v1658
  %v1829 = vpack.c.bf16 %v1661, %v1661
  %v1830 = vpack.c.bf16 %v1740, %v1740
  %v1831 = vpack.c.bf16 %v1743, %v1743
  %v1833 = vsel %vm293, %v1828, 0
  %v1836 = vsel %vm293, %v1830, 0
  %1838 = vmatprep.subr.bf16.mxu0 0
  %1839 = vmatpush1.bf16.xpose.msra.mxu0 0
  %1840 = vmatprep.subr.bf16.mxu0 0
  %1841 = vmatpush1.bf16.xpose.msra.mxu0 0
  %1842 = vmatprep.subr.bf16.mxu0 0
  %1843 = vmatpush1.bf16.xpose.msra.mxu0 0
  %1844 = vmatprep.subr.bf16.mxu0 0
  %1845 = vmatpush1.bf16.xpose.msra.mxu0 0
  %1846 = vmatprep.subr.bf16.mxu0 0
  %1847 = vmatpush1.bf16.xpose.msra.mxu0 0
  %1848 = vmatprep.subr.bf16.mxu0 0
  %1849 = vmatpush1.bf16.xpose.msra.mxu0 0
  %1850 = vmatprep.subr.bf16.mxu0 0
  %1851 = vmatpush1.bf16.xpose.msra.mxu0 0
  %1852 = vmatprep.subr.bf16.mxu0 0
  %1853 = vmatpush1.bf16.xpose.msra.mxu0 %v1836
  %1854 = vmatprep.subr.bf16.mxu0 0
  %1855 = vmatpush2.bf16.xpose.msra.mxu0 0
  %1856 = vmatprep.subr.bf16.mxu0 0
  %1857 = vmatpush2.bf16.xpose.msra.mxu0 0
  %1858 = vmatprep.subr.bf16.mxu0 0
  %1859 = vmatpush2.bf16.xpose.msra.mxu0 0
  %1860 = vmatprep.subr.bf16.mxu0 0
  %1861 = vmatpush2.bf16.xpose.msra.mxu0 0
  %1862 = vmatprep.subr.bf16.mxu0 0
  %1863 = vmatpush2.bf16.xpose.msra.mxu0 0
  %1864 = vmatprep.subr.bf16.mxu0 0
  %1865 = vmatpush2.bf16.xpose.msra.mxu0 0
  %1866 = vmatprep.subr.bf16.mxu0 0
  %1867 = vmatpush2.bf16.xpose.msra.mxu0 0
  %1868 = vmatprep.subr.bf16.mxu0 0
  %1869 = vmatpush2.bf16.xpose.msra.mxu0 0
  %1870 = vmatprep.mubr.bf16.mxu0 0
  %1871 = vmatmul.mubr.bf16.gmra.mxu0 %v1833
  %v1872 = vpop.f32.mrf.mxu0
  %v1873 = vadd.f32 0.0, %v1872
  %v1874 = vpop.f32.mrf.mxu0
  %v1875 = vpop.f32.mrf.mxu0
  %v1876 = vpop.f32.mrf.mxu0
  %1877 = vdwg.mxu0
  %v1879 = vsel %vm293, %v1829, 0
  %v1882 = vsel %vm293, %v1831, 0
  %1884 = vmatprep.subr.bf16.mxu0 0
  %1885 = vmatpush1.bf16.xpose.msra.mxu0 0
  %1886 = vmatprep.subr.bf16.mxu0 0
  %1887 = vmatpush1.bf16.xpose.msra.mxu0 0
  %1888 = vmatprep.subr.bf16.mxu0 0
  %1889 = vmatpush1.bf16.xpose.msra.mxu0 0
  %1890 = vmatprep.subr.bf16.mxu0 0
  %1891 = vmatpush1.bf16.xpose.msra.mxu0 0
  %1892 = vmatprep.subr.bf16.mxu0 0
  %1893 = vmatpush1.bf16.xpose.msra.mxu0 0
  %1894 = vmatprep.subr.bf16.mxu0 0
  %1895 = vmatpush1.bf16.xpose.msra.mxu0 0
  %1896 = vmatprep.subr.bf16.mxu0 0
  %1897 = vmatpush1.bf16.xpose.msra.mxu0 0
  %1898 = vmatprep.subr.bf16.mxu0 0
  %1899 = vmatpush1.bf16.xpose.msra.mxu0 %v1882
  %1900 = vmatprep.subr.bf16.mxu0 0
  %1901 = vmatpush2.bf16.xpose.msra.mxu0 0
  %1902 = vmatprep.subr.bf16.mxu0 0
  %1903 = vmatpush2.bf16.xpose.msra.mxu0 0
  %1904 = vmatprep.subr.bf16.mxu0 0
  %1905 = vmatpush2.bf16.xpose.msra.mxu0 0
  %1906 = vmatprep.subr.bf16.mxu0 0
  %1907 = vmatpush2.bf16.xpose.msra.mxu0 0
  %1908 = vmatprep.subr.bf16.mxu0 0
  %1909 = vmatpush2.bf16.xpose.msra.mxu0 0
  %1910 = vmatprep.subr.bf16.mxu0 0
  %1911 = vmatpush2.bf16.xpose.msra.mxu0 0
  %1912 = vmatprep.subr.bf16.mxu0 0
  %1913 = vmatpush2.bf16.xpose.msra.mxu0 0
  %1914 = vmatprep.subr.bf16.mxu0 0
  %1915 = vmatpush2.bf16.xpose.msra.mxu0 0
  %1916 = vmatprep.mubr.bf16.mxu0 0
  %1917 = vmatmul.mubr.bf16.gmra.mxu0 %v1879
  %v1918 = vpop.f32.mrf.mxu0
  %v1919 = vadd.f32 0.0, %v1918
  %v1920 = vpop.f32.mrf.mxu0
  %v1921 = vpop.f32.mrf.mxu0
  %v1922 = vpop.f32.mrf.mxu0
  %1923 = vdwg.mxu0
  %v1924 = vmul.f32 %v1873, 0.35355338
  %v1925 = vmul.f32 %v1919, 0.35355338
  %v1926 = vsel %vm293, %v1924, -inf
  %1927 = vmax.xlane.f32.xlu0 %v1926
  %v1928 = vpop.xlane.xlu0 %1927
  %v1929 = vsel %vm293, %v1925, -inf
  %1930 = vmax.xlane.f32.xlu0 %v1929
  %v1931 = vpop.xlane.xlu0 %1930
  %v1932 = vsub.f32 %v1924, %v1928
  %v1933 = vsub.f32 %v1925, %v1931
  %v1934 = vmul.f32 %v1932, 1.442695
  %v1935 = vpow.pop %v1934
  %v1936 = vmul.f32 %v1933, 1.442695
  %v1937 = vpow.pop %v1936
  %v1938 = vsel %vm293, %v1935, 0.0
  %1939 = vadd.xlane.f32.xlu0 %v1938
  %v1940 = vpop.xlane.xlu0 %1939
  %v1941 = vsel %vm293, %v1937, 0.0
  %1942 = vadd.xlane.f32.xlu0 %v1941
  %v1943 = vpop.xlane.xlu0 %1942
  %v1944 = vrcp.pop %v1940
  %v1945 = vrcp.pop %v1943
  %v1946 = vmul.f32 %v1935, %v1944
  %v1947 = vmul.f32 %v1937, %v1945
  %v1948 = vpack.c.bf16 %v1946, %v1946
  %v1949 = vpack.c.bf16 %v1947, %v1947
  %v1950 = vpack.c.bf16 %v1822, %v1822
  %v1951 = vpack.c.bf16 %v1825, %v1825
  %v1953 = vsel %vm293, %v1948, 0
  %v1956 = vsel %vm417, %v1950, 0
  %1958 = vmatprep.subr.bf16.mxu0 0
  %1959 = vmatpush1.bf16.msra.mxu0 0
  %1960 = vmatprep.subr.bf16.mxu0 0
  %1961 = vmatpush1.bf16.msra.mxu0 0
  %1962 = vmatprep.subr.bf16.mxu0 0
  %1963 = vmatpush1.bf16.msra.mxu0 0
  %1964 = vmatprep.subr.bf16.mxu0 0
  %1965 = vmatpush1.bf16.msra.mxu0 0
  %1966 = vmatprep.subr.bf16.mxu0 0
  %1967 = vmatpush1.bf16.msra.mxu0 0
  %1968 = vmatprep.subr.bf16.mxu0 0
  %1969 = vmatpush1.bf16.msra.mxu0 0
  %1970 = vmatprep.subr.bf16.mxu0 0
  %1971 = vmatpush1.bf16.msra.mxu0 0
  %1972 = vmatprep.subr.bf16.mxu0 0
  %1973 = vmatpush1.bf16.msra.mxu0 %v1956
  %1974 = vmatprep.subr.bf16.mxu0 0
  %1975 = vmatpush2.bf16.msra.mxu0 0
  %1976 = vmatprep.subr.bf16.mxu0 0
  %1977 = vmatpush2.bf16.msra.mxu0 0
  %1978 = vmatprep.subr.bf16.mxu0 0
  %1979 = vmatpush2.bf16.msra.mxu0 0
  %1980 = vmatprep.subr.bf16.mxu0 0
  %1981 = vmatpush2.bf16.msra.mxu0 0
  %1982 = vmatprep.subr.bf16.mxu0 0
  %1983 = vmatpush2.bf16.msra.mxu0 0
  %1984 = vmatprep.subr.bf16.mxu0 0
  %1985 = vmatpush2.bf16.msra.mxu0 0
  %1986 = vmatprep.subr.bf16.mxu0 0
  %1987 = vmatpush2.bf16.msra.mxu0 0
  %1988 = vmatprep.subr.bf16.mxu0 0
  %1989 = vmatpush2.bf16.msra.mxu0 0
  %1990 = vmatprep.mubr.bf16.mxu0 0
  %1991 = vmatmul.mubr.bf16.gmra.mxu0 %v1953
  %v1992 = vpop.f32.mrf.mxu0
  %v1993 = vadd.f32 0.0, %v1992
  %v1994 = vpop.f32.mrf.mxu0
  %v1995 = vpop.f32.mrf.mxu0
  %v1996 = vpop.f32.mrf.mxu0
  %1997 = vdwg.mxu0
  %v1999 = vsel %vm293, %v1949, 0
  %v2002 = vsel %vm417, %v1951, 0
  %2004 = vmatprep.subr.bf16.mxu0 0
  %2005 = vmatpush1.bf16.msra.mxu0 0
  %2006 = vmatprep.subr.bf16.mxu0 0
  %2007 = vmatpush1.bf16.msra.mxu0 0
  %2008 = vmatprep.subr.bf16.mxu0 0
  %2009 = vmatpush1.bf16.msra.mxu0 0
  %2010 = vmatprep.subr.bf16.mxu0 0
  %2011 = vmatpush1.bf16.msra.mxu0 0
  %2012 = vmatprep.subr.bf16.mxu0 0
  %2013 = vmatpush1.bf16.msra.mxu0 0
  %2014 = vmatprep.subr.bf16.mxu0 0
  %2015 = vmatpush1.bf16.msra.mxu0 0
  %2016 = vmatprep.subr.bf16.mxu0 0
  %2017 = vmatpush1.bf16.msra.mxu0 0
  %2018 = vmatprep.subr.bf16.mxu0 0
  %2019 = vmatpush1.bf16.msra.mxu0 %v2002
  %2020 = vmatprep.subr.bf16.mxu0 0
  %2021 = vmatpush2.bf16.msra.mxu0 0
  %2022 = vmatprep.subr.bf16.mxu0 0
  %2023 = vmatpush2.bf16.msra.mxu0 0
  %2024 = vmatprep.subr.bf16.mxu0 0
  %2025 = vmatpush2.bf16.msra.mxu0 0
  %2026 = vmatprep.subr.bf16.mxu0 0
  %2027 = vmatpush2.bf16.msra.mxu0 0
  %2028 = vmatprep.subr.bf16.mxu0 0
  %2029 = vmatpush2.bf16.msra.mxu0 0
  %2030 = vmatprep.subr.bf16.mxu0 0
  %2031 = vmatpush2.bf16.msra.mxu0 0
  %2032 = vmatprep.subr.bf16.mxu0 0
  %2033 = vmatpush2.bf16.msra.mxu0 0
  %2034 = vmatprep.subr.bf16.mxu0 0
  %2035 = vmatpush2.bf16.msra.mxu0 0
  %2036 = vmatprep.mubr.bf16.mxu0 0
  %2037 = vmatmul.mubr.bf16.gmra.mxu0 %v1999
  %v2038 = vpop.f32.mrf.mxu0
  %v2039 = vadd.f32 0.0, %v2038
  %v2040 = vpop.f32.mrf.mxu0
  %v2041 = vpop.f32.mrf.mxu0
  %v2042 = vpop.f32.mrf.mxu0
  %2043 = vdwg.mxu0
  %v2044 = vpack.c.bf16 %v2039, %v1993
  %s2045 = scalar_lea.vmem %s8, 12
  %v2046 = vld [vmem:[%s2045] sm:$0xf]
  %v2048 = vsel %vm293, %v2044, 0
  %v2051 = vsel %vm417, %v2046, 0
  %2053 = vmatprep.subr.bf16.mxu0 0
  %2054 = vmatpush1.bf16.msra.mxu0 0
  %2055 = vmatprep.subr.bf16.mxu0 0
  %2056 = vmatpush1.bf16.msra.mxu0 0
  %2057 = vmatprep.subr.bf16.mxu0 0
  %2058 = vmatpush1.bf16.msra.mxu0 0
  %2059 = vmatprep.subr.bf16.mxu0 0
  %2060 = vmatpush1.bf16.msra.mxu0 0
  %2061 = vmatprep.subr.bf16.mxu0 0
  %2062 = vmatpush1.bf16.msra.mxu0 0
  %2063 = vmatprep.subr.bf16.mxu0 0
  %2064 = vmatpush1.bf16.msra.mxu0 0
  %2065 = vmatprep.subr.bf16.mxu0 0
  %2066 = vmatpush1.bf16.msra.mxu0 0
  %2067 = vmatprep.subr.bf16.mxu0 0
  %2068 = vmatpush1.bf16.msra.mxu0 %v2051
  %2069 = vmatprep.subr.bf16.mxu0 0
  %2070 = vmatpush2.bf16.msra.mxu0 0
  %2071 = vmatprep.subr.bf16.mxu0 0
  %2072 = vmatpush2.bf16.msra.mxu0 0
  %2073 = vmatprep.subr.bf16.mxu0 0
  %2074 = vmatpush2.bf16.msra.mxu0 0
  %2075 = vmatprep.subr.bf16.mxu0 0
  %2076 = vmatpush2.bf16.msra.mxu0 0
  %2077 = vmatprep.subr.bf16.mxu0 0
  %2078 = vmatpush2.bf16.msra.mxu0 0
  %2079 = vmatprep.subr.bf16.mxu0 0
  %2080 = vmatpush2.bf16.msra.mxu0 0
  %2081 = vmatprep.subr.bf16.mxu0 0
  %2082 = vmatpush2.bf16.msra.mxu0 0
  %2083 = vmatprep.subr.bf16.mxu0 0
  %2084 = vmatpush2.bf16.msra.mxu0 0
  %2085 = vmatprep.mubr.bf16.mxu0 0
  %2086 = vmatmul.mubr.bf16.gmra.mxu0 %v2048
  %v2087 = vpop.f32.mrf.mxu0
  %v2088 = vadd.f32 0.0, %v2087
  %v2089 = vpop.f32.mrf.mxu0
  %v2090 = vpop.f32.mrf.mxu0
  %v2091 = vadd.f32 0.0, %v2090
  %v2092 = vpop.f32.mrf.mxu0
  %2093 = vdwg.mxu0
  %v2094 = vadd.f32 %v1580, %v2088
  %v2095 = vadd.f32 %v1581, %v2091
  %s2096 = scalar_lea.vmem %s2, 128
  %v2097 = vld [vmem:[%s2096] sm:$0xf]
  %v2098 = vld [vmem:[%s2096 + $0x4] sm:$0xf]
  %v2099 = vld [vmem:[%s2096 + $0x8] sm:$0xf]
  %v2100 = vld [vmem:[%s2096 + $0xc] sm:$0xf]
  %v2101 = vld [vmem:[%s2096 + $0x10] sm:$0xf]
  %v2102 = vld [vmem:[%s2096 + $0x14] sm:$0xf]
  %v2103 = vld [vmem:[%s2096 + $0x18] sm:$0xf]
  %v2104 = vld [vmem:[%s2096 + $0x1c] sm:$0xf]
  %s2105 = scalar_lea.vmem %s3, 4
  %v2106 = vld [vmem:[%s2105] sm:$0x1]
  %v2108 = vlaneseq
  %v2109 = vshrl.u32 %v2108, 7
  %v2110 = vsub.s32 0, %v2109
  %v2111 = vrot.slane %v2106, %v2110
  %v2121 = vunpack.c.l.b16 %v2097
  %v2122 = vunpack.c.l.b16 %v2098
  %v2123 = vunpack.c.l.b16 %v2099
  %v2124 = vunpack.c.l.b16 %v2100
  %v2125 = vunpack.c.l.b16 %v2101
  %v2126 = vunpack.c.l.b16 %v2102
  %v2127 = vunpack.c.l.b16 %v2103
  %v2128 = vunpack.c.l.b16 %v2104
  %v2129 = vpack.c.b16 %v2122, %v2121
  %v2130 = vpack.c.b16 %v2124, %v2123
  %v2131 = vpack.c.b16 %v2126, %v2125
  %v2132 = vpack.c.b16 %v2128, %v2127
  %2137 = vmatprep.subr.bf16.mxu0 0
  %2138 = vmatpush1.bf16.msra.mxu0 0
  %2139 = vmatprep.subr.bf16.mxu0 0
  %2140 = vmatpush1.bf16.msra.mxu0 0
  %2141 = vmatprep.subr.bf16.mxu0 0
  %2142 = vmatpush1.bf16.msra.mxu0 0
  %2143 = vmatprep.subr.bf16.mxu0 0
  %2144 = vmatpush1.bf16.msra.mxu0 0
  %2145 = vmatprep.subr.bf16.mxu0 0
  %2146 = vmatpush1.bf16.msra.mxu0 %v2132
  %2147 = vmatprep.subr.bf16.mxu0 0
  %2148 = vmatpush1.bf16.msra.mxu0 %v2131
  %2149 = vmatprep.subr.bf16.mxu0 0
  %2150 = vmatpush1.bf16.msra.mxu0 %v2130
  %2151 = vmatprep.subr.bf16.mxu0 0
  %2152 = vmatpush1.bf16.msra.mxu0 %v2129
  %2153 = vmatprep.subr.bf16.mxu0 0
  %2154 = vmatpush2.bf16.msra.mxu0 0
  %2155 = vmatprep.subr.bf16.mxu0 0
  %2156 = vmatpush2.bf16.msra.mxu0 0
  %2157 = vmatprep.subr.bf16.mxu0 0
  %2158 = vmatpush2.bf16.msra.mxu0 0
  %2159 = vmatprep.subr.bf16.mxu0 0
  %2160 = vmatpush2.bf16.msra.mxu0 0
  %2161 = vmatprep.subr.bf16.mxu0 0
  %2162 = vmatpush2.bf16.msra.mxu0 0
  %2163 = vmatprep.subr.bf16.mxu0 0
  %2164 = vmatpush2.bf16.msra.mxu0 0
  %2165 = vmatprep.subr.bf16.mxu0 0
  %2166 = vmatpush2.bf16.msra.mxu0 0
  %2167 = vmatprep.subr.bf16.mxu0 0
  %2168 = vmatpush2.bf16.msra.mxu0 0
  %2169 = vmatprep.mubr.bf16.mxu0 0
  %2170 = vmatmul.mubr.bf16.gmra.mxu0 %v83
  %v2171 = vpop.f32.mrf.mxu0
  %v2172 = vadd.f32 %v2111, %v2171
  %v2173 = vpop.f32.mrf.mxu0
  %v2174 = vpop.f32.mrf.mxu0
  %v2175 = vadd.f32 %v2111, %v2174
  %v2176 = vpop.f32.mrf.mxu0
  %2177 = vdwg.mxu0
  %s2178 = scalar_lea.vmem %s4, 128
  %v2179 = vld [vmem:[%s2178] sm:$0xf]
  %v2180 = vld [vmem:[%s2178 + $0x4] sm:$0xf]
  %v2181 = vld [vmem:[%s2178 + $0x8] sm:$0xf]
  %v2182 = vld [vmem:[%s2178 + $0xc] sm:$0xf]
  %v2183 = vld [vmem:[%s2178 + $0x10] sm:$0xf]
  %v2184 = vld [vmem:[%s2178 + $0x14] sm:$0xf]
  %v2185 = vld [vmem:[%s2178 + $0x18] sm:$0xf]
  %v2186 = vld [vmem:[%s2178 + $0x1c] sm:$0xf]
  %s2187 = scalar_lea.vmem %s5, 4
  %v2188 = vld [vmem:[%s2187] sm:$0x1]
  %v2190 = vlaneseq
  %v2191 = vshrl.u32 %v2190, 7
  %v2192 = vsub.s32 0, %v2191
  %v2193 = vrot.slane %v2188, %v2192
  %v2203 = vunpack.c.l.b16 %v2179
  %v2204 = vunpack.c.l.b16 %v2180
  %v2205 = vunpack.c.l.b16 %v2181
  %v2206 = vunpack.c.l.b16 %v2182
  %v2207 = vunpack.c.l.b16 %v2183
  %v2208 = vunpack.c.l.b16 %v2184
  %v2209 = vunpack.c.l.b16 %v2185
  %v2210 = vunpack.c.l.b16 %v2186
  %v2211 = vpack.c.b16 %v2204, %v2203
  %v2212 = vpack.c.b16 %v2206, %v2205
  %v2213 = vpack.c.b16 %v2208, %v2207
  %v2214 = vpack.c.b16 %v2210, %v2209
  %2219 = vmatprep.subr.bf16.mxu0 0
  %2220 = vmatpush1.bf16.msra.mxu0 0
  %2221 = vmatprep.subr.bf16.mxu0 0
  %2222 = vmatpush1.bf16.msra.mxu0 0
  %2223 = vmatprep.subr.bf16.mxu0 0
  %2224 = vmatpush1.bf16.msra.mxu0 0
  %2225 = vmatprep.subr.bf16.mxu0 0
  %2226 = vmatpush1.bf16.msra.mxu0 0
  %2227 = vmatprep.subr.bf16.mxu0 0
  %2228 = vmatpush1.bf16.msra.mxu0 %v2214
  %2229 = vmatprep.subr.bf16.mxu0 0
  %2230 = vmatpush1.bf16.msra.mxu0 %v2213
  %2231 = vmatprep.subr.bf16.mxu0 0
  %2232 = vmatpush1.bf16.msra.mxu0 %v2212
  %2233 = vmatprep.subr.bf16.mxu0 0
  %2234 = vmatpush1.bf16.msra.mxu0 %v2211
  %2235 = vmatprep.subr.bf16.mxu0 0
  %2236 = vmatpush2.bf16.msra.mxu0 0
  %2237 = vmatprep.subr.bf16.mxu0 0
  %2238 = vmatpush2.bf16.msra.mxu0 0
  %2239 = vmatprep.subr.bf16.mxu0 0
  %2240 = vmatpush2.bf16.msra.mxu0 0
  %2241 = vmatprep.subr.bf16.mxu0 0
  %2242 = vmatpush2.bf16.msra.mxu0 0
  %2243 = vmatprep.subr.bf16.mxu0 0
  %2244 = vmatpush2.bf16.msra.mxu0 0
  %2245 = vmatprep.subr.bf16.mxu0 0
  %2246 = vmatpush2.bf16.msra.mxu0 0
  %2247 = vmatprep.subr.bf16.mxu0 0
  %2248 = vmatpush2.bf16.msra.mxu0 0
  %2249 = vmatprep.subr.bf16.mxu0 0
  %2250 = vmatpush2.bf16.msra.mxu0 0
  %2251 = vmatprep.mubr.bf16.mxu0 0
  %2252 = vmatmul.mubr.bf16.gmra.mxu0 %v166
  %v2253 = vpop.f32.mrf.mxu0
  %v2254 = vadd.f32 %v2193, %v2253
  %v2255 = vpop.f32.mrf.mxu0
  %v2256 = vpop.f32.mrf.mxu0
  %v2257 = vadd.f32 %v2193, %v2256
  %v2258 = vpop.f32.mrf.mxu0
  %2259 = vdwg.mxu0
  %s2260 = scalar_lea.vmem %s6, 128
  %v2261 = vld [vmem:[%s2260] sm:$0xf]
  %v2262 = vld [vmem:[%s2260 + $0x4] sm:$0xf]
  %v2263 = vld [vmem:[%s2260 + $0x8] sm:$0xf]
  %v2264 = vld [vmem:[%s2260 + $0xc] sm:$0xf]
  %v2265 = vld [vmem:[%s2260 + $0x10] sm:$0xf]
  %v2266 = vld [vmem:[%s2260 + $0x14] sm:$0xf]
  %v2267 = vld [vmem:[%s2260 + $0x18] sm:$0xf]
  %v2268 = vld [vmem:[%s2260 + $0x1c] sm:$0xf]
  %s2269 = scalar_lea.vmem %s7, 4
  %v2270 = vld [vmem:[%s2269] sm:$0x1]
  %v2272 = vlaneseq
  %v2273 = vshrl.u32 %v2272, 7
  %v2274 = vsub.s32 0, %v2273
  %v2275 = vrot.slane %v2270, %v2274
  %v2285 = vunpack.c.l.b16 %v2261
  %v2286 = vunpack.c.l.b16 %v2262
  %v2287 = vunpack.c.l.b16 %v2263
  %v2288 = vunpack.c.l.b16 %v2264
  %v2289 = vunpack.c.l.b16 %v2265
  %v2290 = vunpack.c.l.b16 %v2266
  %v2291 = vunpack.c.l.b16 %v2267
  %v2292 = vunpack.c.l.b16 %v2268
  %v2293 = vpack.c.b16 %v2286, %v2285
  %v2294 = vpack.c.b16 %v2288, %v2287
  %v2295 = vpack.c.b16 %v2290, %v2289
  %v2296 = vpack.c.b16 %v2292, %v2291
  %2301 = vmatprep.subr.bf16.mxu0 0
  %2302 = vmatpush1.bf16.msra.mxu0 0
  %2303 = vmatprep.subr.bf16.mxu0 0
  %2304 = vmatpush1.bf16.msra.mxu0 0
  %2305 = vmatprep.subr.bf16.mxu0 0
  %2306 = vmatpush1.bf16.msra.mxu0 0
  %2307 = vmatprep.subr.bf16.mxu0 0
  %2308 = vmatpush1.bf16.msra.mxu0 0
  %2309 = vmatprep.subr.bf16.mxu0 0
  %2310 = vmatpush1.bf16.msra.mxu0 %v2296
  %2311 = vmatprep.subr.bf16.mxu0 0
  %2312 = vmatpush1.bf16.msra.mxu0 %v2295
  %2313 = vmatprep.subr.bf16.mxu0 0
  %2314 = vmatpush1.bf16.msra.mxu0 %v2294
  %2315 = vmatprep.subr.bf16.mxu0 0
  %2316 = vmatpush1.bf16.msra.mxu0 %v2293
  %2317 = vmatprep.subr.bf16.mxu0 0
  %2318 = vmatpush2.bf16.msra.mxu0 0
  %2319 = vmatprep.subr.bf16.mxu0 0
  %2320 = vmatpush2.bf16.msra.mxu0 0
  %2321 = vmatprep.subr.bf16.mxu0 0
  %2322 = vmatpush2.bf16.msra.mxu0 0
  %2323 = vmatprep.subr.bf16.mxu0 0
  %2324 = vmatpush2.bf16.msra.mxu0 0
  %2325 = vmatprep.subr.bf16.mxu0 0
  %2326 = vmatpush2.bf16.msra.mxu0 0
  %2327 = vmatprep.subr.bf16.mxu0 0
  %2328 = vmatpush2.bf16.msra.mxu0 0
  %2329 = vmatprep.subr.bf16.mxu0 0
  %2330 = vmatpush2.bf16.msra.mxu0 0
  %2331 = vmatprep.subr.bf16.mxu0 0
  %2332 = vmatpush2.bf16.msra.mxu0 0
  %2333 = vmatprep.mubr.bf16.mxu0 0
  %2334 = vmatmul.mubr.bf16.gmra.mxu0 %v166
  %v2335 = vpop.f32.mrf.mxu0
  %v2336 = vadd.f32 %v2275, %v2335
  %v2337 = vpop.f32.mrf.mxu0
  %v2338 = vpop.f32.mrf.mxu0
  %v2339 = vadd.f32 %v2275, %v2338
  %v2340 = vpop.f32.mrf.mxu0
  %2341 = vdwg.mxu0
  %v2342 = vpack.c.bf16 %v2172, %v2172
  %v2343 = vpack.c.bf16 %v2175, %v2175
  %v2344 = vpack.c.bf16 %v2254, %v2254
  %v2345 = vpack.c.bf16 %v2257, %v2257
  %v2347 = vsel %vm293, %v2342, 0
  %v2350 = vsel %vm293, %v2344, 0
  %2352 = vmatprep.subr.bf16.mxu0 0
  %2353 = vmatpush1.bf16.xpose.msra.mxu0 0
  %2354 = vmatprep.subr.bf16.mxu0 0
  %2355 = vmatpush1.bf16.xpose.msra.mxu0 0
  %2356 = vmatprep.subr.bf16.mxu0 0
  %2357 = vmatpush1.bf16.xpose.msra.mxu0 0
  %2358 = vmatprep.subr.bf16.mxu0 0
  %2359 = vmatpush1.bf16.xpose.msra.mxu0 0
  %2360 = vmatprep.subr.bf16.mxu0 0
  %2361 = vmatpush1.bf16.xpose.msra.mxu0 0
  %2362 = vmatprep.subr.bf16.mxu0 0
  %2363 = vmatpush1.bf16.xpose.msra.mxu0 0
  %2364 = vmatprep.subr.bf16.mxu0 0
  %2365 = vmatpush1.bf16.xpose.msra.mxu0 0
  %2366 = vmatprep.subr.bf16.mxu0 0
  %2367 = vmatpush1.bf16.xpose.msra.mxu0 %v2350
  %2368 = vmatprep.subr.bf16.mxu0 0
  %2369 = vmatpush2.bf16.xpose.msra.mxu0 0
  %2370 = vmatprep.subr.bf16.mxu0 0
  %2371 = vmatpush2.bf16.xpose.msra.mxu0 0
  %2372 = vmatprep.subr.bf16.mxu0 0
  %2373 = vmatpush2.bf16.xpose.msra.mxu0 0
  %2374 = vmatprep.subr.bf16.mxu0 0
  %2375 = vmatpush2.bf16.xpose.msra.mxu0 0
  %2376 = vmatprep.subr.bf16.mxu0 0
  %2377 = vmatpush2.bf16.xpose.msra.mxu0 0
  %2378 = vmatprep.subr.bf16.mxu0 0
  %2379 = vmatpush2.bf16.xpose.msra.mxu0 0
  %2380 = vmatprep.subr.bf16.mxu0 0
  %2381 = vmatpush2.bf16.xpose.msra.mxu0 0
  %2382 = vmatprep.subr.bf16.mxu0 0
  %2383 = vmatpush2.bf16.xpose.msra.mxu0 0
  %2384 = vmatprep.mubr.bf16.mxu0 0
  %2385 = vmatmul.mubr.bf16.gmra.mxu0 %v2347
  %v2386 = vpop.f32.mrf.mxu0
  %v2387 = vadd.f32 0.0, %v2386
  %v2388 = vpop.f32.mrf.mxu0
  %v2389 = vpop.f32.mrf.mxu0
  %v2390 = vpop.f32.mrf.mxu0
  %2391 = vdwg.mxu0
  %v2393 = vsel %vm293, %v2343, 0
  %v2396 = vsel %vm293, %v2345, 0
  %2398 = vmatprep.subr.bf16.mxu0 0
  %2399 = vmatpush1.bf16.xpose.msra.mxu0 0
  %2400 = vmatprep.subr.bf16.mxu0 0
  %2401 = vmatpush1.bf16.xpose.msra.mxu0 0
  %2402 = vmatprep.subr.bf16.mxu0 0
  %2403 = vmatpush1.bf16.xpose.msra.mxu0 0
  %2404 = vmatprep.subr.bf16.mxu0 0
  %2405 = vmatpush1.bf16.xpose.msra.mxu0 0
  %2406 = vmatprep.subr.bf16.mxu0 0
  %2407 = vmatpush1.bf16.xpose.msra.mxu0 0
  %2408 = vmatprep.subr.bf16.mxu0 0
  %2409 = vmatpush1.bf16.xpose.msra.mxu0 0
  %2410 = vmatprep.subr.bf16.mxu0 0
  %2411 = vmatpush1.bf16.xpose.msra.mxu0 0
  %2412 = vmatprep.subr.bf16.mxu0 0
  %2413 = vmatpush1.bf16.xpose.msra.mxu0 %v2396
  %2414 = vmatprep.subr.bf16.mxu0 0
  %2415 = vmatpush2.bf16.xpose.msra.mxu0 0
  %2416 = vmatprep.subr.bf16.mxu0 0
  %2417 = vmatpush2.bf16.xpose.msra.mxu0 0
  %2418 = vmatprep.subr.bf16.mxu0 0
  %2419 = vmatpush2.bf16.xpose.msra.mxu0 0
  %2420 = vmatprep.subr.bf16.mxu0 0
  %2421 = vmatpush2.bf16.xpose.msra.mxu0 0
  %2422 = vmatprep.subr.bf16.mxu0 0
  %2423 = vmatpush2.bf16.xpose.msra.mxu0 0
  %2424 = vmatprep.subr.bf16.mxu0 0
  %2425 = vmatpush2.bf16.xpose.msra.mxu0 0
  %2426 = vmatprep.subr.bf16.mxu0 0
  %2427 = vmatpush2.bf16.xpose.msra.mxu0 0
  %2428 = vmatprep.subr.bf16.mxu0 0
  %2429 = vmatpush2.bf16.xpose.msra.mxu0 0
  %2430 = vmatprep.mubr.bf16.mxu0 0
  %2431 = vmatmul.mubr.bf16.gmra.mxu0 %v2393
  %v2432 = vpop.f32.mrf.mxu0
  %v2433 = vadd.f32 0.0, %v2432
  %v2434 = vpop.f32.mrf.mxu0
  %v2435 = vpop.f32.mrf.mxu0
  %v2436 = vpop.f32.mrf.mxu0
  %2437 = vdwg.mxu0
  %v2438 = vmul.f32 %v2387, 0.35355338
  %v2439 = vmul.f32 %v2433, 0.35355338
  %v2440 = vsel %vm293, %v2438, -inf
  %2441 = vmax.xlane.f32.xlu0 %v2440
  %v2442 = vpop.xlane.xlu0 %2441
  %v2443 = vsel %vm293, %v2439, -inf
  %2444 = vmax.xlane.f32.xlu0 %v2443
  %v2445 = vpop.xlane.xlu0 %2444
  %v2446 = vsub.f32 %v2438, %v2442
  %v2447 = vsub.f32 %v2439, %v2445
  %v2448 = vmul.f32 %v2446, 1.442695
  %v2449 = vpow.pop %v2448
  %v2450 = vmul.f32 %v2447, 1.442695
  %v2451 = vpow.pop %v2450
  %v2452 = vsel %vm293, %v2449, 0.0
  %2453 = vadd.xlane.f32.xlu0 %v2452
  %v2454 = vpop.xlane.xlu0 %2453
  %v2455 = vsel %vm293, %v2451, 0.0
  %2456 = vadd.xlane.f32.xlu0 %v2455
  %v2457 = vpop.xlane.xlu0 %2456
  %v2458 = vrcp.pop %v2454
  %v2459 = vrcp.pop %v2457
  %v2460 = vmul.f32 %v2449, %v2458
  %v2461 = vmul.f32 %v2451, %v2459
  %v2462 = vpack.c.bf16 %v2460, %v2460
  %v2463 = vpack.c.bf16 %v2461, %v2461
  %v2464 = vpack.c.bf16 %v2336, %v2336
  %v2465 = vpack.c.bf16 %v2339, %v2339
  %v2467 = vsel %vm293, %v2462, 0
  %v2470 = vsel %vm417, %v2464, 0
  %2472 = vmatprep.subr.bf16.mxu0 0
  %2473 = vmatpush1.bf16.msra.mxu0 0
  %2474 = vmatprep.subr.bf16.mxu0 0
  %2475 = vmatpush1.bf16.msra.mxu0 0
  %2476 = vmatprep.subr.bf16.mxu0 0
  %2477 = vmatpush1.bf16.msra.mxu0 0
  %2478 = vmatprep.subr.bf16.mxu0 0
  %2479 = vmatpush1.bf16.msra.mxu0 0
  %2480 = vmatprep.subr.bf16.mxu0 0
  %2481 = vmatpush1.bf16.msra.mxu0 0
  %2482 = vmatprep.subr.bf16.mxu0 0
  %2483 = vmatpush1.bf16.msra.mxu0 0
  %2484 = vmatprep.subr.bf16.mxu0 0
  %2485 = vmatpush1.bf16.msra.mxu0 0
  %2486 = vmatprep.subr.bf16.mxu0 0
  %2487 = vmatpush1.bf16.msra.mxu0 %v2470
  %2488 = vmatprep.subr.bf16.mxu0 0
  %2489 = vmatpush2.bf16.msra.mxu0 0
  %2490 = vmatprep.subr.bf16.mxu0 0
  %2491 = vmatpush2.bf16.msra.mxu0 0
  %2492 = vmatprep.subr.bf16.mxu0 0
  %2493 = vmatpush2.bf16.msra.mxu0 0
  %2494 = vmatprep.subr.bf16.mxu0 0
  %2495 = vmatpush2.bf16.msra.mxu0 0
  %2496 = vmatprep.subr.bf16.mxu0 0
  %2497 = vmatpush2.bf16.msra.mxu0 0
  %2498 = vmatprep.subr.bf16.mxu0 0
  %2499 = vmatpush2.bf16.msra.mxu0 0
  %2500 = vmatprep.subr.bf16.mxu0 0
  %2501 = vmatpush2.bf16.msra.mxu0 0
  %2502 = vmatprep.subr.bf16.mxu0 0
  %2503 = vmatpush2.bf16.msra.mxu0 0
  %2504 = vmatprep.mubr.bf16.mxu0 0
  %2505 = vmatmul.mubr.bf16.gmra.mxu0 %v2467
  %v2506 = vpop.f32.mrf.mxu0
  %v2507 = vadd.f32 0.0, %v2506
  %v2508 = vpop.f32.mrf.mxu0
  %v2509 = vpop.f32.mrf.mxu0
  %v2510 = vpop.f32.mrf.mxu0
  %2511 = vdwg.mxu0
  %v2513 = vsel %vm293, %v2463, 0
  %v2516 = vsel %vm417, %v2465, 0
  %2518 = vmatprep.subr.bf16.mxu0 0
  %2519 = vmatpush1.bf16.msra.mxu0 0
  %2520 = vmatprep.subr.bf16.mxu0 0
  %2521 = vmatpush1.bf16.msra.mxu0 0
  %2522 = vmatprep.subr.bf16.mxu0 0
  %2523 = vmatpush1.bf16.msra.mxu0 0
  %2524 = vmatprep.subr.bf16.mxu0 0
  %2525 = vmatpush1.bf16.msra.mxu0 0
  %2526 = vmatprep.subr.bf16.mxu0 0
  %2527 = vmatpush1.bf16.msra.mxu0 0
  %2528 = vmatprep.subr.bf16.mxu0 0
  %2529 = vmatpush1.bf16.msra.mxu0 0
  %2530 = vmatprep.subr.bf16.mxu0 0
  %2531 = vmatpush1.bf16.msra.mxu0 0
  %2532 = vmatprep.subr.bf16.mxu0 0
  %2533 = vmatpush1.bf16.msra.mxu0 %v2516
  %2534 = vmatprep.subr.bf16.mxu0 0
  %2535 = vmatpush2.bf16.msra.mxu0 0
  %2536 = vmatprep.subr.bf16.mxu0 0
  %2537 = vmatpush2.bf16.msra.mxu0 0
  %2538 = vmatprep.subr.bf16.mxu0 0
  %2539 = vmatpush2.bf16.msra.mxu0 0
  %2540 = vmatprep.subr.bf16.mxu0 0
  %2541 = vmatpush2.bf16.msra.mxu0 0
  %2542 = vmatprep.subr.bf16.mxu0 0
  %2543 = vmatpush2.bf16.msra.mxu0 0
  %2544 = vmatprep.subr.bf16.mxu0 0
  %2545 = vmatpush2.bf16.msra.mxu0 0
  %2546 = vmatprep.subr.bf16.mxu0 0
  %2547 = vmatpush2.bf16.msra.mxu0 0
  %2548 = vmatprep.subr.bf16.mxu0 0
  %2549 = vmatpush2.bf16.msra.mxu0 0
  %2550 = vmatprep.mubr.bf16.mxu0 0
  %2551 = vmatmul.mubr.bf16.gmra.mxu0 %v2513
  %v2552 = vpop.f32.mrf.mxu0
  %v2553 = vadd.f32 0.0, %v2552
  %v2554 = vpop.f32.mrf.mxu0
  %v2555 = vpop.f32.mrf.mxu0
  %v2556 = vpop.f32.mrf.mxu0
  %2557 = vdwg.mxu0
  %v2558 = vpack.c.bf16 %v2553, %v2507
  %s2559 = scalar_lea.vmem %s8, 16
  %v2560 = vld [vmem:[%s2559] sm:$0xf]
  %v2562 = vsel %vm293, %v2558, 0
  %v2565 = vsel %vm417, %v2560, 0
  %2567 = vmatprep.subr.bf16.mxu0 0
  %2568 = vmatpush1.bf16.msra.mxu0 0
  %2569 = vmatprep.subr.bf16.mxu0 0
  %2570 = vmatpush1.bf16.msra.mxu0 0
  %2571 = vmatprep.subr.bf16.mxu0 0
  %2572 = vmatpush1.bf16.msra.mxu0 0
  %2573 = vmatprep.subr.bf16.mxu0 0
  %2574 = vmatpush1.bf16.msra.mxu0 0
  %2575 = vmatprep.subr.bf16.mxu0 0
  %2576 = vmatpush1.bf16.msra.mxu0 0
  %2577 = vmatprep.subr.bf16.mxu0 0
  %2578 = vmatpush1.bf16.msra.mxu0 0
  %2579 = vmatprep.subr.bf16.mxu0 0
  %2580 = vmatpush1.bf16.msra.mxu0 0
  %2581 = vmatprep.subr.bf16.mxu0 0
  %2582 = vmatpush1.bf16.msra.mxu0 %v2565
  %2583 = vmatprep.subr.bf16.mxu0 0
  %2584 = vmatpush2.bf16.msra.mxu0 0
  %2585 = vmatprep.subr.bf16.mxu0 0
  %2586 = vmatpush2.bf16.msra.mxu0 0
  %2587 = vmatprep.subr.bf16.mxu0 0
  %2588 = vmatpush2.bf16.msra.mxu0 0
  %2589 = vmatprep.subr.bf16.mxu0 0
  %2590 = vmatpush2.bf16.msra.mxu0 0
  %2591 = vmatprep.subr.bf16.mxu0 0
  %2592 = vmatpush2.bf16.msra.mxu0 0
  %2593 = vmatprep.subr.bf16.mxu0 0
  %2594 = vmatpush2.bf16.msra.mxu0 0
  %2595 = vmatprep.subr.bf16.mxu0 0
  %2596 = vmatpush2.bf16.msra.mxu0 0
  %2597 = vmatprep.subr.bf16.mxu0 0
  %2598 = vmatpush2.bf16.msra.mxu0 0
  %2599 = vmatprep.mubr.bf16.mxu0 0
  %2600 = vmatmul.mubr.bf16.gmra.mxu0 %v2562
  %v2601 = vpop.f32.mrf.mxu0
  %v2602 = vadd.f32 0.0, %v2601
  %v2603 = vpop.f32.mrf.mxu0
  %v2604 = vpop.f32.mrf.mxu0
  %v2605 = vadd.f32 0.0, %v2604
  %v2606 = vpop.f32.mrf.mxu0
  %2607 = vdwg.mxu0
  %v2608 = vadd.f32 %v2094, %v2602
  %v2609 = vadd.f32 %v2095, %v2605
  %s2610 = scalar_lea.vmem %s2, 160
  %v2611 = vld [vmem:[%s2610] sm:$0xf]
  %v2612 = vld [vmem:[%s2610 + $0x4] sm:$0xf]
  %v2613 = vld [vmem:[%s2610 + $0x8] sm:$0xf]
  %v2614 = vld [vmem:[%s2610 + $0xc] sm:$0xf]
  %v2615 = vld [vmem:[%s2610 + $0x10] sm:$0xf]
  %v2616 = vld [vmem:[%s2610 + $0x14] sm:$0xf]
  %v2617 = vld [vmem:[%s2610 + $0x18] sm:$0xf]
  %v2618 = vld [vmem:[%s2610 + $0x1c] sm:$0xf]
  %s2619 = scalar_lea.vmem %s3, 5
  %v2620 = vld [vmem:[%s2619] sm:$0x1]
  %v2622 = vlaneseq
  %v2623 = vshrl.u32 %v2622, 7
  %v2624 = vsub.s32 0, %v2623
  %v2625 = vrot.slane %v2620, %v2624
  %v2635 = vunpack.c.l.b16 %v2611
  %v2636 = vunpack.c.l.b16 %v2612
  %v2637 = vunpack.c.l.b16 %v2613
  %v2638 = vunpack.c.l.b16 %v2614
  %v2639 = vunpack.c.l.b16 %v2615
  %v2640 = vunpack.c.l.b16 %v2616
  %v2641 = vunpack.c.l.b16 %v2617
  %v2642 = vunpack.c.l.b16 %v2618
  %v2643 = vpack.c.b16 %v2636, %v2635
  %v2644 = vpack.c.b16 %v2638, %v2637
  %v2645 = vpack.c.b16 %v2640, %v2639
  %v2646 = vpack.c.b16 %v2642, %v2641
  %2651 = vmatprep.subr.bf16.mxu0 0
  %2652 = vmatpush1.bf16.msra.mxu0 0
  %2653 = vmatprep.subr.bf16.mxu0 0
  %2654 = vmatpush1.bf16.msra.mxu0 0
  %2655 = vmatprep.subr.bf16.mxu0 0
  %2656 = vmatpush1.bf16.msra.mxu0 0
  %2657 = vmatprep.subr.bf16.mxu0 0
  %2658 = vmatpush1.bf16.msra.mxu0 0
  %2659 = vmatprep.subr.bf16.mxu0 0
  %2660 = vmatpush1.bf16.msra.mxu0 %v2646
  %2661 = vmatprep.subr.bf16.mxu0 0
  %2662 = vmatpush1.bf16.msra.mxu0 %v2645
  %2663 = vmatprep.subr.bf16.mxu0 0
  %2664 = vmatpush1.bf16.msra.mxu0 %v2644
  %2665 = vmatprep.subr.bf16.mxu0 0
  %2666 = vmatpush1.bf16.msra.mxu0 %v2643
  %2667 = vmatprep.subr.bf16.mxu0 0
  %2668 = vmatpush2.bf16.msra.mxu0 0
  %2669 = vmatprep.subr.bf16.mxu0 0
  %2670 = vmatpush2.bf16.msra.mxu0 0
  %2671 = vmatprep.subr.bf16.mxu0 0
  %2672 = vmatpush2.bf16.msra.mxu0 0
  %2673 = vmatprep.subr.bf16.mxu0 0
  %2674 = vmatpush2.bf16.msra.mxu0 0
  %2675 = vmatprep.subr.bf16.mxu0 0
  %2676 = vmatpush2.bf16.msra.mxu0 0
  %2677 = vmatprep.subr.bf16.mxu0 0
  %2678 = vmatpush2.bf16.msra.mxu0 0
  %2679 = vmatprep.subr.bf16.mxu0 0
  %2680 = vmatpush2.bf16.msra.mxu0 0
  %2681 = vmatprep.subr.bf16.mxu0 0
  %2682 = vmatpush2.bf16.msra.mxu0 0
  %2683 = vmatprep.mubr.bf16.mxu0 0
  %2684 = vmatmul.mubr.bf16.gmra.mxu0 %v83
  %v2685 = vpop.f32.mrf.mxu0
  %v2686 = vadd.f32 %v2625, %v2685
  %v2687 = vpop.f32.mrf.mxu0
  %v2688 = vpop.f32.mrf.mxu0
  %v2689 = vadd.f32 %v2625, %v2688
  %v2690 = vpop.f32.mrf.mxu0
  %2691 = vdwg.mxu0
  %s2692 = scalar_lea.vmem %s4, 160
  %v2693 = vld [vmem:[%s2692] sm:$0xf]
  %v2694 = vld [vmem:[%s2692 + $0x4] sm:$0xf]
  %v2695 = vld [vmem:[%s2692 + $0x8] sm:$0xf]
  %v2696 = vld [vmem:[%s2692 + $0xc] sm:$0xf]
  %v2697 = vld [vmem:[%s2692 + $0x10] sm:$0xf]
  %v2698 = vld [vmem:[%s2692 + $0x14] sm:$0xf]
  %v2699 = vld [vmem:[%s2692 + $0x18] sm:$0xf]
  %v2700 = vld [vmem:[%s2692 + $0x1c] sm:$0xf]
  %s2701 = scalar_lea.vmem %s5, 5
  %v2702 = vld [vmem:[%s2701] sm:$0x1]
  %v2704 = vlaneseq
  %v2705 = vshrl.u32 %v2704, 7
  %v2706 = vsub.s32 0, %v2705
  %v2707 = vrot.slane %v2702, %v2706
  %v2717 = vunpack.c.l.b16 %v2693
  %v2718 = vunpack.c.l.b16 %v2694
  %v2719 = vunpack.c.l.b16 %v2695
  %v2720 = vunpack.c.l.b16 %v2696
  %v2721 = vunpack.c.l.b16 %v2697
  %v2722 = vunpack.c.l.b16 %v2698
  %v2723 = vunpack.c.l.b16 %v2699
  %v2724 = vunpack.c.l.b16 %v2700
  %v2725 = vpack.c.b16 %v2718, %v2717
  %v2726 = vpack.c.b16 %v2720, %v2719
  %v2727 = vpack.c.b16 %v2722, %v2721
  %v2728 = vpack.c.b16 %v2724, %v2723
  %2733 = vmatprep.subr.bf16.mxu0 0
  %2734 = vmatpush1.bf16.msra.mxu0 0
  %2735 = vmatprep.subr.bf16.mxu0 0
  %2736 = vmatpush1.bf16.msra.mxu0 0
  %2737 = vmatprep.subr.bf16.mxu0 0
  %2738 = vmatpush1.bf16.msra.mxu0 0
  %2739 = vmatprep.subr.bf16.mxu0 0
  %2740 = vmatpush1.bf16.msra.mxu0 0
  %2741 = vmatprep.subr.bf16.mxu0 0
  %2742 = vmatpush1.bf16.msra.mxu0 %v2728
  %2743 = vmatprep.subr.bf16.mxu0 0
  %2744 = vmatpush1.bf16.msra.mxu0 %v2727
  %2745 = vmatprep.subr.bf16.mxu0 0
  %2746 = vmatpush1.bf16.msra.mxu0 %v2726
  %2747 = vmatprep.subr.bf16.mxu0 0
  %2748 = vmatpush1.bf16.msra.mxu0 %v2725
  %2749 = vmatprep.subr.bf16.mxu0 0
  %2750 = vmatpush2.bf16.msra.mxu0 0
  %2751 = vmatprep.subr.bf16.mxu0 0
  %2752 = vmatpush2.bf16.msra.mxu0 0
  %2753 = vmatprep.subr.bf16.mxu0 0
  %2754 = vmatpush2.bf16.msra.mxu0 0
  %2755 = vmatprep.subr.bf16.mxu0 0
  %2756 = vmatpush2.bf16.msra.mxu0 0
  %2757 = vmatprep.subr.bf16.mxu0 0
  %2758 = vmatpush2.bf16.msra.mxu0 0
  %2759 = vmatprep.subr.bf16.mxu0 0
  %2760 = vmatpush2.bf16.msra.mxu0 0
  %2761 = vmatprep.subr.bf16.mxu0 0
  %2762 = vmatpush2.bf16.msra.mxu0 0
  %2763 = vmatprep.subr.bf16.mxu0 0
  %2764 = vmatpush2.bf16.msra.mxu0 0
  %2765 = vmatprep.mubr.bf16.mxu0 0
  %2766 = vmatmul.mubr.bf16.gmra.mxu0 %v166
  %v2767 = vpop.f32.mrf.mxu0
  %v2768 = vadd.f32 %v2707, %v2767
  %v2769 = vpop.f32.mrf.mxu0
  %v2770 = vpop.f32.mrf.mxu0
  %v2771 = vadd.f32 %v2707, %v2770
  %v2772 = vpop.f32.mrf.mxu0
  %2773 = vdwg.mxu0
  %s2774 = scalar_lea.vmem %s6, 160
  %v2775 = vld [vmem:[%s2774] sm:$0xf]
  %v2776 = vld [vmem:[%s2774 + $0x4] sm:$0xf]
  %v2777 = vld [vmem:[%s2774 + $0x8] sm:$0xf]
  %v2778 = vld [vmem:[%s2774 + $0xc] sm:$0xf]
  %v2779 = vld [vmem:[%s2774 + $0x10] sm:$0xf]
  %v2780 = vld [vmem:[%s2774 + $0x14] sm:$0xf]
  %v2781 = vld [vmem:[%s2774 + $0x18] sm:$0xf]
  %v2782 = vld [vmem:[%s2774 + $0x1c] sm:$0xf]
  %s2783 = scalar_lea.vmem %s7, 5
  %v2784 = vld [vmem:[%s2783] sm:$0x1]
  %v2786 = vlaneseq
  %v2787 = vshrl.u32 %v2786, 7
  %v2788 = vsub.s32 0, %v2787
  %v2789 = vrot.slane %v2784, %v2788
  %v2799 = vunpack.c.l.b16 %v2775
  %v2800 = vunpack.c.l.b16 %v2776
  %v2801 = vunpack.c.l.b16 %v2777
  %v2802 = vunpack.c.l.b16 %v2778
  %v2803 = vunpack.c.l.b16 %v2779
  %v2804 = vunpack.c.l.b16 %v2780
  %v2805 = vunpack.c.l.b16 %v2781
  %v2806 = vunpack.c.l.b16 %v2782
  %v2807 = vpack.c.b16 %v2800, %v2799
  %v2808 = vpack.c.b16 %v2802, %v2801
  %v2809 = vpack.c.b16 %v2804, %v2803
  %v2810 = vpack.c.b16 %v2806, %v2805
  %2815 = vmatprep.subr.bf16.mxu0 0
  %2816 = vmatpush1.bf16.msra.mxu0 0
  %2817 = vmatprep.subr.bf16.mxu0 0
  %2818 = vmatpush1.bf16.msra.mxu0 0
  %2819 = vmatprep.subr.bf16.mxu0 0
  %2820 = vmatpush1.bf16.msra.mxu0 0
  %2821 = vmatprep.subr.bf16.mxu0 0
  %2822 = vmatpush1.bf16.msra.mxu0 0
  %2823 = vmatprep.subr.bf16.mxu0 0
  %2824 = vmatpush1.bf16.msra.mxu0 %v2810
  %2825 = vmatprep.subr.bf16.mxu0 0
  %2826 = vmatpush1.bf16.msra.mxu0 %v2809
  %2827 = vmatprep.subr.bf16.mxu0 0
  %2828 = vmatpush1.bf16.msra.mxu0 %v2808
  %2829 = vmatprep.subr.bf16.mxu0 0
  %2830 = vmatpush1.bf16.msra.mxu0 %v2807
  %2831 = vmatprep.subr.bf16.mxu0 0
  %2832 = vmatpush2.bf16.msra.mxu0 0
  %2833 = vmatprep.subr.bf16.mxu0 0
  %2834 = vmatpush2.bf16.msra.mxu0 0
  %2835 = vmatprep.subr.bf16.mxu0 0
  %2836 = vmatpush2.bf16.msra.mxu0 0
  %2837 = vmatprep.subr.bf16.mxu0 0
  %2838 = vmatpush2.bf16.msra.mxu0 0
  %2839 = vmatprep.subr.bf16.mxu0 0
  %2840 = vmatpush2.bf16.msra.mxu0 0
  %2841 = vmatprep.subr.bf16.mxu0 0
  %2842 = vmatpush2.bf16.msra.mxu0 0
  %2843 = vmatprep.subr.bf16.mxu0 0
  %2844 = vmatpush2.bf16.msra.mxu0 0
  %2845 = vmatprep.subr.bf16.mxu0 0
  %2846 = vmatpush2.bf16.msra.mxu0 0
  %2847 = vmatprep.mubr.bf16.mxu0 0
  %2848 = vmatmul.mubr.bf16.gmra.mxu0 %v166
  %v2849 = vpop.f32.mrf.mxu0
  %v2850 = vadd.f32 %v2789, %v2849
  %v2851 = vpop.f32.mrf.mxu0
  %v2852 = vpop.f32.mrf.mxu0
  %v2853 = vadd.f32 %v2789, %v2852
  %v2854 = vpop.f32.mrf.mxu0
  %2855 = vdwg.mxu0
  %v2856 = vpack.c.bf16 %v2686, %v2686
  %v2857 = vpack.c.bf16 %v2689, %v2689
  %v2858 = vpack.c.bf16 %v2768, %v2768
  %v2859 = vpack.c.bf16 %v2771, %v2771
  %v2861 = vsel %vm293, %v2856, 0
  %v2864 = vsel %vm293, %v2858, 0
  %2866 = vmatprep.subr.bf16.mxu0 0
  %2867 = vmatpush1.bf16.xpose.msra.mxu0 0
  %2868 = vmatprep.subr.bf16.mxu0 0
  %2869 = vmatpush1.bf16.xpose.msra.mxu0 0
  %2870 = vmatprep.subr.bf16.mxu0 0
  %2871 = vmatpush1.bf16.xpose.msra.mxu0 0
  %2872 = vmatprep.subr.bf16.mxu0 0
  %2873 = vmatpush1.bf16.xpose.msra.mxu0 0
  %2874 = vmatprep.subr.bf16.mxu0 0
  %2875 = vmatpush1.bf16.xpose.msra.mxu0 0
  %2876 = vmatprep.subr.bf16.mxu0 0
  %2877 = vmatpush1.bf16.xpose.msra.mxu0 0
  %2878 = vmatprep.subr.bf16.mxu0 0
  %2879 = vmatpush1.bf16.xpose.msra.mxu0 0
  %2880 = vmatprep.subr.bf16.mxu0 0
  %2881 = vmatpush1.bf16.xpose.msra.mxu0 %v2864
  %2882 = vmatprep.subr.bf16.mxu0 0
  %2883 = vmatpush2.bf16.xpose.msra.mxu0 0
  %2884 = vmatprep.subr.bf16.mxu0 0
  %2885 = vmatpush2.bf16.xpose.msra.mxu0 0
  %2886 = vmatprep.subr.bf16.mxu0 0
  %2887 = vmatpush2.bf16.xpose.msra.mxu0 0
  %2888 = vmatprep.subr.bf16.mxu0 0
  %2889 = vmatpush2.bf16.xpose.msra.mxu0 0
  %2890 = vmatprep.subr.bf16.mxu0 0
  %2891 = vmatpush2.bf16.xpose.msra.mxu0 0
  %2892 = vmatprep.subr.bf16.mxu0 0
  %2893 = vmatpush2.bf16.xpose.msra.mxu0 0
  %2894 = vmatprep.subr.bf16.mxu0 0
  %2895 = vmatpush2.bf16.xpose.msra.mxu0 0
  %2896 = vmatprep.subr.bf16.mxu0 0
  %2897 = vmatpush2.bf16.xpose.msra.mxu0 0
  %2898 = vmatprep.mubr.bf16.mxu0 0
  %2899 = vmatmul.mubr.bf16.gmra.mxu0 %v2861
  %v2900 = vpop.f32.mrf.mxu0
  %v2901 = vadd.f32 0.0, %v2900
  %v2902 = vpop.f32.mrf.mxu0
  %v2903 = vpop.f32.mrf.mxu0
  %v2904 = vpop.f32.mrf.mxu0
  %2905 = vdwg.mxu0
  %v2907 = vsel %vm293, %v2857, 0
  %v2910 = vsel %vm293, %v2859, 0
  %2912 = vmatprep.subr.bf16.mxu0 0
  %2913 = vmatpush1.bf16.xpose.msra.mxu0 0
  %2914 = vmatprep.subr.bf16.mxu0 0
  %2915 = vmatpush1.bf16.xpose.msra.mxu0 0
  %2916 = vmatprep.subr.bf16.mxu0 0
  %2917 = vmatpush1.bf16.xpose.msra.mxu0 0
  %2918 = vmatprep.subr.bf16.mxu0 0
  %2919 = vmatpush1.bf16.xpose.msra.mxu0 0
  %2920 = vmatprep.subr.bf16.mxu0 0
  %2921 = vmatpush1.bf16.xpose.msra.mxu0 0
  %2922 = vmatprep.subr.bf16.mxu0 0
  %2923 = vmatpush1.bf16.xpose.msra.mxu0 0
  %2924 = vmatprep.subr.bf16.mxu0 0
  %2925 = vmatpush1.bf16.xpose.msra.mxu0 0
  %2926 = vmatprep.subr.bf16.mxu0 0
  %2927 = vmatpush1.bf16.xpose.msra.mxu0 %v2910
  %2928 = vmatprep.subr.bf16.mxu0 0
  %2929 = vmatpush2.bf16.xpose.msra.mxu0 0
  %2930 = vmatprep.subr.bf16.mxu0 0
  %2931 = vmatpush2.bf16.xpose.msra.mxu0 0
  %2932 = vmatprep.subr.bf16.mxu0 0
  %2933 = vmatpush2.bf16.xpose.msra.mxu0 0
  %2934 = vmatprep.subr.bf16.mxu0 0
  %2935 = vmatpush2.bf16.xpose.msra.mxu0 0
  %2936 = vmatprep.subr.bf16.mxu0 0
  %2937 = vmatpush2.bf16.xpose.msra.mxu0 0
  %2938 = vmatprep.subr.bf16.mxu0 0
  %2939 = vmatpush2.bf16.xpose.msra.mxu0 0
  %2940 = vmatprep.subr.bf16.mxu0 0
  %2941 = vmatpush2.bf16.xpose.msra.mxu0 0
  %2942 = vmatprep.subr.bf16.mxu0 0
  %2943 = vmatpush2.bf16.xpose.msra.mxu0 0
  %2944 = vmatprep.mubr.bf16.mxu0 0
  %2945 = vmatmul.mubr.bf16.gmra.mxu0 %v2907
  %v2946 = vpop.f32.mrf.mxu0
  %v2947 = vadd.f32 0.0, %v2946
  %v2948 = vpop.f32.mrf.mxu0
  %v2949 = vpop.f32.mrf.mxu0
  %v2950 = vpop.f32.mrf.mxu0
  %2951 = vdwg.mxu0
  %v2952 = vmul.f32 %v2901, 0.35355338
  %v2953 = vmul.f32 %v2947, 0.35355338
  %v2954 = vsel %vm293, %v2952, -inf
  %2955 = vmax.xlane.f32.xlu0 %v2954
  %v2956 = vpop.xlane.xlu0 %2955
  %v2957 = vsel %vm293, %v2953, -inf
  %2958 = vmax.xlane.f32.xlu0 %v2957
  %v2959 = vpop.xlane.xlu0 %2958
  %v2960 = vsub.f32 %v2952, %v2956
  %v2961 = vsub.f32 %v2953, %v2959
  %v2962 = vmul.f32 %v2960, 1.442695
  %v2963 = vpow.pop %v2962
  %v2964 = vmul.f32 %v2961, 1.442695
  %v2965 = vpow.pop %v2964
  %v2966 = vsel %vm293, %v2963, 0.0
  %2967 = vadd.xlane.f32.xlu0 %v2966
  %v2968 = vpop.xlane.xlu0 %2967
  %v2969 = vsel %vm293, %v2965, 0.0
  %2970 = vadd.xlane.f32.xlu0 %v2969
  %v2971 = vpop.xlane.xlu0 %2970
  %v2972 = vrcp.pop %v2968
  %v2973 = vrcp.pop %v2971
  %v2974 = vmul.f32 %v2963, %v2972
  %v2975 = vmul.f32 %v2965, %v2973
  %v2976 = vpack.c.bf16 %v2974, %v2974
  %v2977 = vpack.c.bf16 %v2975, %v2975
  %v2978 = vpack.c.bf16 %v2850, %v2850
  %v2979 = vpack.c.bf16 %v2853, %v2853
  %v2981 = vsel %vm293, %v2976, 0
  %v2984 = vsel %vm417, %v2978, 0
  %2986 = vmatprep.subr.bf16.mxu0 0
  %2987 = vmatpush1.bf16.msra.mxu0 0
  %2988 = vmatprep.subr.bf16.mxu0 0
  %2989 = vmatpush1.bf16.msra.mxu0 0
  %2990 = vmatprep.subr.bf16.mxu0 0
  %2991 = vmatpush1.bf16.msra.mxu0 0
  %2992 = vmatprep.subr.bf16.mxu0 0
  %2993 = vmatpush1.bf16.msra.mxu0 0
  %2994 = vmatprep.subr.bf16.mxu0 0
  %2995 = vmatpush1.bf16.msra.mxu0 0
  %2996 = vmatprep.subr.bf16.mxu0 0
  %2997 = vmatpush1.bf16.msra.mxu0 0
  %2998 = vmatprep.subr.bf16.mxu0 0
  %2999 = vmatpush1.bf16.msra.mxu0 0
  %3000 = vmatprep.subr.bf16.mxu0 0
  %3001 = vmatpush1.bf16.msra.mxu0 %v2984
  %3002 = vmatprep.subr.bf16.mxu0 0
  %3003 = vmatpush2.bf16.msra.mxu0 0
  %3004 = vmatprep.subr.bf16.mxu0 0
  %3005 = vmatpush2.bf16.msra.mxu0 0
  %3006 = vmatprep.subr.bf16.mxu0 0
  %3007 = vmatpush2.bf16.msra.mxu0 0
  %3008 = vmatprep.subr.bf16.mxu0 0
  %3009 = vmatpush2.bf16.msra.mxu0 0
  %3010 = vmatprep.subr.bf16.mxu0 0
  %3011 = vmatpush2.bf16.msra.mxu0 0
  %3012 = vmatprep.subr.bf16.mxu0 0
  %3013 = vmatpush2.bf16.msra.mxu0 0
  %3014 = vmatprep.subr.bf16.mxu0 0
  %3015 = vmatpush2.bf16.msra.mxu0 0
  %3016 = vmatprep.subr.bf16.mxu0 0
  %3017 = vmatpush2.bf16.msra.mxu0 0
  %3018 = vmatprep.mubr.bf16.mxu0 0
  %3019 = vmatmul.mubr.bf16.gmra.mxu0 %v2981
  %v3020 = vpop.f32.mrf.mxu0
  %v3021 = vadd.f32 0.0, %v3020
  %v3022 = vpop.f32.mrf.mxu0
  %v3023 = vpop.f32.mrf.mxu0
  %v3024 = vpop.f32.mrf.mxu0
  %3025 = vdwg.mxu0
  %v3027 = vsel %vm293, %v2977, 0
  %v3030 = vsel %vm417, %v2979, 0
  %3032 = vmatprep.subr.bf16.mxu0 0
  %3033 = vmatpush1.bf16.msra.mxu0 0
  %3034 = vmatprep.subr.bf16.mxu0 0
  %3035 = vmatpush1.bf16.msra.mxu0 0
  %3036 = vmatprep.subr.bf16.mxu0 0
  %3037 = vmatpush1.bf16.msra.mxu0 0
  %3038 = vmatprep.subr.bf16.mxu0 0
  %3039 = vmatpush1.bf16.msra.mxu0 0
  %3040 = vmatprep.subr.bf16.mxu0 0
  %3041 = vmatpush1.bf16.msra.mxu0 0
  %3042 = vmatprep.subr.bf16.mxu0 0
  %3043 = vmatpush1.bf16.msra.mxu0 0
  %3044 = vmatprep.subr.bf16.mxu0 0
  %3045 = vmatpush1.bf16.msra.mxu0 0
  %3046 = vmatprep.subr.bf16.mxu0 0
  %3047 = vmatpush1.bf16.msra.mxu0 %v3030
  %3048 = vmatprep.subr.bf16.mxu0 0
  %3049 = vmatpush2.bf16.msra.mxu0 0
  %3050 = vmatprep.subr.bf16.mxu0 0
  %3051 = vmatpush2.bf16.msra.mxu0 0
  %3052 = vmatprep.subr.bf16.mxu0 0
  %3053 = vmatpush2.bf16.msra.mxu0 0
  %3054 = vmatprep.subr.bf16.mxu0 0
  %3055 = vmatpush2.bf16.msra.mxu0 0
  %3056 = vmatprep.subr.bf16.mxu0 0
  %3057 = vmatpush2.bf16.msra.mxu0 0
  %3058 = vmatprep.subr.bf16.mxu0 0
  %3059 = vmatpush2.bf16.msra.mxu0 0
  %3060 = vmatprep.subr.bf16.mxu0 0
  %3061 = vmatpush2.bf16.msra.mxu0 0
  %3062 = vmatprep.subr.bf16.mxu0 0
  %3063 = vmatpush2.bf16.msra.mxu0 0
  %3064 = vmatprep.mubr.bf16.mxu0 0
  %3065 = vmatmul.mubr.bf16.gmra.mxu0 %v3027
  %v3066 = vpop.f32.mrf.mxu0
  %v3067 = vadd.f32 0.0, %v3066
  %v3068 = vpop.f32.mrf.mxu0
  %v3069 = vpop.f32.mrf.mxu0
  %v3070 = vpop.f32.mrf.mxu0
  %3071 = vdwg.mxu0
  %v3072 = vpack.c.bf16 %v3067, %v3021
  %s3073 = scalar_lea.vmem %s8, 20
  %v3074 = vld [vmem:[%s3073] sm:$0xf]
  %v3076 = vsel %vm293, %v3072, 0
  %v3079 = vsel %vm417, %v3074, 0
  %3081 = vmatprep.subr.bf16.mxu0 0
  %3082 = vmatpush1.bf16.msra.mxu0 0
  %3083 = vmatprep.subr.bf16.mxu0 0
  %3084 = vmatpush1.bf16.msra.mxu0 0
  %3085 = vmatprep.subr.bf16.mxu0 0
  %3086 = vmatpush1.bf16.msra.mxu0 0
  %3087 = vmatprep.subr.bf16.mxu0 0
  %3088 = vmatpush1.bf16.msra.mxu0 0
  %3089 = vmatprep.subr.bf16.mxu0 0
  %3090 = vmatpush1.bf16.msra.mxu0 0
  %3091 = vmatprep.subr.bf16.mxu0 0
  %3092 = vmatpush1.bf16.msra.mxu0 0
  %3093 = vmatprep.subr.bf16.mxu0 0
  %3094 = vmatpush1.bf16.msra.mxu0 0
  %3095 = vmatprep.subr.bf16.mxu0 0
  %3096 = vmatpush1.bf16.msra.mxu0 %v3079
  %3097 = vmatprep.subr.bf16.mxu0 0
  %3098 = vmatpush2.bf16.msra.mxu0 0
  %3099 = vmatprep.subr.bf16.mxu0 0
  %3100 = vmatpush2.bf16.msra.mxu0 0
  %3101 = vmatprep.subr.bf16.mxu0 0
  %3102 = vmatpush2.bf16.msra.mxu0 0
  %3103 = vmatprep.subr.bf16.mxu0 0
  %3104 = vmatpush2.bf16.msra.mxu0 0
  %3105 = vmatprep.subr.bf16.mxu0 0
  %3106 = vmatpush2.bf16.msra.mxu0 0
  %3107 = vmatprep.subr.bf16.mxu0 0
  %3108 = vmatpush2.bf16.msra.mxu0 0
  %3109 = vmatprep.subr.bf16.mxu0 0
  %3110 = vmatpush2.bf16.msra.mxu0 0
  %3111 = vmatprep.subr.bf16.mxu0 0
  %3112 = vmatpush2.bf16.msra.mxu0 0
  %3113 = vmatprep.mubr.bf16.mxu0 0
  %3114 = vmatmul.mubr.bf16.gmra.mxu0 %v3076
  %v3115 = vpop.f32.mrf.mxu0
  %v3116 = vadd.f32 0.0, %v3115
  %v3117 = vpop.f32.mrf.mxu0
  %v3118 = vpop.f32.mrf.mxu0
  %v3119 = vadd.f32 0.0, %v3118
  %v3120 = vpop.f32.mrf.mxu0
  %3121 = vdwg.mxu0
  %v3122 = vadd.f32 %v2608, %v3116
  %v3123 = vadd.f32 %v2609, %v3119
  %s3124 = scalar_lea.vmem %s2, 192
  %v3125 = vld [vmem:[%s3124] sm:$0xf]
  %v3126 = vld [vmem:[%s3124 + $0x4] sm:$0xf]
  %v3127 = vld [vmem:[%s3124 + $0x8] sm:$0xf]
  %v3128 = vld [vmem:[%s3124 + $0xc] sm:$0xf]
  %v3129 = vld [vmem:[%s3124 + $0x10] sm:$0xf]
  %v3130 = vld [vmem:[%s3124 + $0x14] sm:$0xf]
  %v3131 = vld [vmem:[%s3124 + $0x18] sm:$0xf]
  %v3132 = vld [vmem:[%s3124 + $0x1c] sm:$0xf]
  %s3133 = scalar_lea.vmem %s3, 6
  %v3134 = vld [vmem:[%s3133] sm:$0x1]
  %v3136 = vlaneseq
  %v3137 = vshrl.u32 %v3136, 7
  %v3138 = vsub.s32 0, %v3137
  %v3139 = vrot.slane %v3134, %v3138
  %v3149 = vunpack.c.l.b16 %v3125
  %v3150 = vunpack.c.l.b16 %v3126
  %v3151 = vunpack.c.l.b16 %v3127
  %v3152 = vunpack.c.l.b16 %v3128
  %v3153 = vunpack.c.l.b16 %v3129
  %v3154 = vunpack.c.l.b16 %v3130
  %v3155 = vunpack.c.l.b16 %v3131
  %v3156 = vunpack.c.l.b16 %v3132
  %v3157 = vpack.c.b16 %v3150, %v3149
  %v3158 = vpack.c.b16 %v3152, %v3151
  %v3159 = vpack.c.b16 %v3154, %v3153
  %v3160 = vpack.c.b16 %v3156, %v3155
  %3165 = vmatprep.subr.bf16.mxu0 0
  %3166 = vmatpush1.bf16.msra.mxu0 0
  %3167 = vmatprep.subr.bf16.mxu0 0
  %3168 = vmatpush1.bf16.msra.mxu0 0
  %3169 = vmatprep.subr.bf16.mxu0 0
  %3170 = vmatpush1.bf16.msra.mxu0 0
  %3171 = vmatprep.subr.bf16.mxu0 0
  %3172 = vmatpush1.bf16.msra.mxu0 0
  %3173 = vmatprep.subr.bf16.mxu0 0
  %3174 = vmatpush1.bf16.msra.mxu0 %v3160
  %3175 = vmatprep.subr.bf16.mxu0 0
  %3176 = vmatpush1.bf16.msra.mxu0 %v3159
  %3177 = vmatprep.subr.bf16.mxu0 0
  %3178 = vmatpush1.bf16.msra.mxu0 %v3158
  %3179 = vmatprep.subr.bf16.mxu0 0
  %3180 = vmatpush1.bf16.msra.mxu0 %v3157
  %3181 = vmatprep.subr.bf16.mxu0 0
  %3182 = vmatpush2.bf16.msra.mxu0 0
  %3183 = vmatprep.subr.bf16.mxu0 0
  %3184 = vmatpush2.bf16.msra.mxu0 0
  %3185 = vmatprep.subr.bf16.mxu0 0
  %3186 = vmatpush2.bf16.msra.mxu0 0
  %3187 = vmatprep.subr.bf16.mxu0 0
  %3188 = vmatpush2.bf16.msra.mxu0 0
  %3189 = vmatprep.subr.bf16.mxu0 0
  %3190 = vmatpush2.bf16.msra.mxu0 0
  %3191 = vmatprep.subr.bf16.mxu0 0
  %3192 = vmatpush2.bf16.msra.mxu0 0
  %3193 = vmatprep.subr.bf16.mxu0 0
  %3194 = vmatpush2.bf16.msra.mxu0 0
  %3195 = vmatprep.subr.bf16.mxu0 0
  %3196 = vmatpush2.bf16.msra.mxu0 0
  %3197 = vmatprep.mubr.bf16.mxu0 0
  %3198 = vmatmul.mubr.bf16.gmra.mxu0 %v83
  %v3199 = vpop.f32.mrf.mxu0
  %v3200 = vadd.f32 %v3139, %v3199
  %v3201 = vpop.f32.mrf.mxu0
  %v3202 = vpop.f32.mrf.mxu0
  %v3203 = vadd.f32 %v3139, %v3202
  %v3204 = vpop.f32.mrf.mxu0
  %3205 = vdwg.mxu0
  %s3206 = scalar_lea.vmem %s4, 192
  %v3207 = vld [vmem:[%s3206] sm:$0xf]
  %v3208 = vld [vmem:[%s3206 + $0x4] sm:$0xf]
  %v3209 = vld [vmem:[%s3206 + $0x8] sm:$0xf]
  %v3210 = vld [vmem:[%s3206 + $0xc] sm:$0xf]
  %v3211 = vld [vmem:[%s3206 + $0x10] sm:$0xf]
  %v3212 = vld [vmem:[%s3206 + $0x14] sm:$0xf]
  %v3213 = vld [vmem:[%s3206 + $0x18] sm:$0xf]
  %v3214 = vld [vmem:[%s3206 + $0x1c] sm:$0xf]
  %s3215 = scalar_lea.vmem %s5, 6
  %v3216 = vld [vmem:[%s3215] sm:$0x1]
  %v3218 = vlaneseq
  %v3219 = vshrl.u32 %v3218, 7
  %v3220 = vsub.s32 0, %v3219
  %v3221 = vrot.slane %v3216, %v3220
  %v3231 = vunpack.c.l.b16 %v3207
  %v3232 = vunpack.c.l.b16 %v3208
  %v3233 = vunpack.c.l.b16 %v3209
  %v3234 = vunpack.c.l.b16 %v3210
  %v3235 = vunpack.c.l.b16 %v3211
  %v3236 = vunpack.c.l.b16 %v3212
  %v3237 = vunpack.c.l.b16 %v3213
  %v3238 = vunpack.c.l.b16 %v3214
  %v3239 = vpack.c.b16 %v3232, %v3231
  %v3240 = vpack.c.b16 %v3234, %v3233
  %v3241 = vpack.c.b16 %v3236, %v3235
  %v3242 = vpack.c.b16 %v3238, %v3237
  %3247 = vmatprep.subr.bf16.mxu0 0
  %3248 = vmatpush1.bf16.msra.mxu0 0
  %3249 = vmatprep.subr.bf16.mxu0 0
  %3250 = vmatpush1.bf16.msra.mxu0 0
  %3251 = vmatprep.subr.bf16.mxu0 0
  %3252 = vmatpush1.bf16.msra.mxu0 0
  %3253 = vmatprep.subr.bf16.mxu0 0
  %3254 = vmatpush1.bf16.msra.mxu0 0
  %3255 = vmatprep.subr.bf16.mxu0 0
  %3256 = vmatpush1.bf16.msra.mxu0 %v3242
  %3257 = vmatprep.subr.bf16.mxu0 0
  %3258 = vmatpush1.bf16.msra.mxu0 %v3241
  %3259 = vmatprep.subr.bf16.mxu0 0
  %3260 = vmatpush1.bf16.msra.mxu0 %v3240
  %3261 = vmatprep.subr.bf16.mxu0 0
  %3262 = vmatpush1.bf16.msra.mxu0 %v3239
  %3263 = vmatprep.subr.bf16.mxu0 0
  %3264 = vmatpush2.bf16.msra.mxu0 0
  %3265 = vmatprep.subr.bf16.mxu0 0
  %3266 = vmatpush2.bf16.msra.mxu0 0
  %3267 = vmatprep.subr.bf16.mxu0 0
  %3268 = vmatpush2.bf16.msra.mxu0 0
  %3269 = vmatprep.subr.bf16.mxu0 0
  %3270 = vmatpush2.bf16.msra.mxu0 0
  %3271 = vmatprep.subr.bf16.mxu0 0
  %3272 = vmatpush2.bf16.msra.mxu0 0
  %3273 = vmatprep.subr.bf16.mxu0 0
  %3274 = vmatpush2.bf16.msra.mxu0 0
  %3275 = vmatprep.subr.bf16.mxu0 0
  %3276 = vmatpush2.bf16.msra.mxu0 0
  %3277 = vmatprep.subr.bf16.mxu0 0
  %3278 = vmatpush2.bf16.msra.mxu0 0
  %3279 = vmatprep.mubr.bf16.mxu0 0
  %3280 = vmatmul.mubr.bf16.gmra.mxu0 %v166
  %v3281 = vpop.f32.mrf.mxu0
  %v3282 = vadd.f32 %v3221, %v3281
  %v3283 = vpop.f32.mrf.mxu0
  %v3284 = vpop.f32.mrf.mxu0
  %v3285 = vadd.f32 %v3221, %v3284
  %v3286 = vpop.f32.mrf.mxu0
  %3287 = vdwg.mxu0
  %s3288 = scalar_lea.vmem %s6, 192
  %v3289 = vld [vmem:[%s3288] sm:$0xf]
  %v3290 = vld [vmem:[%s3288 + $0x4] sm:$0xf]
  %v3291 = vld [vmem:[%s3288 + $0x8] sm:$0xf]
  %v3292 = vld [vmem:[%s3288 + $0xc] sm:$0xf]
  %v3293 = vld [vmem:[%s3288 + $0x10] sm:$0xf]
  %v3294 = vld [vmem:[%s3288 + $0x14] sm:$0xf]
  %v3295 = vld [vmem:[%s3288 + $0x18] sm:$0xf]
  %v3296 = vld [vmem:[%s3288 + $0x1c] sm:$0xf]
  %s3297 = scalar_lea.vmem %s7, 6
  %v3298 = vld [vmem:[%s3297] sm:$0x1]
  %v3300 = vlaneseq
  %v3301 = vshrl.u32 %v3300, 7
  %v3302 = vsub.s32 0, %v3301
  %v3303 = vrot.slane %v3298, %v3302
  %v3313 = vunpack.c.l.b16 %v3289
  %v3314 = vunpack.c.l.b16 %v3290
  %v3315 = vunpack.c.l.b16 %v3291
  %v3316 = vunpack.c.l.b16 %v3292
  %v3317 = vunpack.c.l.b16 %v3293
  %v3318 = vunpack.c.l.b16 %v3294
  %v3319 = vunpack.c.l.b16 %v3295
  %v3320 = vunpack.c.l.b16 %v3296
  %v3321 = vpack.c.b16 %v3314, %v3313
  %v3322 = vpack.c.b16 %v3316, %v3315
  %v3323 = vpack.c.b16 %v3318, %v3317
  %v3324 = vpack.c.b16 %v3320, %v3319
  %3329 = vmatprep.subr.bf16.mxu0 0
  %3330 = vmatpush1.bf16.msra.mxu0 0
  %3331 = vmatprep.subr.bf16.mxu0 0
  %3332 = vmatpush1.bf16.msra.mxu0 0
  %3333 = vmatprep.subr.bf16.mxu0 0
  %3334 = vmatpush1.bf16.msra.mxu0 0
  %3335 = vmatprep.subr.bf16.mxu0 0
  %3336 = vmatpush1.bf16.msra.mxu0 0
  %3337 = vmatprep.subr.bf16.mxu0 0
  %3338 = vmatpush1.bf16.msra.mxu0 %v3324
  %3339 = vmatprep.subr.bf16.mxu0 0
  %3340 = vmatpush1.bf16.msra.mxu0 %v3323
  %3341 = vmatprep.subr.bf16.mxu0 0
  %3342 = vmatpush1.bf16.msra.mxu0 %v3322
  %3343 = vmatprep.subr.bf16.mxu0 0
  %3344 = vmatpush1.bf16.msra.mxu0 %v3321
  %3345 = vmatprep.subr.bf16.mxu0 0
  %3346 = vmatpush2.bf16.msra.mxu0 0
  %3347 = vmatprep.subr.bf16.mxu0 0
  %3348 = vmatpush2.bf16.msra.mxu0 0
  %3349 = vmatprep.subr.bf16.mxu0 0
  %3350 = vmatpush2.bf16.msra.mxu0 0
  %3351 = vmatprep.subr.bf16.mxu0 0
  %3352 = vmatpush2.bf16.msra.mxu0 0
  %3353 = vmatprep.subr.bf16.mxu0 0
  %3354 = vmatpush2.bf16.msra.mxu0 0
  %3355 = vmatprep.subr.bf16.mxu0 0
  %3356 = vmatpush2.bf16.msra.mxu0 0
  %3357 = vmatprep.subr.bf16.mxu0 0
  %3358 = vmatpush2.bf16.msra.mxu0 0
  %3359 = vmatprep.subr.bf16.mxu0 0
  %3360 = vmatpush2.bf16.msra.mxu0 0
  %3361 = vmatprep.mubr.bf16.mxu0 0
  %3362 = vmatmul.mubr.bf16.gmra.mxu0 %v166
  %v3363 = vpop.f32.mrf.mxu0
  %v3364 = vadd.f32 %v3303, %v3363
  %v3365 = vpop.f32.mrf.mxu0
  %v3366 = vpop.f32.mrf.mxu0
  %v3367 = vadd.f32 %v3303, %v3366
  %v3368 = vpop.f32.mrf.mxu0
  %3369 = vdwg.mxu0
  %v3370 = vpack.c.bf16 %v3200, %v3200
  %v3371 = vpack.c.bf16 %v3203, %v3203
  %v3372 = vpack.c.bf16 %v3282, %v3282
  %v3373 = vpack.c.bf16 %v3285, %v3285
  %v3375 = vsel %vm293, %v3370, 0
  %v3378 = vsel %vm293, %v3372, 0
  %3380 = vmatprep.subr.bf16.mxu0 0
  %3381 = vmatpush1.bf16.xpose.msra.mxu0 0
  %3382 = vmatprep.subr.bf16.mxu0 0
  %3383 = vmatpush1.bf16.xpose.msra.mxu0 0
  %3384 = vmatprep.subr.bf16.mxu0 0
  %3385 = vmatpush1.bf16.xpose.msra.mxu0 0
  %3386 = vmatprep.subr.bf16.mxu0 0
  %3387 = vmatpush1.bf16.xpose.msra.mxu0 0
  %3388 = vmatprep.subr.bf16.mxu0 0
  %3389 = vmatpush1.bf16.xpose.msra.mxu0 0
  %3390 = vmatprep.subr.bf16.mxu0 0
  %3391 = vmatpush1.bf16.xpose.msra.mxu0 0
  %3392 = vmatprep.subr.bf16.mxu0 0
  %3393 = vmatpush1.bf16.xpose.msra.mxu0 0
  %3394 = vmatprep.subr.bf16.mxu0 0
  %3395 = vmatpush1.bf16.xpose.msra.mxu0 %v3378
  %3396 = vmatprep.subr.bf16.mxu0 0
  %3397 = vmatpush2.bf16.xpose.msra.mxu0 0
  %3398 = vmatprep.subr.bf16.mxu0 0
  %3399 = vmatpush2.bf16.xpose.msra.mxu0 0
  %3400 = vmatprep.subr.bf16.mxu0 0
  %3401 = vmatpush2.bf16.xpose.msra.mxu0 0
  %3402 = vmatprep.subr.bf16.mxu0 0
  %3403 = vmatpush2.bf16.xpose.msra.mxu0 0
  %3404 = vmatprep.subr.bf16.mxu0 0
  %3405 = vmatpush2.bf16.xpose.msra.mxu0 0
  %3406 = vmatprep.subr.bf16.mxu0 0
  %3407 = vmatpush2.bf16.xpose.msra.mxu0 0
  %3408 = vmatprep.subr.bf16.mxu0 0
  %3409 = vmatpush2.bf16.xpose.msra.mxu0 0
  %3410 = vmatprep.subr.bf16.mxu0 0
  %3411 = vmatpush2.bf16.xpose.msra.mxu0 0
  %3412 = vmatprep.mubr.bf16.mxu0 0
  %3413 = vmatmul.mubr.bf16.gmra.mxu0 %v3375
  %v3414 = vpop.f32.mrf.mxu0
  %v3415 = vadd.f32 0.0, %v3414
  %v3416 = vpop.f32.mrf.mxu0
  %v3417 = vpop.f32.mrf.mxu0
  %v3418 = vpop.f32.mrf.mxu0
  %3419 = vdwg.mxu0
  %v3421 = vsel %vm293, %v3371, 0
  %v3424 = vsel %vm293, %v3373, 0
  %3426 = vmatprep.subr.bf16.mxu0 0
  %3427 = vmatpush1.bf16.xpose.msra.mxu0 0
  %3428 = vmatprep.subr.bf16.mxu0 0
  %3429 = vmatpush1.bf16.xpose.msra.mxu0 0
  %3430 = vmatprep.subr.bf16.mxu0 0
  %3431 = vmatpush1.bf16.xpose.msra.mxu0 0
  %3432 = vmatprep.subr.bf16.mxu0 0
  %3433 = vmatpush1.bf16.xpose.msra.mxu0 0
  %3434 = vmatprep.subr.bf16.mxu0 0
  %3435 = vmatpush1.bf16.xpose.msra.mxu0 0
  %3436 = vmatprep.subr.bf16.mxu0 0
  %3437 = vmatpush1.bf16.xpose.msra.mxu0 0
  %3438 = vmatprep.subr.bf16.mxu0 0
  %3439 = vmatpush1.bf16.xpose.msra.mxu0 0
  %3440 = vmatprep.subr.bf16.mxu0 0
  %3441 = vmatpush1.bf16.xpose.msra.mxu0 %v3424
  %3442 = vmatprep.subr.bf16.mxu0 0
  %3443 = vmatpush2.bf16.xpose.msra.mxu0 0
  %3444 = vmatprep.subr.bf16.mxu0 0
  %3445 = vmatpush2.bf16.xpose.msra.mxu0 0
  %3446 = vmatprep.subr.bf16.mxu0 0
  %3447 = vmatpush2.bf16.xpose.msra.mxu0 0
  %3448 = vmatprep.subr.bf16.mxu0 0
  %3449 = vmatpush2.bf16.xpose.msra.mxu0 0
  %3450 = vmatprep.subr.bf16.mxu0 0
  %3451 = vmatpush2.bf16.xpose.msra.mxu0 0
  %3452 = vmatprep.subr.bf16.mxu0 0
  %3453 = vmatpush2.bf16.xpose.msra.mxu0 0
  %3454 = vmatprep.subr.bf16.mxu0 0
  %3455 = vmatpush2.bf16.xpose.msra.mxu0 0
  %3456 = vmatprep.subr.bf16.mxu0 0
  %3457 = vmatpush2.bf16.xpose.msra.mxu0 0
  %3458 = vmatprep.mubr.bf16.mxu0 0
  %3459 = vmatmul.mubr.bf16.gmra.mxu0 %v3421
  %v3460 = vpop.f32.mrf.mxu0
  %v3461 = vadd.f32 0.0, %v3460
  %v3462 = vpop.f32.mrf.mxu0
  %v3463 = vpop.f32.mrf.mxu0
  %v3464 = vpop.f32.mrf.mxu0
  %3465 = vdwg.mxu0
  %v3466 = vmul.f32 %v3415, 0.35355338
  %v3467 = vmul.f32 %v3461, 0.35355338
  %v3468 = vsel %vm293, %v3466, -inf
  %3469 = vmax.xlane.f32.xlu0 %v3468
  %v3470 = vpop.xlane.xlu0 %3469
  %v3471 = vsel %vm293, %v3467, -inf
  %3472 = vmax.xlane.f32.xlu0 %v3471
  %v3473 = vpop.xlane.xlu0 %3472
  %v3474 = vsub.f32 %v3466, %v3470
  %v3475 = vsub.f32 %v3467, %v3473
  %v3476 = vmul.f32 %v3474, 1.442695
  %v3477 = vpow.pop %v3476
  %v3478 = vmul.f32 %v3475, 1.442695
  %v3479 = vpow.pop %v3478
  %v3480 = vsel %vm293, %v3477, 0.0
  %3481 = vadd.xlane.f32.xlu0 %v3480
  %v3482 = vpop.xlane.xlu0 %3481
  %v3483 = vsel %vm293, %v3479, 0.0
  %3484 = vadd.xlane.f32.xlu0 %v3483
  %v3485 = vpop.xlane.xlu0 %3484
  %v3486 = vrcp.pop %v3482
  %v3487 = vrcp.pop %v3485
  %v3488 = vmul.f32 %v3477, %v3486
  %v3489 = vmul.f32 %v3479, %v3487
  %v3490 = vpack.c.bf16 %v3488, %v3488
  %v3491 = vpack.c.bf16 %v3489, %v3489
  %v3492 = vpack.c.bf16 %v3364, %v3364
  %v3493 = vpack.c.bf16 %v3367, %v3367
  %v3495 = vsel %vm293, %v3490, 0
  %v3498 = vsel %vm417, %v3492, 0
  %3500 = vmatprep.subr.bf16.mxu0 0
  %3501 = vmatpush1.bf16.msra.mxu0 0
  %3502 = vmatprep.subr.bf16.mxu0 0
  %3503 = vmatpush1.bf16.msra.mxu0 0
  %3504 = vmatprep.subr.bf16.mxu0 0
  %3505 = vmatpush1.bf16.msra.mxu0 0
  %3506 = vmatprep.subr.bf16.mxu0 0
  %3507 = vmatpush1.bf16.msra.mxu0 0
  %3508 = vmatprep.subr.bf16.mxu0 0
  %3509 = vmatpush1.bf16.msra.mxu0 0
  %3510 = vmatprep.subr.bf16.mxu0 0
  %3511 = vmatpush1.bf16.msra.mxu0 0
  %3512 = vmatprep.subr.bf16.mxu0 0
  %3513 = vmatpush1.bf16.msra.mxu0 0
  %3514 = vmatprep.subr.bf16.mxu0 0
  %3515 = vmatpush1.bf16.msra.mxu0 %v3498
  %3516 = vmatprep.subr.bf16.mxu0 0
  %3517 = vmatpush2.bf16.msra.mxu0 0
  %3518 = vmatprep.subr.bf16.mxu0 0
  %3519 = vmatpush2.bf16.msra.mxu0 0
  %3520 = vmatprep.subr.bf16.mxu0 0
  %3521 = vmatpush2.bf16.msra.mxu0 0
  %3522 = vmatprep.subr.bf16.mxu0 0
  %3523 = vmatpush2.bf16.msra.mxu0 0
  %3524 = vmatprep.subr.bf16.mxu0 0
  %3525 = vmatpush2.bf16.msra.mxu0 0
  %3526 = vmatprep.subr.bf16.mxu0 0
  %3527 = vmatpush2.bf16.msra.mxu0 0
  %3528 = vmatprep.subr.bf16.mxu0 0
  %3529 = vmatpush2.bf16.msra.mxu0 0
  %3530 = vmatprep.subr.bf16.mxu0 0
  %3531 = vmatpush2.bf16.msra.mxu0 0
  %3532 = vmatprep.mubr.bf16.mxu0 0
  %3533 = vmatmul.mubr.bf16.gmra.mxu0 %v3495
  %v3534 = vpop.f32.mrf.mxu0
  %v3535 = vadd.f32 0.0, %v3534
  %v3536 = vpop.f32.mrf.mxu0
  %v3537 = vpop.f32.mrf.mxu0
  %v3538 = vpop.f32.mrf.mxu0
  %3539 = vdwg.mxu0
  %v3541 = vsel %vm293, %v3491, 0
  %v3544 = vsel %vm417, %v3493, 0
  %3546 = vmatprep.subr.bf16.mxu0 0
  %3547 = vmatpush1.bf16.msra.mxu0 0
  %3548 = vmatprep.subr.bf16.mxu0 0
  %3549 = vmatpush1.bf16.msra.mxu0 0
  %3550 = vmatprep.subr.bf16.mxu0 0
  %3551 = vmatpush1.bf16.msra.mxu0 0
  %3552 = vmatprep.subr.bf16.mxu0 0
  %3553 = vmatpush1.bf16.msra.mxu0 0
  %3554 = vmatprep.subr.bf16.mxu0 0
  %3555 = vmatpush1.bf16.msra.mxu0 0
  %3556 = vmatprep.subr.bf16.mxu0 0
  %3557 = vmatpush1.bf16.msra.mxu0 0
  %3558 = vmatprep.subr.bf16.mxu0 0
  %3559 = vmatpush1.bf16.msra.mxu0 0
  %3560 = vmatprep.subr.bf16.mxu0 0
  %3561 = vmatpush1.bf16.msra.mxu0 %v3544
  %3562 = vmatprep.subr.bf16.mxu0 0
  %3563 = vmatpush2.bf16.msra.mxu0 0
  %3564 = vmatprep.subr.bf16.mxu0 0
  %3565 = vmatpush2.bf16.msra.mxu0 0
  %3566 = vmatprep.subr.bf16.mxu0 0
  %3567 = vmatpush2.bf16.msra.mxu0 0
  %3568 = vmatprep.subr.bf16.mxu0 0
  %3569 = vmatpush2.bf16.msra.mxu0 0
  %3570 = vmatprep.subr.bf16.mxu0 0
  %3571 = vmatpush2.bf16.msra.mxu0 0
  %3572 = vmatprep.subr.bf16.mxu0 0
  %3573 = vmatpush2.bf16.msra.mxu0 0
  %3574 = vmatprep.subr.bf16.mxu0 0
  %3575 = vmatpush2.bf16.msra.mxu0 0
  %3576 = vmatprep.subr.bf16.mxu0 0
  %3577 = vmatpush2.bf16.msra.mxu0 0
  %3578 = vmatprep.mubr.bf16.mxu0 0
  %3579 = vmatmul.mubr.bf16.gmra.mxu0 %v3541
  %v3580 = vpop.f32.mrf.mxu0
  %v3581 = vadd.f32 0.0, %v3580
  %v3582 = vpop.f32.mrf.mxu0
  %v3583 = vpop.f32.mrf.mxu0
  %v3584 = vpop.f32.mrf.mxu0
  %3585 = vdwg.mxu0
  %v3586 = vpack.c.bf16 %v3581, %v3535
  %s3587 = scalar_lea.vmem %s8, 24
  %v3588 = vld [vmem:[%s3587] sm:$0xf]
  %v3590 = vsel %vm293, %v3586, 0
  %v3593 = vsel %vm417, %v3588, 0
  %3595 = vmatprep.subr.bf16.mxu0 0
  %3596 = vmatpush1.bf16.msra.mxu0 0
  %3597 = vmatprep.subr.bf16.mxu0 0
  %3598 = vmatpush1.bf16.msra.mxu0 0
  %3599 = vmatprep.subr.bf16.mxu0 0
  %3600 = vmatpush1.bf16.msra.mxu0 0
  %3601 = vmatprep.subr.bf16.mxu0 0
  %3602 = vmatpush1.bf16.msra.mxu0 0
  %3603 = vmatprep.subr.bf16.mxu0 0
  %3604 = vmatpush1.bf16.msra.mxu0 0
  %3605 = vmatprep.subr.bf16.mxu0 0
  %3606 = vmatpush1.bf16.msra.mxu0 0
  %3607 = vmatprep.subr.bf16.mxu0 0
  %3608 = vmatpush1.bf16.msra.mxu0 0
  %3609 = vmatprep.subr.bf16.mxu0 0
  %3610 = vmatpush1.bf16.msra.mxu0 %v3593
  %3611 = vmatprep.subr.bf16.mxu0 0
  %3612 = vmatpush2.bf16.msra.mxu0 0
  %3613 = vmatprep.subr.bf16.mxu0 0
  %3614 = vmatpush2.bf16.msra.mxu0 0
  %3615 = vmatprep.subr.bf16.mxu0 0
  %3616 = vmatpush2.bf16.msra.mxu0 0
  %3617 = vmatprep.subr.bf16.mxu0 0
  %3618 = vmatpush2.bf16.msra.mxu0 0
  %3619 = vmatprep.subr.bf16.mxu0 0
  %3620 = vmatpush2.bf16.msra.mxu0 0
  %3621 = vmatprep.subr.bf16.mxu0 0
  %3622 = vmatpush2.bf16.msra.mxu0 0
  %3623 = vmatprep.subr.bf16.mxu0 0
  %3624 = vmatpush2.bf16.msra.mxu0 0
  %3625 = vmatprep.subr.bf16.mxu0 0
  %3626 = vmatpush2.bf16.msra.mxu0 0
  %3627 = vmatprep.mubr.bf16.mxu0 0
  %3628 = vmatmul.mubr.bf16.gmra.mxu0 %v3590
  %v3629 = vpop.f32.mrf.mxu0
  %v3630 = vadd.f32 0.0, %v3629
  %v3631 = vpop.f32.mrf.mxu0
  %v3632 = vpop.f32.mrf.mxu0
  %v3633 = vadd.f32 0.0, %v3632
  %v3634 = vpop.f32.mrf.mxu0
  %3635 = vdwg.mxu0
  %v3636 = vadd.f32 %v3122, %v3630
  %v3637 = vadd.f32 %v3123, %v3633
  %s3638 = scalar_lea.vmem %s2, 224
  %v3639 = vld [vmem:[%s3638] sm:$0xf]
  %v3640 = vld [vmem:[%s3638 + $0x4] sm:$0xf]
  %v3641 = vld [vmem:[%s3638 + $0x8] sm:$0xf]
  %v3642 = vld [vmem:[%s3638 + $0xc] sm:$0xf]
  %v3643 = vld [vmem:[%s3638 + $0x10] sm:$0xf]
  %v3644 = vld [vmem:[%s3638 + $0x14] sm:$0xf]
  %v3645 = vld [vmem:[%s3638 + $0x18] sm:$0xf]
  %v3646 = vld [vmem:[%s3638 + $0x1c] sm:$0xf]
  %s3647 = scalar_lea.vmem %s3, 7
  %v3648 = vld [vmem:[%s3647] sm:$0x1]
  %v3650 = vlaneseq
  %v3651 = vshrl.u32 %v3650, 7
  %v3652 = vsub.s32 0, %v3651
  %v3653 = vrot.slane %v3648, %v3652
  %v3663 = vunpack.c.l.b16 %v3639
  %v3664 = vunpack.c.l.b16 %v3640
  %v3665 = vunpack.c.l.b16 %v3641
  %v3666 = vunpack.c.l.b16 %v3642
  %v3667 = vunpack.c.l.b16 %v3643
  %v3668 = vunpack.c.l.b16 %v3644
  %v3669 = vunpack.c.l.b16 %v3645
  %v3670 = vunpack.c.l.b16 %v3646
  %v3671 = vpack.c.b16 %v3664, %v3663
  %v3672 = vpack.c.b16 %v3666, %v3665
  %v3673 = vpack.c.b16 %v3668, %v3667
  %v3674 = vpack.c.b16 %v3670, %v3669
  %3679 = vmatprep.subr.bf16.mxu0 0
  %3680 = vmatpush1.bf16.msra.mxu0 0
  %3681 = vmatprep.subr.bf16.mxu0 0
  %3682 = vmatpush1.bf16.msra.mxu0 0
  %3683 = vmatprep.subr.bf16.mxu0 0
  %3684 = vmatpush1.bf16.msra.mxu0 0
  %3685 = vmatprep.subr.bf16.mxu0 0
  %3686 = vmatpush1.bf16.msra.mxu0 0
  %3687 = vmatprep.subr.bf16.mxu0 0
  %3688 = vmatpush1.bf16.msra.mxu0 %v3674
  %3689 = vmatprep.subr.bf16.mxu0 0
  %3690 = vmatpush1.bf16.msra.mxu0 %v3673
  %3691 = vmatprep.subr.bf16.mxu0 0
  %3692 = vmatpush1.bf16.msra.mxu0 %v3672
  %3693 = vmatprep.subr.bf16.mxu0 0
  %3694 = vmatpush1.bf16.msra.mxu0 %v3671
  %3695 = vmatprep.subr.bf16.mxu0 0
  %3696 = vmatpush2.bf16.msra.mxu0 0
  %3697 = vmatprep.subr.bf16.mxu0 0
  %3698 = vmatpush2.bf16.msra.mxu0 0
  %3699 = vmatprep.subr.bf16.mxu0 0
  %3700 = vmatpush2.bf16.msra.mxu0 0
  %3701 = vmatprep.subr.bf16.mxu0 0
  %3702 = vmatpush2.bf16.msra.mxu0 0
  %3703 = vmatprep.subr.bf16.mxu0 0
  %3704 = vmatpush2.bf16.msra.mxu0 0
  %3705 = vmatprep.subr.bf16.mxu0 0
  %3706 = vmatpush2.bf16.msra.mxu0 0
  %3707 = vmatprep.subr.bf16.mxu0 0
  %3708 = vmatpush2.bf16.msra.mxu0 0
  %3709 = vmatprep.subr.bf16.mxu0 0
  %3710 = vmatpush2.bf16.msra.mxu0 0
  %3711 = vmatprep.mubr.bf16.mxu0 0
  %3712 = vmatmul.mubr.bf16.gmra.mxu0 %v83
  %v3713 = vpop.f32.mrf.mxu0
  %v3714 = vadd.f32 %v3653, %v3713
  %v3715 = vpop.f32.mrf.mxu0
  %v3716 = vpop.f32.mrf.mxu0
  %v3717 = vadd.f32 %v3653, %v3716
  %v3718 = vpop.f32.mrf.mxu0
  %3719 = vdwg.mxu0
  %s3720 = scalar_lea.vmem %s4, 224
  %v3721 = vld [vmem:[%s3720] sm:$0xf]
  %v3722 = vld [vmem:[%s3720 + $0x4] sm:$0xf]
  %v3723 = vld [vmem:[%s3720 + $0x8] sm:$0xf]
  %v3724 = vld [vmem:[%s3720 + $0xc] sm:$0xf]
  %v3725 = vld [vmem:[%s3720 + $0x10] sm:$0xf]
  %v3726 = vld [vmem:[%s3720 + $0x14] sm:$0xf]
  %v3727 = vld [vmem:[%s3720 + $0x18] sm:$0xf]
  %v3728 = vld [vmem:[%s3720 + $0x1c] sm:$0xf]
  %s3729 = scalar_lea.vmem %s5, 7
  %v3730 = vld [vmem:[%s3729] sm:$0x1]
  %v3732 = vlaneseq
  %v3733 = vshrl.u32 %v3732, 7
  %v3734 = vsub.s32 0, %v3733
  %v3735 = vrot.slane %v3730, %v3734
  %v3745 = vunpack.c.l.b16 %v3721
  %v3746 = vunpack.c.l.b16 %v3722
  %v3747 = vunpack.c.l.b16 %v3723
  %v3748 = vunpack.c.l.b16 %v3724
  %v3749 = vunpack.c.l.b16 %v3725
  %v3750 = vunpack.c.l.b16 %v3726
  %v3751 = vunpack.c.l.b16 %v3727
  %v3752 = vunpack.c.l.b16 %v3728
  %v3753 = vpack.c.b16 %v3746, %v3745
  %v3754 = vpack.c.b16 %v3748, %v3747
  %v3755 = vpack.c.b16 %v3750, %v3749
  %v3756 = vpack.c.b16 %v3752, %v3751
  %3761 = vmatprep.subr.bf16.mxu0 0
  %3762 = vmatpush1.bf16.msra.mxu0 0
  %3763 = vmatprep.subr.bf16.mxu0 0
  %3764 = vmatpush1.bf16.msra.mxu0 0
  %3765 = vmatprep.subr.bf16.mxu0 0
  %3766 = vmatpush1.bf16.msra.mxu0 0
  %3767 = vmatprep.subr.bf16.mxu0 0
  %3768 = vmatpush1.bf16.msra.mxu0 0
  %3769 = vmatprep.subr.bf16.mxu0 0
  %3770 = vmatpush1.bf16.msra.mxu0 %v3756
  %3771 = vmatprep.subr.bf16.mxu0 0
  %3772 = vmatpush1.bf16.msra.mxu0 %v3755
  %3773 = vmatprep.subr.bf16.mxu0 0
  %3774 = vmatpush1.bf16.msra.mxu0 %v3754
  %3775 = vmatprep.subr.bf16.mxu0 0
  %3776 = vmatpush1.bf16.msra.mxu0 %v3753
  %3777 = vmatprep.subr.bf16.mxu0 0
  %3778 = vmatpush2.bf16.msra.mxu0 0
  %3779 = vmatprep.subr.bf16.mxu0 0
  %3780 = vmatpush2.bf16.msra.mxu0 0
  %3781 = vmatprep.subr.bf16.mxu0 0
  %3782 = vmatpush2.bf16.msra.mxu0 0
  %3783 = vmatprep.subr.bf16.mxu0 0
  %3784 = vmatpush2.bf16.msra.mxu0 0
  %3785 = vmatprep.subr.bf16.mxu0 0
  %3786 = vmatpush2.bf16.msra.mxu0 0
  %3787 = vmatprep.subr.bf16.mxu0 0
  %3788 = vmatpush2.bf16.msra.mxu0 0
  %3789 = vmatprep.subr.bf16.mxu0 0
  %3790 = vmatpush2.bf16.msra.mxu0 0
  %3791 = vmatprep.subr.bf16.mxu0 0
  %3792 = vmatpush2.bf16.msra.mxu0 0
  %3793 = vmatprep.mubr.bf16.mxu0 0
  %3794 = vmatmul.mubr.bf16.gmra.mxu0 %v166
  %v3795 = vpop.f32.mrf.mxu0
  %v3796 = vadd.f32 %v3735, %v3795
  %v3797 = vpop.f32.mrf.mxu0
  %v3798 = vpop.f32.mrf.mxu0
  %v3799 = vadd.f32 %v3735, %v3798
  %v3800 = vpop.f32.mrf.mxu0
  %3801 = vdwg.mxu0
  %s3802 = scalar_lea.vmem %s6, 224
  %v3803 = vld [vmem:[%s3802] sm:$0xf]
  %v3804 = vld [vmem:[%s3802 + $0x4] sm:$0xf]
  %v3805 = vld [vmem:[%s3802 + $0x8] sm:$0xf]
  %v3806 = vld [vmem:[%s3802 + $0xc] sm:$0xf]
  %v3807 = vld [vmem:[%s3802 + $0x10] sm:$0xf]
  %v3808 = vld [vmem:[%s3802 + $0x14] sm:$0xf]
  %v3809 = vld [vmem:[%s3802 + $0x18] sm:$0xf]
  %v3810 = vld [vmem:[%s3802 + $0x1c] sm:$0xf]
  %s3811 = scalar_lea.vmem %s7, 7
  %v3812 = vld [vmem:[%s3811] sm:$0x1]
  %v3814 = vlaneseq
  %v3815 = vshrl.u32 %v3814, 7
  %v3816 = vsub.s32 0, %v3815
  %v3817 = vrot.slane %v3812, %v3816
  %v3827 = vunpack.c.l.b16 %v3803
  %v3828 = vunpack.c.l.b16 %v3804
  %v3829 = vunpack.c.l.b16 %v3805
  %v3830 = vunpack.c.l.b16 %v3806
  %v3831 = vunpack.c.l.b16 %v3807
  %v3832 = vunpack.c.l.b16 %v3808
  %v3833 = vunpack.c.l.b16 %v3809
  %v3834 = vunpack.c.l.b16 %v3810
  %v3835 = vpack.c.b16 %v3828, %v3827
  %v3836 = vpack.c.b16 %v3830, %v3829
  %v3837 = vpack.c.b16 %v3832, %v3831
  %v3838 = vpack.c.b16 %v3834, %v3833
  %3843 = vmatprep.subr.bf16.mxu0 0
  %3844 = vmatpush1.bf16.msra.mxu0 0
  %3845 = vmatprep.subr.bf16.mxu0 0
  %3846 = vmatpush1.bf16.msra.mxu0 0
  %3847 = vmatprep.subr.bf16.mxu0 0
  %3848 = vmatpush1.bf16.msra.mxu0 0
  %3849 = vmatprep.subr.bf16.mxu0 0
  %3850 = vmatpush1.bf16.msra.mxu0 0
  %3851 = vmatprep.subr.bf16.mxu0 0
  %3852 = vmatpush1.bf16.msra.mxu0 %v3838
  %3853 = vmatprep.subr.bf16.mxu0 0
  %3854 = vmatpush1.bf16.msra.mxu0 %v3837
  %3855 = vmatprep.subr.bf16.mxu0 0
  %3856 = vmatpush1.bf16.msra.mxu0 %v3836
  %3857 = vmatprep.subr.bf16.mxu0 0
  %3858 = vmatpush1.bf16.msra.mxu0 %v3835
  %3859 = vmatprep.subr.bf16.mxu0 0
  %3860 = vmatpush2.bf16.msra.mxu0 0
  %3861 = vmatprep.subr.bf16.mxu0 0
  %3862 = vmatpush2.bf16.msra.mxu0 0
  %3863 = vmatprep.subr.bf16.mxu0 0
  %3864 = vmatpush2.bf16.msra.mxu0 0
  %3865 = vmatprep.subr.bf16.mxu0 0
  %3866 = vmatpush2.bf16.msra.mxu0 0
  %3867 = vmatprep.subr.bf16.mxu0 0
  %3868 = vmatpush2.bf16.msra.mxu0 0
  %3869 = vmatprep.subr.bf16.mxu0 0
  %3870 = vmatpush2.bf16.msra.mxu0 0
  %3871 = vmatprep.subr.bf16.mxu0 0
  %3872 = vmatpush2.bf16.msra.mxu0 0
  %3873 = vmatprep.subr.bf16.mxu0 0
  %3874 = vmatpush2.bf16.msra.mxu0 0
  %3875 = vmatprep.mubr.bf16.mxu0 0
  %3876 = vmatmul.mubr.bf16.gmra.mxu0 %v166
  %v3877 = vpop.f32.mrf.mxu0
  %v3878 = vadd.f32 %v3817, %v3877
  %v3879 = vpop.f32.mrf.mxu0
  %v3880 = vpop.f32.mrf.mxu0
  %v3881 = vadd.f32 %v3817, %v3880
  %v3882 = vpop.f32.mrf.mxu0
  %3883 = vdwg.mxu0
  %v3884 = vpack.c.bf16 %v3714, %v3714
  %v3885 = vpack.c.bf16 %v3717, %v3717
  %v3886 = vpack.c.bf16 %v3796, %v3796
  %v3887 = vpack.c.bf16 %v3799, %v3799
  %v3889 = vsel %vm293, %v3884, 0
  %v3892 = vsel %vm293, %v3886, 0
  %3894 = vmatprep.subr.bf16.mxu0 0
  %3895 = vmatpush1.bf16.xpose.msra.mxu0 0
  %3896 = vmatprep.subr.bf16.mxu0 0
  %3897 = vmatpush1.bf16.xpose.msra.mxu0 0
  %3898 = vmatprep.subr.bf16.mxu0 0
  %3899 = vmatpush1.bf16.xpose.msra.mxu0 0
  %3900 = vmatprep.subr.bf16.mxu0 0
  %3901 = vmatpush1.bf16.xpose.msra.mxu0 0
  %3902 = vmatprep.subr.bf16.mxu0 0
  %3903 = vmatpush1.bf16.xpose.msra.mxu0 0
  %3904 = vmatprep.subr.bf16.mxu0 0
  %3905 = vmatpush1.bf16.xpose.msra.mxu0 0
  %3906 = vmatprep.subr.bf16.mxu0 0
  %3907 = vmatpush1.bf16.xpose.msra.mxu0 0
  %3908 = vmatprep.subr.bf16.mxu0 0
  %3909 = vmatpush1.bf16.xpose.msra.mxu0 %v3892
  %3910 = vmatprep.subr.bf16.mxu0 0
  %3911 = vmatpush2.bf16.xpose.msra.mxu0 0
  %3912 = vmatprep.subr.bf16.mxu0 0
  %3913 = vmatpush2.bf16.xpose.msra.mxu0 0
  %3914 = vmatprep.subr.bf16.mxu0 0
  %3915 = vmatpush2.bf16.xpose.msra.mxu0 0
  %3916 = vmatprep.subr.bf16.mxu0 0
  %3917 = vmatpush2.bf16.xpose.msra.mxu0 0
  %3918 = vmatprep.subr.bf16.mxu0 0
  %3919 = vmatpush2.bf16.xpose.msra.mxu0 0
  %3920 = vmatprep.subr.bf16.mxu0 0
  %3921 = vmatpush2.bf16.xpose.msra.mxu0 0
  %3922 = vmatprep.subr.bf16.mxu0 0
  %3923 = vmatpush2.bf16.xpose.msra.mxu0 0
  %3924 = vmatprep.subr.bf16.mxu0 0
  %3925 = vmatpush2.bf16.xpose.msra.mxu0 0
  %3926 = vmatprep.mubr.bf16.mxu0 0
  %3927 = vmatmul.mubr.bf16.gmra.mxu0 %v3889
  %v3928 = vpop.f32.mrf.mxu0
  %v3929 = vadd.f32 0.0, %v3928
  %v3930 = vpop.f32.mrf.mxu0
  %v3931 = vpop.f32.mrf.mxu0
  %v3932 = vpop.f32.mrf.mxu0
  %3933 = vdwg.mxu0
  %v3935 = vsel %vm293, %v3885, 0
  %v3938 = vsel %vm293, %v3887, 0
  %3940 = vmatprep.subr.bf16.mxu0 0
  %3941 = vmatpush1.bf16.xpose.msra.mxu0 0
  %3942 = vmatprep.subr.bf16.mxu0 0
  %3943 = vmatpush1.bf16.xpose.msra.mxu0 0
  %3944 = vmatprep.subr.bf16.mxu0 0
  %3945 = vmatpush1.bf16.xpose.msra.mxu0 0
  %3946 = vmatprep.subr.bf16.mxu0 0
  %3947 = vmatpush1.bf16.xpose.msra.mxu0 0
  %3948 = vmatprep.subr.bf16.mxu0 0
  %3949 = vmatpush1.bf16.xpose.msra.mxu0 0
  %3950 = vmatprep.subr.bf16.mxu0 0
  %3951 = vmatpush1.bf16.xpose.msra.mxu0 0
  %3952 = vmatprep.subr.bf16.mxu0 0
  %3953 = vmatpush1.bf16.xpose.msra.mxu0 0
  %3954 = vmatprep.subr.bf16.mxu0 0
  %3955 = vmatpush1.bf16.xpose.msra.mxu0 %v3938
  %3956 = vmatprep.subr.bf16.mxu0 0
  %3957 = vmatpush2.bf16.xpose.msra.mxu0 0
  %3958 = vmatprep.subr.bf16.mxu0 0
  %3959 = vmatpush2.bf16.xpose.msra.mxu0 0
  %3960 = vmatprep.subr.bf16.mxu0 0
  %3961 = vmatpush2.bf16.xpose.msra.mxu0 0
  %3962 = vmatprep.subr.bf16.mxu0 0
  %3963 = vmatpush2.bf16.xpose.msra.mxu0 0
  %3964 = vmatprep.subr.bf16.mxu0 0
  %3965 = vmatpush2.bf16.xpose.msra.mxu0 0
  %3966 = vmatprep.subr.bf16.mxu0 0
  %3967 = vmatpush2.bf16.xpose.msra.mxu0 0
  %3968 = vmatprep.subr.bf16.mxu0 0
  %3969 = vmatpush2.bf16.xpose.msra.mxu0 0
  %3970 = vmatprep.subr.bf16.mxu0 0
  %3971 = vmatpush2.bf16.xpose.msra.mxu0 0
  %3972 = vmatprep.mubr.bf16.mxu0 0
  %3973 = vmatmul.mubr.bf16.gmra.mxu0 %v3935
  %v3974 = vpop.f32.mrf.mxu0
  %v3975 = vadd.f32 0.0, %v3974
  %v3976 = vpop.f32.mrf.mxu0
  %v3977 = vpop.f32.mrf.mxu0
  %v3978 = vpop.f32.mrf.mxu0
  %3979 = vdwg.mxu0
  %v3980 = vmul.f32 %v3929, 0.35355338
  %v3981 = vmul.f32 %v3975, 0.35355338
  %v3982 = vsel %vm293, %v3980, -inf
  %3983 = vmax.xlane.f32.xlu0 %v3982
  %v3984 = vpop.xlane.xlu0 %3983
  %v3985 = vsel %vm293, %v3981, -inf
  %3986 = vmax.xlane.f32.xlu0 %v3985
  %v3987 = vpop.xlane.xlu0 %3986
  %v3988 = vsub.f32 %v3980, %v3984
  %v3989 = vsub.f32 %v3981, %v3987
  %v3990 = vmul.f32 %v3988, 1.442695
  %v3991 = vpow.pop %v3990
  %v3992 = vmul.f32 %v3989, 1.442695
  %v3993 = vpow.pop %v3992
  %v3994 = vsel %vm293, %v3991, 0.0
  %3995 = vadd.xlane.f32.xlu0 %v3994
  %v3996 = vpop.xlane.xlu0 %3995
  %v3997 = vsel %vm293, %v3993, 0.0
  %3998 = vadd.xlane.f32.xlu0 %v3997
  %v3999 = vpop.xlane.xlu0 %3998
  %v4000 = vrcp.pop %v3996
  %v4001 = vrcp.pop %v3999
  %v4002 = vmul.f32 %v3991, %v4000
  %v4003 = vmul.f32 %v3993, %v4001
  %v4004 = vpack.c.bf16 %v4002, %v4002
  %v4005 = vpack.c.bf16 %v4003, %v4003
  %v4006 = vpack.c.bf16 %v3878, %v3878
  %v4007 = vpack.c.bf16 %v3881, %v3881
  %v4009 = vsel %vm293, %v4004, 0
  %v4012 = vsel %vm417, %v4006, 0
  %4014 = vmatprep.subr.bf16.mxu0 0
  %4015 = vmatpush1.bf16.msra.mxu0 0
  %4016 = vmatprep.subr.bf16.mxu0 0
  %4017 = vmatpush1.bf16.msra.mxu0 0
  %4018 = vmatprep.subr.bf16.mxu0 0
  %4019 = vmatpush1.bf16.msra.mxu0 0
  %4020 = vmatprep.subr.bf16.mxu0 0
  %4021 = vmatpush1.bf16.msra.mxu0 0
  %4022 = vmatprep.subr.bf16.mxu0 0
  %4023 = vmatpush1.bf16.msra.mxu0 0
  %4024 = vmatprep.subr.bf16.mxu0 0
  %4025 = vmatpush1.bf16.msra.mxu0 0
  %4026 = vmatprep.subr.bf16.mxu0 0
  %4027 = vmatpush1.bf16.msra.mxu0 0
  %4028 = vmatprep.subr.bf16.mxu0 0
  %4029 = vmatpush1.bf16.msra.mxu0 %v4012
  %4030 = vmatprep.subr.bf16.mxu0 0
  %4031 = vmatpush2.bf16.msra.mxu0 0
  %4032 = vmatprep.subr.bf16.mxu0 0
  %4033 = vmatpush2.bf16.msra.mxu0 0
  %4034 = vmatprep.subr.bf16.mxu0 0
  %4035 = vmatpush2.bf16.msra.mxu0 0
  %4036 = vmatprep.subr.bf16.mxu0 0
  %4037 = vmatpush2.bf16.msra.mxu0 0
  %4038 = vmatprep.subr.bf16.mxu0 0
  %4039 = vmatpush2.bf16.msra.mxu0 0
  %4040 = vmatprep.subr.bf16.mxu0 0
  %4041 = vmatpush2.bf16.msra.mxu0 0
  %4042 = vmatprep.subr.bf16.mxu0 0
  %4043 = vmatpush2.bf16.msra.mxu0 0
  %4044 = vmatprep.subr.bf16.mxu0 0
  %4045 = vmatpush2.bf16.msra.mxu0 0
  %4046 = vmatprep.mubr.bf16.mxu0 0
  %4047 = vmatmul.mubr.bf16.gmra.mxu0 %v4009
  %v4048 = vpop.f32.mrf.mxu0
  %v4049 = vadd.f32 0.0, %v4048
  %v4050 = vpop.f32.mrf.mxu0
  %v4051 = vpop.f32.mrf.mxu0
  %v4052 = vpop.f32.mrf.mxu0
  %4053 = vdwg.mxu0
  %v4055 = vsel %vm293, %v4005, 0
  %v4058 = vsel %vm417, %v4007, 0
  %4060 = vmatprep.subr.bf16.mxu0 0
  %4061 = vmatpush1.bf16.msra.mxu0 0
  %4062 = vmatprep.subr.bf16.mxu0 0
  %4063 = vmatpush1.bf16.msra.mxu0 0
  %4064 = vmatprep.subr.bf16.mxu0 0
  %4065 = vmatpush1.bf16.msra.mxu0 0
  %4066 = vmatprep.subr.bf16.mxu0 0
  %4067 = vmatpush1.bf16.msra.mxu0 0
  %4068 = vmatprep.subr.bf16.mxu0 0
  %4069 = vmatpush1.bf16.msra.mxu0 0
  %4070 = vmatprep.subr.bf16.mxu0 0
  %4071 = vmatpush1.bf16.msra.mxu0 0
  %4072 = vmatprep.subr.bf16.mxu0 0
  %4073 = vmatpush1.bf16.msra.mxu0 0
  %4074 = vmatprep.subr.bf16.mxu0 0
  %4075 = vmatpush1.bf16.msra.mxu0 %v4058
  %4076 = vmatprep.subr.bf16.mxu0 0
  %4077 = vmatpush2.bf16.msra.mxu0 0
  %4078 = vmatprep.subr.bf16.mxu0 0
  %4079 = vmatpush2.bf16.msra.mxu0 0
  %4080 = vmatprep.subr.bf16.mxu0 0
  %4081 = vmatpush2.bf16.msra.mxu0 0
  %4082 = vmatprep.subr.bf16.mxu0 0
  %4083 = vmatpush2.bf16.msra.mxu0 0
  %4084 = vmatprep.subr.bf16.mxu0 0
  %4085 = vmatpush2.bf16.msra.mxu0 0
  %4086 = vmatprep.subr.bf16.mxu0 0
  %4087 = vmatpush2.bf16.msra.mxu0 0
  %4088 = vmatprep.subr.bf16.mxu0 0
  %4089 = vmatpush2.bf16.msra.mxu0 0
  %4090 = vmatprep.subr.bf16.mxu0 0
  %4091 = vmatpush2.bf16.msra.mxu0 0
  %4092 = vmatprep.mubr.bf16.mxu0 0
  %4093 = vmatmul.mubr.bf16.gmra.mxu0 %v4055
  %v4094 = vpop.f32.mrf.mxu0
  %v4095 = vadd.f32 0.0, %v4094
  %v4096 = vpop.f32.mrf.mxu0
  %v4097 = vpop.f32.mrf.mxu0
  %v4098 = vpop.f32.mrf.mxu0
  %4099 = vdwg.mxu0
  %v4100 = vpack.c.bf16 %v4095, %v4049
  %s4101 = scalar_lea.vmem %s8, 28
  %v4102 = vld [vmem:[%s4101] sm:$0xf]
  %v4104 = vsel %vm293, %v4100, 0
  %v4107 = vsel %vm417, %v4102, 0
  %4109 = vmatprep.subr.bf16.mxu0 0
  %4110 = vmatpush1.bf16.msra.mxu0 0
  %4111 = vmatprep.subr.bf16.mxu0 0
  %4112 = vmatpush1.bf16.msra.mxu0 0
  %4113 = vmatprep.subr.bf16.mxu0 0
  %4114 = vmatpush1.bf16.msra.mxu0 0
  %4115 = vmatprep.subr.bf16.mxu0 0
  %4116 = vmatpush1.bf16.msra.mxu0 0
  %4117 = vmatprep.subr.bf16.mxu0 0
  %4118 = vmatpush1.bf16.msra.mxu0 0
  %4119 = vmatprep.subr.bf16.mxu0 0
  %4120 = vmatpush1.bf16.msra.mxu0 0
  %4121 = vmatprep.subr.bf16.mxu0 0
  %4122 = vmatpush1.bf16.msra.mxu0 0
  %4123 = vmatprep.subr.bf16.mxu0 0
  %4124 = vmatpush1.bf16.msra.mxu0 %v4107
  %4125 = vmatprep.subr.bf16.mxu0 0
  %4126 = vmatpush2.bf16.msra.mxu0 0
  %4127 = vmatprep.subr.bf16.mxu0 0
  %4128 = vmatpush2.bf16.msra.mxu0 0
  %4129 = vmatprep.subr.bf16.mxu0 0
  %4130 = vmatpush2.bf16.msra.mxu0 0
  %4131 = vmatprep.subr.bf16.mxu0 0
  %4132 = vmatpush2.bf16.msra.mxu0 0
  %4133 = vmatprep.subr.bf16.mxu0 0
  %4134 = vmatpush2.bf16.msra.mxu0 0
  %4135 = vmatprep.subr.bf16.mxu0 0
  %4136 = vmatpush2.bf16.msra.mxu0 0
  %4137 = vmatprep.subr.bf16.mxu0 0
  %4138 = vmatpush2.bf16.msra.mxu0 0
  %4139 = vmatprep.subr.bf16.mxu0 0
  %4140 = vmatpush2.bf16.msra.mxu0 0
  %4141 = vmatprep.mubr.bf16.mxu0 0
  %4142 = vmatmul.mubr.bf16.gmra.mxu0 %v4104
  %v4143 = vpop.f32.mrf.mxu0
  %v4144 = vadd.f32 0.0, %v4143
  %v4145 = vpop.f32.mrf.mxu0
  %v4146 = vpop.f32.mrf.mxu0
  %v4147 = vadd.f32 0.0, %v4146
  %v4148 = vpop.f32.mrf.mxu0
  %4149 = vdwg.mxu0
  %v4150 = vadd.f32 %v3636, %v4144
  %v4151 = vadd.f32 %v3637, %v4147
  %v4152 = vld [vmem:[%s9] sm:$0x1]
  %v4154 = vlaneseq
  %v4155 = vshrl.u32 %v4154, 7
  %v4156 = vsub.s32 0, %v4155
  %v4157 = vrot.slane %v4152, %v4156
  %v4159 = vadd.f32 %v4150, %v4157
  %v4160 = vadd.f32 %v4151, %v4157
  %4161 = vst.msk [vmem:[%s10] sm:$0xff] %vm81, %v4159
  %4162 = vst.msk [vmem:[%s10 + $0x8] sm:$0xff] %vm81, %v4160
  // Predicated region
  $region42: #{timbre_block_forward.9} parent=0 // pred_check
    _
  $region43: #{timbre_block_forward.9} parent=0 // pred_check_branch
    %4164 = sbr.rel (0) target = $region45
  $region44: #{timbre_block_forward.9} parent=0 // pred_region
    _
  $region45: #{timbre_block_forward.9} parent=0 // pred_fallthru
    _
  // Predicated region
  $region46: #{timbre_block_forward.9} parent=0 // pred_check
    _
  $region47: #{timbre_block_forward.9} parent=0 // pred_check_branch
    %4166 = sbr.rel (0) target = $region49
  $region48: #{timbre_block_forward.9} parent=0 // pred_region
    _
  $region49: #{timbre_block_forward.9} parent=0 // pred_fallthru
    _

// kernel: timbre_block_forward.10
$region0: #{timbre_block_forward.10}
  #allocation0 [shape = 'u32[]', space=smem, size = 0x4, offset = 0x4, fixed_abs, tag = 'smem constant byte address 0x4 - core index']
  #allocation1 [shape = 'u32[144,128]{1,0:T(1,128)}', space=vmem, size = 0x12000, scoped, tag = 'internal scratch']
  %s0 = inlined_call_operand.vmem [shape: f32[16,64], index: 0, kind: input, shape index: {}]
  %s1 = inlined_call_operand.vmem [shape: f32[32,64], index: 1, kind: input, shape index: {}]
  %s2 = inlined_call_operand.vmem [shape: bf16[8,64,8], index: 2, kind: input, shape index: {}]
  %s3 = inlined_call_operand.vmem [shape: f32[8,1,8], index: 3, kind: input, shape index: {}]
  %s4 = inlined_call_operand.vmem [shape: bf16[8,64,8], index: 4, kind: input, shape index: {}]
  %s5 = inlined_call_operand.vmem [shape: f32[8,1,8], index: 5, kind: input, shape index: {}]
  %s6 = inlined_call_operand.vmem [shape: bf16[8,64,8], index: 6, kind: input, shape index: {}]
  %s7 = inlined_call_operand.vmem [shape: f32[8,1,8], index: 7, kind: input, shape index: {}]
  %s8 = inlined_call_operand.vmem [shape: bf16[8,8,64], index: 8, kind: input, shape index: {}]
  %s9 = inlined_call_operand.vmem [shape: f32[1,64], index: 9, kind: input, shape index: {}]
  %s10 = inlined_call_operand.vmem [shape: f32[16,64], index: 10, kind: output, shape index: {}]
  %s11 = sld [smem:[#allocation0]]
  $region50: #{timbre_block_forward.10} parent=0
    _
  %s13 = ssub.s32 1, %s11
  %s14 = scalar_select 0, %s13, %s11
  // Predicated region
  $region2: #{timbre_block_forward.10} parent=0 // pred_check
    _
  $region3: #{timbre_block_forward.10} parent=0 // pred_check_branch
    %16 = sbr.rel (0) target = $region5
  $region4: #{timbre_block_forward.10} parent=0 // pred_region
    _
  $region5: #{timbre_block_forward.10} parent=0 // pred_fallthru
    _
  // Predicated region
  $region6: #{timbre_block_forward.10} parent=0 // pred_check
    _
  $region7: #{timbre_block_forward.10} parent=0 // pred_check_branch
    %18 = sbr.rel (0) target = $region9
  $region8: #{timbre_block_forward.10} parent=0 // pred_region
    _
  $region9: #{timbre_block_forward.10} parent=0 // pred_fallthru
    _
  // Predicated region
  $region10: #{timbre_block_forward.10} parent=0 // pred_check
    _
  $region11: #{timbre_block_forward.10} parent=0 // pred_check_branch
    %20 = sbr.rel (0) target = $region13
  $region12: #{timbre_block_forward.10} parent=0 // pred_region
    _
  $region13: #{timbre_block_forward.10} parent=0 // pred_fallthru
    _
  // Predicated region
  $region14: #{timbre_block_forward.10} parent=0 // pred_check
    _
  $region15: #{timbre_block_forward.10} parent=0 // pred_check_branch
    %22 = sbr.rel (0) target = $region17
  $region16: #{timbre_block_forward.10} parent=0 // pred_region
    _
  $region17: #{timbre_block_forward.10} parent=0 // pred_fallthru
    _
  // Predicated region
  $region18: #{timbre_block_forward.10} parent=0 // pred_check
    _
  $region19: #{timbre_block_forward.10} parent=0 // pred_check_branch
    %24 = sbr.rel (0) target = $region21
  $region20: #{timbre_block_forward.10} parent=0 // pred_region
    _
  $region21: #{timbre_block_forward.10} parent=0 // pred_fallthru
    _
  // Predicated region
  $region22: #{timbre_block_forward.10} parent=0 // pred_check
    _
  $region23: #{timbre_block_forward.10} parent=0 // pred_check_branch
    %26 = sbr.rel (0) target = $region25
  $region24: #{timbre_block_forward.10} parent=0 // pred_region
    _
  $region25: #{timbre_block_forward.10} parent=0 // pred_fallthru
    _
  // Predicated region
  $region26: #{timbre_block_forward.10} parent=0 // pred_check
    _
  $region27: #{timbre_block_forward.10} parent=0 // pred_check_branch
    %28 = sbr.rel (0) target = $region29
  $region28: #{timbre_block_forward.10} parent=0 // pred_region
    _
  $region29: #{timbre_block_forward.10} parent=0 // pred_fallthru
    _
  // Predicated region
  $region30: #{timbre_block_forward.10} parent=0 // pred_check
    _
  $region31: #{timbre_block_forward.10} parent=0 // pred_check_branch
    %30 = sbr.rel (0) target = $region33
  $region32: #{timbre_block_forward.10} parent=0 // pred_region
    _
  $region33: #{timbre_block_forward.10} parent=0 // pred_fallthru
    _
  // Predicated region
  $region34: #{timbre_block_forward.10} parent=0 // pred_check
    _
  $region35: #{timbre_block_forward.10} parent=0 // pred_check_branch
    %32 = sbr.rel (0) target = $region37
  $region36: #{timbre_block_forward.10} parent=0 // pred_region
    _
  $region37: #{timbre_block_forward.10} parent=0 // pred_fallthru
    _
  // Predicated region
  $region38: #{timbre_block_forward.10} parent=0 // pred_check
    _
  $region39: #{timbre_block_forward.10} parent=0 // pred_check_branch
    %34 = sbr.rel (0) target = $region41
  $region40: #{timbre_block_forward.10} parent=0 // pred_region
    _
  $region41: #{timbre_block_forward.10} parent=0 // pred_fallthru
    _
  %v36 = vld [vmem:[%s0] sm:$0xff]
  %v37 = vld [vmem:[%s0 + $0x8] sm:$0xff]
  %v38 = vpack.c.bf16 %v37, %v36
  %v39 = vld [vmem:[%s1] sm:$0xff]
  %v40 = vld [vmem:[%s1 + $0x8] sm:$0xff]
  %v41 = vld [vmem:[%s1 + $0x10] sm:$0xff]
  %v42 = vld [vmem:[%s1 + $0x18] sm:$0xff]
  %v43 = vpack.c.bf16 %v40, %v39
  %v44 = vpack.c.bf16 %v42, %v41
  %v45 = vld [vmem:[%s2] sm:$0xf]
  %v46 = vld [vmem:[%s2 + $0x4] sm:$0xf]
  %v47 = vld [vmem:[%s2 + $0x8] sm:$0xf]
  %v48 = vld [vmem:[%s2 + $0xc] sm:$0xf]
  %v49 = vld [vmem:[%s2 + $0x10] sm:$0xf]
  %v50 = vld [vmem:[%s2 + $0x14] sm:$0xf]
  %v51 = vld [vmem:[%s2 + $0x18] sm:$0xf]
  %v52 = vld [vmem:[%s2 + $0x1c] sm:$0xf]
  %v53 = vld [vmem:[%s3] sm:$0x1]
  %v55 = vlaneseq
  %v56 = vshrl.u32 %v55, 7
  %v57 = vsub.s32 0, %v56
  %v58 = vrot.slane %v53, %v57
  %v68 = vunpack.c.l.b16 %v45
  %v69 = vunpack.c.l.b16 %v46
  %v70 = vunpack.c.l.b16 %v47
  %v71 = vunpack.c.l.b16 %v48
  %v72 = vunpack.c.l.b16 %v49
  %v73 = vunpack.c.l.b16 %v50
  %v74 = vunpack.c.l.b16 %v51
  %v75 = vunpack.c.l.b16 %v52
  %v76 = vpack.c.b16 %v69, %v68
  %v77 = vpack.c.b16 %v71, %v70
  %v78 = vpack.c.b16 %v73, %v72
  %v79 = vpack.c.b16 %v75, %v74
  %vm84 = vcmask 523264
  %v86 = vsel %vm84, %v38, 0
  %88 = vmatprep.subr.bf16.mxu0 0
  %89 = vmatpush1.bf16.msra.mxu0 0
  %90 = vmatprep.subr.bf16.mxu0 0
  %91 = vmatpush1.bf16.msra.mxu0 0
  %92 = vmatprep.subr.bf16.mxu0 0
  %93 = vmatpush1.bf16.msra.mxu0 0
  %94 = vmatprep.subr.bf16.mxu0 0
  %95 = vmatpush1.bf16.msra.mxu0 0
  %96 = vmatprep.subr.bf16.mxu0 0
  %97 = vmatpush1.bf16.msra.mxu0 %v79
  %98 = vmatprep.subr.bf16.mxu0 0
  %99 = vmatpush1.bf16.msra.mxu0 %v78
  %100 = vmatprep.subr.bf16.mxu0 0
  %101 = vmatpush1.bf16.msra.mxu0 %v77
  %102 = vmatprep.subr.bf16.mxu0 0
  %103 = vmatpush1.bf16.msra.mxu0 %v76
  %104 = vmatprep.subr.bf16.mxu0 0
  %105 = vmatpush2.bf16.msra.mxu0 0
  %106 = vmatprep.subr.bf16.mxu0 0
  %107 = vmatpush2.bf16.msra.mxu0 0
  %108 = vmatprep.subr.bf16.mxu0 0
  %109 = vmatpush2.bf16.msra.mxu0 0
  %110 = vmatprep.subr.bf16.mxu0 0
  %111 = vmatpush2.bf16.msra.mxu0 0
  %112 = vmatprep.subr.bf16.mxu0 0
  %113 = vmatpush2.bf16.msra.mxu0 0
  %114 = vmatprep.subr.bf16.mxu0 0
  %115 = vmatpush2.bf16.msra.mxu0 0
  %116 = vmatprep.subr.bf16.mxu0 0
  %117 = vmatpush2.bf16.msra.mxu0 0
  %118 = vmatprep.subr.bf16.mxu0 0
  %119 = vmatpush2.bf16.msra.mxu0 0
  %120 = vmatprep.mubr.bf16.mxu0 0
  %121 = vmatmul.mubr.bf16.gmra.mxu0 %v86
  %v122 = vpop.f32.mrf.mxu0
  %v123 = vadd.f32 %v58, %v122
  %v124 = vpop.f32.mrf.mxu0
  %v125 = vpop.f32.mrf.mxu0
  %v126 = vadd.f32 %v58, %v125
  %v127 = vpop.f32.mrf.mxu0
  %128 = vdwg.mxu0
  %v129 = vld [vmem:[%s4] sm:$0xf]
  %v130 = vld [vmem:[%s4 + $0x4] sm:$0xf]
  %v131 = vld [vmem:[%s4 + $0x8] sm:$0xf]
  %v132 = vld [vmem:[%s4 + $0xc] sm:$0xf]
  %v133 = vld [vmem:[%s4 + $0x10] sm:$0xf]
  %v134 = vld [vmem:[%s4 + $0x14] sm:$0xf]
  %v135 = vld [vmem:[%s4 + $0x18] sm:$0xf]
  %v136 = vld [vmem:[%s4 + $0x1c] sm:$0xf]
  %v137 = vld [vmem:[%s5] sm:$0x1]
  %v139 = vlaneseq
  %v140 = vshrl.u32 %v139, 7
  %v141 = vsub.s32 0, %v140
  %v142 = vrot.slane %v137, %v141
  %v152 = vunpack.c.l.b16 %v129
  %v153 = vunpack.c.l.b16 %v130
  %v154 = vunpack.c.l.b16 %v131
  %v155 = vunpack.c.l.b16 %v132
  %v156 = vunpack.c.l.b16 %v133
  %v157 = vunpack.c.l.b16 %v134
  %v158 = vunpack.c.l.b16 %v135
  %v159 = vunpack.c.l.b16 %v136
  %v160 = vpack.c.b16 %v153, %v152
  %v161 = vpack.c.b16 %v155, %v154
  %v162 = vpack.c.b16 %v157, %v156
  %v163 = vpack.c.b16 %v159, %v158
  %v169 = vsel %vm84, %v43, 0
  %v172 = vsel %vm84, %v44, 0
  %174 = vmatprep.subr.bf16.mxu0 0
  %175 = vmatpush1.bf16.msra.mxu0 0
  %176 = vmatprep.subr.bf16.mxu0 0
  %177 = vmatpush1.bf16.msra.mxu0 0
  %178 = vmatprep.subr.bf16.mxu0 0
  %179 = vmatpush1.bf16.msra.mxu0 0
  %180 = vmatprep.subr.bf16.mxu0 0
  %181 = vmatpush1.bf16.msra.mxu0 0
  %182 = vmatprep.subr.bf16.mxu0 0
  %183 = vmatpush1.bf16.msra.mxu0 %v163
  %184 = vmatprep.subr.bf16.mxu0 0
  %185 = vmatpush1.bf16.msra.mxu0 %v162
  %186 = vmatprep.subr.bf16.mxu0 0
  %187 = vmatpush1.bf16.msra.mxu0 %v161
  %188 = vmatprep.subr.bf16.mxu0 0
  %189 = vmatpush1.bf16.msra.mxu0 %v160
  %190 = vmatprep.subr.bf16.mxu0 0
  %191 = vmatpush2.bf16.msra.mxu0 0
  %192 = vmatprep.subr.bf16.mxu0 0
  %193 = vmatpush2.bf16.msra.mxu0 0
  %194 = vmatprep.subr.bf16.mxu0 0
  %195 = vmatpush2.bf16.msra.mxu0 0
  %196 = vmatprep.subr.bf16.mxu0 0
  %197 = vmatpush2.bf16.msra.mxu0 0
  %198 = vmatprep.subr.bf16.mxu0 0
  %199 = vmatpush2.bf16.msra.mxu0 0
  %200 = vmatprep.subr.bf16.mxu0 0
  %201 = vmatpush2.bf16.msra.mxu0 0
  %202 = vmatprep.subr.bf16.mxu0 0
  %203 = vmatpush2.bf16.msra.mxu0 0
  %204 = vmatprep.subr.bf16.mxu0 0
  %205 = vmatpush2.bf16.msra.mxu0 0
  %206 = vmatprep.mubr.bf16.mxu0 0
  %207 = vmatmul.mubr.bf16.gmra.mxu0 %v169
  %v208 = vpop.f32.mrf.mxu0
  %v209 = vadd.f32 %v142, %v208
  %v210 = vpop.f32.mrf.mxu0
  %v211 = vpop.f32.mrf.mxu0
  %v212 = vadd.f32 %v142, %v211
  %v213 = vpop.f32.mrf.mxu0
  %214 = vmatprep.mubr.bf16.mxu0 0
  %215 = vmatmul.mubr.bf16.gmra.mxu0 %v172
  %v216 = vpop.f32.mrf.mxu0
  %v217 = vadd.f32 %v142, %v216
  %v218 = vpop.f32.mrf.mxu0
  %v219 = vpop.f32.mrf.mxu0
  %v220 = vadd.f32 %v142, %v219
  %v221 = vpop.f32.mrf.mxu0
  %222 = vdwg.mxu0
  %v223 = vld [vmem:[%s6] sm:$0xf]
  %v224 = vld [vmem:[%s6 + $0x4] sm:$0xf]
  %v225 = vld [vmem:[%s6 + $0x8] sm:$0xf]
  %v226 = vld [vmem:[%s6 + $0xc] sm:$0xf]
  %v227 = vld [vmem:[%s6 + $0x10] sm:$0xf]
  %v228 = vld [vmem:[%s6 + $0x14] sm:$0xf]
  %v229 = vld [vmem:[%s6 + $0x18] sm:$0xf]
  %v230 = vld [vmem:[%s6 + $0x1c] sm:$0xf]
  %v231 = vld [vmem:[%s7] sm:$0x1]
  %v233 = vlaneseq
  %v234 = vshrl.u32 %v233, 7
  %v235 = vsub.s32 0, %v234
  %v236 = vrot.slane %v231, %v235
  %v246 = vunpack.c.l.b16 %v223
  %v247 = vunpack.c.l.b16 %v224
  %v248 = vunpack.c.l.b16 %v225
  %v249 = vunpack.c.l.b16 %v226
  %v250 = vunpack.c.l.b16 %v227
  %v251 = vunpack.c.l.b16 %v228
  %v252 = vunpack.c.l.b16 %v229
  %v253 = vunpack.c.l.b16 %v230
  %v254 = vpack.c.b16 %v247, %v246
  %v255 = vpack.c.b16 %v249, %v248
  %v256 = vpack.c.b16 %v251, %v250
  %v257 = vpack.c.b16 %v253, %v252
  %262 = vmatprep.subr.bf16.mxu0 0
  %263 = vmatpush1.bf16.msra.mxu0 0
  %264 = vmatprep.subr.bf16.mxu0 0
  %265 = vmatpush1.bf16.msra.mxu0 0
  %266 = vmatprep.subr.bf16.mxu0 0
  %267 = vmatpush1.bf16.msra.mxu0 0
  %268 = vmatprep.subr.bf16.mxu0 0
  %269 = vmatpush1.bf16.msra.mxu0 0
  %270 = vmatprep.subr.bf16.mxu0 0
  %271 = vmatpush1.bf16.msra.mxu0 %v257
  %272 = vmatprep.subr.bf16.mxu0 0
  %273 = vmatpush1.bf16.msra.mxu0 %v256
  %274 = vmatprep.subr.bf16.mxu0 0
  %275 = vmatpush1.bf16.msra.mxu0 %v255
  %276 = vmatprep.subr.bf16.mxu0 0
  %277 = vmatpush1.bf16.msra.mxu0 %v254
  %278 = vmatprep.subr.bf16.mxu0 0
  %279 = vmatpush2.bf16.msra.mxu0 0
  %280 = vmatprep.subr.bf16.mxu0 0
  %281 = vmatpush2.bf16.msra.mxu0 0
  %282 = vmatprep.subr.bf16.mxu0 0
  %283 = vmatpush2.bf16.msra.mxu0 0
  %284 = vmatprep.subr.bf16.mxu0 0
  %285 = vmatpush2.bf16.msra.mxu0 0
  %286 = vmatprep.subr.bf16.mxu0 0
  %287 = vmatpush2.bf16.msra.mxu0 0
  %288 = vmatprep.subr.bf16.mxu0 0
  %289 = vmatpush2.bf16.msra.mxu0 0
  %290 = vmatprep.subr.bf16.mxu0 0
  %291 = vmatpush2.bf16.msra.mxu0 0
  %292 = vmatprep.subr.bf16.mxu0 0
  %293 = vmatpush2.bf16.msra.mxu0 0
  %294 = vmatprep.mubr.bf16.mxu0 0
  %295 = vmatmul.mubr.bf16.gmra.mxu0 %v169
  %v296 = vpop.f32.mrf.mxu0
  %v297 = vadd.f32 %v236, %v296
  %v298 = vpop.f32.mrf.mxu0
  %v299 = vpop.f32.mrf.mxu0
  %v300 = vadd.f32 %v236, %v299
  %v301 = vpop.f32.mrf.mxu0
  %302 = vmatprep.mubr.bf16.mxu0 0
  %303 = vmatmul.mubr.bf16.gmra.mxu0 %v172
  %v304 = vpop.f32.mrf.mxu0
  %v305 = vadd.f32 %v236, %v304
  %v306 = vpop.f32.mrf.mxu0
  %v307 = vpop.f32.mrf.mxu0
  %v308 = vadd.f32 %v236, %v307
  %v309 = vpop.f32.mrf.mxu0
  %310 = vdwg.mxu0
  %v311 = vpack.c.bf16 %v123, %v123
  %v312 = vpack.c.bf16 %v126, %v126
  %v313 = vpack.c.bf16 %v212, %v209
  %v314 = vpack.c.bf16 %v220, %v217
  %vm315 = vcmask 64512
  %v317 = vsel %vm315, %v311, 0
  %v320 = vsel %vm315, %v313, 0
  %322 = vmatprep.subr.bf16.mxu0 0
  %323 = vmatpush1.bf16.xpose.msra.mxu0 0
  %324 = vmatprep.subr.bf16.mxu0 0
  %325 = vmatpush1.bf16.xpose.msra.mxu0 0
  %326 = vmatprep.subr.bf16.mxu0 0
  %327 = vmatpush1.bf16.xpose.msra.mxu0 0
  %328 = vmatprep.subr.bf16.mxu0 0
  %329 = vmatpush1.bf16.xpose.msra.mxu0 0
  %330 = vmatprep.subr.bf16.mxu0 0
  %331 = vmatpush1.bf16.xpose.msra.mxu0 0
  %332 = vmatprep.subr.bf16.mxu0 0
  %333 = vmatpush1.bf16.xpose.msra.mxu0 0
  %334 = vmatprep.subr.bf16.mxu0 0
  %335 = vmatpush1.bf16.xpose.msra.mxu0 0
  %336 = vmatprep.subr.bf16.mxu0 0
  %337 = vmatpush1.bf16.xpose.msra.mxu0 %v320
  %338 = vmatprep.subr.bf16.mxu0 0
  %339 = vmatpush2.bf16.xpose.msra.mxu0 0
  %340 = vmatprep.subr.bf16.mxu0 0
  %341 = vmatpush2.bf16.xpose.msra.mxu0 0
  %342 = vmatprep.subr.bf16.mxu0 0
  %343 = vmatpush2.bf16.xpose.msra.mxu0 0
  %344 = vmatprep.subr.bf16.mxu0 0
  %345 = vmatpush2.bf16.xpose.msra.mxu0 0
  %346 = vmatprep.subr.bf16.mxu0 0
  %347 = vmatpush2.bf16.xpose.msra.mxu0 0
  %348 = vmatprep.subr.bf16.mxu0 0
  %349 = vmatpush2.bf16.xpose.msra.mxu0 0
  %350 = vmatprep.subr.bf16.mxu0 0
  %351 = vmatpush2.bf16.xpose.msra.mxu0 0
  %352 = vmatprep.subr.bf16.mxu0 0
  %353 = vmatpush2.bf16.xpose.msra.mxu0 0
  %354 = vmatprep.mubr.bf16.mxu0 0
  %355 = vmatmul.mubr.bf16.gmra.mxu0 %v317
  %v356 = vpop.f32.mrf.mxu0
  %v357 = vadd.f32 0.0, %v356
  %v358 = vpop.f32.mrf.mxu0
  %v359 = vpop.f32.mrf.mxu0
  %v360 = vpop.f32.mrf.mxu0
  %361 = vdwg.mxu0
  %v363 = vsel %vm315, %v312, 0
  %v366 = vsel %vm315, %v314, 0
  %368 = vmatprep.subr.bf16.mxu0 0
  %369 = vmatpush1.bf16.xpose.msra.mxu0 0
  %370 = vmatprep.subr.bf16.mxu0 0
  %371 = vmatpush1.bf16.xpose.msra.mxu0 0
  %372 = vmatprep.subr.bf16.mxu0 0
  %373 = vmatpush1.bf16.xpose.msra.mxu0 0
  %374 = vmatprep.subr.bf16.mxu0 0
  %375 = vmatpush1.bf16.xpose.msra.mxu0 0
  %376 = vmatprep.subr.bf16.mxu0 0
  %377 = vmatpush1.bf16.xpose.msra.mxu0 0
  %378 = vmatprep.subr.bf16.mxu0 0
  %379 = vmatpush1.bf16.xpose.msra.mxu0 0
  %380 = vmatprep.subr.bf16.mxu0 0
  %381 = vmatpush1.bf16.xpose.msra.mxu0 0
  %382 = vmatprep.subr.bf16.mxu0 0
  %383 = vmatpush1.bf16.xpose.msra.mxu0 %v366
  %384 = vmatprep.subr.bf16.mxu0 0
  %385 = vmatpush2.bf16.xpose.msra.mxu0 0
  %386 = vmatprep.subr.bf16.mxu0 0
  %387 = vmatpush2.bf16.xpose.msra.mxu0 0
  %388 = vmatprep.subr.bf16.mxu0 0
  %389 = vmatpush2.bf16.xpose.msra.mxu0 0
  %390 = vmatprep.subr.bf16.mxu0 0
  %391 = vmatpush2.bf16.xpose.msra.mxu0 0
  %392 = vmatprep.subr.bf16.mxu0 0
  %393 = vmatpush2.bf16.xpose.msra.mxu0 0
  %394 = vmatprep.subr.bf16.mxu0 0
  %395 = vmatpush2.bf16.xpose.msra.mxu0 0
  %396 = vmatprep.subr.bf16.mxu0 0
  %397 = vmatpush2.bf16.xpose.msra.mxu0 0
  %398 = vmatprep.subr.bf16.mxu0 0
  %399 = vmatpush2.bf16.xpose.msra.mxu0 0
  %400 = vmatprep.mubr.bf16.mxu0 0
  %401 = vmatmul.mubr.bf16.gmra.mxu0 %v363
  %v402 = vpop.f32.mrf.mxu0
  %v403 = vadd.f32 0.0, %v402
  %v404 = vpop.f32.mrf.mxu0
  %v405 = vpop.f32.mrf.mxu0
  %v406 = vpop.f32.mrf.mxu0
  %407 = vdwg.mxu0
  %v408 = vmul.f32 %v357, 0.35355338
  %v409 = vmul.f32 %v403, 0.35355338
  %vm410 = vcmask 130048
  %v411 = vsel %vm410, %v408, -inf
  %412 = vmax.xlane.f32.xlu0 %v411
  %v413 = vpop.xlane.xlu0 %412
  %v414 = vsel %vm410, %v409, -inf
  %415 = vmax.xlane.f32.xlu0 %v414
  %v416 = vpop.xlane.xlu0 %415
  %v417 = vsub.f32 %v408, %v413
  %v418 = vsub.f32 %v409, %v416
  %v419 = vmul.f32 %v417, 1.442695
  %v420 = vpow.pop %v419
  %v421 = vmul.f32 %v418, 1.442695
  %v422 = vpow.pop %v421
  %v423 = vsel %vm410, %v420, 0.0
  %424 = vadd.xlane.f32.xlu0 %v423
  %v425 = vpop.xlane.xlu0 %424
  %v426 = vsel %vm410, %v422, 0.0
  %427 = vadd.xlane.f32.xlu0 %v426
  %v428 = vpop.xlane.xlu0 %427
  %v429 = vrcp.pop %v425
  %v430 = vrcp.pop %v428
  %v431 = vmul.f32 %v420, %v429
  %v432 = vmul.f32 %v422, %v430
  %v433 = vpack.c.bf16 %v431, %v431
  %v434 = vpack.c.bf16 %v432, %v432
  %v435 = vpack.c.bf16 %v300, %v297
  %v436 = vpack.c.bf16 %v308, %v305
  %v438 = vsel %vm410, %v433, 0
  %440 = vmatprep.subr.bf16.mxu0 0
  %441 = vmatpush1.bf16.msra.mxu0 0
  %442 = vmatprep.subr.bf16.mxu0 0
  %443 = vmatpush1.bf16.msra.mxu0 0
  %444 = vmatprep.subr.bf16.mxu0 0
  %445 = vmatpush1.bf16.msra.mxu0 0
  %446 = vmatprep.subr.bf16.mxu0 0
  %447 = vmatpush1.bf16.msra.mxu0 0
  %448 = vmatprep.subr.bf16.mxu0 0
  %449 = vmatpush1.bf16.msra.mxu0 0
  %450 = vmatprep.subr.bf16.mxu0 0
  %451 = vmatpush1.bf16.msra.mxu0 0
  %452 = vmatprep.subr.bf16.mxu0 0
  %453 = vmatpush1.bf16.msra.mxu0 0
  %454 = vmatprep.subr.bf16.mxu0 0
  %455 = vmatpush1.bf16.msra.mxu0 %v435
  %456 = vmatprep.subr.bf16.mxu0 0
  %457 = vmatpush2.bf16.msra.mxu0 0
  %458 = vmatprep.subr.bf16.mxu0 0
  %459 = vmatpush2.bf16.msra.mxu0 0
  %460 = vmatprep.subr.bf16.mxu0 0
  %461 = vmatpush2.bf16.msra.mxu0 0
  %462 = vmatprep.subr.bf16.mxu0 0
  %463 = vmatpush2.bf16.msra.mxu0 0
  %464 = vmatprep.subr.bf16.mxu0 0
  %465 = vmatpush2.bf16.msra.mxu0 0
  %466 = vmatprep.subr.bf16.mxu0 0
  %467 = vmatpush2.bf16.msra.mxu0 0
  %468 = vmatprep.subr.bf16.mxu0 0
  %469 = vmatpush2.bf16.msra.mxu0 0
  %470 = vmatprep.subr.bf16.mxu0 0
  %471 = vmatpush2.bf16.msra.mxu0 0
  %472 = vmatprep.mubr.bf16.mxu0 0
  %473 = vmatmul.mubr.bf16.gmra.mxu0 %v438
  %v474 = vpop.f32.mrf.mxu0
  %v475 = vadd.f32 0.0, %v474
  %v476 = vpop.f32.mrf.mxu0
  %v477 = vpop.f32.mrf.mxu0
  %v478 = vpop.f32.mrf.mxu0
  %479 = vdwg.mxu0
  %v481 = vsel %vm410, %v434, 0
  %483 = vmatprep.subr.bf16.mxu0 0
  %484 = vmatpush1.bf16.msra.mxu0 0
  %485 = vmatprep.subr.bf16.mxu0 0
  %486 = vmatpush1.bf16.msra.mxu0 0
  %487 = vmatprep.subr.bf16.mxu0 0
  %488 = vmatpush1.bf16.msra.mxu0 0
  %489 = vmatprep.subr.bf16.mxu0 0
  %490 = vmatpush1.bf16.msra.mxu0 0
  %491 = vmatprep.subr.bf16.mxu0 0
  %492 = vmatpush1.bf16.msra.mxu0 0
  %493 = vmatprep.subr.bf16.mxu0 0
  %494 = vmatpush1.bf16.msra.mxu0 0
  %495 = vmatprep.subr.bf16.mxu0 0
  %496 = vmatpush1.bf16.msra.mxu0 0
  %497 = vmatprep.subr.bf16.mxu0 0
  %498 = vmatpush1.bf16.msra.mxu0 %v436
  %499 = vmatprep.subr.bf16.mxu0 0
  %500 = vmatpush2.bf16.msra.mxu0 0
  %501 = vmatprep.subr.bf16.mxu0 0
  %502 = vmatpush2.bf16.msra.mxu0 0
  %503 = vmatprep.subr.bf16.mxu0 0
  %504 = vmatpush2.bf16.msra.mxu0 0
  %505 = vmatprep.subr.bf16.mxu0 0
  %506 = vmatpush2.bf16.msra.mxu0 0
  %507 = vmatprep.subr.bf16.mxu0 0
  %508 = vmatpush2.bf16.msra.mxu0 0
  %509 = vmatprep.subr.bf16.mxu0 0
  %510 = vmatpush2.bf16.msra.mxu0 0
  %511 = vmatprep.subr.bf16.mxu0 0
  %512 = vmatpush2.bf16.msra.mxu0 0
  %513 = vmatprep.subr.bf16.mxu0 0
  %514 = vmatpush2.bf16.msra.mxu0 0
  %515 = vmatprep.mubr.bf16.mxu0 0
  %516 = vmatmul.mubr.bf16.gmra.mxu0 %v481
  %v517 = vpop.f32.mrf.mxu0
  %v518 = vadd.f32 0.0, %v517
  %v519 = vpop.f32.mrf.mxu0
  %v520 = vpop.f32.mrf.mxu0
  %v521 = vpop.f32.mrf.mxu0
  %522 = vdwg.mxu0
  %v523 = vpack.c.bf16 %v518, %v475
  %v524 = vld [vmem:[%s8] sm:$0xf]
  %s525 = scalar_lea.vmem %s2, 32
  %v526 = vld [vmem:[%s525] sm:$0xf]
  %v527 = vld [vmem:[%s525 + $0x4] sm:$0xf]
  %v528 = vld [vmem:[%s525 + $0x8] sm:$0xf]
  %v529 = vld [vmem:[%s525 + $0xc] sm:$0xf]
  %v530 = vld [vmem:[%s525 + $0x10] sm:$0xf]
  %v531 = vld [vmem:[%s525 + $0x14] sm:$0xf]
  %v532 = vld [vmem:[%s525 + $0x18] sm:$0xf]
  %v533 = vld [vmem:[%s525 + $0x1c] sm:$0xf]
  %s534 = scalar_lea.vmem %s3, 1
  %v535 = vld [vmem:[%s534] sm:$0x1]
  %v537 = vlaneseq
  %v538 = vshrl.u32 %v537, 7
  %v539 = vsub.s32 0, %v538
  %v540 = vrot.slane %v535, %v539
  %v550 = vunpack.c.l.b16 %v526
  %v551 = vunpack.c.l.b16 %v527
  %v552 = vunpack.c.l.b16 %v528
  %v553 = vunpack.c.l.b16 %v529
  %v554 = vunpack.c.l.b16 %v530
  %v555 = vunpack.c.l.b16 %v531
  %v556 = vunpack.c.l.b16 %v532
  %v557 = vunpack.c.l.b16 %v533
  %v558 = vpack.c.b16 %v551, %v550
  %v559 = vpack.c.b16 %v553, %v552
  %v560 = vpack.c.b16 %v555, %v554
  %v561 = vpack.c.b16 %v557, %v556
  %566 = vmatprep.subr.bf16.mxu0 0
  %567 = vmatpush1.bf16.msra.mxu0 0
  %568 = vmatprep.subr.bf16.mxu0 0
  %569 = vmatpush1.bf16.msra.mxu0 0
  %570 = vmatprep.subr.bf16.mxu0 0
  %571 = vmatpush1.bf16.msra.mxu0 0
  %572 = vmatprep.subr.bf16.mxu0 0
  %573 = vmatpush1.bf16.msra.mxu0 0
  %574 = vmatprep.subr.bf16.mxu0 0
  %575 = vmatpush1.bf16.msra.mxu0 %v561
  %576 = vmatprep.subr.bf16.mxu0 0
  %577 = vmatpush1.bf16.msra.mxu0 %v560
  %578 = vmatprep.subr.bf16.mxu0 0
  %579 = vmatpush1.bf16.msra.mxu0 %v559
  %580 = vmatprep.subr.bf16.mxu0 0
  %581 = vmatpush1.bf16.msra.mxu0 %v558
  %582 = vmatprep.subr.bf16.mxu0 0
  %583 = vmatpush2.bf16.msra.mxu0 0
  %584 = vmatprep.subr.bf16.mxu0 0
  %585 = vmatpush2.bf16.msra.mxu0 0
  %586 = vmatprep.subr.bf16.mxu0 0
  %587 = vmatpush2.bf16.msra.mxu0 0
  %588 = vmatprep.subr.bf16.mxu0 0
  %589 = vmatpush2.bf16.msra.mxu0 0
  %590 = vmatprep.subr.bf16.mxu0 0
  %591 = vmatpush2.bf16.msra.mxu0 0
  %592 = vmatprep.subr.bf16.mxu0 0
  %593 = vmatpush2.bf16.msra.mxu0 0
  %594 = vmatprep.subr.bf16.mxu0 0
  %595 = vmatpush2.bf16.msra.mxu0 0
  %596 = vmatprep.subr.bf16.mxu0 0
  %597 = vmatpush2.bf16.msra.mxu0 0
  %598 = vmatprep.mubr.bf16.mxu0 0
  %599 = vmatmul.mubr.bf16.gmra.mxu0 %v86
  %v600 = vpop.f32.mrf.mxu0
  %v601 = vadd.f32 %v540, %v600
  %v602 = vpop.f32.mrf.mxu0
  %v603 = vpop.f32.mrf.mxu0
  %v604 = vadd.f32 %v540, %v603
  %v605 = vpop.f32.mrf.mxu0
  %606 = vdwg.mxu0
  %s607 = scalar_lea.vmem %s4, 32
  %v608 = vld [vmem:[%s607] sm:$0xf]
  %v609 = vld [vmem:[%s607 + $0x4] sm:$0xf]
  %v610 = vld [vmem:[%s607 + $0x8] sm:$0xf]
  %v611 = vld [vmem:[%s607 + $0xc] sm:$0xf]
  %v612 = vld [vmem:[%s607 + $0x10] sm:$0xf]
  %v613 = vld [vmem:[%s607 + $0x14] sm:$0xf]
  %v614 = vld [vmem:[%s607 + $0x18] sm:$0xf]
  %v615 = vld [vmem:[%s607 + $0x1c] sm:$0xf]
  %s616 = scalar_lea.vmem %s5, 1
  %v617 = vld [vmem:[%s616] sm:$0x1]
  %v619 = vlaneseq
  %v620 = vshrl.u32 %v619, 7
  %v621 = vsub.s32 0, %v620
  %v622 = vrot.slane %v617, %v621
  %v632 = vunpack.c.l.b16 %v608
  %v633 = vunpack.c.l.b16 %v609
  %v634 = vunpack.c.l.b16 %v610
  %v635 = vunpack.c.l.b16 %v611
  %v636 = vunpack.c.l.b16 %v612
  %v637 = vunpack.c.l.b16 %v613
  %v638 = vunpack.c.l.b16 %v614
  %v639 = vunpack.c.l.b16 %v615
  %v640 = vpack.c.b16 %v633, %v632
  %v641 = vpack.c.b16 %v635, %v634
  %v642 = vpack.c.b16 %v637, %v636
  %v643 = vpack.c.b16 %v639, %v638
  %648 = vmatprep.subr.bf16.mxu0 0
  %649 = vmatpush1.bf16.msra.mxu0 0
  %650 = vmatprep.subr.bf16.mxu0 0
  %651 = vmatpush1.bf16.msra.mxu0 0
  %652 = vmatprep.subr.bf16.mxu0 0
  %653 = vmatpush1.bf16.msra.mxu0 0
  %654 = vmatprep.subr.bf16.mxu0 0
  %655 = vmatpush1.bf16.msra.mxu0 0
  %656 = vmatprep.subr.bf16.mxu0 0
  %657 = vmatpush1.bf16.msra.mxu0 %v643
  %658 = vmatprep.subr.bf16.mxu0 0
  %659 = vmatpush1.bf16.msra.mxu0 %v642
  %660 = vmatprep.subr.bf16.mxu0 0
  %661 = vmatpush1.bf16.msra.mxu0 %v641
  %662 = vmatprep.subr.bf16.mxu0 0
  %663 = vmatpush1.bf16.msra.mxu0 %v640
  %664 = vmatprep.subr.bf16.mxu0 0
  %665 = vmatpush2.bf16.msra.mxu0 0
  %666 = vmatprep.subr.bf16.mxu0 0
  %667 = vmatpush2.bf16.msra.mxu0 0
  %668 = vmatprep.subr.bf16.mxu0 0
  %669 = vmatpush2.bf16.msra.mxu0 0
  %670 = vmatprep.subr.bf16.mxu0 0
  %671 = vmatpush2.bf16.msra.mxu0 0
  %672 = vmatprep.subr.bf16.mxu0 0
  %673 = vmatpush2.bf16.msra.mxu0 0
  %674 = vmatprep.subr.bf16.mxu0 0
  %675 = vmatpush2.bf16.msra.mxu0 0
  %676 = vmatprep.subr.bf16.mxu0 0
  %677 = vmatpush2.bf16.msra.mxu0 0
  %678 = vmatprep.subr.bf16.mxu0 0
  %679 = vmatpush2.bf16.msra.mxu0 0
  %680 = vmatprep.mubr.bf16.mxu0 0
  %681 = vmatmul.mubr.bf16.gmra.mxu0 %v169
  %v682 = vpop.f32.mrf.mxu0
  %v683 = vadd.f32 %v622, %v682
  %v684 = vpop.f32.mrf.mxu0
  %v685 = vpop.f32.mrf.mxu0
  %v686 = vadd.f32 %v622, %v685
  %v687 = vpop.f32.mrf.mxu0
  %688 = vmatprep.mubr.bf16.mxu0 0
  %689 = vmatmul.mubr.bf16.gmra.mxu0 %v172
  %v690 = vpop.f32.mrf.mxu0
  %v691 = vadd.f32 %v622, %v690
  %v692 = vpop.f32.mrf.mxu0
  %v693 = vpop.f32.mrf.mxu0
  %v694 = vadd.f32 %v622, %v693
  %v695 = vpop.f32.mrf.mxu0
  %696 = vdwg.mxu0
  %s697 = scalar_lea.vmem %s6, 32
  %v698 = vld [vmem:[%s697] sm:$0xf]
  %v699 = vld [vmem:[%s697 + $0x4] sm:$0xf]
  %v700 = vld [vmem:[%s697 + $0x8] sm:$0xf]
  %v701 = vld [vmem:[%s697 + $0xc] sm:$0xf]
  %v702 = vld [vmem:[%s697 + $0x10] sm:$0xf]
  %v703 = vld [vmem:[%s697 + $0x14] sm:$0xf]
  %v704 = vld [vmem:[%s697 + $0x18] sm:$0xf]
  %v705 = vld [vmem:[%s697 + $0x1c] sm:$0xf]
  %s706 = scalar_lea.vmem %s7, 1
  %v707 = vld [vmem:[%s706] sm:$0x1]
  %v709 = vlaneseq
  %v710 = vshrl.u32 %v709, 7
  %v711 = vsub.s32 0, %v710
  %v712 = vrot.slane %v707, %v711
  %v722 = vunpack.c.l.b16 %v698
  %v723 = vunpack.c.l.b16 %v699
  %v724 = vunpack.c.l.b16 %v700
  %v725 = vunpack.c.l.b16 %v701
  %v726 = vunpack.c.l.b16 %v702
  %v727 = vunpack.c.l.b16 %v703
  %v728 = vunpack.c.l.b16 %v704
  %v729 = vunpack.c.l.b16 %v705
  %v730 = vpack.c.b16 %v723, %v722
  %v731 = vpack.c.b16 %v725, %v724
  %v732 = vpack.c.b16 %v727, %v726
  %v733 = vpack.c.b16 %v729, %v728
  %738 = vmatprep.subr.bf16.mxu0 0
  %739 = vmatpush1.bf16.msra.mxu0 0
  %740 = vmatprep.subr.bf16.mxu0 0
  %741 = vmatpush1.bf16.msra.mxu0 0
  %742 = vmatprep.subr.bf16.mxu0 0
  %743 = vmatpush1.bf16.msra.mxu0 0
  %744 = vmatprep.subr.bf16.mxu0 0
  %745 = vmatpush1.bf16.msra.mxu0 0
  %746 = vmatprep.subr.bf16.mxu0 0
  %747 = vmatpush1.bf16.msra.mxu0 %v733
  %748 = vmatprep.subr.bf16.mxu0 0
  %749 = vmatpush1.bf16.msra.mxu0 %v732
  %750 = vmatprep.subr.bf16.mxu0 0
  %751 = vmatpush1.bf16.msra.mxu0 %v731
  %752 = vmatprep.subr.bf16.mxu0 0
  %753 = vmatpush1.bf16.msra.mxu0 %v730
  %754 = vmatprep.subr.bf16.mxu0 0
  %755 = vmatpush2.bf16.msra.mxu0 0
  %756 = vmatprep.subr.bf16.mxu0 0
  %757 = vmatpush2.bf16.msra.mxu0 0
  %758 = vmatprep.subr.bf16.mxu0 0
  %759 = vmatpush2.bf16.msra.mxu0 0
  %760 = vmatprep.subr.bf16.mxu0 0
  %761 = vmatpush2.bf16.msra.mxu0 0
  %762 = vmatprep.subr.bf16.mxu0 0
  %763 = vmatpush2.bf16.msra.mxu0 0
  %764 = vmatprep.subr.bf16.mxu0 0
  %765 = vmatpush2.bf16.msra.mxu0 0
  %766 = vmatprep.subr.bf16.mxu0 0
  %767 = vmatpush2.bf16.msra.mxu0 0
  %768 = vmatprep.subr.bf16.mxu0 0
  %769 = vmatpush2.bf16.msra.mxu0 0
  %770 = vmatprep.mubr.bf16.mxu0 0
  %771 = vmatmul.mubr.bf16.gmra.mxu0 %v169
  %v772 = vpop.f32.mrf.mxu0
  %v773 = vadd.f32 %v712, %v772
  %v774 = vpop.f32.mrf.mxu0
  %v775 = vpop.f32.mrf.mxu0
  %v776 = vadd.f32 %v712, %v775
  %v777 = vpop.f32.mrf.mxu0
  %778 = vmatprep.mubr.bf16.mxu0 0
  %779 = vmatmul.mubr.bf16.gmra.mxu0 %v172
  %v780 = vpop.f32.mrf.mxu0
  %v781 = vadd.f32 %v712, %v780
  %v782 = vpop.f32.mrf.mxu0
  %v783 = vpop.f32.mrf.mxu0
  %v784 = vadd.f32 %v712, %v783
  %v785 = vpop.f32.mrf.mxu0
  %786 = vdwg.mxu0
  %v787 = vpack.c.bf16 %v601, %v601
  %v788 = vpack.c.bf16 %v604, %v604
  %v789 = vpack.c.bf16 %v686, %v683
  %v790 = vpack.c.bf16 %v694, %v691
  %v792 = vsel %vm315, %v787, 0
  %v795 = vsel %vm315, %v789, 0
  %797 = vmatprep.subr.bf16.mxu0 0
  %798 = vmatpush1.bf16.xpose.msra.mxu0 0
  %799 = vmatprep.subr.bf16.mxu0 0
  %800 = vmatpush1.bf16.xpose.msra.mxu0 0
  %801 = vmatprep.subr.bf16.mxu0 0
  %802 = vmatpush1.bf16.xpose.msra.mxu0 0
  %803 = vmatprep.subr.bf16.mxu0 0
  %804 = vmatpush1.bf16.xpose.msra.mxu0 0
  %805 = vmatprep.subr.bf16.mxu0 0
  %806 = vmatpush1.bf16.xpose.msra.mxu0 0
  %807 = vmatprep.subr.bf16.mxu0 0
  %808 = vmatpush1.bf16.xpose.msra.mxu0 0
  %809 = vmatprep.subr.bf16.mxu0 0
  %810 = vmatpush1.bf16.xpose.msra.mxu0 0
  %811 = vmatprep.subr.bf16.mxu0 0
  %812 = vmatpush1.bf16.xpose.msra.mxu0 %v795
  %813 = vmatprep.subr.bf16.mxu0 0
  %814 = vmatpush2.bf16.xpose.msra.mxu0 0
  %815 = vmatprep.subr.bf16.mxu0 0
  %816 = vmatpush2.bf16.xpose.msra.mxu0 0
  %817 = vmatprep.subr.bf16.mxu0 0
  %818 = vmatpush2.bf16.xpose.msra.mxu0 0
  %819 = vmatprep.subr.bf16.mxu0 0
  %820 = vmatpush2.bf16.xpose.msra.mxu0 0
  %821 = vmatprep.subr.bf16.mxu0 0
  %822 = vmatpush2.bf16.xpose.msra.mxu0 0
  %823 = vmatprep.subr.bf16.mxu0 0
  %824 = vmatpush2.bf16.xpose.msra.mxu0 0
  %825 = vmatprep.subr.bf16.mxu0 0
  %826 = vmatpush2.bf16.xpose.msra.mxu0 0
  %827 = vmatprep.subr.bf16.mxu0 0
  %828 = vmatpush2.bf16.xpose.msra.mxu0 0
  %829 = vmatprep.mubr.bf16.mxu0 0
  %830 = vmatmul.mubr.bf16.gmra.mxu0 %v792
  %v831 = vpop.f32.mrf.mxu0
  %v832 = vadd.f32 0.0, %v831
  %v833 = vpop.f32.mrf.mxu0
  %v834 = vpop.f32.mrf.mxu0
  %v835 = vpop.f32.mrf.mxu0
  %836 = vdwg.mxu0
  %v838 = vsel %vm315, %v788, 0
  %v841 = vsel %vm315, %v790, 0
  %843 = vmatprep.subr.bf16.mxu0 0
  %844 = vmatpush1.bf16.xpose.msra.mxu0 0
  %845 = vmatprep.subr.bf16.mxu0 0
  %846 = vmatpush1.bf16.xpose.msra.mxu0 0
  %847 = vmatprep.subr.bf16.mxu0 0
  %848 = vmatpush1.bf16.xpose.msra.mxu0 0
  %849 = vmatprep.subr.bf16.mxu0 0
  %850 = vmatpush1.bf16.xpose.msra.mxu0 0
  %851 = vmatprep.subr.bf16.mxu0 0
  %852 = vmatpush1.bf16.xpose.msra.mxu0 0
  %853 = vmatprep.subr.bf16.mxu0 0
  %854 = vmatpush1.bf16.xpose.msra.mxu0 0
  %855 = vmatprep.subr.bf16.mxu0 0
  %856 = vmatpush1.bf16.xpose.msra.mxu0 0
  %857 = vmatprep.subr.bf16.mxu0 0
  %858 = vmatpush1.bf16.xpose.msra.mxu0 %v841
  %859 = vmatprep.subr.bf16.mxu0 0
  %860 = vmatpush2.bf16.xpose.msra.mxu0 0
  %861 = vmatprep.subr.bf16.mxu0 0
  %862 = vmatpush2.bf16.xpose.msra.mxu0 0
  %863 = vmatprep.subr.bf16.mxu0 0
  %864 = vmatpush2.bf16.xpose.msra.mxu0 0
  %865 = vmatprep.subr.bf16.mxu0 0
  %866 = vmatpush2.bf16.xpose.msra.mxu0 0
  %867 = vmatprep.subr.bf16.mxu0 0
  %868 = vmatpush2.bf16.xpose.msra.mxu0 0
  %869 = vmatprep.subr.bf16.mxu0 0
  %870 = vmatpush2.bf16.xpose.msra.mxu0 0
  %871 = vmatprep.subr.bf16.mxu0 0
  %872 = vmatpush2.bf16.xpose.msra.mxu0 0
  %873 = vmatprep.subr.bf16.mxu0 0
  %874 = vmatpush2.bf16.xpose.msra.mxu0 0
  %875 = vmatprep.mubr.bf16.mxu0 0
  %876 = vmatmul.mubr.bf16.gmra.mxu0 %v838
  %v877 = vpop.f32.mrf.mxu0
  %v878 = vadd.f32 0.0, %v877
  %v879 = vpop.f32.mrf.mxu0
  %v880 = vpop.f32.mrf.mxu0
  %v881 = vpop.f32.mrf.mxu0
  %882 = vdwg.mxu0
  %v883 = vmul.f32 %v832, 0.35355338
  %v884 = vmul.f32 %v878, 0.35355338
  %v885 = vsel %vm410, %v883, -inf
  %886 = vmax.xlane.f32.xlu0 %v885
  %v887 = vpop.xlane.xlu0 %886
  %v888 = vsel %vm410, %v884, -inf
  %889 = vmax.xlane.f32.xlu0 %v888
  %v890 = vpop.xlane.xlu0 %889
  %v891 = vsub.f32 %v883, %v887
  %v892 = vsub.f32 %v884, %v890
  %v893 = vmul.f32 %v891, 1.442695
  %v894 = vpow.pop %v893
  %v895 = vmul.f32 %v892, 1.442695
  %v896 = vpow.pop %v895
  %v897 = vsel %vm410, %v894, 0.0
  %898 = vadd.xlane.f32.xlu0 %v897
  %v899 = vpop.xlane.xlu0 %898
  %v900 = vsel %vm410, %v896, 0.0
  %901 = vadd.xlane.f32.xlu0 %v900
  %v902 = vpop.xlane.xlu0 %901
  %v903 = vrcp.pop %v899
  %v904 = vrcp.pop %v902
  %v905 = vmul.f32 %v894, %v903
  %v906 = vmul.f32 %v896, %v904
  %v907 = vpack.c.bf16 %v905, %v905
  %v908 = vpack.c.bf16 %v906, %v906
  %v909 = vpack.c.bf16 %v776, %v773
  %v910 = vpack.c.bf16 %v784, %v781
  %v912 = vsel %vm410, %v907, 0
  %914 = vmatprep.subr.bf16.mxu0 0
  %915 = vmatpush1.bf16.msra.mxu0 0
  %916 = vmatprep.subr.bf16.mxu0 0
  %917 = vmatpush1.bf16.msra.mxu0 0
  %918 = vmatprep.subr.bf16.mxu0 0
  %919 = vmatpush1.bf16.msra.mxu0 0
  %920 = vmatprep.subr.bf16.mxu0 0
  %921 = vmatpush1.bf16.msra.mxu0 0
  %922 = vmatprep.subr.bf16.mxu0 0
  %923 = vmatpush1.bf16.msra.mxu0 0
  %924 = vmatprep.subr.bf16.mxu0 0
  %925 = vmatpush1.bf16.msra.mxu0 0
  %926 = vmatprep.subr.bf16.mxu0 0
  %927 = vmatpush1.bf16.msra.mxu0 0
  %928 = vmatprep.subr.bf16.mxu0 0
  %929 = vmatpush1.bf16.msra.mxu0 %v909
  %930 = vmatprep.subr.bf16.mxu0 0
  %931 = vmatpush2.bf16.msra.mxu0 0
  %932 = vmatprep.subr.bf16.mxu0 0
  %933 = vmatpush2.bf16.msra.mxu0 0
  %934 = vmatprep.subr.bf16.mxu0 0
  %935 = vmatpush2.bf16.msra.mxu0 0
  %936 = vmatprep.subr.bf16.mxu0 0
  %937 = vmatpush2.bf16.msra.mxu0 0
  %938 = vmatprep.subr.bf16.mxu0 0
  %939 = vmatpush2.bf16.msra.mxu0 0
  %940 = vmatprep.subr.bf16.mxu0 0
  %941 = vmatpush2.bf16.msra.mxu0 0
  %942 = vmatprep.subr.bf16.mxu0 0
  %943 = vmatpush2.bf16.msra.mxu0 0
  %944 = vmatprep.subr.bf16.mxu0 0
  %945 = vmatpush2.bf16.msra.mxu0 0
  %946 = vmatprep.mubr.bf16.mxu0 0
  %947 = vmatmul.mubr.bf16.gmra.mxu0 %v912
  %v948 = vpop.f32.mrf.mxu0
  %v949 = vadd.f32 0.0, %v948
  %v950 = vpop.f32.mrf.mxu0
  %v951 = vpop.f32.mrf.mxu0
  %v952 = vpop.f32.mrf.mxu0
  %953 = vdwg.mxu0
  %v955 = vsel %vm410, %v908, 0
  %957 = vmatprep.subr.bf16.mxu0 0
  %958 = vmatpush1.bf16.msra.mxu0 0
  %959 = vmatprep.subr.bf16.mxu0 0
  %960 = vmatpush1.bf16.msra.mxu0 0
  %961 = vmatprep.subr.bf16.mxu0 0
  %962 = vmatpush1.bf16.msra.mxu0 0
  %963 = vmatprep.subr.bf16.mxu0 0
  %964 = vmatpush1.bf16.msra.mxu0 0
  %965 = vmatprep.subr.bf16.mxu0 0
  %966 = vmatpush1.bf16.msra.mxu0 0
  %967 = vmatprep.subr.bf16.mxu0 0
  %968 = vmatpush1.bf16.msra.mxu0 0
  %969 = vmatprep.subr.bf16.mxu0 0
  %970 = vmatpush1.bf16.msra.mxu0 0
  %971 = vmatprep.subr.bf16.mxu0 0
  %972 = vmatpush1.bf16.msra.mxu0 %v910
  %973 = vmatprep.subr.bf16.mxu0 0
  %974 = vmatpush2.bf16.msra.mxu0 0
  %975 = vmatprep.subr.bf16.mxu0 0
  %976 = vmatpush2.bf16.msra.mxu0 0
  %977 = vmatprep.subr.bf16.mxu0 0
  %978 = vmatpush2.bf16.msra.mxu0 0
  %979 = vmatprep.subr.bf16.mxu0 0
  %980 = vmatpush2.bf16.msra.mxu0 0
  %981 = vmatprep.subr.bf16.mxu0 0
  %982 = vmatpush2.bf16.msra.mxu0 0
  %983 = vmatprep.subr.bf16.mxu0 0
  %984 = vmatpush2.bf16.msra.mxu0 0
  %985 = vmatprep.subr.bf16.mxu0 0
  %986 = vmatpush2.bf16.msra.mxu0 0
  %987 = vmatprep.subr.bf16.mxu0 0
  %988 = vmatpush2.bf16.msra.mxu0 0
  %989 = vmatprep.mubr.bf16.mxu0 0
  %990 = vmatmul.mubr.bf16.gmra.mxu0 %v955
  %v991 = vpop.f32.mrf.mxu0
  %v992 = vadd.f32 0.0, %v991
  %v993 = vpop.f32.mrf.mxu0
  %v994 = vpop.f32.mrf.mxu0
  %v995 = vpop.f32.mrf.mxu0
  %996 = vdwg.mxu0
  %v997 = vpack.c.bf16 %v992, %v949
  %s998 = scalar_lea.vmem %s8, 4
  %v999 = vld [vmem:[%s998] sm:$0xf]
  %v1001 = vsel %vm315, %v997, 0
  %vm1003 = vcmask 1043456
  %v1005 = vsel %vm1003, %v999, 0
  %1007 = vmatprep.subr.bf16.mxu0 0
  %1008 = vmatpush1.bf16.msra.mxu0 0
  %1009 = vmatprep.subr.bf16.mxu0 0
  %1010 = vmatpush1.bf16.msra.mxu0 0
  %1011 = vmatprep.subr.bf16.mxu0 0
  %1012 = vmatpush1.bf16.msra.mxu0 0
  %1013 = vmatprep.subr.bf16.mxu0 0
  %1014 = vmatpush1.bf16.msra.mxu0 0
  %1015 = vmatprep.subr.bf16.mxu0 0
  %1016 = vmatpush1.bf16.msra.mxu0 0
  %1017 = vmatprep.subr.bf16.mxu0 0
  %1018 = vmatpush1.bf16.msra.mxu0 0
  %1019 = vmatprep.subr.bf16.mxu0 0
  %1020 = vmatpush1.bf16.msra.mxu0 0
  %1021 = vmatprep.subr.bf16.mxu0 0
  %1022 = vmatpush1.bf16.msra.mxu0 %v1005
  %1023 = vmatprep.subr.bf16.mxu0 0
  %1024 = vmatpush2.bf16.msra.mxu0 0
  %1025 = vmatprep.subr.bf16.mxu0 0
  %1026 = vmatpush2.bf16.msra.mxu0 0
  %1027 = vmatprep.subr.bf16.mxu0 0
  %1028 = vmatpush2.bf16.msra.mxu0 0
  %1029 = vmatprep.subr.bf16.mxu0 0
  %1030 = vmatpush2.bf16.msra.mxu0 0
  %1031 = vmatprep.subr.bf16.mxu0 0
  %1032 = vmatpush2.bf16.msra.mxu0 0
  %1033 = vmatprep.subr.bf16.mxu0 0
  %1034 = vmatpush2.bf16.msra.mxu0 0
  %1035 = vmatprep.subr.bf16.mxu0 0
  %1036 = vmatpush2.bf16.msra.mxu0 0
  %1037 = vmatprep.subr.bf16.mxu0 0
  %1038 = vmatpush2.bf16.msra.mxu0 0
  %1039 = vmatprep.mubr.bf16.mxu0 0
  %1040 = vmatmul.mubr.bf16.gmra.mxu0 %v1001
  %v1041 = vpop.f32.mrf.mxu0
  %v1042 = vadd.f32 0.0, %v1041
  %v1043 = vpop.f32.mrf.mxu0
  %v1044 = vpop.f32.mrf.mxu0
  %v1045 = vadd.f32 0.0, %v1044
  %v1046 = vpop.f32.mrf.mxu0
  %1047 = vdwg.mxu0
  %v1049 = vsel %vm315, %v523, 0
  %v1052 = vsel %vm1003, %v524, 0
  %1054 = vmatprep.subr.bf16.mxu0 0
  %1055 = vmatpush1.bf16.msra.mxu0 0
  %1056 = vmatprep.subr.bf16.mxu0 0
  %1057 = vmatpush1.bf16.msra.mxu0 0
  %1058 = vmatprep.subr.bf16.mxu0 0
  %1059 = vmatpush1.bf16.msra.mxu0 0
  %1060 = vmatprep.subr.bf16.mxu0 0
  %1061 = vmatpush1.bf16.msra.mxu0 0
  %1062 = vmatprep.subr.bf16.mxu0 0
  %1063 = vmatpush1.bf16.msra.mxu0 0
  %1064 = vmatprep.subr.bf16.mxu0 0
  %1065 = vmatpush1.bf16.msra.mxu0 0
  %1066 = vmatprep.subr.bf16.mxu0 0
  %1067 = vmatpush1.bf16.msra.mxu0 0
  %1068 = vmatprep.subr.bf16.mxu0 0
  %1069 = vmatpush1.bf16.msra.mxu0 %v1052
  %1070 = vmatprep.subr.bf16.mxu0 0
  %1071 = vmatpush2.bf16.msra.mxu0 0
  %1072 = vmatprep.subr.bf16.mxu0 0
  %1073 = vmatpush2.bf16.msra.mxu0 0
  %1074 = vmatprep.subr.bf16.mxu0 0
  %1075 = vmatpush2.bf16.msra.mxu0 0
  %1076 = vmatprep.subr.bf16.mxu0 0
  %1077 = vmatpush2.bf16.msra.mxu0 0
  %1078 = vmatprep.subr.bf16.mxu0 0
  %1079 = vmatpush2.bf16.msra.mxu0 0
  %1080 = vmatprep.subr.bf16.mxu0 0
  %1081 = vmatpush2.bf16.msra.mxu0 0
  %1082 = vmatprep.subr.bf16.mxu0 0
  %1083 = vmatpush2.bf16.msra.mxu0 0
  %1084 = vmatprep.subr.bf16.mxu0 0
  %1085 = vmatpush2.bf16.msra.mxu0 0
  %1086 = vmatprep.mubr.bf16.mxu0 0
  %1087 = vmatmul.mubr.bf16.gmra.mxu0 %v1049
  %v1088 = vpop.f32.mrf.mxu0
  %v1089 = vadd.f32 %v1042, %v1088
  %v1090 = vpop.f32.mrf.mxu0
  %v1091 = vpop.f32.mrf.mxu0
  %v1092 = vadd.f32 %v1045, %v1091
  %v1093 = vpop.f32.mrf.mxu0
  %1094 = vdwg.mxu0
  %s1095 = scalar_lea.vmem %s2, 64
  %v1096 = vld [vmem:[%s1095] sm:$0xf]
  %v1097 = vld [vmem:[%s1095 + $0x4] sm:$0xf]
  %v1098 = vld [vmem:[%s1095 + $0x8] sm:$0xf]
  %v1099 = vld [vmem:[%s1095 + $0xc] sm:$0xf]
  %v1100 = vld [vmem:[%s1095 + $0x10] sm:$0xf]
  %v1101 = vld [vmem:[%s1095 + $0x14] sm:$0xf]
  %v1102 = vld [vmem:[%s1095 + $0x18] sm:$0xf]
  %v1103 = vld [vmem:[%s1095 + $0x1c] sm:$0xf]
  %s1104 = scalar_lea.vmem %s3, 2
  %v1105 = vld [vmem:[%s1104] sm:$0x1]
  %v1107 = vlaneseq
  %v1108 = vshrl.u32 %v1107, 7
  %v1109 = vsub.s32 0, %v1108
  %v1110 = vrot.slane %v1105, %v1109
  %v1120 = vunpack.c.l.b16 %v1096
  %v1121 = vunpack.c.l.b16 %v1097
  %v1122 = vunpack.c.l.b16 %v1098
  %v1123 = vunpack.c.l.b16 %v1099
  %v1124 = vunpack.c.l.b16 %v1100
  %v1125 = vunpack.c.l.b16 %v1101
  %v1126 = vunpack.c.l.b16 %v1102
  %v1127 = vunpack.c.l.b16 %v1103
  %v1128 = vpack.c.b16 %v1121, %v1120
  %v1129 = vpack.c.b16 %v1123, %v1122
  %v1130 = vpack.c.b16 %v1125, %v1124
  %v1131 = vpack.c.b16 %v1127, %v1126
  %1136 = vmatprep.subr.bf16.mxu0 0
  %1137 = vmatpush1.bf16.msra.mxu0 0
  %1138 = vmatprep.subr.bf16.mxu0 0
  %1139 = vmatpush1.bf16.msra.mxu0 0
  %1140 = vmatprep.subr.bf16.mxu0 0
  %1141 = vmatpush1.bf16.msra.mxu0 0
  %1142 = vmatprep.subr.bf16.mxu0 0
  %1143 = vmatpush1.bf16.msra.mxu0 0
  %1144 = vmatprep.subr.bf16.mxu0 0
  %1145 = vmatpush1.bf16.msra.mxu0 %v1131
  %1146 = vmatprep.subr.bf16.mxu0 0
  %1147 = vmatpush1.bf16.msra.mxu0 %v1130
  %1148 = vmatprep.subr.bf16.mxu0 0
  %1149 = vmatpush1.bf16.msra.mxu0 %v1129
  %1150 = vmatprep.subr.bf16.mxu0 0
  %1151 = vmatpush1.bf16.msra.mxu0 %v1128
  %1152 = vmatprep.subr.bf16.mxu0 0
  %1153 = vmatpush2.bf16.msra.mxu0 0
  %1154 = vmatprep.subr.bf16.mxu0 0
  %1155 = vmatpush2.bf16.msra.mxu0 0
  %1156 = vmatprep.subr.bf16.mxu0 0
  %1157 = vmatpush2.bf16.msra.mxu0 0
  %1158 = vmatprep.subr.bf16.mxu0 0
  %1159 = vmatpush2.bf16.msra.mxu0 0
  %1160 = vmatprep.subr.bf16.mxu0 0
  %1161 = vmatpush2.bf16.msra.mxu0 0
  %1162 = vmatprep.subr.bf16.mxu0 0
  %1163 = vmatpush2.bf16.msra.mxu0 0
  %1164 = vmatprep.subr.bf16.mxu0 0
  %1165 = vmatpush2.bf16.msra.mxu0 0
  %1166 = vmatprep.subr.bf16.mxu0 0
  %1167 = vmatpush2.bf16.msra.mxu0 0
  %1168 = vmatprep.mubr.bf16.mxu0 0
  %1169 = vmatmul.mubr.bf16.gmra.mxu0 %v86
  %v1170 = vpop.f32.mrf.mxu0
  %v1171 = vadd.f32 %v1110, %v1170
  %v1172 = vpop.f32.mrf.mxu0
  %v1173 = vpop.f32.mrf.mxu0
  %v1174 = vadd.f32 %v1110, %v1173
  %v1175 = vpop.f32.mrf.mxu0
  %1176 = vdwg.mxu0
  %s1177 = scalar_lea.vmem %s4, 64
  %v1178 = vld [vmem:[%s1177] sm:$0xf]
  %v1179 = vld [vmem:[%s1177 + $0x4] sm:$0xf]
  %v1180 = vld [vmem:[%s1177 + $0x8] sm:$0xf]
  %v1181 = vld [vmem:[%s1177 + $0xc] sm:$0xf]
  %v1182 = vld [vmem:[%s1177 + $0x10] sm:$0xf]
  %v1183 = vld [vmem:[%s1177 + $0x14] sm:$0xf]
  %v1184 = vld [vmem:[%s1177 + $0x18] sm:$0xf]
  %v1185 = vld [vmem:[%s1177 + $0x1c] sm:$0xf]
  %s1186 = scalar_lea.vmem %s5, 2
  %v1187 = vld [vmem:[%s1186] sm:$0x1]
  %v1189 = vlaneseq
  %v1190 = vshrl.u32 %v1189, 7
  %v1191 = vsub.s32 0, %v1190
  %v1192 = vrot.slane %v1187, %v1191
  %v1202 = vunpack.c.l.b16 %v1178
  %v1203 = vunpack.c.l.b16 %v1179
  %v1204 = vunpack.c.l.b16 %v1180
  %v1205 = vunpack.c.l.b16 %v1181
  %v1206 = vunpack.c.l.b16 %v1182
  %v1207 = vunpack.c.l.b16 %v1183
  %v1208 = vunpack.c.l.b16 %v1184
  %v1209 = vunpack.c.l.b16 %v1185
  %v1210 = vpack.c.b16 %v1203, %v1202
  %v1211 = vpack.c.b16 %v1205, %v1204
  %v1212 = vpack.c.b16 %v1207, %v1206
  %v1213 = vpack.c.b16 %v1209, %v1208
  %1218 = vmatprep.subr.bf16.mxu0 0
  %1219 = vmatpush1.bf16.msra.mxu0 0
  %1220 = vmatprep.subr.bf16.mxu0 0
  %1221 = vmatpush1.bf16.msra.mxu0 0
  %1222 = vmatprep.subr.bf16.mxu0 0
  %1223 = vmatpush1.bf16.msra.mxu0 0
  %1224 = vmatprep.subr.bf16.mxu0 0
  %1225 = vmatpush1.bf16.msra.mxu0 0
  %1226 = vmatprep.subr.bf16.mxu0 0
  %1227 = vmatpush1.bf16.msra.mxu0 %v1213
  %1228 = vmatprep.subr.bf16.mxu0 0
  %1229 = vmatpush1.bf16.msra.mxu0 %v1212
  %1230 = vmatprep.subr.bf16.mxu0 0
  %1231 = vmatpush1.bf16.msra.mxu0 %v1211
  %1232 = vmatprep.subr.bf16.mxu0 0
  %1233 = vmatpush1.bf16.msra.mxu0 %v1210
  %1234 = vmatprep.subr.bf16.mxu0 0
  %1235 = vmatpush2.bf16.msra.mxu0 0
  %1236 = vmatprep.subr.bf16.mxu0 0
  %1237 = vmatpush2.bf16.msra.mxu0 0
  %1238 = vmatprep.subr.bf16.mxu0 0
  %1239 = vmatpush2.bf16.msra.mxu0 0
  %1240 = vmatprep.subr.bf16.mxu0 0
  %1241 = vmatpush2.bf16.msra.mxu0 0
  %1242 = vmatprep.subr.bf16.mxu0 0
  %1243 = vmatpush2.bf16.msra.mxu0 0
  %1244 = vmatprep.subr.bf16.mxu0 0
  %1245 = vmatpush2.bf16.msra.mxu0 0
  %1246 = vmatprep.subr.bf16.mxu0 0
  %1247 = vmatpush2.bf16.msra.mxu0 0
  %1248 = vmatprep.subr.bf16.mxu0 0
  %1249 = vmatpush2.bf16.msra.mxu0 0
  %1250 = vmatprep.mubr.bf16.mxu0 0
  %1251 = vmatmul.mubr.bf16.gmra.mxu0 %v169
  %v1252 = vpop.f32.mrf.mxu0
  %v1253 = vadd.f32 %v1192, %v1252
  %v1254 = vpop.f32.mrf.mxu0
  %v1255 = vpop.f32.mrf.mxu0
  %v1256 = vadd.f32 %v1192, %v1255
  %v1257 = vpop.f32.mrf.mxu0
  %1258 = vmatprep.mubr.bf16.mxu0 0
  %1259 = vmatmul.mubr.bf16.gmra.mxu0 %v172
  %v1260 = vpop.f32.mrf.mxu0
  %v1261 = vadd.f32 %v1192, %v1260
  %v1262 = vpop.f32.mrf.mxu0
  %v1263 = vpop.f32.mrf.mxu0
  %v1264 = vadd.f32 %v1192, %v1263
  %v1265 = vpop.f32.mrf.mxu0
  %1266 = vdwg.mxu0
  %s1267 = scalar_lea.vmem %s6, 64
  %v1268 = vld [vmem:[%s1267] sm:$0xf]
  %v1269 = vld [vmem:[%s1267 + $0x4] sm:$0xf]
  %v1270 = vld [vmem:[%s1267 + $0x8] sm:$0xf]
  %v1271 = vld [vmem:[%s1267 + $0xc] sm:$0xf]
  %v1272 = vld [vmem:[%s1267 + $0x10] sm:$0xf]
  %v1273 = vld [vmem:[%s1267 + $0x14] sm:$0xf]
  %v1274 = vld [vmem:[%s1267 + $0x18] sm:$0xf]
  %v1275 = vld [vmem:[%s1267 + $0x1c] sm:$0xf]
  %s1276 = scalar_lea.vmem %s7, 2
  %v1277 = vld [vmem:[%s1276] sm:$0x1]
  %v1279 = vlaneseq
  %v1280 = vshrl.u32 %v1279, 7
  %v1281 = vsub.s32 0, %v1280
  %v1282 = vrot.slane %v1277, %v1281
  %v1292 = vunpack.c.l.b16 %v1268
  %v1293 = vunpack.c.l.b16 %v1269
  %v1294 = vunpack.c.l.b16 %v1270
  %v1295 = vunpack.c.l.b16 %v1271
  %v1296 = vunpack.c.l.b16 %v1272
  %v1297 = vunpack.c.l.b16 %v1273
  %v1298 = vunpack.c.l.b16 %v1274
  %v1299 = vunpack.c.l.b16 %v1275
  %v1300 = vpack.c.b16 %v1293, %v1292
  %v1301 = vpack.c.b16 %v1295, %v1294
  %v1302 = vpack.c.b16 %v1297, %v1296
  %v1303 = vpack.c.b16 %v1299, %v1298
  %1308 = vmatprep.subr.bf16.mxu0 0
  %1309 = vmatpush1.bf16.msra.mxu0 0
  %1310 = vmatprep.subr.bf16.mxu0 0
  %1311 = vmatpush1.bf16.msra.mxu0 0
  %1312 = vmatprep.subr.bf16.mxu0 0
  %1313 = vmatpush1.bf16.msra.mxu0 0
  %1314 = vmatprep.subr.bf16.mxu0 0
  %1315 = vmatpush1.bf16.msra.mxu0 0
  %1316 = vmatprep.subr.bf16.mxu0 0
  %1317 = vmatpush1.bf16.msra.mxu0 %v1303
  %1318 = vmatprep.subr.bf16.mxu0 0
  %1319 = vmatpush1.bf16.msra.mxu0 %v1302
  %1320 = vmatprep.subr.bf16.mxu0 0
  %1321 = vmatpush1.bf16.msra.mxu0 %v1301
  %1322 = vmatprep.subr.bf16.mxu0 0
  %1323 = vmatpush1.bf16.msra.mxu0 %v1300
  %1324 = vmatprep.subr.bf16.mxu0 0
  %1325 = vmatpush2.bf16.msra.mxu0 0
  %1326 = vmatprep.subr.bf16.mxu0 0
  %1327 = vmatpush2.bf16.msra.mxu0 0
  %1328 = vmatprep.subr.bf16.mxu0 0
  %1329 = vmatpush2.bf16.msra.mxu0 0
  %1330 = vmatprep.subr.bf16.mxu0 0
  %1331 = vmatpush2.bf16.msra.mxu0 0
  %1332 = vmatprep.subr.bf16.mxu0 0
  %1333 = vmatpush2.bf16.msra.mxu0 0
  %1334 = vmatprep.subr.bf16.mxu0 0
  %1335 = vmatpush2.bf16.msra.mxu0 0
  %1336 = vmatprep.subr.bf16.mxu0 0
  %1337 = vmatpush2.bf16.msra.mxu0 0
  %1338 = vmatprep.subr.bf16.mxu0 0
  %1339 = vmatpush2.bf16.msra.mxu0 0
  %1340 = vmatprep.mubr.bf16.mxu0 0
  %1341 = vmatmul.mubr.bf16.gmra.mxu0 %v169
  %v1342 = vpop.f32.mrf.mxu0
  %v1343 = vadd.f32 %v1282, %v1342
  %v1344 = vpop.f32.mrf.mxu0
  %v1345 = vpop.f32.mrf.mxu0
  %v1346 = vadd.f32 %v1282, %v1345
  %v1347 = vpop.f32.mrf.mxu0
  %1348 = vmatprep.mubr.bf16.mxu0 0
  %1349 = vmatmul.mubr.bf16.gmra.mxu0 %v172
  %v1350 = vpop.f32.mrf.mxu0
  %v1351 = vadd.f32 %v1282, %v1350
  %v1352 = vpop.f32.mrf.mxu0
  %v1353 = vpop.f32.mrf.mxu0
  %v1354 = vadd.f32 %v1282, %v1353
  %v1355 = vpop.f32.mrf.mxu0
  %1356 = vdwg.mxu0
  %v1357 = vpack.c.bf16 %v1171, %v1171
  %v1358 = vpack.c.bf16 %v1174, %v1174
  %v1359 = vpack.c.bf16 %v1256, %v1253
  %v1360 = vpack.c.bf16 %v1264, %v1261
  %v1362 = vsel %vm315, %v1357, 0
  %v1365 = vsel %vm315, %v1359, 0
  %1367 = vmatprep.subr.bf16.mxu0 0
  %1368 = vmatpush1.bf16.xpose.msra.mxu0 0
  %1369 = vmatprep.subr.bf16.mxu0 0
  %1370 = vmatpush1.bf16.xpose.msra.mxu0 0
  %1371 = vmatprep.subr.bf16.mxu0 0
  %1372 = vmatpush1.bf16.xpose.msra.mxu0 0
  %1373 = vmatprep.subr.bf16.mxu0 0
  %1374 = vmatpush1.bf16.xpose.msra.mxu0 0
  %1375 = vmatprep.subr.bf16.mxu0 0
  %1376 = vmatpush1.bf16.xpose.msra.mxu0 0
  %1377 = vmatprep.subr.bf16.mxu0 0
  %1378 = vmatpush1.bf16.xpose.msra.mxu0 0
  %1379 = vmatprep.subr.bf16.mxu0 0
  %1380 = vmatpush1.bf16.xpose.msra.mxu0 0
  %1381 = vmatprep.subr.bf16.mxu0 0
  %1382 = vmatpush1.bf16.xpose.msra.mxu0 %v1365
  %1383 = vmatprep.subr.bf16.mxu0 0
  %1384 = vmatpush2.bf16.xpose.msra.mxu0 0
  %1385 = vmatprep.subr.bf16.mxu0 0
  %1386 = vmatpush2.bf16.xpose.msra.mxu0 0
  %1387 = vmatprep.subr.bf16.mxu0 0
  %1388 = vmatpush2.bf16.xpose.msra.mxu0 0
  %1389 = vmatprep.subr.bf16.mxu0 0
  %1390 = vmatpush2.bf16.xpose.msra.mxu0 0
  %1391 = vmatprep.subr.bf16.mxu0 0
  %1392 = vmatpush2.bf16.xpose.msra.mxu0 0
  %1393 = vmatprep.subr.bf16.mxu0 0
  %1394 = vmatpush2.bf16.xpose.msra.mxu0 0
  %1395 = vmatprep.subr.bf16.mxu0 0
  %1396 = vmatpush2.bf16.xpose.msra.mxu0 0
  %1397 = vmatprep.subr.bf16.mxu0 0
  %1398 = vmatpush2.bf16.xpose.msra.mxu0 0
  %1399 = vmatprep.mubr.bf16.mxu0 0
  %1400 = vmatmul.mubr.bf16.gmra.mxu0 %v1362
  %v1401 = vpop.f32.mrf.mxu0
  %v1402 = vadd.f32 0.0, %v1401
  %v1403 = vpop.f32.mrf.mxu0
  %v1404 = vpop.f32.mrf.mxu0
  %v1405 = vpop.f32.mrf.mxu0
  %1406 = vdwg.mxu0
  %v1408 = vsel %vm315, %v1358, 0
  %v1411 = vsel %vm315, %v1360, 0
  %1413 = vmatprep.subr.bf16.mxu0 0
  %1414 = vmatpush1.bf16.xpose.msra.mxu0 0
  %1415 = vmatprep.subr.bf16.mxu0 0
  %1416 = vmatpush1.bf16.xpose.msra.mxu0 0
  %1417 = vmatprep.subr.bf16.mxu0 0
  %1418 = vmatpush1.bf16.xpose.msra.mxu0 0
  %1419 = vmatprep.subr.bf16.mxu0 0
  %1420 = vmatpush1.bf16.xpose.msra.mxu0 0
  %1421 = vmatprep.subr.bf16.mxu0 0
  %1422 = vmatpush1.bf16.xpose.msra.mxu0 0
  %1423 = vmatprep.subr.bf16.mxu0 0
  %1424 = vmatpush1.bf16.xpose.msra.mxu0 0
  %1425 = vmatprep.subr.bf16.mxu0 0
  %1426 = vmatpush1.bf16.xpose.msra.mxu0 0
  %1427 = vmatprep.subr.bf16.mxu0 0
  %1428 = vmatpush1.bf16.xpose.msra.mxu0 %v1411
  %1429 = vmatprep.subr.bf16.mxu0 0
  %1430 = vmatpush2.bf16.xpose.msra.mxu0 0
  %1431 = vmatprep.subr.bf16.mxu0 0
  %1432 = vmatpush2.bf16.xpose.msra.mxu0 0
  %1433 = vmatprep.subr.bf16.mxu0 0
  %1434 = vmatpush2.bf16.xpose.msra.mxu0 0
  %1435 = vmatprep.subr.bf16.mxu0 0
  %1436 = vmatpush2.bf16.xpose.msra.mxu0 0
  %1437 = vmatprep.subr.bf16.mxu0 0
  %1438 = vmatpush2.bf16.xpose.msra.mxu0 0
  %1439 = vmatprep.subr.bf16.mxu0 0
  %1440 = vmatpush2.bf16.xpose.msra.mxu0 0
  %1441 = vmatprep.subr.bf16.mxu0 0
  %1442 = vmatpush2.bf16.xpose.msra.mxu0 0
  %1443 = vmatprep.subr.bf16.mxu0 0
  %1444 = vmatpush2.bf16.xpose.msra.mxu0 0
  %1445 = vmatprep.mubr.bf16.mxu0 0
  %1446 = vmatmul.mubr.bf16.gmra.mxu0 %v1408
  %v1447 = vpop.f32.mrf.mxu0
  %v1448 = vadd.f32 0.0, %v1447
  %v1449 = vpop.f32.mrf.mxu0
  %v1450 = vpop.f32.mrf.mxu0
  %v1451 = vpop.f32.mrf.mxu0
  %1452 = vdwg.mxu0
  %v1453 = vmul.f32 %v1402, 0.35355338
  %v1454 = vmul.f32 %v1448, 0.35355338
  %v1455 = vsel %vm410, %v1453, -inf
  %1456 = vmax.xlane.f32.xlu0 %v1455
  %v1457 = vpop.xlane.xlu0 %1456
  %v1458 = vsel %vm410, %v1454, -inf
  %1459 = vmax.xlane.f32.xlu0 %v1458
  %v1460 = vpop.xlane.xlu0 %1459
  %v1461 = vsub.f32 %v1453, %v1457
  %v1462 = vsub.f32 %v1454, %v1460
  %v1463 = vmul.f32 %v1461, 1.442695
  %v1464 = vpow.pop %v1463
  %v1465 = vmul.f32 %v1462, 1.442695
  %v1466 = vpow.pop %v1465
  %v1467 = vsel %vm410, %v1464, 0.0
  %1468 = vadd.xlane.f32.xlu0 %v1467
  %v1469 = vpop.xlane.xlu0 %1468
  %v1470 = vsel %vm410, %v1466, 0.0
  %1471 = vadd.xlane.f32.xlu0 %v1470
  %v1472 = vpop.xlane.xlu0 %1471
  %v1473 = vrcp.pop %v1469
  %v1474 = vrcp.pop %v1472
  %v1475 = vmul.f32 %v1464, %v1473
  %v1476 = vmul.f32 %v1466, %v1474
  %v1477 = vpack.c.bf16 %v1475, %v1475
  %v1478 = vpack.c.bf16 %v1476, %v1476
  %v1479 = vpack.c.bf16 %v1346, %v1343
  %v1480 = vpack.c.bf16 %v1354, %v1351
  %v1482 = vsel %vm410, %v1477, 0
  %1484 = vmatprep.subr.bf16.mxu0 0
  %1485 = vmatpush1.bf16.msra.mxu0 0
  %1486 = vmatprep.subr.bf16.mxu0 0
  %1487 = vmatpush1.bf16.msra.mxu0 0
  %1488 = vmatprep.subr.bf16.mxu0 0
  %1489 = vmatpush1.bf16.msra.mxu0 0
  %1490 = vmatprep.subr.bf16.mxu0 0
  %1491 = vmatpush1.bf16.msra.mxu0 0
  %1492 = vmatprep.subr.bf16.mxu0 0
  %1493 = vmatpush1.bf16.msra.mxu0 0
  %1494 = vmatprep.subr.bf16.mxu0 0
  %1495 = vmatpush1.bf16.msra.mxu0 0
  %1496 = vmatprep.subr.bf16.mxu0 0
  %1497 = vmatpush1.bf16.msra.mxu0 0
  %1498 = vmatprep.subr.bf16.mxu0 0
  %1499 = vmatpush1.bf16.msra.mxu0 %v1479
  %1500 = vmatprep.subr.bf16.mxu0 0
  %1501 = vmatpush2.bf16.msra.mxu0 0
  %1502 = vmatprep.subr.bf16.mxu0 0
  %1503 = vmatpush2.bf16.msra.mxu0 0
  %1504 = vmatprep.subr.bf16.mxu0 0
  %1505 = vmatpush2.bf16.msra.mxu0 0
  %1506 = vmatprep.subr.bf16.mxu0 0
  %1507 = vmatpush2.bf16.msra.mxu0 0
  %1508 = vmatprep.subr.bf16.mxu0 0
  %1509 = vmatpush2.bf16.msra.mxu0 0
  %1510 = vmatprep.subr.bf16.mxu0 0
  %1511 = vmatpush2.bf16.msra.mxu0 0
  %1512 = vmatprep.subr.bf16.mxu0 0
  %1513 = vmatpush2.bf16.msra.mxu0 0
  %1514 = vmatprep.subr.bf16.mxu0 0
  %1515 = vmatpush2.bf16.msra.mxu0 0
  %1516 = vmatprep.mubr.bf16.mxu0 0
  %1517 = vmatmul.mubr.bf16.gmra.mxu0 %v1482
  %v1518 = vpop.f32.mrf.mxu0
  %v1519 = vadd.f32 0.0, %v1518
  %v1520 = vpop.f32.mrf.mxu0
  %v1521 = vpop.f32.mrf.mxu0
  %v1522 = vpop.f32.mrf.mxu0
  %1523 = vdwg.mxu0
  %v1525 = vsel %vm410, %v1478, 0
  %1527 = vmatprep.subr.bf16.mxu0 0
  %1528 = vmatpush1.bf16.msra.mxu0 0
  %1529 = vmatprep.subr.bf16.mxu0 0
  %1530 = vmatpush1.bf16.msra.mxu0 0
  %1531 = vmatprep.subr.bf16.mxu0 0
  %1532 = vmatpush1.bf16.msra.mxu0 0
  %1533 = vmatprep.subr.bf16.mxu0 0
  %1534 = vmatpush1.bf16.msra.mxu0 0
  %1535 = vmatprep.subr.bf16.mxu0 0
  %1536 = vmatpush1.bf16.msra.mxu0 0
  %1537 = vmatprep.subr.bf16.mxu0 0
  %1538 = vmatpush1.bf16.msra.mxu0 0
  %1539 = vmatprep.subr.bf16.mxu0 0
  %1540 = vmatpush1.bf16.msra.mxu0 0
  %1541 = vmatprep.subr.bf16.mxu0 0
  %1542 = vmatpush1.bf16.msra.mxu0 %v1480
  %1543 = vmatprep.subr.bf16.mxu0 0
  %1544 = vmatpush2.bf16.msra.mxu0 0
  %1545 = vmatprep.subr.bf16.mxu0 0
  %1546 = vmatpush2.bf16.msra.mxu0 0
  %1547 = vmatprep.subr.bf16.mxu0 0
  %1548 = vmatpush2.bf16.msra.mxu0 0
  %1549 = vmatprep.subr.bf16.mxu0 0
  %1550 = vmatpush2.bf16.msra.mxu0 0
  %1551 = vmatprep.subr.bf16.mxu0 0
  %1552 = vmatpush2.bf16.msra.mxu0 0
  %1553 = vmatprep.subr.bf16.mxu0 0
  %1554 = vmatpush2.bf16.msra.mxu0 0
  %1555 = vmatprep.subr.bf16.mxu0 0
  %1556 = vmatpush2.bf16.msra.mxu0 0
  %1557 = vmatprep.subr.bf16.mxu0 0
  %1558 = vmatpush2.bf16.msra.mxu0 0
  %1559 = vmatprep.mubr.bf16.mxu0 0
  %1560 = vmatmul.mubr.bf16.gmra.mxu0 %v1525
  %v1561 = vpop.f32.mrf.mxu0
  %v1562 = vadd.f32 0.0, %v1561
  %v1563 = vpop.f32.mrf.mxu0
  %v1564 = vpop.f32.mrf.mxu0
  %v1565 = vpop.f32.mrf.mxu0
  %1566 = vdwg.mxu0
  %v1567 = vpack.c.bf16 %v1562, %v1519
  %s1568 = scalar_lea.vmem %s8, 8
  %v1569 = vld [vmem:[%s1568] sm:$0xf]
  %v1571 = vsel %vm315, %v1567, 0
  %v1574 = vsel %vm1003, %v1569, 0
  %1576 = vmatprep.subr.bf16.mxu0 0
  %1577 = vmatpush1.bf16.msra.mxu0 0
  %1578 = vmatprep.subr.bf16.mxu0 0
  %1579 = vmatpush1.bf16.msra.mxu0 0
  %1580 = vmatprep.subr.bf16.mxu0 0
  %1581 = vmatpush1.bf16.msra.mxu0 0
  %1582 = vmatprep.subr.bf16.mxu0 0
  %1583 = vmatpush1.bf16.msra.mxu0 0
  %1584 = vmatprep.subr.bf16.mxu0 0
  %1585 = vmatpush1.bf16.msra.mxu0 0
  %1586 = vmatprep.subr.bf16.mxu0 0
  %1587 = vmatpush1.bf16.msra.mxu0 0
  %1588 = vmatprep.subr.bf16.mxu0 0
  %1589 = vmatpush1.bf16.msra.mxu0 0
  %1590 = vmatprep.subr.bf16.mxu0 0
  %1591 = vmatpush1.bf16.msra.mxu0 %v1574
  %1592 = vmatprep.subr.bf16.mxu0 0
  %1593 = vmatpush2.bf16.msra.mxu0 0
  %1594 = vmatprep.subr.bf16.mxu0 0
  %1595 = vmatpush2.bf16.msra.mxu0 0
  %1596 = vmatprep.subr.bf16.mxu0 0
  %1597 = vmatpush2.bf16.msra.mxu0 0
  %1598 = vmatprep.subr.bf16.mxu0 0
  %1599 = vmatpush2.bf16.msra.mxu0 0
  %1600 = vmatprep.subr.bf16.mxu0 0
  %1601 = vmatpush2.bf16.msra.mxu0 0
  %1602 = vmatprep.subr.bf16.mxu0 0
  %1603 = vmatpush2.bf16.msra.mxu0 0
  %1604 = vmatprep.subr.bf16.mxu0 0
  %1605 = vmatpush2.bf16.msra.mxu0 0
  %1606 = vmatprep.subr.bf16.mxu0 0
  %1607 = vmatpush2.bf16.msra.mxu0 0
  %1608 = vmatprep.mubr.bf16.mxu0 0
  %1609 = vmatmul.mubr.bf16.gmra.mxu0 %v1571
  %v1610 = vpop.f32.mrf.mxu0
  %v1611 = vadd.f32 0.0, %v1610
  %v1612 = vpop.f32.mrf.mxu0
  %v1613 = vpop.f32.mrf.mxu0
  %v1614 = vadd.f32 0.0, %v1613
  %v1615 = vpop.f32.mrf.mxu0
  %1616 = vdwg.mxu0
  %v1617 = vadd.f32 %v1089, %v1611
  %v1618 = vadd.f32 %v1092, %v1614
  %s1619 = scalar_lea.vmem %s2, 96
  %v1620 = vld [vmem:[%s1619] sm:$0xf]
  %v1621 = vld [vmem:[%s1619 + $0x4] sm:$0xf]
  %v1622 = vld [vmem:[%s1619 + $0x8] sm:$0xf]
  %v1623 = vld [vmem:[%s1619 + $0xc] sm:$0xf]
  %v1624 = vld [vmem:[%s1619 + $0x10] sm:$0xf]
  %v1625 = vld [vmem:[%s1619 + $0x14] sm:$0xf]
  %v1626 = vld [vmem:[%s1619 + $0x18] sm:$0xf]
  %v1627 = vld [vmem:[%s1619 + $0x1c] sm:$0xf]
  %s1628 = scalar_lea.vmem %s3, 3
  %v1629 = vld [vmem:[%s1628] sm:$0x1]
  %v1631 = vlaneseq
  %v1632 = vshrl.u32 %v1631, 7
  %v1633 = vsub.s32 0, %v1632
  %v1634 = vrot.slane %v1629, %v1633
  %v1644 = vunpack.c.l.b16 %v1620
  %v1645 = vunpack.c.l.b16 %v1621
  %v1646 = vunpack.c.l.b16 %v1622
  %v1647 = vunpack.c.l.b16 %v1623
  %v1648 = vunpack.c.l.b16 %v1624
  %v1649 = vunpack.c.l.b16 %v1625
  %v1650 = vunpack.c.l.b16 %v1626
  %v1651 = vunpack.c.l.b16 %v1627
  %v1652 = vpack.c.b16 %v1645, %v1644
  %v1653 = vpack.c.b16 %v1647, %v1646
  %v1654 = vpack.c.b16 %v1649, %v1648
  %v1655 = vpack.c.b16 %v1651, %v1650
  %1660 = vmatprep.subr.bf16.mxu0 0
  %1661 = vmatpush1.bf16.msra.mxu0 0
  %1662 = vmatprep.subr.bf16.mxu0 0
  %1663 = vmatpush1.bf16.msra.mxu0 0
  %1664 = vmatprep.subr.bf16.mxu0 0
  %1665 = vmatpush1.bf16.msra.mxu0 0
  %1666 = vmatprep.subr.bf16.mxu0 0
  %1667 = vmatpush1.bf16.msra.mxu0 0
  %1668 = vmatprep.subr.bf16.mxu0 0
  %1669 = vmatpush1.bf16.msra.mxu0 %v1655
  %1670 = vmatprep.subr.bf16.mxu0 0
  %1671 = vmatpush1.bf16.msra.mxu0 %v1654
  %1672 = vmatprep.subr.bf16.mxu0 0
  %1673 = vmatpush1.bf16.msra.mxu0 %v1653
  %1674 = vmatprep.subr.bf16.mxu0 0
  %1675 = vmatpush1.bf16.msra.mxu0 %v1652
  %1676 = vmatprep.subr.bf16.mxu0 0
  %1677 = vmatpush2.bf16.msra.mxu0 0
  %1678 = vmatprep.subr.bf16.mxu0 0
  %1679 = vmatpush2.bf16.msra.mxu0 0
  %1680 = vmatprep.subr.bf16.mxu0 0
  %1681 = vmatpush2.bf16.msra.mxu0 0
  %1682 = vmatprep.subr.bf16.mxu0 0
  %1683 = vmatpush2.bf16.msra.mxu0 0
  %1684 = vmatprep.subr.bf16.mxu0 0
  %1685 = vmatpush2.bf16.msra.mxu0 0
  %1686 = vmatprep.subr.bf16.mxu0 0
  %1687 = vmatpush2.bf16.msra.mxu0 0
  %1688 = vmatprep.subr.bf16.mxu0 0
  %1689 = vmatpush2.bf16.msra.mxu0 0
  %1690 = vmatprep.subr.bf16.mxu0 0
  %1691 = vmatpush2.bf16.msra.mxu0 0
  %1692 = vmatprep.mubr.bf16.mxu0 0
  %1693 = vmatmul.mubr.bf16.gmra.mxu0 %v86
  %v1694 = vpop.f32.mrf.mxu0
  %v1695 = vadd.f32 %v1634, %v1694
  %v1696 = vpop.f32.mrf.mxu0
  %v1697 = vpop.f32.mrf.mxu0
  %v1698 = vadd.f32 %v1634, %v1697
  %v1699 = vpop.f32.mrf.mxu0
  %1700 = vdwg.mxu0
  %s1701 = scalar_lea.vmem %s4, 96
  %v1702 = vld [vmem:[%s1701] sm:$0xf]
  %v1703 = vld [vmem:[%s1701 + $0x4] sm:$0xf]
  %v1704 = vld [vmem:[%s1701 + $0x8] sm:$0xf]
  %v1705 = vld [vmem:[%s1701 + $0xc] sm:$0xf]
  %v1706 = vld [vmem:[%s1701 + $0x10] sm:$0xf]
  %v1707 = vld [vmem:[%s1701 + $0x14] sm:$0xf]
  %v1708 = vld [vmem:[%s1701 + $0x18] sm:$0xf]
  %v1709 = vld [vmem:[%s1701 + $0x1c] sm:$0xf]
  %s1710 = scalar_lea.vmem %s5, 3
  %v1711 = vld [vmem:[%s1710] sm:$0x1]
  %v1713 = vlaneseq
  %v1714 = vshrl.u32 %v1713, 7
  %v1715 = vsub.s32 0, %v1714
  %v1716 = vrot.slane %v1711, %v1715
  %v1726 = vunpack.c.l.b16 %v1702
  %v1727 = vunpack.c.l.b16 %v1703
  %v1728 = vunpack.c.l.b16 %v1704
  %v1729 = vunpack.c.l.b16 %v1705
  %v1730 = vunpack.c.l.b16 %v1706
  %v1731 = vunpack.c.l.b16 %v1707
  %v1732 = vunpack.c.l.b16 %v1708
  %v1733 = vunpack.c.l.b16 %v1709
  %v1734 = vpack.c.b16 %v1727, %v1726
  %v1735 = vpack.c.b16 %v1729, %v1728
  %v1736 = vpack.c.b16 %v1731, %v1730
  %v1737 = vpack.c.b16 %v1733, %v1732
  %1742 = vmatprep.subr.bf16.mxu0 0
  %1743 = vmatpush1.bf16.msra.mxu0 0
  %1744 = vmatprep.subr.bf16.mxu0 0
  %1745 = vmatpush1.bf16.msra.mxu0 0
  %1746 = vmatprep.subr.bf16.mxu0 0
  %1747 = vmatpush1.bf16.msra.mxu0 0
  %1748 = vmatprep.subr.bf16.mxu0 0
  %1749 = vmatpush1.bf16.msra.mxu0 0
  %1750 = vmatprep.subr.bf16.mxu0 0
  %1751 = vmatpush1.bf16.msra.mxu0 %v1737
  %1752 = vmatprep.subr.bf16.mxu0 0
  %1753 = vmatpush1.bf16.msra.mxu0 %v1736
  %1754 = vmatprep.subr.bf16.mxu0 0
  %1755 = vmatpush1.bf16.msra.mxu0 %v1735
  %1756 = vmatprep.subr.bf16.mxu0 0
  %1757 = vmatpush1.bf16.msra.mxu0 %v1734
  %1758 = vmatprep.subr.bf16.mxu0 0
  %1759 = vmatpush2.bf16.msra.mxu0 0
  %1760 = vmatprep.subr.bf16.mxu0 0
  %1761 = vmatpush2.bf16.msra.mxu0 0
  %1762 = vmatprep.subr.bf16.mxu0 0
  %1763 = vmatpush2.bf16.msra.mxu0 0
  %1764 = vmatprep.subr.bf16.mxu0 0
  %1765 = vmatpush2.bf16.msra.mxu0 0
  %1766 = vmatprep.subr.bf16.mxu0 0
  %1767 = vmatpush2.bf16.msra.mxu0 0
  %1768 = vmatprep.subr.bf16.mxu0 0
  %1769 = vmatpush2.bf16.msra.mxu0 0
  %1770 = vmatprep.subr.bf16.mxu0 0
  %1771 = vmatpush2.bf16.msra.mxu0 0
  %1772 = vmatprep.subr.bf16.mxu0 0
  %1773 = vmatpush2.bf16.msra.mxu0 0
  %1774 = vmatprep.mubr.bf16.mxu0 0
  %1775 = vmatmul.mubr.bf16.gmra.mxu0 %v169
  %v1776 = vpop.f32.mrf.mxu0
  %v1777 = vadd.f32 %v1716, %v1776
  %v1778 = vpop.f32.mrf.mxu0
  %v1779 = vpop.f32.mrf.mxu0
  %v1780 = vadd.f32 %v1716, %v1779
  %v1781 = vpop.f32.mrf.mxu0
  %1782 = vmatprep.mubr.bf16.mxu0 0
  %1783 = vmatmul.mubr.bf16.gmra.mxu0 %v172
  %v1784 = vpop.f32.mrf.mxu0
  %v1785 = vadd.f32 %v1716, %v1784
  %v1786 = vpop.f32.mrf.mxu0
  %v1787 = vpop.f32.mrf.mxu0
  %v1788 = vadd.f32 %v1716, %v1787
  %v1789 = vpop.f32.mrf.mxu0
  %1790 = vdwg.mxu0
  %s1791 = scalar_lea.vmem %s6, 96
  %v1792 = vld [vmem:[%s1791] sm:$0xf]
  %v1793 = vld [vmem:[%s1791 + $0x4] sm:$0xf]
  %v1794 = vld [vmem:[%s1791 + $0x8] sm:$0xf]
  %v1795 = vld [vmem:[%s1791 + $0xc] sm:$0xf]
  %v1796 = vld [vmem:[%s1791 + $0x10] sm:$0xf]
  %v1797 = vld [vmem:[%s1791 + $0x14] sm:$0xf]
  %v1798 = vld [vmem:[%s1791 + $0x18] sm:$0xf]
  %v1799 = vld [vmem:[%s1791 + $0x1c] sm:$0xf]
  %s1800 = scalar_lea.vmem %s7, 3
  %v1801 = vld [vmem:[%s1800] sm:$0x1]
  %v1803 = vlaneseq
  %v1804 = vshrl.u32 %v1803, 7
  %v1805 = vsub.s32 0, %v1804
  %v1806 = vrot.slane %v1801, %v1805
  %v1816 = vunpack.c.l.b16 %v1792
  %v1817 = vunpack.c.l.b16 %v1793
  %v1818 = vunpack.c.l.b16 %v1794
  %v1819 = vunpack.c.l.b16 %v1795
  %v1820 = vunpack.c.l.b16 %v1796
  %v1821 = vunpack.c.l.b16 %v1797
  %v1822 = vunpack.c.l.b16 %v1798
  %v1823 = vunpack.c.l.b16 %v1799
  %v1824 = vpack.c.b16 %v1817, %v1816
  %v1825 = vpack.c.b16 %v1819, %v1818
  %v1826 = vpack.c.b16 %v1821, %v1820
  %v1827 = vpack.c.b16 %v1823, %v1822
  %1832 = vmatprep.subr.bf16.mxu0 0
  %1833 = vmatpush1.bf16.msra.mxu0 0
  %1834 = vmatprep.subr.bf16.mxu0 0
  %1835 = vmatpush1.bf16.msra.mxu0 0
  %1836 = vmatprep.subr.bf16.mxu0 0
  %1837 = vmatpush1.bf16.msra.mxu0 0
  %1838 = vmatprep.subr.bf16.mxu0 0
  %1839 = vmatpush1.bf16.msra.mxu0 0
  %1840 = vmatprep.subr.bf16.mxu0 0
  %1841 = vmatpush1.bf16.msra.mxu0 %v1827
  %1842 = vmatprep.subr.bf16.mxu0 0
  %1843 = vmatpush1.bf16.msra.mxu0 %v1826
  %1844 = vmatprep.subr.bf16.mxu0 0
  %1845 = vmatpush1.bf16.msra.mxu0 %v1825
  %1846 = vmatprep.subr.bf16.mxu0 0
  %1847 = vmatpush1.bf16.msra.mxu0 %v1824
  %1848 = vmatprep.subr.bf16.mxu0 0
  %1849 = vmatpush2.bf16.msra.mxu0 0
  %1850 = vmatprep.subr.bf16.mxu0 0
  %1851 = vmatpush2.bf16.msra.mxu0 0
  %1852 = vmatprep.subr.bf16.mxu0 0
  %1853 = vmatpush2.bf16.msra.mxu0 0
  %1854 = vmatprep.subr.bf16.mxu0 0
  %1855 = vmatpush2.bf16.msra.mxu0 0
  %1856 = vmatprep.subr.bf16.mxu0 0
  %1857 = vmatpush2.bf16.msra.mxu0 0
  %1858 = vmatprep.subr.bf16.mxu0 0
  %1859 = vmatpush2.bf16.msra.mxu0 0
  %1860 = vmatprep.subr.bf16.mxu0 0
  %1861 = vmatpush2.bf16.msra.mxu0 0
  %1862 = vmatprep.subr.bf16.mxu0 0
  %1863 = vmatpush2.bf16.msra.mxu0 0
  %1864 = vmatprep.mubr.bf16.mxu0 0
  %1865 = vmatmul.mubr.bf16.gmra.mxu0 %v169
  %v1866 = vpop.f32.mrf.mxu0
  %v1867 = vadd.f32 %v1806, %v1866
  %v1868 = vpop.f32.mrf.mxu0
  %v1869 = vpop.f32.mrf.mxu0
  %v1870 = vadd.f32 %v1806, %v1869
  %v1871 = vpop.f32.mrf.mxu0
  %1872 = vmatprep.mubr.bf16.mxu0 0
  %1873 = vmatmul.mubr.bf16.gmra.mxu0 %v172
  %v1874 = vpop.f32.mrf.mxu0
  %v1875 = vadd.f32 %v1806, %v1874
  %v1876 = vpop.f32.mrf.mxu0
  %v1877 = vpop.f32.mrf.mxu0
  %v1878 = vadd.f32 %v1806, %v1877
  %v1879 = vpop.f32.mrf.mxu0
  %1880 = vdwg.mxu0
  %v1881 = vpack.c.bf16 %v1695, %v1695
  %v1882 = vpack.c.bf16 %v1698, %v1698
  %v1883 = vpack.c.bf16 %v1780, %v1777
  %v1884 = vpack.c.bf16 %v1788, %v1785
  %v1886 = vsel %vm315, %v1881, 0
  %v1889 = vsel %vm315, %v1883, 0
  %1891 = vmatprep.subr.bf16.mxu0 0
  %1892 = vmatpush1.bf16.xpose.msra.mxu0 0
  %1893 = vmatprep.subr.bf16.mxu0 0
  %1894 = vmatpush1.bf16.xpose.msra.mxu0 0
  %1895 = vmatprep.subr.bf16.mxu0 0
  %1896 = vmatpush1.bf16.xpose.msra.mxu0 0
  %1897 = vmatprep.subr.bf16.mxu0 0
  %1898 = vmatpush1.bf16.xpose.msra.mxu0 0
  %1899 = vmatprep.subr.bf16.mxu0 0
  %1900 = vmatpush1.bf16.xpose.msra.mxu0 0
  %1901 = vmatprep.subr.bf16.mxu0 0
  %1902 = vmatpush1.bf16.xpose.msra.mxu0 0
  %1903 = vmatprep.subr.bf16.mxu0 0
  %1904 = vmatpush1.bf16.xpose.msra.mxu0 0
  %1905 = vmatprep.subr.bf16.mxu0 0
  %1906 = vmatpush1.bf16.xpose.msra.mxu0 %v1889
  %1907 = vmatprep.subr.bf16.mxu0 0
  %1908 = vmatpush2.bf16.xpose.msra.mxu0 0
  %1909 = vmatprep.subr.bf16.mxu0 0
  %1910 = vmatpush2.bf16.xpose.msra.mxu0 0
  %1911 = vmatprep.subr.bf16.mxu0 0
  %1912 = vmatpush2.bf16.xpose.msra.mxu0 0
  %1913 = vmatprep.subr.bf16.mxu0 0
  %1914 = vmatpush2.bf16.xpose.msra.mxu0 0
  %1915 = vmatprep.subr.bf16.mxu0 0
  %1916 = vmatpush2.bf16.xpose.msra.mxu0 0
  %1917 = vmatprep.subr.bf16.mxu0 0
  %1918 = vmatpush2.bf16.xpose.msra.mxu0 0
  %1919 = vmatprep.subr.bf16.mxu0 0
  %1920 = vmatpush2.bf16.xpose.msra.mxu0 0
  %1921 = vmatprep.subr.bf16.mxu0 0
  %1922 = vmatpush2.bf16.xpose.msra.mxu0 0
  %1923 = vmatprep.mubr.bf16.mxu0 0
  %1924 = vmatmul.mubr.bf16.gmra.mxu0 %v1886
  %v1925 = vpop.f32.mrf.mxu0
  %v1926 = vadd.f32 0.0, %v1925
  %v1927 = vpop.f32.mrf.mxu0
  %v1928 = vpop.f32.mrf.mxu0
  %v1929 = vpop.f32.mrf.mxu0
  %1930 = vdwg.mxu0
  %v1932 = vsel %vm315, %v1882, 0
  %v1935 = vsel %vm315, %v1884, 0
  %1937 = vmatprep.subr.bf16.mxu0 0
  %1938 = vmatpush1.bf16.xpose.msra.mxu0 0
  %1939 = vmatprep.subr.bf16.mxu0 0
  %1940 = vmatpush1.bf16.xpose.msra.mxu0 0
  %1941 = vmatprep.subr.bf16.mxu0 0
  %1942 = vmatpush1.bf16.xpose.msra.mxu0 0
  %1943 = vmatprep.subr.bf16.mxu0 0
  %1944 = vmatpush1.bf16.xpose.msra.mxu0 0
  %1945 = vmatprep.subr.bf16.mxu0 0
  %1946 = vmatpush1.bf16.xpose.msra.mxu0 0
  %1947 = vmatprep.subr.bf16.mxu0 0
  %1948 = vmatpush1.bf16.xpose.msra.mxu0 0
  %1949 = vmatprep.subr.bf16.mxu0 0
  %1950 = vmatpush1.bf16.xpose.msra.mxu0 0
  %1951 = vmatprep.subr.bf16.mxu0 0
  %1952 = vmatpush1.bf16.xpose.msra.mxu0 %v1935
  %1953 = vmatprep.subr.bf16.mxu0 0
  %1954 = vmatpush2.bf16.xpose.msra.mxu0 0
  %1955 = vmatprep.subr.bf16.mxu0 0
  %1956 = vmatpush2.bf16.xpose.msra.mxu0 0
  %1957 = vmatprep.subr.bf16.mxu0 0
  %1958 = vmatpush2.bf16.xpose.msra.mxu0 0
  %1959 = vmatprep.subr.bf16.mxu0 0
  %1960 = vmatpush2.bf16.xpose.msra.mxu0 0
  %1961 = vmatprep.subr.bf16.mxu0 0
  %1962 = vmatpush2.bf16.xpose.msra.mxu0 0
  %1963 = vmatprep.subr.bf16.mxu0 0
  %1964 = vmatpush2.bf16.xpose.msra.mxu0 0
  %1965 = vmatprep.subr.bf16.mxu0 0
  %1966 = vmatpush2.bf16.xpose.msra.mxu0 0
  %1967 = vmatprep.subr.bf16.mxu0 0
  %1968 = vmatpush2.bf16.xpose.msra.mxu0 0
  %1969 = vmatprep.mubr.bf16.mxu0 0
  %1970 = vmatmul.mubr.bf16.gmra.mxu0 %v1932
  %v1971 = vpop.f32.mrf.mxu0
  %v1972 = vadd.f32 0.0, %v1971
  %v1973 = vpop.f32.mrf.mxu0
  %v1974 = vpop.f32.mrf.mxu0
  %v1975 = vpop.f32.mrf.mxu0
  %1976 = vdwg.mxu0
  %v1977 = vmul.f32 %v1926, 0.35355338
  %v1978 = vmul.f32 %v1972, 0.35355338
  %v1979 = vsel %vm410, %v1977, -inf
  %1980 = vmax.xlane.f32.xlu0 %v1979
  %v1981 = vpop.xlane.xlu0 %1980
  %v1982 = vsel %vm410, %v1978, -inf
  %1983 = vmax.xlane.f32.xlu0 %v1982
  %v1984 = vpop.xlane.xlu0 %1983
  %v1985 = vsub.f32 %v1977, %v1981
  %v1986 = vsub.f32 %v1978, %v1984
  %v1987 = vmul.f32 %v1985, 1.442695
  %v1988 = vpow.pop %v1987
  %v1989 = vmul.f32 %v1986, 1.442695
  %v1990 = vpow.pop %v1989
  %v1991 = vsel %vm410, %v1988, 0.0
  %1992 = vadd.xlane.f32.xlu0 %v1991
  %v1993 = vpop.xlane.xlu0 %1992
  %v1994 = vsel %vm410, %v1990, 0.0
  %1995 = vadd.xlane.f32.xlu0 %v1994
  %v1996 = vpop.xlane.xlu0 %1995
  %v1997 = vrcp.pop %v1993
  %v1998 = vrcp.pop %v1996
  %v1999 = vmul.f32 %v1988, %v1997
  %v2000 = vmul.f32 %v1990, %v1998
  %v2001 = vpack.c.bf16 %v1999, %v1999
  %v2002 = vpack.c.bf16 %v2000, %v2000
  %v2003 = vpack.c.bf16 %v1870, %v1867
  %v2004 = vpack.c.bf16 %v1878, %v1875
  %v2006 = vsel %vm410, %v2001, 0
  %2008 = vmatprep.subr.bf16.mxu0 0
  %2009 = vmatpush1.bf16.msra.mxu0 0
  %2010 = vmatprep.subr.bf16.mxu0 0
  %2011 = vmatpush1.bf16.msra.mxu0 0
  %2012 = vmatprep.subr.bf16.mxu0 0
  %2013 = vmatpush1.bf16.msra.mxu0 0
  %2014 = vmatprep.subr.bf16.mxu0 0
  %2015 = vmatpush1.bf16.msra.mxu0 0
  %2016 = vmatprep.subr.bf16.mxu0 0
  %2017 = vmatpush1.bf16.msra.mxu0 0
  %2018 = vmatprep.subr.bf16.mxu0 0
  %2019 = vmatpush1.bf16.msra.mxu0 0
  %2020 = vmatprep.subr.bf16.mxu0 0
  %2021 = vmatpush1.bf16.msra.mxu0 0
  %2022 = vmatprep.subr.bf16.mxu0 0
  %2023 = vmatpush1.bf16.msra.mxu0 %v2003
  %2024 = vmatprep.subr.bf16.mxu0 0
  %2025 = vmatpush2.bf16.msra.mxu0 0
  %2026 = vmatprep.subr.bf16.mxu0 0
  %2027 = vmatpush2.bf16.msra.mxu0 0
  %2028 = vmatprep.subr.bf16.mxu0 0
  %2029 = vmatpush2.bf16.msra.mxu0 0
  %2030 = vmatprep.subr.bf16.mxu0 0
  %2031 = vmatpush2.bf16.msra.mxu0 0
  %2032 = vmatprep.subr.bf16.mxu0 0
  %2033 = vmatpush2.bf16.msra.mxu0 0
  %2034 = vmatprep.subr.bf16.mxu0 0
  %2035 = vmatpush2.bf16.msra.mxu0 0
  %2036 = vmatprep.subr.bf16.mxu0 0
  %2037 = vmatpush2.bf16.msra.mxu0 0
  %2038 = vmatprep.subr.bf16.mxu0 0
  %2039 = vmatpush2.bf16.msra.mxu0 0
  %2040 = vmatprep.mubr.bf16.mxu0 0
  %2041 = vmatmul.mubr.bf16.gmra.mxu0 %v2006
  %v2042 = vpop.f32.mrf.mxu0
  %v2043 = vadd.f32 0.0, %v2042
  %v2044 = vpop.f32.mrf.mxu0
  %v2045 = vpop.f32.mrf.mxu0
  %v2046 = vpop.f32.mrf.mxu0
  %2047 = vdwg.mxu0
  %v2049 = vsel %vm410, %v2002, 0
  %2051 = vmatprep.subr.bf16.mxu0 0
  %2052 = vmatpush1.bf16.msra.mxu0 0
  %2053 = vmatprep.subr.bf16.mxu0 0
  %2054 = vmatpush1.bf16.msra.mxu0 0
  %2055 = vmatprep.subr.bf16.mxu0 0
  %2056 = vmatpush1.bf16.msra.mxu0 0
  %2057 = vmatprep.subr.bf16.mxu0 0
  %2058 = vmatpush1.bf16.msra.mxu0 0
  %2059 = vmatprep.subr.bf16.mxu0 0
  %2060 = vmatpush1.bf16.msra.mxu0 0
  %2061 = vmatprep.subr.bf16.mxu0 0
  %2062 = vmatpush1.bf16.msra.mxu0 0
  %2063 = vmatprep.subr.bf16.mxu0 0
  %2064 = vmatpush1.bf16.msra.mxu0 0
  %2065 = vmatprep.subr.bf16.mxu0 0
  %2066 = vmatpush1.bf16.msra.mxu0 %v2004
  %2067 = vmatprep.subr.bf16.mxu0 0
  %2068 = vmatpush2.bf16.msra.mxu0 0
  %2069 = vmatprep.subr.bf16.mxu0 0
  %2070 = vmatpush2.bf16.msra.mxu0 0
  %2071 = vmatprep.subr.bf16.mxu0 0
  %2072 = vmatpush2.bf16.msra.mxu0 0
  %2073 = vmatprep.subr.bf16.mxu0 0
  %2074 = vmatpush2.bf16.msra.mxu0 0
  %2075 = vmatprep.subr.bf16.mxu0 0
  %2076 = vmatpush2.bf16.msra.mxu0 0
  %2077 = vmatprep.subr.bf16.mxu0 0
  %2078 = vmatpush2.bf16.msra.mxu0 0
  %2079 = vmatprep.subr.bf16.mxu0 0
  %2080 = vmatpush2.bf16.msra.mxu0 0
  %2081 = vmatprep.subr.bf16.mxu0 0
  %2082 = vmatpush2.bf16.msra.mxu0 0
  %2083 = vmatprep.mubr.bf16.mxu0 0
  %2084 = vmatmul.mubr.bf16.gmra.mxu0 %v2049
  %v2085 = vpop.f32.mrf.mxu0
  %v2086 = vadd.f32 0.0, %v2085
  %v2087 = vpop.f32.mrf.mxu0
  %v2088 = vpop.f32.mrf.mxu0
  %v2089 = vpop.f32.mrf.mxu0
  %2090 = vdwg.mxu0
  %v2091 = vpack.c.bf16 %v2086, %v2043
  %s2092 = scalar_lea.vmem %s8, 12
  %v2093 = vld [vmem:[%s2092] sm:$0xf]
  %v2095 = vsel %vm315, %v2091, 0
  %v2098 = vsel %vm1003, %v2093, 0
  %2100 = vmatprep.subr.bf16.mxu0 0
  %2101 = vmatpush1.bf16.msra.mxu0 0
  %2102 = vmatprep.subr.bf16.mxu0 0
  %2103 = vmatpush1.bf16.msra.mxu0 0
  %2104 = vmatprep.subr.bf16.mxu0 0
  %2105 = vmatpush1.bf16.msra.mxu0 0
  %2106 = vmatprep.subr.bf16.mxu0 0
  %2107 = vmatpush1.bf16.msra.mxu0 0
  %2108 = vmatprep.subr.bf16.mxu0 0
  %2109 = vmatpush1.bf16.msra.mxu0 0
  %2110 = vmatprep.subr.bf16.mxu0 0
  %2111 = vmatpush1.bf16.msra.mxu0 0
  %2112 = vmatprep.subr.bf16.mxu0 0
  %2113 = vmatpush1.bf16.msra.mxu0 0
  %2114 = vmatprep.subr.bf16.mxu0 0
  %2115 = vmatpush1.bf16.msra.mxu0 %v2098
  %2116 = vmatprep.subr.bf16.mxu0 0
  %2117 = vmatpush2.bf16.msra.mxu0 0
  %2118 = vmatprep.subr.bf16.mxu0 0
  %2119 = vmatpush2.bf16.msra.mxu0 0
  %2120 = vmatprep.subr.bf16.mxu0 0
  %2121 = vmatpush2.bf16.msra.mxu0 0
  %2122 = vmatprep.subr.bf16.mxu0 0
  %2123 = vmatpush2.bf16.msra.mxu0 0
  %2124 = vmatprep.subr.bf16.mxu0 0
  %2125 = vmatpush2.bf16.msra.mxu0 0
  %2126 = vmatprep.subr.bf16.mxu0 0
  %2127 = vmatpush2.bf16.msra.mxu0 0
  %2128 = vmatprep.subr.bf16.mxu0 0
  %2129 = vmatpush2.bf16.msra.mxu0 0
  %2130 = vmatprep.subr.bf16.mxu0 0
  %2131 = vmatpush2.bf16.msra.mxu0 0
  %2132 = vmatprep.mubr.bf16.mxu0 0
  %2133 = vmatmul.mubr.bf16.gmra.mxu0 %v2095
  %v2134 = vpop.f32.mrf.mxu0
  %v2135 = vadd.f32 0.0, %v2134
  %v2136 = vpop.f32.mrf.mxu0
  %v2137 = vpop.f32.mrf.mxu0
  %v2138 = vadd.f32 0.0, %v2137
  %v2139 = vpop.f32.mrf.mxu0
  %2140 = vdwg.mxu0
  %v2141 = vadd.f32 %v1617, %v2135
  %v2142 = vadd.f32 %v1618, %v2138
  %s2143 = scalar_lea.vmem %s2, 128
  %v2144 = vld [vmem:[%s2143] sm:$0xf]
  %v2145 = vld [vmem:[%s2143 + $0x4] sm:$0xf]
  %v2146 = vld [vmem:[%s2143 + $0x8] sm:$0xf]
  %v2147 = vld [vmem:[%s2143 + $0xc] sm:$0xf]
  %v2148 = vld [vmem:[%s2143 + $0x10] sm:$0xf]
  %v2149 = vld [vmem:[%s2143 + $0x14] sm:$0xf]
  %v2150 = vld [vmem:[%s2143 + $0x18] sm:$0xf]
  %v2151 = vld [vmem:[%s2143 + $0x1c] sm:$0xf]
  %s2152 = scalar_lea.vmem %s3, 4
  %v2153 = vld [vmem:[%s2152] sm:$0x1]
  %v2155 = vlaneseq
  %v2156 = vshrl.u32 %v2155, 7
  %v2157 = vsub.s32 0, %v2156
  %v2158 = vrot.slane %v2153, %v2157
  %v2168 = vunpack.c.l.b16 %v2144
  %v2169 = vunpack.c.l.b16 %v2145
  %v2170 = vunpack.c.l.b16 %v2146
  %v2171 = vunpack.c.l.b16 %v2147
  %v2172 = vunpack.c.l.b16 %v2148
  %v2173 = vunpack.c.l.b16 %v2149
  %v2174 = vunpack.c.l.b16 %v2150
  %v2175 = vunpack.c.l.b16 %v2151
  %v2176 = vpack.c.b16 %v2169, %v2168
  %v2177 = vpack.c.b16 %v2171, %v2170
  %v2178 = vpack.c.b16 %v2173, %v2172
  %v2179 = vpack.c.b16 %v2175, %v2174
  %2184 = vmatprep.subr.bf16.mxu0 0
  %2185 = vmatpush1.bf16.msra.mxu0 0
  %2186 = vmatprep.subr.bf16.mxu0 0
  %2187 = vmatpush1.bf16.msra.mxu0 0
  %2188 = vmatprep.subr.bf16.mxu0 0
  %2189 = vmatpush1.bf16.msra.mxu0 0
  %2190 = vmatprep.subr.bf16.mxu0 0
  %2191 = vmatpush1.bf16.msra.mxu0 0
  %2192 = vmatprep.subr.bf16.mxu0 0
  %2193 = vmatpush1.bf16.msra.mxu0 %v2179
  %2194 = vmatprep.subr.bf16.mxu0 0
  %2195 = vmatpush1.bf16.msra.mxu0 %v2178
  %2196 = vmatprep.subr.bf16.mxu0 0
  %2197 = vmatpush1.bf16.msra.mxu0 %v2177
  %2198 = vmatprep.subr.bf16.mxu0 0
  %2199 = vmatpush1.bf16.msra.mxu0 %v2176
  %2200 = vmatprep.subr.bf16.mxu0 0
  %2201 = vmatpush2.bf16.msra.mxu0 0
  %2202 = vmatprep.subr.bf16.mxu0 0
  %2203 = vmatpush2.bf16.msra.mxu0 0
  %2204 = vmatprep.subr.bf16.mxu0 0
  %2205 = vmatpush2.bf16.msra.mxu0 0
  %2206 = vmatprep.subr.bf16.mxu0 0
  %2207 = vmatpush2.bf16.msra.mxu0 0
  %2208 = vmatprep.subr.bf16.mxu0 0
  %2209 = vmatpush2.bf16.msra.mxu0 0
  %2210 = vmatprep.subr.bf16.mxu0 0
  %2211 = vmatpush2.bf16.msra.mxu0 0
  %2212 = vmatprep.subr.bf16.mxu0 0
  %2213 = vmatpush2.bf16.msra.mxu0 0
  %2214 = vmatprep.subr.bf16.mxu0 0
  %2215 = vmatpush2.bf16.msra.mxu0 0
  %2216 = vmatprep.mubr.bf16.mxu0 0
  %2217 = vmatmul.mubr.bf16.gmra.mxu0 %v86
  %v2218 = vpop.f32.mrf.mxu0
  %v2219 = vadd.f32 %v2158, %v2218
  %v2220 = vpop.f32.mrf.mxu0
  %v2221 = vpop.f32.mrf.mxu0
  %v2222 = vadd.f32 %v2158, %v2221
  %v2223 = vpop.f32.mrf.mxu0
  %2224 = vdwg.mxu0
  %s2225 = scalar_lea.vmem %s4, 128
  %v2226 = vld [vmem:[%s2225] sm:$0xf]
  %v2227 = vld [vmem:[%s2225 + $0x4] sm:$0xf]
  %v2228 = vld [vmem:[%s2225 + $0x8] sm:$0xf]
  %v2229 = vld [vmem:[%s2225 + $0xc] sm:$0xf]
  %v2230 = vld [vmem:[%s2225 + $0x10] sm:$0xf]
  %v2231 = vld [vmem:[%s2225 + $0x14] sm:$0xf]
  %v2232 = vld [vmem:[%s2225 + $0x18] sm:$0xf]
  %v2233 = vld [vmem:[%s2225 + $0x1c] sm:$0xf]
  %s2234 = scalar_lea.vmem %s5, 4
  %v2235 = vld [vmem:[%s2234] sm:$0x1]
  %v2237 = vlaneseq
  %v2238 = vshrl.u32 %v2237, 7
  %v2239 = vsub.s32 0, %v2238
  %v2240 = vrot.slane %v2235, %v2239
  %v2250 = vunpack.c.l.b16 %v2226
  %v2251 = vunpack.c.l.b16 %v2227
  %v2252 = vunpack.c.l.b16 %v2228
  %v2253 = vunpack.c.l.b16 %v2229
  %v2254 = vunpack.c.l.b16 %v2230
  %v2255 = vunpack.c.l.b16 %v2231
  %v2256 = vunpack.c.l.b16 %v2232
  %v2257 = vunpack.c.l.b16 %v2233
  %v2258 = vpack.c.b16 %v2251, %v2250
  %v2259 = vpack.c.b16 %v2253, %v2252
  %v2260 = vpack.c.b16 %v2255, %v2254
  %v2261 = vpack.c.b16 %v2257, %v2256
  %2266 = vmatprep.subr.bf16.mxu0 0
  %2267 = vmatpush1.bf16.msra.mxu0 0
  %2268 = vmatprep.subr.bf16.mxu0 0
  %2269 = vmatpush1.bf16.msra.mxu0 0
  %2270 = vmatprep.subr.bf16.mxu0 0
  %2271 = vmatpush1.bf16.msra.mxu0 0
  %2272 = vmatprep.subr.bf16.mxu0 0
  %2273 = vmatpush1.bf16.msra.mxu0 0
  %2274 = vmatprep.subr.bf16.mxu0 0
  %2275 = vmatpush1.bf16.msra.mxu0 %v2261
  %2276 = vmatprep.subr.bf16.mxu0 0
  %2277 = vmatpush1.bf16.msra.mxu0 %v2260
  %2278 = vmatprep.subr.bf16.mxu0 0
  %2279 = vmatpush1.bf16.msra.mxu0 %v2259
  %2280 = vmatprep.subr.bf16.mxu0 0
  %2281 = vmatpush1.bf16.msra.mxu0 %v2258
  %2282 = vmatprep.subr.bf16.mxu0 0
  %2283 = vmatpush2.bf16.msra.mxu0 0
  %2284 = vmatprep.subr.bf16.mxu0 0
  %2285 = vmatpush2.bf16.msra.mxu0 0
  %2286 = vmatprep.subr.bf16.mxu0 0
  %2287 = vmatpush2.bf16.msra.mxu0 0
  %2288 = vmatprep.subr.bf16.mxu0 0
  %2289 = vmatpush2.bf16.msra.mxu0 0
  %2290 = vmatprep.subr.bf16.mxu0 0
  %2291 = vmatpush2.bf16.msra.mxu0 0
  %2292 = vmatprep.subr.bf16.mxu0 0
  %2293 = vmatpush2.bf16.msra.mxu0 0
  %2294 = vmatprep.subr.bf16.mxu0 0
  %2295 = vmatpush2.bf16.msra.mxu0 0
  %2296 = vmatprep.subr.bf16.mxu0 0
  %2297 = vmatpush2.bf16.msra.mxu0 0
  %2298 = vmatprep.mubr.bf16.mxu0 0
  %2299 = vmatmul.mubr.bf16.gmra.mxu0 %v169
  %v2300 = vpop.f32.mrf.mxu0
  %v2301 = vadd.f32 %v2240, %v2300
  %v2302 = vpop.f32.mrf.mxu0
  %v2303 = vpop.f32.mrf.mxu0
  %v2304 = vadd.f32 %v2240, %v2303
  %v2305 = vpop.f32.mrf.mxu0
  %2306 = vmatprep.mubr.bf16.mxu0 0
  %2307 = vmatmul.mubr.bf16.gmra.mxu0 %v172
  %v2308 = vpop.f32.mrf.mxu0
  %v2309 = vadd.f32 %v2240, %v2308
  %v2310 = vpop.f32.mrf.mxu0
  %v2311 = vpop.f32.mrf.mxu0
  %v2312 = vadd.f32 %v2240, %v2311
  %v2313 = vpop.f32.mrf.mxu0
  %2314 = vdwg.mxu0
  %s2315 = scalar_lea.vmem %s6, 128
  %v2316 = vld [vmem:[%s2315] sm:$0xf]
  %v2317 = vld [vmem:[%s2315 + $0x4] sm:$0xf]
  %v2318 = vld [vmem:[%s2315 + $0x8] sm:$0xf]
  %v2319 = vld [vmem:[%s2315 + $0xc] sm:$0xf]
  %v2320 = vld [vmem:[%s2315 + $0x10] sm:$0xf]
  %v2321 = vld [vmem:[%s2315 + $0x14] sm:$0xf]
  %v2322 = vld [vmem:[%s2315 + $0x18] sm:$0xf]
  %v2323 = vld [vmem:[%s2315 + $0x1c] sm:$0xf]
  %s2324 = scalar_lea.vmem %s7, 4
  %v2325 = vld [vmem:[%s2324] sm:$0x1]
  %v2327 = vlaneseq
  %v2328 = vshrl.u32 %v2327, 7
  %v2329 = vsub.s32 0, %v2328
  %v2330 = vrot.slane %v2325, %v2329
  %v2340 = vunpack.c.l.b16 %v2316
  %v2341 = vunpack.c.l.b16 %v2317
  %v2342 = vunpack.c.l.b16 %v2318
  %v2343 = vunpack.c.l.b16 %v2319
  %v2344 = vunpack.c.l.b16 %v2320
  %v2345 = vunpack.c.l.b16 %v2321
  %v2346 = vunpack.c.l.b16 %v2322
  %v2347 = vunpack.c.l.b16 %v2323
  %v2348 = vpack.c.b16 %v2341, %v2340
  %v2349 = vpack.c.b16 %v2343, %v2342
  %v2350 = vpack.c.b16 %v2345, %v2344
  %v2351 = vpack.c.b16 %v2347, %v2346
  %2356 = vmatprep.subr.bf16.mxu0 0
  %2357 = vmatpush1.bf16.msra.mxu0 0
  %2358 = vmatprep.subr.bf16.mxu0 0
  %2359 = vmatpush1.bf16.msra.mxu0 0
  %2360 = vmatprep.subr.bf16.mxu0 0
  %2361 = vmatpush1.bf16.msra.mxu0 0
  %2362 = vmatprep.subr.bf16.mxu0 0
  %2363 = vmatpush1.bf16.msra.mxu0 0
  %2364 = vmatprep.subr.bf16.mxu0 0
  %2365 = vmatpush1.bf16.msra.mxu0 %v2351
  %2366 = vmatprep.subr.bf16.mxu0 0
  %2367 = vmatpush1.bf16.msra.mxu0 %v2350
  %2368 = vmatprep.subr.bf16.mxu0 0
  %2369 = vmatpush1.bf16.msra.mxu0 %v2349
  %2370 = vmatprep.subr.bf16.mxu0 0
  %2371 = vmatpush1.bf16.msra.mxu0 %v2348
  %2372 = vmatprep.subr.bf16.mxu0 0
  %2373 = vmatpush2.bf16.msra.mxu0 0
  %2374 = vmatprep.subr.bf16.mxu0 0
  %2375 = vmatpush2.bf16.msra.mxu0 0
  %2376 = vmatprep.subr.bf16.mxu0 0
  %2377 = vmatpush2.bf16.msra.mxu0 0
  %2378 = vmatprep.subr.bf16.mxu0 0
  %2379 = vmatpush2.bf16.msra.mxu0 0
  %2380 = vmatprep.subr.bf16.mxu0 0
  %2381 = vmatpush2.bf16.msra.mxu0 0
  %2382 = vmatprep.subr.bf16.mxu0 0
  %2383 = vmatpush2.bf16.msra.mxu0 0
  %2384 = vmatprep.subr.bf16.mxu0 0
  %2385 = vmatpush2.bf16.msra.mxu0 0
  %2386 = vmatprep.subr.bf16.mxu0 0
  %2387 = vmatpush2.bf16.msra.mxu0 0
  %2388 = vmatprep.mubr.bf16.mxu0 0
  %2389 = vmatmul.mubr.bf16.gmra.mxu0 %v169
  %v2390 = vpop.f32.mrf.mxu0
  %v2391 = vadd.f32 %v2330, %v2390
  %v2392 = vpop.f32.mrf.mxu0
  %v2393 = vpop.f32.mrf.mxu0
  %v2394 = vadd.f32 %v2330, %v2393
  %v2395 = vpop.f32.mrf.mxu0
  %2396 = vmatprep.mubr.bf16.mxu0 0
  %2397 = vmatmul.mubr.bf16.gmra.mxu0 %v172
  %v2398 = vpop.f32.mrf.mxu0
  %v2399 = vadd.f32 %v2330, %v2398
  %v2400 = vpop.f32.mrf.mxu0
  %v2401 = vpop.f32.mrf.mxu0
  %v2402 = vadd.f32 %v2330, %v2401
  %v2403 = vpop.f32.mrf.mxu0
  %2404 = vdwg.mxu0
  %v2405 = vpack.c.bf16 %v2219, %v2219
  %v2406 = vpack.c.bf16 %v2222, %v2222
  %v2407 = vpack.c.bf16 %v2304, %v2301
  %v2408 = vpack.c.bf16 %v2312, %v2309
  %v2410 = vsel %vm315, %v2405, 0
  %v2413 = vsel %vm315, %v2407, 0
  %2415 = vmatprep.subr.bf16.mxu0 0
  %2416 = vmatpush1.bf16.xpose.msra.mxu0 0
  %2417 = vmatprep.subr.bf16.mxu0 0
  %2418 = vmatpush1.bf16.xpose.msra.mxu0 0
  %2419 = vmatprep.subr.bf16.mxu0 0
  %2420 = vmatpush1.bf16.xpose.msra.mxu0 0
  %2421 = vmatprep.subr.bf16.mxu0 0
  %2422 = vmatpush1.bf16.xpose.msra.mxu0 0
  %2423 = vmatprep.subr.bf16.mxu0 0
  %2424 = vmatpush1.bf16.xpose.msra.mxu0 0
  %2425 = vmatprep.subr.bf16.mxu0 0
  %2426 = vmatpush1.bf16.xpose.msra.mxu0 0
  %2427 = vmatprep.subr.bf16.mxu0 0
  %2428 = vmatpush1.bf16.xpose.msra.mxu0 0
  %2429 = vmatprep.subr.bf16.mxu0 0
  %2430 = vmatpush1.bf16.xpose.msra.mxu0 %v2413
  %2431 = vmatprep.subr.bf16.mxu0 0
  %2432 = vmatpush2.bf16.xpose.msra.mxu0 0
  %2433 = vmatprep.subr.bf16.mxu0 0
  %2434 = vmatpush2.bf16.xpose.msra.mxu0 0
  %2435 = vmatprep.subr.bf16.mxu0 0
  %2436 = vmatpush2.bf16.xpose.msra.mxu0 0
  %2437 = vmatprep.subr.bf16.mxu0 0
  %2438 = vmatpush2.bf16.xpose.msra.mxu0 0
  %2439 = vmatprep.subr.bf16.mxu0 0
  %2440 = vmatpush2.bf16.xpose.msra.mxu0 0
  %2441 = vmatprep.subr.bf16.mxu0 0
  %2442 = vmatpush2.bf16.xpose.msra.mxu0 0
  %2443 = vmatprep.subr.bf16.mxu0 0
  %2444 = vmatpush2.bf16.xpose.msra.mxu0 0
  %2445 = vmatprep.subr.bf16.mxu0 0
  %2446 = vmatpush2.bf16.xpose.msra.mxu0 0
  %2447 = vmatprep.mubr.bf16.mxu0 0
  %2448 = vmatmul.mubr.bf16.gmra.mxu0 %v2410
  %v2449 = vpop.f32.mrf.mxu0
  %v2450 = vadd.f32 0.0, %v2449
  %v2451 = vpop.f32.mrf.mxu0
  %v2452 = vpop.f32.mrf.mxu0
  %v2453 = vpop.f32.mrf.mxu0
  %2454 = vdwg.mxu0
  %v2456 = vsel %vm315, %v2406, 0
  %v2459 = vsel %vm315, %v2408, 0
  %2461 = vmatprep.subr.bf16.mxu0 0
  %2462 = vmatpush1.bf16.xpose.msra.mxu0 0
  %2463 = vmatprep.subr.bf16.mxu0 0
  %2464 = vmatpush1.bf16.xpose.msra.mxu0 0
  %2465 = vmatprep.subr.bf16.mxu0 0
  %2466 = vmatpush1.bf16.xpose.msra.mxu0 0
  %2467 = vmatprep.subr.bf16.mxu0 0
  %2468 = vmatpush1.bf16.xpose.msra.mxu0 0
  %2469 = vmatprep.subr.bf16.mxu0 0
  %2470 = vmatpush1.bf16.xpose.msra.mxu0 0
  %2471 = vmatprep.subr.bf16.mxu0 0
  %2472 = vmatpush1.bf16.xpose.msra.mxu0 0
  %2473 = vmatprep.subr.bf16.mxu0 0
  %2474 = vmatpush1.bf16.xpose.msra.mxu0 0
  %2475 = vmatprep.subr.bf16.mxu0 0
  %2476 = vmatpush1.bf16.xpose.msra.mxu0 %v2459
  %2477 = vmatprep.subr.bf16.mxu0 0
  %2478 = vmatpush2.bf16.xpose.msra.mxu0 0
  %2479 = vmatprep.subr.bf16.mxu0 0
  %2480 = vmatpush2.bf16.xpose.msra.mxu0 0
  %2481 = vmatprep.subr.bf16.mxu0 0
  %2482 = vmatpush2.bf16.xpose.msra.mxu0 0
  %2483 = vmatprep.subr.bf16.mxu0 0
  %2484 = vmatpush2.bf16.xpose.msra.mxu0 0
  %2485 = vmatprep.subr.bf16.mxu0 0
  %2486 = vmatpush2.bf16.xpose.msra.mxu0 0
  %2487 = vmatprep.subr.bf16.mxu0 0
  %2488 = vmatpush2.bf16.xpose.msra.mxu0 0
  %2489 = vmatprep.subr.bf16.mxu0 0
  %2490 = vmatpush2.bf16.xpose.msra.mxu0 0
  %2491 = vmatprep.subr.bf16.mxu0 0
  %2492 = vmatpush2.bf16.xpose.msra.mxu0 0
  %2493 = vmatprep.mubr.bf16.mxu0 0
  %2494 = vmatmul.mubr.bf16.gmra.mxu0 %v2456
  %v2495 = vpop.f32.mrf.mxu0
  %v2496 = vadd.f32 0.0, %v2495
  %v2497 = vpop.f32.mrf.mxu0
  %v2498 = vpop.f32.mrf.mxu0
  %v2499 = vpop.f32.mrf.mxu0
  %2500 = vdwg.mxu0
  %v2501 = vmul.f32 %v2450, 0.35355338
  %v2502 = vmul.f32 %v2496, 0.35355338
  %v2503 = vsel %vm410, %v2501, -inf
  %2504 = vmax.xlane.f32.xlu0 %v2503
  %v2505 = vpop.xlane.xlu0 %2504
  %v2506 = vsel %vm410, %v2502, -inf
  %2507 = vmax.xlane.f32.xlu0 %v2506
  %v2508 = vpop.xlane.xlu0 %2507
  %v2509 = vsub.f32 %v2501, %v2505
  %v2510 = vsub.f32 %v2502, %v2508
  %v2511 = vmul.f32 %v2509, 1.442695
  %v2512 = vpow.pop %v2511
  %v2513 = vmul.f32 %v2510, 1.442695
  %v2514 = vpow.pop %v2513
  %v2515 = vsel %vm410, %v2512, 0.0
  %2516 = vadd.xlane.f32.xlu0 %v2515
  %v2517 = vpop.xlane.xlu0 %2516
  %v2518 = vsel %vm410, %v2514, 0.0
  %2519 = vadd.xlane.f32.xlu0 %v2518
  %v2520 = vpop.xlane.xlu0 %2519
  %v2521 = vrcp.pop %v2517
  %v2522 = vrcp.pop %v2520
  %v2523 = vmul.f32 %v2512, %v2521
  %v2524 = vmul.f32 %v2514, %v2522
  %v2525 = vpack.c.bf16 %v2523, %v2523
  %v2526 = vpack.c.bf16 %v2524, %v2524
  %v2527 = vpack.c.bf16 %v2394, %v2391
  %v2528 = vpack.c.bf16 %v2402, %v2399
  %v2530 = vsel %vm410, %v2525, 0
  %2532 = vmatprep.subr.bf16.mxu0 0
  %2533 = vmatpush1.bf16.msra.mxu0 0
  %2534 = vmatprep.subr.bf16.mxu0 0
  %2535 = vmatpush1.bf16.msra.mxu0 0
  %2536 = vmatprep.subr.bf16.mxu0 0
  %2537 = vmatpush1.bf16.msra.mxu0 0
  %2538 = vmatprep.subr.bf16.mxu0 0
  %2539 = vmatpush1.bf16.msra.mxu0 0
  %2540 = vmatprep.subr.bf16.mxu0 0
  %2541 = vmatpush1.bf16.msra.mxu0 0
  %2542 = vmatprep.subr.bf16.mxu0 0
  %2543 = vmatpush1.bf16.msra.mxu0 0
  %2544 = vmatprep.subr.bf16.mxu0 0
  %2545 = vmatpush1.bf16.msra.mxu0 0
  %2546 = vmatprep.subr.bf16.mxu0 0
  %2547 = vmatpush1.bf16.msra.mxu0 %v2527
  %2548 = vmatprep.subr.bf16.mxu0 0
  %2549 = vmatpush2.bf16.msra.mxu0 0
  %2550 = vmatprep.subr.bf16.mxu0 0
  %2551 = vmatpush2.bf16.msra.mxu0 0
  %2552 = vmatprep.subr.bf16.mxu0 0
  %2553 = vmatpush2.bf16.msra.mxu0 0
  %2554 = vmatprep.subr.bf16.mxu0 0
  %2555 = vmatpush2.bf16.msra.mxu0 0
  %2556 = vmatprep.subr.bf16.mxu0 0
  %2557 = vmatpush2.bf16.msra.mxu0 0
  %2558 = vmatprep.subr.bf16.mxu0 0
  %2559 = vmatpush2.bf16.msra.mxu0 0
  %2560 = vmatprep.subr.bf16.mxu0 0
  %2561 = vmatpush2.bf16.msra.mxu0 0
  %2562 = vmatprep.subr.bf16.mxu0 0
  %2563 = vmatpush2.bf16.msra.mxu0 0
  %2564 = vmatprep.mubr.bf16.mxu0 0
  %2565 = vmatmul.mubr.bf16.gmra.mxu0 %v2530
  %v2566 = vpop.f32.mrf.mxu0
  %v2567 = vadd.f32 0.0, %v2566
  %v2568 = vpop.f32.mrf.mxu0
  %v2569 = vpop.f32.mrf.mxu0
  %v2570 = vpop.f32.mrf.mxu0
  %2571 = vdwg.mxu0
  %v2573 = vsel %vm410, %v2526, 0
  %2575 = vmatprep.subr.bf16.mxu0 0
  %2576 = vmatpush1.bf16.msra.mxu0 0
  %2577 = vmatprep.subr.bf16.mxu0 0
  %2578 = vmatpush1.bf16.msra.mxu0 0
  %2579 = vmatprep.subr.bf16.mxu0 0
  %2580 = vmatpush1.bf16.msra.mxu0 0
  %2581 = vmatprep.subr.bf16.mxu0 0
  %2582 = vmatpush1.bf16.msra.mxu0 0
  %2583 = vmatprep.subr.bf16.mxu0 0
  %2584 = vmatpush1.bf16.msra.mxu0 0
  %2585 = vmatprep.subr.bf16.mxu0 0
  %2586 = vmatpush1.bf16.msra.mxu0 0
  %2587 = vmatprep.subr.bf16.mxu0 0
  %2588 = vmatpush1.bf16.msra.mxu0 0
  %2589 = vmatprep.subr.bf16.mxu0 0
  %2590 = vmatpush1.bf16.msra.mxu0 %v2528
  %2591 = vmatprep.subr.bf16.mxu0 0
  %2592 = vmatpush2.bf16.msra.mxu0 0
  %2593 = vmatprep.subr.bf16.mxu0 0
  %2594 = vmatpush2.bf16.msra.mxu0 0
  %2595 = vmatprep.subr.bf16.mxu0 0
  %2596 = vmatpush2.bf16.msra.mxu0 0
  %2597 = vmatprep.subr.bf16.mxu0 0
  %2598 = vmatpush2.bf16.msra.mxu0 0
  %2599 = vmatprep.subr.bf16.mxu0 0
  %2600 = vmatpush2.bf16.msra.mxu0 0
  %2601 = vmatprep.subr.bf16.mxu0 0
  %2602 = vmatpush2.bf16.msra.mxu0 0
  %2603 = vmatprep.subr.bf16.mxu0 0
  %2604 = vmatpush2.bf16.msra.mxu0 0
  %2605 = vmatprep.subr.bf16.mxu0 0
  %2606 = vmatpush2.bf16.msra.mxu0 0
  %2607 = vmatprep.mubr.bf16.mxu0 0
  %2608 = vmatmul.mubr.bf16.gmra.mxu0 %v2573
  %v2609 = vpop.f32.mrf.mxu0
  %v2610 = vadd.f32 0.0, %v2609
  %v2611 = vpop.f32.mrf.mxu0
  %v2612 = vpop.f32.mrf.mxu0
  %v2613 = vpop.f32.mrf.mxu0
  %2614 = vdwg.mxu0
  %v2615 = vpack.c.bf16 %v2610, %v2567
  %s2616 = scalar_lea.vmem %s8, 16
  %v2617 = vld [vmem:[%s2616] sm:$0xf]
  %v2619 = vsel %vm315, %v2615, 0
  %v2622 = vsel %vm1003, %v2617, 0
  %2624 = vmatprep.subr.bf16.mxu0 0
  %2625 = vmatpush1.bf16.msra.mxu0 0
  %2626 = vmatprep.subr.bf16.mxu0 0
  %2627 = vmatpush1.bf16.msra.mxu0 0
  %2628 = vmatprep.subr.bf16.mxu0 0
  %2629 = vmatpush1.bf16.msra.mxu0 0
  %2630 = vmatprep.subr.bf16.mxu0 0
  %2631 = vmatpush1.bf16.msra.mxu0 0
  %2632 = vmatprep.subr.bf16.mxu0 0
  %2633 = vmatpush1.bf16.msra.mxu0 0
  %2634 = vmatprep.subr.bf16.mxu0 0
  %2635 = vmatpush1.bf16.msra.mxu0 0
  %2636 = vmatprep.subr.bf16.mxu0 0
  %2637 = vmatpush1.bf16.msra.mxu0 0
  %2638 = vmatprep.subr.bf16.mxu0 0
  %2639 = vmatpush1.bf16.msra.mxu0 %v2622
  %2640 = vmatprep.subr.bf16.mxu0 0
  %2641 = vmatpush2.bf16.msra.mxu0 0
  %2642 = vmatprep.subr.bf16.mxu0 0
  %2643 = vmatpush2.bf16.msra.mxu0 0
  %2644 = vmatprep.subr.bf16.mxu0 0
  %2645 = vmatpush2.bf16.msra.mxu0 0
  %2646 = vmatprep.subr.bf16.mxu0 0
  %2647 = vmatpush2.bf16.msra.mxu0 0
  %2648 = vmatprep.subr.bf16.mxu0 0
  %2649 = vmatpush2.bf16.msra.mxu0 0
  %2650 = vmatprep.subr.bf16.mxu0 0
  %2651 = vmatpush2.bf16.msra.mxu0 0
  %2652 = vmatprep.subr.bf16.mxu0 0
  %2653 = vmatpush2.bf16.msra.mxu0 0
  %2654 = vmatprep.subr.bf16.mxu0 0
  %2655 = vmatpush2.bf16.msra.mxu0 0
  %2656 = vmatprep.mubr.bf16.mxu0 0
  %2657 = vmatmul.mubr.bf16.gmra.mxu0 %v2619
  %v2658 = vpop.f32.mrf.mxu0
  %v2659 = vadd.f32 0.0, %v2658
  %v2660 = vpop.f32.mrf.mxu0
  %v2661 = vpop.f32.mrf.mxu0
  %v2662 = vadd.f32 0.0, %v2661
  %v2663 = vpop.f32.mrf.mxu0
  %2664 = vdwg.mxu0
  %v2665 = vadd.f32 %v2141, %v2659
  %v2666 = vadd.f32 %v2142, %v2662
  %s2667 = scalar_lea.vmem %s2, 160
  %v2668 = vld [vmem:[%s2667] sm:$0xf]
  %v2669 = vld [vmem:[%s2667 + $0x4] sm:$0xf]
  %v2670 = vld [vmem:[%s2667 + $0x8] sm:$0xf]
  %v2671 = vld [vmem:[%s2667 + $0xc] sm:$0xf]
  %v2672 = vld [vmem:[%s2667 + $0x10] sm:$0xf]
  %v2673 = vld [vmem:[%s2667 + $0x14] sm:$0xf]
  %v2674 = vld [vmem:[%s2667 + $0x18] sm:$0xf]
  %v2675 = vld [vmem:[%s2667 + $0x1c] sm:$0xf]
  %s2676 = scalar_lea.vmem %s3, 5
  %v2677 = vld [vmem:[%s2676] sm:$0x1]
  %v2679 = vlaneseq
  %v2680 = vshrl.u32 %v2679, 7
  %v2681 = vsub.s32 0, %v2680
  %v2682 = vrot.slane %v2677, %v2681
  %v2692 = vunpack.c.l.b16 %v2668
  %v2693 = vunpack.c.l.b16 %v2669
  %v2694 = vunpack.c.l.b16 %v2670
  %v2695 = vunpack.c.l.b16 %v2671
  %v2696 = vunpack.c.l.b16 %v2672
  %v2697 = vunpack.c.l.b16 %v2673
  %v2698 = vunpack.c.l.b16 %v2674
  %v2699 = vunpack.c.l.b16 %v2675
  %v2700 = vpack.c.b16 %v2693, %v2692
  %v2701 = vpack.c.b16 %v2695, %v2694
  %v2702 = vpack.c.b16 %v2697, %v2696
  %v2703 = vpack.c.b16 %v2699, %v2698
  %2708 = vmatprep.subr.bf16.mxu0 0
  %2709 = vmatpush1.bf16.msra.mxu0 0
  %2710 = vmatprep.subr.bf16.mxu0 0
  %2711 = vmatpush1.bf16.msra.mxu0 0
  %2712 = vmatprep.subr.bf16.mxu0 0
  %2713 = vmatpush1.bf16.msra.mxu0 0
  %2714 = vmatprep.subr.bf16.mxu0 0
  %2715 = vmatpush1.bf16.msra.mxu0 0
  %2716 = vmatprep.subr.bf16.mxu0 0
  %2717 = vmatpush1.bf16.msra.mxu0 %v2703
  %2718 = vmatprep.subr.bf16.mxu0 0
  %2719 = vmatpush1.bf16.msra.mxu0 %v2702
  %2720 = vmatprep.subr.bf16.mxu0 0
  %2721 = vmatpush1.bf16.msra.mxu0 %v2701
  %2722 = vmatprep.subr.bf16.mxu0 0
  %2723 = vmatpush1.bf16.msra.mxu0 %v2700
  %2724 = vmatprep.subr.bf16.mxu0 0
  %2725 = vmatpush2.bf16.msra.mxu0 0
  %2726 = vmatprep.subr.bf16.mxu0 0
  %2727 = vmatpush2.bf16.msra.mxu0 0
  %2728 = vmatprep.subr.bf16.mxu0 0
  %2729 = vmatpush2.bf16.msra.mxu0 0
  %2730 = vmatprep.subr.bf16.mxu0 0
  %2731 = vmatpush2.bf16.msra.mxu0 0
  %2732 = vmatprep.subr.bf16.mxu0 0
  %2733 = vmatpush2.bf16.msra.mxu0 0
  %2734 = vmatprep.subr.bf16.mxu0 0
  %2735 = vmatpush2.bf16.msra.mxu0 0
  %2736 = vmatprep.subr.bf16.mxu0 0
  %2737 = vmatpush2.bf16.msra.mxu0 0
  %2738 = vmatprep.subr.bf16.mxu0 0
  %2739 = vmatpush2.bf16.msra.mxu0 0
  %2740 = vmatprep.mubr.bf16.mxu0 0
  %2741 = vmatmul.mubr.bf16.gmra.mxu0 %v86
  %v2742 = vpop.f32.mrf.mxu0
  %v2743 = vadd.f32 %v2682, %v2742
  %v2744 = vpop.f32.mrf.mxu0
  %v2745 = vpop.f32.mrf.mxu0
  %v2746 = vadd.f32 %v2682, %v2745
  %v2747 = vpop.f32.mrf.mxu0
  %2748 = vdwg.mxu0
  %s2749 = scalar_lea.vmem %s4, 160
  %v2750 = vld [vmem:[%s2749] sm:$0xf]
  %v2751 = vld [vmem:[%s2749 + $0x4] sm:$0xf]
  %v2752 = vld [vmem:[%s2749 + $0x8] sm:$0xf]
  %v2753 = vld [vmem:[%s2749 + $0xc] sm:$0xf]
  %v2754 = vld [vmem:[%s2749 + $0x10] sm:$0xf]
  %v2755 = vld [vmem:[%s2749 + $0x14] sm:$0xf]
  %v2756 = vld [vmem:[%s2749 + $0x18] sm:$0xf]
  %v2757 = vld [vmem:[%s2749 + $0x1c] sm:$0xf]
  %s2758 = scalar_lea.vmem %s5, 5
  %v2759 = vld [vmem:[%s2758] sm:$0x1]
  %v2761 = vlaneseq
  %v2762 = vshrl.u32 %v2761, 7
  %v2763 = vsub.s32 0, %v2762
  %v2764 = vrot.slane %v2759, %v2763
  %v2774 = vunpack.c.l.b16 %v2750
  %v2775 = vunpack.c.l.b16 %v2751
  %v2776 = vunpack.c.l.b16 %v2752
  %v2777 = vunpack.c.l.b16 %v2753
  %v2778 = vunpack.c.l.b16 %v2754
  %v2779 = vunpack.c.l.b16 %v2755
  %v2780 = vunpack.c.l.b16 %v2756
  %v2781 = vunpack.c.l.b16 %v2757
  %v2782 = vpack.c.b16 %v2775, %v2774
  %v2783 = vpack.c.b16 %v2777, %v2776
  %v2784 = vpack.c.b16 %v2779, %v2778
  %v2785 = vpack.c.b16 %v2781, %v2780
  %2790 = vmatprep.subr.bf16.mxu0 0
  %2791 = vmatpush1.bf16.msra.mxu0 0
  %2792 = vmatprep.subr.bf16.mxu0 0
  %2793 = vmatpush1.bf16.msra.mxu0 0
  %2794 = vmatprep.subr.bf16.mxu0 0
  %2795 = vmatpush1.bf16.msra.mxu0 0
  %2796 = vmatprep.subr.bf16.mxu0 0
  %2797 = vmatpush1.bf16.msra.mxu0 0
  %2798 = vmatprep.subr.bf16.mxu0 0
  %2799 = vmatpush1.bf16.msra.mxu0 %v2785
  %2800 = vmatprep.subr.bf16.mxu0 0
  %2801 = vmatpush1.bf16.msra.mxu0 %v2784
  %2802 = vmatprep.subr.bf16.mxu0 0
  %2803 = vmatpush1.bf16.msra.mxu0 %v2783
  %2804 = vmatprep.subr.bf16.mxu0 0
  %2805 = vmatpush1.bf16.msra.mxu0 %v2782
  %2806 = vmatprep.subr.bf16.mxu0 0
  %2807 = vmatpush2.bf16.msra.mxu0 0
  %2808 = vmatprep.subr.bf16.mxu0 0
  %2809 = vmatpush2.bf16.msra.mxu0 0
  %2810 = vmatprep.subr.bf16.mxu0 0
  %2811 = vmatpush2.bf16.msra.mxu0 0
  %2812 = vmatprep.subr.bf16.mxu0 0
  %2813 = vmatpush2.bf16.msra.mxu0 0
  %2814 = vmatprep.subr.bf16.mxu0 0
  %2815 = vmatpush2.bf16.msra.mxu0 0
  %2816 = vmatprep.subr.bf16.mxu0 0
  %2817 = vmatpush2.bf16.msra.mxu0 0
  %2818 = vmatprep.subr.bf16.mxu0 0
  %2819 = vmatpush2.bf16.msra.mxu0 0
  %2820 = vmatprep.subr.bf16.mxu0 0
  %2821 = vmatpush2.bf16.msra.mxu0 0
  %2822 = vmatprep.mubr.bf16.mxu0 0
  %2823 = vmatmul.mubr.bf16.gmra.mxu0 %v169
  %v2824 = vpop.f32.mrf.mxu0
  %v2825 = vadd.f32 %v2764, %v2824
  %v2826 = vpop.f32.mrf.mxu0
  %v2827 = vpop.f32.mrf.mxu0
  %v2828 = vadd.f32 %v2764, %v2827
  %v2829 = vpop.f32.mrf.mxu0
  %2830 = vmatprep.mubr.bf16.mxu0 0
  %2831 = vmatmul.mubr.bf16.gmra.mxu0 %v172
  %v2832 = vpop.f32.mrf.mxu0
  %v2833 = vadd.f32 %v2764, %v2832
  %v2834 = vpop.f32.mrf.mxu0
  %v2835 = vpop.f32.mrf.mxu0
  %v2836 = vadd.f32 %v2764, %v2835
  %v2837 = vpop.f32.mrf.mxu0
  %2838 = vdwg.mxu0
  %s2839 = scalar_lea.vmem %s6, 160
  %v2840 = vld [vmem:[%s2839] sm:$0xf]
  %v2841 = vld [vmem:[%s2839 + $0x4] sm:$0xf]
  %v2842 = vld [vmem:[%s2839 + $0x8] sm:$0xf]
  %v2843 = vld [vmem:[%s2839 + $0xc] sm:$0xf]
  %v2844 = vld [vmem:[%s2839 + $0x10] sm:$0xf]
  %v2845 = vld [vmem:[%s2839 + $0x14] sm:$0xf]
  %v2846 = vld [vmem:[%s2839 + $0x18] sm:$0xf]
  %v2847 = vld [vmem:[%s2839 + $0x1c] sm:$0xf]
  %s2848 = scalar_lea.vmem %s7, 5
  %v2849 = vld [vmem:[%s2848] sm:$0x1]
  %v2851 = vlaneseq
  %v2852 = vshrl.u32 %v2851, 7
  %v2853 = vsub.s32 0, %v2852
  %v2854 = vrot.slane %v2849, %v2853
  %v2864 = vunpack.c.l.b16 %v2840
  %v2865 = vunpack.c.l.b16 %v2841
  %v2866 = vunpack.c.l.b16 %v2842
  %v2867 = vunpack.c.l.b16 %v2843
  %v2868 = vunpack.c.l.b16 %v2844
  %v2869 = vunpack.c.l.b16 %v2845
  %v2870 = vunpack.c.l.b16 %v2846
  %v2871 = vunpack.c.l.b16 %v2847
  %v2872 = vpack.c.b16 %v2865, %v2864
  %v2873 = vpack.c.b16 %v2867, %v2866
  %v2874 = vpack.c.b16 %v2869, %v2868
  %v2875 = vpack.c.b16 %v2871, %v2870
  %2880 = vmatprep.subr.bf16.mxu0 0
  %2881 = vmatpush1.bf16.msra.mxu0 0
  %2882 = vmatprep.subr.bf16.mxu0 0
  %2883 = vmatpush1.bf16.msra.mxu0 0
  %2884 = vmatprep.subr.bf16.mxu0 0
  %2885 = vmatpush1.bf16.msra.mxu0 0
  %2886 = vmatprep.subr.bf16.mxu0 0
  %2887 = vmatpush1.bf16.msra.mxu0 0
  %2888 = vmatprep.subr.bf16.mxu0 0
  %2889 = vmatpush1.bf16.msra.mxu0 %v2875
  %2890 = vmatprep.subr.bf16.mxu0 0
  %2891 = vmatpush1.bf16.msra.mxu0 %v2874
  %2892 = vmatprep.subr.bf16.mxu0 0
  %2893 = vmatpush1.bf16.msra.mxu0 %v2873
  %2894 = vmatprep.subr.bf16.mxu0 0
  %2895 = vmatpush1.bf16.msra.mxu0 %v2872
  %2896 = vmatprep.subr.bf16.mxu0 0
  %2897 = vmatpush2.bf16.msra.mxu0 0
  %2898 = vmatprep.subr.bf16.mxu0 0
  %2899 = vmatpush2.bf16.msra.mxu0 0
  %2900 = vmatprep.subr.bf16.mxu0 0
  %2901 = vmatpush2.bf16.msra.mxu0 0
  %2902 = vmatprep.subr.bf16.mxu0 0
  %2903 = vmatpush2.bf16.msra.mxu0 0
  %2904 = vmatprep.subr.bf16.mxu0 0
  %2905 = vmatpush2.bf16.msra.mxu0 0
  %2906 = vmatprep.subr.bf16.mxu0 0
  %2907 = vmatpush2.bf16.msra.mxu0 0
  %2908 = vmatprep.subr.bf16.mxu0 0
  %2909 = vmatpush2.bf16.msra.mxu0 0
  %2910 = vmatprep.subr.bf16.mxu0 0
  %2911 = vmatpush2.bf16.msra.mxu0 0
  %2912 = vmatprep.mubr.bf16.mxu0 0
  %2913 = vmatmul.mubr.bf16.gmra.mxu0 %v169
  %v2914 = vpop.f32.mrf.mxu0
  %v2915 = vadd.f32 %v2854, %v2914
  %v2916 = vpop.f32.mrf.mxu0
  %v2917 = vpop.f32.mrf.mxu0
  %v2918 = vadd.f32 %v2854, %v2917
  %v2919 = vpop.f32.mrf.mxu0
  %2920 = vmatprep.mubr.bf16.mxu0 0
  %2921 = vmatmul.mubr.bf16.gmra.mxu0 %v172
  %v2922 = vpop.f32.mrf.mxu0
  %v2923 = vadd.f32 %v2854, %v2922
  %v2924 = vpop.f32.mrf.mxu0
  %v2925 = vpop.f32.mrf.mxu0
  %v2926 = vadd.f32 %v2854, %v2925
  %v2927 = vpop.f32.mrf.mxu0
  %2928 = vdwg.mxu0
  %v2929 = vpack.c.bf16 %v2743, %v2743
  %v2930 = vpack.c.bf16 %v2746, %v2746
  %v2931 = vpack.c.bf16 %v2828, %v2825
  %v2932 = vpack.c.bf16 %v2836, %v2833
  %v2934 = vsel %vm315, %v2929, 0
  %v2937 = vsel %vm315, %v2931, 0
  %2939 = vmatprep.subr.bf16.mxu0 0
  %2940 = vmatpush1.bf16.xpose.msra.mxu0 0
  %2941 = vmatprep.subr.bf16.mxu0 0
  %2942 = vmatpush1.bf16.xpose.msra.mxu0 0
  %2943 = vmatprep.subr.bf16.mxu0 0
  %2944 = vmatpush1.bf16.xpose.msra.mxu0 0
  %2945 = vmatprep.subr.bf16.mxu0 0
  %2946 = vmatpush1.bf16.xpose.msra.mxu0 0
  %2947 = vmatprep.subr.bf16.mxu0 0
  %2948 = vmatpush1.bf16.xpose.msra.mxu0 0
  %2949 = vmatprep.subr.bf16.mxu0 0
  %2950 = vmatpush1.bf16.xpose.msra.mxu0 0
  %2951 = vmatprep.subr.bf16.mxu0 0
  %2952 = vmatpush1.bf16.xpose.msra.mxu0 0
  %2953 = vmatprep.subr.bf16.mxu0 0
  %2954 = vmatpush1.bf16.xpose.msra.mxu0 %v2937
  %2955 = vmatprep.subr.bf16.mxu0 0
  %2956 = vmatpush2.bf16.xpose.msra.mxu0 0
  %2957 = vmatprep.subr.bf16.mxu0 0
  %2958 = vmatpush2.bf16.xpose.msra.mxu0 0
  %2959 = vmatprep.subr.bf16.mxu0 0
  %2960 = vmatpush2.bf16.xpose.msra.mxu0 0
  %2961 = vmatprep.subr.bf16.mxu0 0
  %2962 = vmatpush2.bf16.xpose.msra.mxu0 0
  %2963 = vmatprep.subr.bf16.mxu0 0
  %2964 = vmatpush2.bf16.xpose.msra.mxu0 0
  %2965 = vmatprep.subr.bf16.mxu0 0
  %2966 = vmatpush2.bf16.xpose.msra.mxu0 0
  %2967 = vmatprep.subr.bf16.mxu0 0
  %2968 = vmatpush2.bf16.xpose.msra.mxu0 0
  %2969 = vmatprep.subr.bf16.mxu0 0
  %2970 = vmatpush2.bf16.xpose.msra.mxu0 0
  %2971 = vmatprep.mubr.bf16.mxu0 0
  %2972 = vmatmul.mubr.bf16.gmra.mxu0 %v2934
  %v2973 = vpop.f32.mrf.mxu0
  %v2974 = vadd.f32 0.0, %v2973
  %v2975 = vpop.f32.mrf.mxu0
  %v2976 = vpop.f32.mrf.mxu0
  %v2977 = vpop.f32.mrf.mxu0
  %2978 = vdwg.mxu0
  %v2980 = vsel %vm315, %v2930, 0
  %v2983 = vsel %vm315, %v2932, 0
  %2985 = vmatprep.subr.bf16.mxu0 0
  %2986 = vmatpush1.bf16.xpose.msra.mxu0 0
  %2987 = vmatprep.subr.bf16.mxu0 0
  %2988 = vmatpush1.bf16.xpose.msra.mxu0 0
  %2989 = vmatprep.subr.bf16.mxu0 0
  %2990 = vmatpush1.bf16.xpose.msra.mxu0 0
  %2991 = vmatprep.subr.bf16.mxu0 0
  %2992 = vmatpush1.bf16.xpose.msra.mxu0 0
  %2993 = vmatprep.subr.bf16.mxu0 0
  %2994 = vmatpush1.bf16.xpose.msra.mxu0 0
  %2995 = vmatprep.subr.bf16.mxu0 0
  %2996 = vmatpush1.bf16.xpose.msra.mxu0 0
  %2997 = vmatprep.subr.bf16.mxu0 0
  %2998 = vmatpush1.bf16.xpose.msra.mxu0 0
  %2999 = vmatprep.subr.bf16.mxu0 0
  %3000 = vmatpush1.bf16.xpose.msra.mxu0 %v2983
  %3001 = vmatprep.subr.bf16.mxu0 0
  %3002 = vmatpush2.bf16.xpose.msra.mxu0 0
  %3003 = vmatprep.subr.bf16.mxu0 0
  %3004 = vmatpush2.bf16.xpose.msra.mxu0 0
  %3005 = vmatprep.subr.bf16.mxu0 0
  %3006 = vmatpush2.bf16.xpose.msra.mxu0 0
  %3007 = vmatprep.subr.bf16.mxu0 0
  %3008 = vmatpush2.bf16.xpose.msra.mxu0 0
  %3009 = vmatprep.subr.bf16.mxu0 0
  %3010 = vmatpush2.bf16.xpose.msra.mxu0 0
  %3011 = vmatprep.subr.bf16.mxu0 0
  %3012 = vmatpush2.bf16.xpose.msra.mxu0 0
  %3013 = vmatprep.subr.bf16.mxu0 0
  %3014 = vmatpush2.bf16.xpose.msra.mxu0 0
  %3015 = vmatprep.subr.bf16.mxu0 0
  %3016 = vmatpush2.bf16.xpose.msra.mxu0 0
  %3017 = vmatprep.mubr.bf16.mxu0 0
  %3018 = vmatmul.mubr.bf16.gmra.mxu0 %v2980
  %v3019 = vpop.f32.mrf.mxu0
  %v3020 = vadd.f32 0.0, %v3019
  %v3021 = vpop.f32.mrf.mxu0
  %v3022 = vpop.f32.mrf.mxu0
  %v3023 = vpop.f32.mrf.mxu0
  %3024 = vdwg.mxu0
  %v3025 = vmul.f32 %v2974, 0.35355338
  %v3026 = vmul.f32 %v3020, 0.35355338
  %v3027 = vsel %vm410, %v3025, -inf
  %3028 = vmax.xlane.f32.xlu0 %v3027
  %v3029 = vpop.xlane.xlu0 %3028
  %v3030 = vsel %vm410, %v3026, -inf
  %3031 = vmax.xlane.f32.xlu0 %v3030
  %v3032 = vpop.xlane.xlu0 %3031
  %v3033 = vsub.f32 %v3025, %v3029
  %v3034 = vsub.f32 %v3026, %v3032
  %v3035 = vmul.f32 %v3033, 1.442695
  %v3036 = vpow.pop %v3035
  %v3037 = vmul.f32 %v3034, 1.442695
  %v3038 = vpow.pop %v3037
  %v3039 = vsel %vm410, %v3036, 0.0
  %3040 = vadd.xlane.f32.xlu0 %v3039
  %v3041 = vpop.xlane.xlu0 %3040
  %v3042 = vsel %vm410, %v3038, 0.0
  %3043 = vadd.xlane.f32.xlu0 %v3042
  %v3044 = vpop.xlane.xlu0 %3043
  %v3045 = vrcp.pop %v3041
  %v3046 = vrcp.pop %v3044
  %v3047 = vmul.f32 %v3036, %v3045
  %v3048 = vmul.f32 %v3038, %v3046
  %v3049 = vpack.c.bf16 %v3047, %v3047
  %v3050 = vpack.c.bf16 %v3048, %v3048
  %v3051 = vpack.c.bf16 %v2918, %v2915
  %v3052 = vpack.c.bf16 %v2926, %v2923
  %v3054 = vsel %vm410, %v3049, 0
  %3056 = vmatprep.subr.bf16.mxu0 0
  %3057 = vmatpush1.bf16.msra.mxu0 0
  %3058 = vmatprep.subr.bf16.mxu0 0
  %3059 = vmatpush1.bf16.msra.mxu0 0
  %3060 = vmatprep.subr.bf16.mxu0 0
  %3061 = vmatpush1.bf16.msra.mxu0 0
  %3062 = vmatprep.subr.bf16.mxu0 0
  %3063 = vmatpush1.bf16.msra.mxu0 0
  %3064 = vmatprep.subr.bf16.mxu0 0
  %3065 = vmatpush1.bf16.msra.mxu0 0
  %3066 = vmatprep.subr.bf16.mxu0 0
  %3067 = vmatpush1.bf16.msra.mxu0 0
  %3068 = vmatprep.subr.bf16.mxu0 0
  %3069 = vmatpush1.bf16.msra.mxu0 0
  %3070 = vmatprep.subr.bf16.mxu0 0
  %3071 = vmatpush1.bf16.msra.mxu0 %v3051
  %3072 = vmatprep.subr.bf16.mxu0 0
  %3073 = vmatpush2.bf16.msra.mxu0 0
  %3074 = vmatprep.subr.bf16.mxu0 0
  %3075 = vmatpush2.bf16.msra.mxu0 0
  %3076 = vmatprep.subr.bf16.mxu0 0
  %3077 = vmatpush2.bf16.msra.mxu0 0
  %3078 = vmatprep.subr.bf16.mxu0 0
  %3079 = vmatpush2.bf16.msra.mxu0 0
  %3080 = vmatprep.subr.bf16.mxu0 0
  %3081 = vmatpush2.bf16.msra.mxu0 0
  %3082 = vmatprep.subr.bf16.mxu0 0
  %3083 = vmatpush2.bf16.msra.mxu0 0
  %3084 = vmatprep.subr.bf16.mxu0 0
  %3085 = vmatpush2.bf16.msra.mxu0 0
  %3086 = vmatprep.subr.bf16.mxu0 0
  %3087 = vmatpush2.bf16.msra.mxu0 0
  %3088 = vmatprep.mubr.bf16.mxu0 0
  %3089 = vmatmul.mubr.bf16.gmra.mxu0 %v3054
  %v3090 = vpop.f32.mrf.mxu0
  %v3091 = vadd.f32 0.0, %v3090
  %v3092 = vpop.f32.mrf.mxu0
  %v3093 = vpop.f32.mrf.mxu0
  %v3094 = vpop.f32.mrf.mxu0
  %3095 = vdwg.mxu0
  %v3097 = vsel %vm410, %v3050, 0
  %3099 = vmatprep.subr.bf16.mxu0 0
  %3100 = vmatpush1.bf16.msra.mxu0 0
  %3101 = vmatprep.subr.bf16.mxu0 0
  %3102 = vmatpush1.bf16.msra.mxu0 0
  %3103 = vmatprep.subr.bf16.mxu0 0
  %3104 = vmatpush1.bf16.msra.mxu0 0
  %3105 = vmatprep.subr.bf16.mxu0 0
  %3106 = vmatpush1.bf16.msra.mxu0 0
  %3107 = vmatprep.subr.bf16.mxu0 0
  %3108 = vmatpush1.bf16.msra.mxu0 0
  %3109 = vmatprep.subr.bf16.mxu0 0
  %3110 = vmatpush1.bf16.msra.mxu0 0
  %3111 = vmatprep.subr.bf16.mxu0 0
  %3112 = vmatpush1.bf16.msra.mxu0 0
  %3113 = vmatprep.subr.bf16.mxu0 0
  %3114 = vmatpush1.bf16.msra.mxu0 %v3052
  %3115 = vmatprep.subr.bf16.mxu0 0
  %3116 = vmatpush2.bf16.msra.mxu0 0
  %3117 = vmatprep.subr.bf16.mxu0 0
  %3118 = vmatpush2.bf16.msra.mxu0 0
  %3119 = vmatprep.subr.bf16.mxu0 0
  %3120 = vmatpush2.bf16.msra.mxu0 0
  %3121 = vmatprep.subr.bf16.mxu0 0
  %3122 = vmatpush2.bf16.msra.mxu0 0
  %3123 = vmatprep.subr.bf16.mxu0 0
  %3124 = vmatpush2.bf16.msra.mxu0 0
  %3125 = vmatprep.subr.bf16.mxu0 0
  %3126 = vmatpush2.bf16.msra.mxu0 0
  %3127 = vmatprep.subr.bf16.mxu0 0
  %3128 = vmatpush2.bf16.msra.mxu0 0
  %3129 = vmatprep.subr.bf16.mxu0 0
  %3130 = vmatpush2.bf16.msra.mxu0 0
  %3131 = vmatprep.mubr.bf16.mxu0 0
  %3132 = vmatmul.mubr.bf16.gmra.mxu0 %v3097
  %v3133 = vpop.f32.mrf.mxu0
  %v3134 = vadd.f32 0.0, %v3133
  %v3135 = vpop.f32.mrf.mxu0
  %v3136 = vpop.f32.mrf.mxu0
  %v3137 = vpop.f32.mrf.mxu0
  %3138 = vdwg.mxu0
  %v3139 = vpack.c.bf16 %v3134, %v3091
  %s3140 = scalar_lea.vmem %s8, 20
  %v3141 = vld [vmem:[%s3140] sm:$0xf]
  %v3143 = vsel %vm315, %v3139, 0
  %v3146 = vsel %vm1003, %v3141, 0
  %3148 = vmatprep.subr.bf16.mxu0 0
  %3149 = vmatpush1.bf16.msra.mxu0 0
  %3150 = vmatprep.subr.bf16.mxu0 0
  %3151 = vmatpush1.bf16.msra.mxu0 0
  %3152 = vmatprep.subr.bf16.mxu0 0
  %3153 = vmatpush1.bf16.msra.mxu0 0
  %3154 = vmatprep.subr.bf16.mxu0 0
  %3155 = vmatpush1.bf16.msra.mxu0 0
  %3156 = vmatprep.subr.bf16.mxu0 0
  %3157 = vmatpush1.bf16.msra.mxu0 0
  %3158 = vmatprep.subr.bf16.mxu0 0
  %3159 = vmatpush1.bf16.msra.mxu0 0
  %3160 = vmatprep.subr.bf16.mxu0 0
  %3161 = vmatpush1.bf16.msra.mxu0 0
  %3162 = vmatprep.subr.bf16.mxu0 0
  %3163 = vmatpush1.bf16.msra.mxu0 %v3146
  %3164 = vmatprep.subr.bf16.mxu0 0
  %3165 = vmatpush2.bf16.msra.mxu0 0
  %3166 = vmatprep.subr.bf16.mxu0 0
  %3167 = vmatpush2.bf16.msra.mxu0 0
  %3168 = vmatprep.subr.bf16.mxu0 0
  %3169 = vmatpush2.bf16.msra.mxu0 0
  %3170 = vmatprep.subr.bf16.mxu0 0
  %3171 = vmatpush2.bf16.msra.mxu0 0
  %3172 = vmatprep.subr.bf16.mxu0 0
  %3173 = vmatpush2.bf16.msra.mxu0 0
  %3174 = vmatprep.subr.bf16.mxu0 0
  %3175 = vmatpush2.bf16.msra.mxu0 0
  %3176 = vmatprep.subr.bf16.mxu0 0
  %3177 = vmatpush2.bf16.msra.mxu0 0
  %3178 = vmatprep.subr.bf16.mxu0 0
  %3179 = vmatpush2.bf16.msra.mxu0 0
  %3180 = vmatprep.mubr.bf16.mxu0 0
  %3181 = vmatmul.mubr.bf16.gmra.mxu0 %v3143
  %v3182 = vpop.f32.mrf.mxu0
  %v3183 = vadd.f32 0.0, %v3182
  %v3184 = vpop.f32.mrf.mxu0
  %v3185 = vpop.f32.mrf.mxu0
  %v3186 = vadd.f32 0.0, %v3185
  %v3187 = vpop.f32.mrf.mxu0
  %3188 = vdwg.mxu0
  %v3189 = vadd.f32 %v2665, %v3183
  %v3190 = vadd.f32 %v2666, %v3186
  %s3191 = scalar_lea.vmem %s2, 192
  %v3192 = vld [vmem:[%s3191] sm:$0xf]
  %v3193 = vld [vmem:[%s3191 + $0x4] sm:$0xf]
  %v3194 = vld [vmem:[%s3191 + $0x8] sm:$0xf]
  %v3195 = vld [vmem:[%s3191 + $0xc] sm:$0xf]
  %v3196 = vld [vmem:[%s3191 + $0x10] sm:$0xf]
  %v3197 = vld [vmem:[%s3191 + $0x14] sm:$0xf]
  %v3198 = vld [vmem:[%s3191 + $0x18] sm:$0xf]
  %v3199 = vld [vmem:[%s3191 + $0x1c] sm:$0xf]
  %s3200 = scalar_lea.vmem %s3, 6
  %v3201 = vld [vmem:[%s3200] sm:$0x1]
  %v3203 = vlaneseq
  %v3204 = vshrl.u32 %v3203, 7
  %v3205 = vsub.s32 0, %v3204
  %v3206 = vrot.slane %v3201, %v3205
  %v3216 = vunpack.c.l.b16 %v3192
  %v3217 = vunpack.c.l.b16 %v3193
  %v3218 = vunpack.c.l.b16 %v3194
  %v3219 = vunpack.c.l.b16 %v3195
  %v3220 = vunpack.c.l.b16 %v3196
  %v3221 = vunpack.c.l.b16 %v3197
  %v3222 = vunpack.c.l.b16 %v3198
  %v3223 = vunpack.c.l.b16 %v3199
  %v3224 = vpack.c.b16 %v3217, %v3216
  %v3225 = vpack.c.b16 %v3219, %v3218
  %v3226 = vpack.c.b16 %v3221, %v3220
  %v3227 = vpack.c.b16 %v3223, %v3222
  %3232 = vmatprep.subr.bf16.mxu0 0
  %3233 = vmatpush1.bf16.msra.mxu0 0
  %3234 = vmatprep.subr.bf16.mxu0 0
  %3235 = vmatpush1.bf16.msra.mxu0 0
  %3236 = vmatprep.subr.bf16.mxu0 0
  %3237 = vmatpush1.bf16.msra.mxu0 0
  %3238 = vmatprep.subr.bf16.mxu0 0
  %3239 = vmatpush1.bf16.msra.mxu0 0
  %3240 = vmatprep.subr.bf16.mxu0 0
  %3241 = vmatpush1.bf16.msra.mxu0 %v3227
  %3242 = vmatprep.subr.bf16.mxu0 0
  %3243 = vmatpush1.bf16.msra.mxu0 %v3226
  %3244 = vmatprep.subr.bf16.mxu0 0
  %3245 = vmatpush1.bf16.msra.mxu0 %v3225
  %3246 = vmatprep.subr.bf16.mxu0 0
  %3247 = vmatpush1.bf16.msra.mxu0 %v3224
  %3248 = vmatprep.subr.bf16.mxu0 0
  %3249 = vmatpush2.bf16.msra.mxu0 0
  %3250 = vmatprep.subr.bf16.mxu0 0
  %3251 = vmatpush2.bf16.msra.mxu0 0
  %3252 = vmatprep.subr.bf16.mxu0 0
  %3253 = vmatpush2.bf16.msra.mxu0 0
  %3254 = vmatprep.subr.bf16.mxu0 0
  %3255 = vmatpush2.bf16.msra.mxu0 0
  %3256 = vmatprep.subr.bf16.mxu0 0
  %3257 = vmatpush2.bf16.msra.mxu0 0
  %3258 = vmatprep.subr.bf16.mxu0 0
  %3259 = vmatpush2.bf16.msra.mxu0 0
  %3260 = vmatprep.subr.bf16.mxu0 0
  %3261 = vmatpush2.bf16.msra.mxu0 0
  %3262 = vmatprep.subr.bf16.mxu0 0
  %3263 = vmatpush2.bf16.msra.mxu0 0
  %3264 = vmatprep.mubr.bf16.mxu0 0
  %3265 = vmatmul.mubr.bf16.gmra.mxu0 %v86
  %v3266 = vpop.f32.mrf.mxu0
  %v3267 = vadd.f32 %v3206, %v3266
  %v3268 = vpop.f32.mrf.mxu0
  %v3269 = vpop.f32.mrf.mxu0
  %v3270 = vadd.f32 %v3206, %v3269
  %v3271 = vpop.f32.mrf.mxu0
  %3272 = vdwg.mxu0
  %s3273 = scalar_lea.vmem %s4, 192
  %v3274 = vld [vmem:[%s3273] sm:$0xf]
  %v3275 = vld [vmem:[%s3273 + $0x4] sm:$0xf]
  %v3276 = vld [vmem:[%s3273 + $0x8] sm:$0xf]
  %v3277 = vld [vmem:[%s3273 + $0xc] sm:$0xf]
  %v3278 = vld [vmem:[%s3273 + $0x10] sm:$0xf]
  %v3279 = vld [vmem:[%s3273 + $0x14] sm:$0xf]
  %v3280 = vld [vmem:[%s3273 + $0x18] sm:$0xf]
  %v3281 = vld [vmem:[%s3273 + $0x1c] sm:$0xf]
  %s3282 = scalar_lea.vmem %s5, 6
  %v3283 = vld [vmem:[%s3282] sm:$0x1]
  %v3285 = vlaneseq
  %v3286 = vshrl.u32 %v3285, 7
  %v3287 = vsub.s32 0, %v3286
  %v3288 = vrot.slane %v3283, %v3287
  %v3298 = vunpack.c.l.b16 %v3274
  %v3299 = vunpack.c.l.b16 %v3275
  %v3300 = vunpack.c.l.b16 %v3276
  %v3301 = vunpack.c.l.b16 %v3277
  %v3302 = vunpack.c.l.b16 %v3278
  %v3303 = vunpack.c.l.b16 %v3279
  %v3304 = vunpack.c.l.b16 %v3280
  %v3305 = vunpack.c.l.b16 %v3281
  %v3306 = vpack.c.b16 %v3299, %v3298
  %v3307 = vpack.c.b16 %v3301, %v3300
  %v3308 = vpack.c.b16 %v3303, %v3302
  %v3309 = vpack.c.b16 %v3305, %v3304
  %3314 = vmatprep.subr.bf16.mxu0 0
  %3315 = vmatpush1.bf16.msra.mxu0 0
  %3316 = vmatprep.subr.bf16.mxu0 0
  %3317 = vmatpush1.bf16.msra.mxu0 0
  %3318 = vmatprep.subr.bf16.mxu0 0
  %3319 = vmatpush1.bf16.msra.mxu0 0
  %3320 = vmatprep.subr.bf16.mxu0 0
  %3321 = vmatpush1.bf16.msra.mxu0 0
  %3322 = vmatprep.subr.bf16.mxu0 0
  %3323 = vmatpush1.bf16.msra.mxu0 %v3309
  %3324 = vmatprep.subr.bf16.mxu0 0
  %3325 = vmatpush1.bf16.msra.mxu0 %v3308
  %3326 = vmatprep.subr.bf16.mxu0 0
  %3327 = vmatpush1.bf16.msra.mxu0 %v3307
  %3328 = vmatprep.subr.bf16.mxu0 0
  %3329 = vmatpush1.bf16.msra.mxu0 %v3306
  %3330 = vmatprep.subr.bf16.mxu0 0
  %3331 = vmatpush2.bf16.msra.mxu0 0
  %3332 = vmatprep.subr.bf16.mxu0 0
  %3333 = vmatpush2.bf16.msra.mxu0 0
  %3334 = vmatprep.subr.bf16.mxu0 0
  %3335 = vmatpush2.bf16.msra.mxu0 0
  %3336 = vmatprep.subr.bf16.mxu0 0
  %3337 = vmatpush2.bf16.msra.mxu0 0
  %3338 = vmatprep.subr.bf16.mxu0 0
  %3339 = vmatpush2.bf16.msra.mxu0 0
  %3340 = vmatprep.subr.bf16.mxu0 0
  %3341 = vmatpush2.bf16.msra.mxu0 0
  %3342 = vmatprep.subr.bf16.mxu0 0
  %3343 = vmatpush2.bf16.msra.mxu0 0
  %3344 = vmatprep.subr.bf16.mxu0 0
  %3345 = vmatpush2.bf16.msra.mxu0 0
  %3346 = vmatprep.mubr.bf16.mxu0 0
  %3347 = vmatmul.mubr.bf16.gmra.mxu0 %v169
  %v3348 = vpop.f32.mrf.mxu0
  %v3349 = vadd.f32 %v3288, %v3348
  %v3350 = vpop.f32.mrf.mxu0
  %v3351 = vpop.f32.mrf.mxu0
  %v3352 = vadd.f32 %v3288, %v3351
  %v3353 = vpop.f32.mrf.mxu0
  %3354 = vmatprep.mubr.bf16.mxu0 0
  %3355 = vmatmul.mubr.bf16.gmra.mxu0 %v172
  %v3356 = vpop.f32.mrf.mxu0
  %v3357 = vadd.f32 %v3288, %v3356
  %v3358 = vpop.f32.mrf.mxu0
  %v3359 = vpop.f32.mrf.mxu0
  %v3360 = vadd.f32 %v3288, %v3359
  %v3361 = vpop.f32.mrf.mxu0
  %3362 = vdwg.mxu0
  %s3363 = scalar_lea.vmem %s6, 192
  %v3364 = vld [vmem:[%s3363] sm:$0xf]
  %v3365 = vld [vmem:[%s3363 + $0x4] sm:$0xf]
  %v3366 = vld [vmem:[%s3363 + $0x8] sm:$0xf]
  %v3367 = vld [vmem:[%s3363 + $0xc] sm:$0xf]
  %v3368 = vld [vmem:[%s3363 + $0x10] sm:$0xf]
  %v3369 = vld [vmem:[%s3363 + $0x14] sm:$0xf]
  %v3370 = vld [vmem:[%s3363 + $0x18] sm:$0xf]
  %v3371 = vld [vmem:[%s3363 + $0x1c] sm:$0xf]
  %s3372 = scalar_lea.vmem %s7, 6
  %v3373 = vld [vmem:[%s3372] sm:$0x1]
  %v3375 = vlaneseq
  %v3376 = vshrl.u32 %v3375, 7
  %v3377 = vsub.s32 0, %v3376
  %v3378 = vrot.slane %v3373, %v3377
  %v3388 = vunpack.c.l.b16 %v3364
  %v3389 = vunpack.c.l.b16 %v3365
  %v3390 = vunpack.c.l.b16 %v3366
  %v3391 = vunpack.c.l.b16 %v3367
  %v3392 = vunpack.c.l.b16 %v3368
  %v3393 = vunpack.c.l.b16 %v3369
  %v3394 = vunpack.c.l.b16 %v3370
  %v3395 = vunpack.c.l.b16 %v3371
  %v3396 = vpack.c.b16 %v3389, %v3388
  %v3397 = vpack.c.b16 %v3391, %v3390
  %v3398 = vpack.c.b16 %v3393, %v3392
  %v3399 = vpack.c.b16 %v3395, %v3394
  %3404 = vmatprep.subr.bf16.mxu0 0
  %3405 = vmatpush1.bf16.msra.mxu0 0
  %3406 = vmatprep.subr.bf16.mxu0 0
  %3407 = vmatpush1.bf16.msra.mxu0 0
  %3408 = vmatprep.subr.bf16.mxu0 0
  %3409 = vmatpush1.bf16.msra.mxu0 0
  %3410 = vmatprep.subr.bf16.mxu0 0
  %3411 = vmatpush1.bf16.msra.mxu0 0
  %3412 = vmatprep.subr.bf16.mxu0 0
  %3413 = vmatpush1.bf16.msra.mxu0 %v3399
  %3414 = vmatprep.subr.bf16.mxu0 0
  %3415 = vmatpush1.bf16.msra.mxu0 %v3398
  %3416 = vmatprep.subr.bf16.mxu0 0
  %3417 = vmatpush1.bf16.msra.mxu0 %v3397
  %3418 = vmatprep.subr.bf16.mxu0 0
  %3419 = vmatpush1.bf16.msra.mxu0 %v3396
  %3420 = vmatprep.subr.bf16.mxu0 0
  %3421 = vmatpush2.bf16.msra.mxu0 0
  %3422 = vmatprep.subr.bf16.mxu0 0
  %3423 = vmatpush2.bf16.msra.mxu0 0
  %3424 = vmatprep.subr.bf16.mxu0 0
  %3425 = vmatpush2.bf16.msra.mxu0 0
  %3426 = vmatprep.subr.bf16.mxu0 0
  %3427 = vmatpush2.bf16.msra.mxu0 0
  %3428 = vmatprep.subr.bf16.mxu0 0
  %3429 = vmatpush2.bf16.msra.mxu0 0
  %3430 = vmatprep.subr.bf16.mxu0 0
  %3431 = vmatpush2.bf16.msra.mxu0 0
  %3432 = vmatprep.subr.bf16.mxu0 0
  %3433 = vmatpush2.bf16.msra.mxu0 0
  %3434 = vmatprep.subr.bf16.mxu0 0
  %3435 = vmatpush2.bf16.msra.mxu0 0
  %3436 = vmatprep.mubr.bf16.mxu0 0
  %3437 = vmatmul.mubr.bf16.gmra.mxu0 %v169
  %v3438 = vpop.f32.mrf.mxu0
  %v3439 = vadd.f32 %v3378, %v3438
  %v3440 = vpop.f32.mrf.mxu0
  %v3441 = vpop.f32.mrf.mxu0
  %v3442 = vadd.f32 %v3378, %v3441
  %v3443 = vpop.f32.mrf.mxu0
  %3444 = vmatprep.mubr.bf16.mxu0 0
  %3445 = vmatmul.mubr.bf16.gmra.mxu0 %v172
  %v3446 = vpop.f32.mrf.mxu0
  %v3447 = vadd.f32 %v3378, %v3446
  %v3448 = vpop.f32.mrf.mxu0
  %v3449 = vpop.f32.mrf.mxu0
  %v3450 = vadd.f32 %v3378, %v3449
  %v3451 = vpop.f32.mrf.mxu0
  %3452 = vdwg.mxu0
  %v3453 = vpack.c.bf16 %v3267, %v3267
  %v3454 = vpack.c.bf16 %v3270, %v3270
  %v3455 = vpack.c.bf16 %v3352, %v3349
  %v3456 = vpack.c.bf16 %v3360, %v3357
  %v3458 = vsel %vm315, %v3453, 0
  %v3461 = vsel %vm315, %v3455, 0
  %3463 = vmatprep.subr.bf16.mxu0 0
  %3464 = vmatpush1.bf16.xpose.msra.mxu0 0
  %3465 = vmatprep.subr.bf16.mxu0 0
  %3466 = vmatpush1.bf16.xpose.msra.mxu0 0
  %3467 = vmatprep.subr.bf16.mxu0 0
  %3468 = vmatpush1.bf16.xpose.msra.mxu0 0
  %3469 = vmatprep.subr.bf16.mxu0 0
  %3470 = vmatpush1.bf16.xpose.msra.mxu0 0
  %3471 = vmatprep.subr.bf16.mxu0 0
  %3472 = vmatpush1.bf16.xpose.msra.mxu0 0
  %3473 = vmatprep.subr.bf16.mxu0 0
  %3474 = vmatpush1.bf16.xpose.msra.mxu0 0
  %3475 = vmatprep.subr.bf16.mxu0 0
  %3476 = vmatpush1.bf16.xpose.msra.mxu0 0
  %3477 = vmatprep.subr.bf16.mxu0 0
  %3478 = vmatpush1.bf16.xpose.msra.mxu0 %v3461
  %3479 = vmatprep.subr.bf16.mxu0 0
  %3480 = vmatpush2.bf16.xpose.msra.mxu0 0
  %3481 = vmatprep.subr.bf16.mxu0 0
  %3482 = vmatpush2.bf16.xpose.msra.mxu0 0
  %3483 = vmatprep.subr.bf16.mxu0 0
  %3484 = vmatpush2.bf16.xpose.msra.mxu0 0
  %3485 = vmatprep.subr.bf16.mxu0 0
  %3486 = vmatpush2.bf16.xpose.msra.mxu0 0
  %3487 = vmatprep.subr.bf16.mxu0 0
  %3488 = vmatpush2.bf16.xpose.msra.mxu0 0
  %3489 = vmatprep.subr.bf16.mxu0 0
  %3490 = vmatpush2.bf16.xpose.msra.mxu0 0
  %3491 = vmatprep.subr.bf16.mxu0 0
  %3492 = vmatpush2.bf16.xpose.msra.mxu0 0
  %3493 = vmatprep.subr.bf16.mxu0 0
  %3494 = vmatpush2.bf16.xpose.msra.mxu0 0
  %3495 = vmatprep.mubr.bf16.mxu0 0
  %3496 = vmatmul.mubr.bf16.gmra.mxu0 %v3458
  %v3497 = vpop.f32.mrf.mxu0
  %v3498 = vadd.f32 0.0, %v3497
  %v3499 = vpop.f32.mrf.mxu0
  %v3500 = vpop.f32.mrf.mxu0
  %v3501 = vpop.f32.mrf.mxu0
  %3502 = vdwg.mxu0
  %v3504 = vsel %vm315, %v3454, 0
  %v3507 = vsel %vm315, %v3456, 0
  %3509 = vmatprep.subr.bf16.mxu0 0
  %3510 = vmatpush1.bf16.xpose.msra.mxu0 0
  %3511 = vmatprep.subr.bf16.mxu0 0
  %3512 = vmatpush1.bf16.xpose.msra.mxu0 0
  %3513 = vmatprep.subr.bf16.mxu0 0
  %3514 = vmatpush1.bf16.xpose.msra.mxu0 0
  %3515 = vmatprep.subr.bf16.mxu0 0
  %3516 = vmatpush1.bf16.xpose.msra.mxu0 0
  %3517 = vmatprep.subr.bf16.mxu0 0
  %3518 = vmatpush1.bf16.xpose.msra.mxu0 0
  %3519 = vmatprep.subr.bf16.mxu0 0
  %3520 = vmatpush1.bf16.xpose.msra.mxu0 0
  %3521 = vmatprep.subr.bf16.mxu0 0
  %3522 = vmatpush1.bf16.xpose.msra.mxu0 0
  %3523 = vmatprep.subr.bf16.mxu0 0
  %3524 = vmatpush1.bf16.xpose.msra.mxu0 %v3507
  %3525 = vmatprep.subr.bf16.mxu0 0
  %3526 = vmatpush2.bf16.xpose.msra.mxu0 0
  %3527 = vmatprep.subr.bf16.mxu0 0
  %3528 = vmatpush2.bf16.xpose.msra.mxu0 0
  %3529 = vmatprep.subr.bf16.mxu0 0
  %3530 = vmatpush2.bf16.xpose.msra.mxu0 0
  %3531 = vmatprep.subr.bf16.mxu0 0
  %3532 = vmatpush2.bf16.xpose.msra.mxu0 0
  %3533 = vmatprep.subr.bf16.mxu0 0
  %3534 = vmatpush2.bf16.xpose.msra.mxu0 0
  %3535 = vmatprep.subr.bf16.mxu0 0
  %3536 = vmatpush2.bf16.xpose.msra.mxu0 0
  %3537 = vmatprep.subr.bf16.mxu0 0
  %3538 = vmatpush2.bf16.xpose.msra.mxu0 0
  %3539 = vmatprep.subr.bf16.mxu0 0
  %3540 = vmatpush2.bf16.xpose.msra.mxu0 0
  %3541 = vmatprep.mubr.bf16.mxu0 0
  %3542 = vmatmul.mubr.bf16.gmra.mxu0 %v3504
  %v3543 = vpop.f32.mrf.mxu0
  %v3544 = vadd.f32 0.0, %v3543
  %v3545 = vpop.f32.mrf.mxu0
  %v3546 = vpop.f32.mrf.mxu0
  %v3547 = vpop.f32.mrf.mxu0
  %3548 = vdwg.mxu0
  %v3549 = vmul.f32 %v3498, 0.35355338
  %v3550 = vmul.f32 %v3544, 0.35355338
  %v3551 = vsel %vm410, %v3549, -inf
  %3552 = vmax.xlane.f32.xlu0 %v3551
  %v3553 = vpop.xlane.xlu0 %3552
  %v3554 = vsel %vm410, %v3550, -inf
  %3555 = vmax.xlane.f32.xlu0 %v3554
  %v3556 = vpop.xlane.xlu0 %3555
  %v3557 = vsub.f32 %v3549, %v3553
  %v3558 = vsub.f32 %v3550, %v3556
  %v3559 = vmul.f32 %v3557, 1.442695
  %v3560 = vpow.pop %v3559
  %v3561 = vmul.f32 %v3558, 1.442695
  %v3562 = vpow.pop %v3561
  %v3563 = vsel %vm410, %v3560, 0.0
  %3564 = vadd.xlane.f32.xlu0 %v3563
  %v3565 = vpop.xlane.xlu0 %3564
  %v3566 = vsel %vm410, %v3562, 0.0
  %3567 = vadd.xlane.f32.xlu0 %v3566
  %v3568 = vpop.xlane.xlu0 %3567
  %v3569 = vrcp.pop %v3565
  %v3570 = vrcp.pop %v3568
  %v3571 = vmul.f32 %v3560, %v3569
  %v3572 = vmul.f32 %v3562, %v3570
  %v3573 = vpack.c.bf16 %v3571, %v3571
  %v3574 = vpack.c.bf16 %v3572, %v3572
  %v3575 = vpack.c.bf16 %v3442, %v3439
  %v3576 = vpack.c.bf16 %v3450, %v3447
  %v3578 = vsel %vm410, %v3573, 0
  %3580 = vmatprep.subr.bf16.mxu0 0
  %3581 = vmatpush1.bf16.msra.mxu0 0
  %3582 = vmatprep.subr.bf16.mxu0 0
  %3583 = vmatpush1.bf16.msra.mxu0 0
  %3584 = vmatprep.subr.bf16.mxu0 0
  %3585 = vmatpush1.bf16.msra.mxu0 0
  %3586 = vmatprep.subr.bf16.mxu0 0
  %3587 = vmatpush1.bf16.msra.mxu0 0
  %3588 = vmatprep.subr.bf16.mxu0 0
  %3589 = vmatpush1.bf16.msra.mxu0 0
  %3590 = vmatprep.subr.bf16.mxu0 0
  %3591 = vmatpush1.bf16.msra.mxu0 0
  %3592 = vmatprep.subr.bf16.mxu0 0
  %3593 = vmatpush1.bf16.msra.mxu0 0
  %3594 = vmatprep.subr.bf16.mxu0 0
  %3595 = vmatpush1.bf16.msra.mxu0 %v3575
  %3596 = vmatprep.subr.bf16.mxu0 0
  %3597 = vmatpush2.bf16.msra.mxu0 0
  %3598 = vmatprep.subr.bf16.mxu0 0
  %3599 = vmatpush2.bf16.msra.mxu0 0
  %3600 = vmatprep.subr.bf16.mxu0 0
  %3601 = vmatpush2.bf16.msra.mxu0 0
  %3602 = vmatprep.subr.bf16.mxu0 0
  %3603 = vmatpush2.bf16.msra.mxu0 0
  %3604 = vmatprep.subr.bf16.mxu0 0
  %3605 = vmatpush2.bf16.msra.mxu0 0
  %3606 = vmatprep.subr.bf16.mxu0 0
  %3607 = vmatpush2.bf16.msra.mxu0 0
  %3608 = vmatprep.subr.bf16.mxu0 0
  %3609 = vmatpush2.bf16.msra.mxu0 0
  %3610 = vmatprep.subr.bf16.mxu0 0
  %3611 = vmatpush2.bf16.msra.mxu0 0
  %3612 = vmatprep.mubr.bf16.mxu0 0
  %3613 = vmatmul.mubr.bf16.gmra.mxu0 %v3578
  %v3614 = vpop.f32.mrf.mxu0
  %v3615 = vadd.f32 0.0, %v3614
  %v3616 = vpop.f32.mrf.mxu0
  %v3617 = vpop.f32.mrf.mxu0
  %v3618 = vpop.f32.mrf.mxu0
  %3619 = vdwg.mxu0
  %v3621 = vsel %vm410, %v3574, 0
  %3623 = vmatprep.subr.bf16.mxu0 0
  %3624 = vmatpush1.bf16.msra.mxu0 0
  %3625 = vmatprep.subr.bf16.mxu0 0
  %3626 = vmatpush1.bf16.msra.mxu0 0
  %3627 = vmatprep.subr.bf16.mxu0 0
  %3628 = vmatpush1.bf16.msra.mxu0 0
  %3629 = vmatprep.subr.bf16.mxu0 0
  %3630 = vmatpush1.bf16.msra.mxu0 0
  %3631 = vmatprep.subr.bf16.mxu0 0
  %3632 = vmatpush1.bf16.msra.mxu0 0
  %3633 = vmatprep.subr.bf16.mxu0 0
  %3634 = vmatpush1.bf16.msra.mxu0 0
  %3635 = vmatprep.subr.bf16.mxu0 0
  %3636 = vmatpush1.bf16.msra.mxu0 0
  %3637 = vmatprep.subr.bf16.mxu0 0
  %3638 = vmatpush1.bf16.msra.mxu0 %v3576
  %3639 = vmatprep.subr.bf16.mxu0 0
  %3640 = vmatpush2.bf16.msra.mxu0 0
  %3641 = vmatprep.subr.bf16.mxu0 0
  %3642 = vmatpush2.bf16.msra.mxu0 0
  %3643 = vmatprep.subr.bf16.mxu0 0
  %3644 = vmatpush2.bf16.msra.mxu0 0
  %3645 = vmatprep.subr.bf16.mxu0 0
  %3646 = vmatpush2.bf16.msra.mxu0 0
  %3647 = vmatprep.subr.bf16.mxu0 0
  %3648 = vmatpush2.bf16.msra.mxu0 0
  %3649 = vmatprep.subr.bf16.mxu0 0
  %3650 = vmatpush2.bf16.msra.mxu0 0
  %3651 = vmatprep.subr.bf16.mxu0 0
  %3652 = vmatpush2.bf16.msra.mxu0 0
  %3653 = vmatprep.subr.bf16.mxu0 0
  %3654 = vmatpush2.bf16.msra.mxu0 0
  %3655 = vmatprep.mubr.bf16.mxu0 0
  %3656 = vmatmul.mubr.bf16.gmra.mxu0 %v3621
  %v3657 = vpop.f32.mrf.mxu0
  %v3658 = vadd.f32 0.0, %v3657
  %v3659 = vpop.f32.mrf.mxu0
  %v3660 = vpop.f32.mrf.mxu0
  %v3661 = vpop.f32.mrf.mxu0
  %3662 = vdwg.mxu0
  %v3663 = vpack.c.bf16 %v3658, %v3615
  %s3664 = scalar_lea.vmem %s8, 24
  %v3665 = vld [vmem:[%s3664] sm:$0xf]
  %v3667 = vsel %vm315, %v3663, 0
  %v3670 = vsel %vm1003, %v3665, 0
  %3672 = vmatprep.subr.bf16.mxu0 0
  %3673 = vmatpush1.bf16.msra.mxu0 0
  %3674 = vmatprep.subr.bf16.mxu0 0
  %3675 = vmatpush1.bf16.msra.mxu0 0
  %3676 = vmatprep.subr.bf16.mxu0 0
  %3677 = vmatpush1.bf16.msra.mxu0 0
  %3678 = vmatprep.subr.bf16.mxu0 0
  %3679 = vmatpush1.bf16.msra.mxu0 0
  %3680 = vmatprep.subr.bf16.mxu0 0
  %3681 = vmatpush1.bf16.msra.mxu0 0
  %3682 = vmatprep.subr.bf16.mxu0 0
  %3683 = vmatpush1.bf16.msra.mxu0 0
  %3684 = vmatprep.subr.bf16.mxu0 0
  %3685 = vmatpush1.bf16.msra.mxu0 0
  %3686 = vmatprep.subr.bf16.mxu0 0
  %3687 = vmatpush1.bf16.msra.mxu0 %v3670
  %3688 = vmatprep.subr.bf16.mxu0 0
  %3689 = vmatpush2.bf16.msra.mxu0 0
  %3690 = vmatprep.subr.bf16.mxu0 0
  %3691 = vmatpush2.bf16.msra.mxu0 0
  %3692 = vmatprep.subr.bf16.mxu0 0
  %3693 = vmatpush2.bf16.msra.mxu0 0
  %3694 = vmatprep.subr.bf16.mxu0 0
  %3695 = vmatpush2.bf16.msra.mxu0 0
  %3696 = vmatprep.subr.bf16.mxu0 0
  %3697 = vmatpush2.bf16.msra.mxu0 0
  %3698 = vmatprep.subr.bf16.mxu0 0
  %3699 = vmatpush2.bf16.msra.mxu0 0
  %3700 = vmatprep.subr.bf16.mxu0 0
  %3701 = vmatpush2.bf16.msra.mxu0 0
  %3702 = vmatprep.subr.bf16.mxu0 0
  %3703 = vmatpush2.bf16.msra.mxu0 0
  %3704 = vmatprep.mubr.bf16.mxu0 0
  %3705 = vmatmul.mubr.bf16.gmra.mxu0 %v3667
  %v3706 = vpop.f32.mrf.mxu0
  %v3707 = vadd.f32 0.0, %v3706
  %v3708 = vpop.f32.mrf.mxu0
  %v3709 = vpop.f32.mrf.mxu0
  %v3710 = vadd.f32 0.0, %v3709
  %v3711 = vpop.f32.mrf.mxu0
  %3712 = vdwg.mxu0
  %v3713 = vadd.f32 %v3189, %v3707
  %v3714 = vadd.f32 %v3190, %v3710
  %s3715 = scalar_lea.vmem %s2, 224
  %v3716 = vld [vmem:[%s3715] sm:$0xf]
  %v3717 = vld [vmem:[%s3715 + $0x4] sm:$0xf]
  %v3718 = vld [vmem:[%s3715 + $0x8] sm:$0xf]
  %v3719 = vld [vmem:[%s3715 + $0xc] sm:$0xf]
  %v3720 = vld [vmem:[%s3715 + $0x10] sm:$0xf]
  %v3721 = vld [vmem:[%s3715 + $0x14] sm:$0xf]
  %v3722 = vld [vmem:[%s3715 + $0x18] sm:$0xf]
  %v3723 = vld [vmem:[%s3715 + $0x1c] sm:$0xf]
  %s3724 = scalar_lea.vmem %s3, 7
  %v3725 = vld [vmem:[%s3724] sm:$0x1]
  %v3727 = vlaneseq
  %v3728 = vshrl.u32 %v3727, 7
  %v3729 = vsub.s32 0, %v3728
  %v3730 = vrot.slane %v3725, %v3729
  %v3740 = vunpack.c.l.b16 %v3716
  %v3741 = vunpack.c.l.b16 %v3717
  %v3742 = vunpack.c.l.b16 %v3718
  %v3743 = vunpack.c.l.b16 %v3719
  %v3744 = vunpack.c.l.b16 %v3720
  %v3745 = vunpack.c.l.b16 %v3721
  %v3746 = vunpack.c.l.b16 %v3722
  %v3747 = vunpack.c.l.b16 %v3723
  %v3748 = vpack.c.b16 %v3741, %v3740
  %v3749 = vpack.c.b16 %v3743, %v3742
  %v3750 = vpack.c.b16 %v3745, %v3744
  %v3751 = vpack.c.b16 %v3747, %v3746
  %3756 = vmatprep.subr.bf16.mxu0 0
  %3757 = vmatpush1.bf16.msra.mxu0 0
  %3758 = vmatprep.subr.bf16.mxu0 0
  %3759 = vmatpush1.bf16.msra.mxu0 0
  %3760 = vmatprep.subr.bf16.mxu0 0
  %3761 = vmatpush1.bf16.msra.mxu0 0
  %3762 = vmatprep.subr.bf16.mxu0 0
  %3763 = vmatpush1.bf16.msra.mxu0 0
  %3764 = vmatprep.subr.bf16.mxu0 0
  %3765 = vmatpush1.bf16.msra.mxu0 %v3751
  %3766 = vmatprep.subr.bf16.mxu0 0
  %3767 = vmatpush1.bf16.msra.mxu0 %v3750
  %3768 = vmatprep.subr.bf16.mxu0 0
  %3769 = vmatpush1.bf16.msra.mxu0 %v3749
  %3770 = vmatprep.subr.bf16.mxu0 0
  %3771 = vmatpush1.bf16.msra.mxu0 %v3748
  %3772 = vmatprep.subr.bf16.mxu0 0
  %3773 = vmatpush2.bf16.msra.mxu0 0
  %3774 = vmatprep.subr.bf16.mxu0 0
  %3775 = vmatpush2.bf16.msra.mxu0 0
  %3776 = vmatprep.subr.bf16.mxu0 0
  %3777 = vmatpush2.bf16.msra.mxu0 0
  %3778 = vmatprep.subr.bf16.mxu0 0
  %3779 = vmatpush2.bf16.msra.mxu0 0
  %3780 = vmatprep.subr.bf16.mxu0 0
  %3781 = vmatpush2.bf16.msra.mxu0 0
  %3782 = vmatprep.subr.bf16.mxu0 0
  %3783 = vmatpush2.bf16.msra.mxu0 0
  %3784 = vmatprep.subr.bf16.mxu0 0
  %3785 = vmatpush2.bf16.msra.mxu0 0
  %3786 = vmatprep.subr.bf16.mxu0 0
  %3787 = vmatpush2.bf16.msra.mxu0 0
  %3788 = vmatprep.mubr.bf16.mxu0 0
  %3789 = vmatmul.mubr.bf16.gmra.mxu0 %v86
  %v3790 = vpop.f32.mrf.mxu0
  %v3791 = vadd.f32 %v3730, %v3790
  %v3792 = vpop.f32.mrf.mxu0
  %v3793 = vpop.f32.mrf.mxu0
  %v3794 = vadd.f32 %v3730, %v3793
  %v3795 = vpop.f32.mrf.mxu0
  %3796 = vdwg.mxu0
  %s3797 = scalar_lea.vmem %s4, 224
  %v3798 = vld [vmem:[%s3797] sm:$0xf]
  %v3799 = vld [vmem:[%s3797 + $0x4] sm:$0xf]
  %v3800 = vld [vmem:[%s3797 + $0x8] sm:$0xf]
  %v3801 = vld [vmem:[%s3797 + $0xc] sm:$0xf]
  %v3802 = vld [vmem:[%s3797 + $0x10] sm:$0xf]
  %v3803 = vld [vmem:[%s3797 + $0x14] sm:$0xf]
  %v3804 = vld [vmem:[%s3797 + $0x18] sm:$0xf]
  %v3805 = vld [vmem:[%s3797 + $0x1c] sm:$0xf]
  %s3806 = scalar_lea.vmem %s5, 7
  %v3807 = vld [vmem:[%s3806] sm:$0x1]
  %v3809 = vlaneseq
  %v3810 = vshrl.u32 %v3809, 7
  %v3811 = vsub.s32 0, %v3810
  %v3812 = vrot.slane %v3807, %v3811
  %v3822 = vunpack.c.l.b16 %v3798
  %v3823 = vunpack.c.l.b16 %v3799
  %v3824 = vunpack.c.l.b16 %v3800
  %v3825 = vunpack.c.l.b16 %v3801
  %v3826 = vunpack.c.l.b16 %v3802
  %v3827 = vunpack.c.l.b16 %v3803
  %v3828 = vunpack.c.l.b16 %v3804
  %v3829 = vunpack.c.l.b16 %v3805
  %v3830 = vpack.c.b16 %v3823, %v3822
  %v3831 = vpack.c.b16 %v3825, %v3824
  %v3832 = vpack.c.b16 %v3827, %v3826
  %v3833 = vpack.c.b16 %v3829, %v3828
  %3838 = vmatprep.subr.bf16.mxu0 0
  %3839 = vmatpush1.bf16.msra.mxu0 0
  %3840 = vmatprep.subr.bf16.mxu0 0
  %3841 = vmatpush1.bf16.msra.mxu0 0
  %3842 = vmatprep.subr.bf16.mxu0 0
  %3843 = vmatpush1.bf16.msra.mxu0 0
  %3844 = vmatprep.subr.bf16.mxu0 0
  %3845 = vmatpush1.bf16.msra.mxu0 0
  %3846 = vmatprep.subr.bf16.mxu0 0
  %3847 = vmatpush1.bf16.msra.mxu0 %v3833
  %3848 = vmatprep.subr.bf16.mxu0 0
  %3849 = vmatpush1.bf16.msra.mxu0 %v3832
  %3850 = vmatprep.subr.bf16.mxu0 0
  %3851 = vmatpush1.bf16.msra.mxu0 %v3831
  %3852 = vmatprep.subr.bf16.mxu0 0
  %3853 = vmatpush1.bf16.msra.mxu0 %v3830
  %3854 = vmatprep.subr.bf16.mxu0 0
  %3855 = vmatpush2.bf16.msra.mxu0 0
  %3856 = vmatprep.subr.bf16.mxu0 0
  %3857 = vmatpush2.bf16.msra.mxu0 0
  %3858 = vmatprep.subr.bf16.mxu0 0
  %3859 = vmatpush2.bf16.msra.mxu0 0
  %3860 = vmatprep.subr.bf16.mxu0 0
  %3861 = vmatpush2.bf16.msra.mxu0 0
  %3862 = vmatprep.subr.bf16.mxu0 0
  %3863 = vmatpush2.bf16.msra.mxu0 0
  %3864 = vmatprep.subr.bf16.mxu0 0
  %3865 = vmatpush2.bf16.msra.mxu0 0
  %3866 = vmatprep.subr.bf16.mxu0 0
  %3867 = vmatpush2.bf16.msra.mxu0 0
  %3868 = vmatprep.subr.bf16.mxu0 0
  %3869 = vmatpush2.bf16.msra.mxu0 0
  %3870 = vmatprep.mubr.bf16.mxu0 0
  %3871 = vmatmul.mubr.bf16.gmra.mxu0 %v169
  %v3872 = vpop.f32.mrf.mxu0
  %v3873 = vadd.f32 %v3812, %v3872
  %v3874 = vpop.f32.mrf.mxu0
  %v3875 = vpop.f32.mrf.mxu0
  %v3876 = vadd.f32 %v3812, %v3875
  %v3877 = vpop.f32.mrf.mxu0
  %3878 = vmatprep.mubr.bf16.mxu0 0
  %3879 = vmatmul.mubr.bf16.gmra.mxu0 %v172
  %v3880 = vpop.f32.mrf.mxu0
  %v3881 = vadd.f32 %v3812, %v3880
  %v3882 = vpop.f32.mrf.mxu0
  %v3883 = vpop.f32.mrf.mxu0
  %v3884 = vadd.f32 %v3812, %v3883
  %v3885 = vpop.f32.mrf.mxu0
  %3886 = vdwg.mxu0
  %s3887 = scalar_lea.vmem %s6, 224
  %v3888 = vld [vmem:[%s3887] sm:$0xf]
  %v3889 = vld [vmem:[%s3887 + $0x4] sm:$0xf]
  %v3890 = vld [vmem:[%s3887 + $0x8] sm:$0xf]
  %v3891 = vld [vmem:[%s3887 + $0xc] sm:$0xf]
  %v3892 = vld [vmem:[%s3887 + $0x10] sm:$0xf]
  %v3893 = vld [vmem:[%s3887 + $0x14] sm:$0xf]
  %v3894 = vld [vmem:[%s3887 + $0x18] sm:$0xf]
  %v3895 = vld [vmem:[%s3887 + $0x1c] sm:$0xf]
  %s3896 = scalar_lea.vmem %s7, 7
  %v3897 = vld [vmem:[%s3896] sm:$0x1]
  %v3899 = vlaneseq
  %v3900 = vshrl.u32 %v3899, 7
  %v3901 = vsub.s32 0, %v3900
  %v3902 = vrot.slane %v3897, %v3901
  %v3912 = vunpack.c.l.b16 %v3888
  %v3913 = vunpack.c.l.b16 %v3889
  %v3914 = vunpack.c.l.b16 %v3890
  %v3915 = vunpack.c.l.b16 %v3891
  %v3916 = vunpack.c.l.b16 %v3892
  %v3917 = vunpack.c.l.b16 %v3893
  %v3918 = vunpack.c.l.b16 %v3894
  %v3919 = vunpack.c.l.b16 %v3895
  %v3920 = vpack.c.b16 %v3913, %v3912
  %v3921 = vpack.c.b16 %v3915, %v3914
  %v3922 = vpack.c.b16 %v3917, %v3916
  %v3923 = vpack.c.b16 %v3919, %v3918
  %3928 = vmatprep.subr.bf16.mxu0 0
  %3929 = vmatpush1.bf16.msra.mxu0 0
  %3930 = vmatprep.subr.bf16.mxu0 0
  %3931 = vmatpush1.bf16.msra.mxu0 0
  %3932 = vmatprep.subr.bf16.mxu0 0
  %3933 = vmatpush1.bf16.msra.mxu0 0
  %3934 = vmatprep.subr.bf16.mxu0 0
  %3935 = vmatpush1.bf16.msra.mxu0 0
  %3936 = vmatprep.subr.bf16.mxu0 0
  %3937 = vmatpush1.bf16.msra.mxu0 %v3923
  %3938 = vmatprep.subr.bf16.mxu0 0
  %3939 = vmatpush1.bf16.msra.mxu0 %v3922
  %3940 = vmatprep.subr.bf16.mxu0 0
  %3941 = vmatpush1.bf16.msra.mxu0 %v3921
  %3942 = vmatprep.subr.bf16.mxu0 0
  %3943 = vmatpush1.bf16.msra.mxu0 %v3920
  %3944 = vmatprep.subr.bf16.mxu0 0
  %3945 = vmatpush2.bf16.msra.mxu0 0
  %3946 = vmatprep.subr.bf16.mxu0 0
  %3947 = vmatpush2.bf16.msra.mxu0 0
  %3948 = vmatprep.subr.bf16.mxu0 0
  %3949 = vmatpush2.bf16.msra.mxu0 0
  %3950 = vmatprep.subr.bf16.mxu0 0
  %3951 = vmatpush2.bf16.msra.mxu0 0
  %3952 = vmatprep.subr.bf16.mxu0 0
  %3953 = vmatpush2.bf16.msra.mxu0 0
  %3954 = vmatprep.subr.bf16.mxu0 0
  %3955 = vmatpush2.bf16.msra.mxu0 0
  %3956 = vmatprep.subr.bf16.mxu0 0
  %3957 = vmatpush2.bf16.msra.mxu0 0
  %3958 = vmatprep.subr.bf16.mxu0 0
  %3959 = vmatpush2.bf16.msra.mxu0 0
  %3960 = vmatprep.mubr.bf16.mxu0 0
  %3961 = vmatmul.mubr.bf16.gmra.mxu0 %v169
  %v3962 = vpop.f32.mrf.mxu0
  %v3963 = vadd.f32 %v3902, %v3962
  %v3964 = vpop.f32.mrf.mxu0
  %v3965 = vpop.f32.mrf.mxu0
  %v3966 = vadd.f32 %v3902, %v3965
  %v3967 = vpop.f32.mrf.mxu0
  %3968 = vmatprep.mubr.bf16.mxu0 0
  %3969 = vmatmul.mubr.bf16.gmra.mxu0 %v172
  %v3970 = vpop.f32.mrf.mxu0
  %v3971 = vadd.f32 %v3902, %v3970
  %v3972 = vpop.f32.mrf.mxu0
  %v3973 = vpop.f32.mrf.mxu0
  %v3974 = vadd.f32 %v3902, %v3973
  %v3975 = vpop.f32.mrf.mxu0
  %3976 = vdwg.mxu0
  %v3977 = vpack.c.bf16 %v3791, %v3791
  %v3978 = vpack.c.bf16 %v3794, %v3794
  %v3979 = vpack.c.bf16 %v3876, %v3873
  %v3980 = vpack.c.bf16 %v3884, %v3881
  %v3982 = vsel %vm315, %v3977, 0
  %v3985 = vsel %vm315, %v3979, 0
  %3987 = vmatprep.subr.bf16.mxu0 0
  %3988 = vmatpush1.bf16.xpose.msra.mxu0 0
  %3989 = vmatprep.subr.bf16.mxu0 0
  %3990 = vmatpush1.bf16.xpose.msra.mxu0 0
  %3991 = vmatprep.subr.bf16.mxu0 0
  %3992 = vmatpush1.bf16.xpose.msra.mxu0 0
  %3993 = vmatprep.subr.bf16.mxu0 0
  %3994 = vmatpush1.bf16.xpose.msra.mxu0 0
  %3995 = vmatprep.subr.bf16.mxu0 0
  %3996 = vmatpush1.bf16.xpose.msra.mxu0 0
  %3997 = vmatprep.subr.bf16.mxu0 0
  %3998 = vmatpush1.bf16.xpose.msra.mxu0 0
  %3999 = vmatprep.subr.bf16.mxu0 0
  %4000 = vmatpush1.bf16.xpose.msra.mxu0 0
  %4001 = vmatprep.subr.bf16.mxu0 0
  %4002 = vmatpush1.bf16.xpose.msra.mxu0 %v3985
  %4003 = vmatprep.subr.bf16.mxu0 0
  %4004 = vmatpush2.bf16.xpose.msra.mxu0 0
  %4005 = vmatprep.subr.bf16.mxu0 0
  %4006 = vmatpush2.bf16.xpose.msra.mxu0 0
  %4007 = vmatprep.subr.bf16.mxu0 0
  %4008 = vmatpush2.bf16.xpose.msra.mxu0 0
  %4009 = vmatprep.subr.bf16.mxu0 0
  %4010 = vmatpush2.bf16.xpose.msra.mxu0 0
  %4011 = vmatprep.subr.bf16.mxu0 0
  %4012 = vmatpush2.bf16.xpose.msra.mxu0 0
  %4013 = vmatprep.subr.bf16.mxu0 0
  %4014 = vmatpush2.bf16.xpose.msra.mxu0 0
  %4015 = vmatprep.subr.bf16.mxu0 0
  %4016 = vmatpush2.bf16.xpose.msra.mxu0 0
  %4017 = vmatprep.subr.bf16.mxu0 0
  %4018 = vmatpush2.bf16.xpose.msra.mxu0 0
  %4019 = vmatprep.mubr.bf16.mxu0 0
  %4020 = vmatmul.mubr.bf16.gmra.mxu0 %v3982
  %v4021 = vpop.f32.mrf.mxu0
  %v4022 = vadd.f32 0.0, %v4021
  %v4023 = vpop.f32.mrf.mxu0
  %v4024 = vpop.f32.mrf.mxu0
  %v4025 = vpop.f32.mrf.mxu0
  %4026 = vdwg.mxu0
  %v4028 = vsel %vm315, %v3978, 0
  %v4031 = vsel %vm315, %v3980, 0
  %4033 = vmatprep.subr.bf16.mxu0 0
  %4034 = vmatpush1.bf16.xpose.msra.mxu0 0
  %4035 = vmatprep.subr.bf16.mxu0 0
  %4036 = vmatpush1.bf16.xpose.msra.mxu0 0
  %4037 = vmatprep.subr.bf16.mxu0 0
  %4038 = vmatpush1.bf16.xpose.msra.mxu0 0
  %4039 = vmatprep.subr.bf16.mxu0 0
  %4040 = vmatpush1.bf16.xpose.msra.mxu0 0
  %4041 = vmatprep.subr.bf16.mxu0 0
  %4042 = vmatpush1.bf16.xpose.msra.mxu0 0
  %4043 = vmatprep.subr.bf16.mxu0 0
  %4044 = vmatpush1.bf16.xpose.msra.mxu0 0
  %4045 = vmatprep.subr.bf16.mxu0 0
  %4046 = vmatpush1.bf16.xpose.msra.mxu0 0
  %4047 = vmatprep.subr.bf16.mxu0 0
  %4048 = vmatpush1.bf16.xpose.msra.mxu0 %v4031
  %4049 = vmatprep.subr.bf16.mxu0 0
  %4050 = vmatpush2.bf16.xpose.msra.mxu0 0
  %4051 = vmatprep.subr.bf16.mxu0 0
  %4052 = vmatpush2.bf16.xpose.msra.mxu0 0
  %4053 = vmatprep.subr.bf16.mxu0 0
  %4054 = vmatpush2.bf16.xpose.msra.mxu0 0
  %4055 = vmatprep.subr.bf16.mxu0 0
  %4056 = vmatpush2.bf16.xpose.msra.mxu0 0
  %4057 = vmatprep.subr.bf16.mxu0 0
  %4058 = vmatpush2.bf16.xpose.msra.mxu0 0
  %4059 = vmatprep.subr.bf16.mxu0 0
  %4060 = vmatpush2.bf16.xpose.msra.mxu0 0
  %4061 = vmatprep.subr.bf16.mxu0 0
  %4062 = vmatpush2.bf16.xpose.msra.mxu0 0
  %4063 = vmatprep.subr.bf16.mxu0 0
  %4064 = vmatpush2.bf16.xpose.msra.mxu0 0
  %4065 = vmatprep.mubr.bf16.mxu0 0
  %4066 = vmatmul.mubr.bf16.gmra.mxu0 %v4028
  %v4067 = vpop.f32.mrf.mxu0
  %v4068 = vadd.f32 0.0, %v4067
  %v4069 = vpop.f32.mrf.mxu0
  %v4070 = vpop.f32.mrf.mxu0
  %v4071 = vpop.f32.mrf.mxu0
  %4072 = vdwg.mxu0
  %v4073 = vmul.f32 %v4022, 0.35355338
  %v4074 = vmul.f32 %v4068, 0.35355338
  %v4075 = vsel %vm410, %v4073, -inf
  %4076 = vmax.xlane.f32.xlu0 %v4075
  %v4077 = vpop.xlane.xlu0 %4076
  %v4078 = vsel %vm410, %v4074, -inf
  %4079 = vmax.xlane.f32.xlu0 %v4078
  %v4080 = vpop.xlane.xlu0 %4079
  %v4081 = vsub.f32 %v4073, %v4077
  %v4082 = vsub.f32 %v4074, %v4080
  %v4083 = vmul.f32 %v4081, 1.442695
  %v4084 = vpow.pop %v4083
  %v4085 = vmul.f32 %v4082, 1.442695
  %v4086 = vpow.pop %v4085
  %v4087 = vsel %vm410, %v4084, 0.0
  %4088 = vadd.xlane.f32.xlu0 %v4087
  %v4089 = vpop.xlane.xlu0 %4088
  %v4090 = vsel %vm410, %v4086, 0.0
  %4091 = vadd.xlane.f32.xlu0 %v4090
  %v4092 = vpop.xlane.xlu0 %4091
  %v4093 = vrcp.pop %v4089
  %v4094 = vrcp.pop %v4092
  %v4095 = vmul.f32 %v4084, %v4093
  %v4096 = vmul.f32 %v4086, %v4094
  %v4097 = vpack.c.bf16 %v4095, %v4095
  %v4098 = vpack.c.bf16 %v4096, %v4096
  %v4099 = vpack.c.bf16 %v3966, %v3963
  %v4100 = vpack.c.bf16 %v3974, %v3971
  %v4102 = vsel %vm410, %v4097, 0
  %4104 = vmatprep.subr.bf16.mxu0 0
  %4105 = vmatpush1.bf16.msra.mxu0 0
  %4106 = vmatprep.subr.bf16.mxu0 0
  %4107 = vmatpush1.bf16.msra.mxu0 0
  %4108 = vmatprep.subr.bf16.mxu0 0
  %4109 = vmatpush1.bf16.msra.mxu0 0
  %4110 = vmatprep.subr.bf16.mxu0 0
  %4111 = vmatpush1.bf16.msra.mxu0 0
  %4112 = vmatprep.subr.bf16.mxu0 0
  %4113 = vmatpush1.bf16.msra.mxu0 0
  %4114 = vmatprep.subr.bf16.mxu0 0
  %4115 = vmatpush1.bf16.msra.mxu0 0
  %4116 = vmatprep.subr.bf16.mxu0 0
  %4117 = vmatpush1.bf16.msra.mxu0 0
  %4118 = vmatprep.subr.bf16.mxu0 0
  %4119 = vmatpush1.bf16.msra.mxu0 %v4099
  %4120 = vmatprep.subr.bf16.mxu0 0
  %4121 = vmatpush2.bf16.msra.mxu0 0
  %4122 = vmatprep.subr.bf16.mxu0 0
  %4123 = vmatpush2.bf16.msra.mxu0 0
  %4124 = vmatprep.subr.bf16.mxu0 0
  %4125 = vmatpush2.bf16.msra.mxu0 0
  %4126 = vmatprep.subr.bf16.mxu0 0
  %4127 = vmatpush2.bf16.msra.mxu0 0
  %4128 = vmatprep.subr.bf16.mxu0 0
  %4129 = vmatpush2.bf16.msra.mxu0 0
  %4130 = vmatprep.subr.bf16.mxu0 0
  %4131 = vmatpush2.bf16.msra.mxu0 0
  %4132 = vmatprep.subr.bf16.mxu0 0
  %4133 = vmatpush2.bf16.msra.mxu0 0
  %4134 = vmatprep.subr.bf16.mxu0 0
  %4135 = vmatpush2.bf16.msra.mxu0 0
  %4136 = vmatprep.mubr.bf16.mxu0 0
  %4137 = vmatmul.mubr.bf16.gmra.mxu0 %v4102
  %v4138 = vpop.f32.mrf.mxu0
  %v4139 = vadd.f32 0.0, %v4138
  %v4140 = vpop.f32.mrf.mxu0
  %v4141 = vpop.f32.mrf.mxu0
  %v4142 = vpop.f32.mrf.mxu0
  %4143 = vdwg.mxu0
  %v4145 = vsel %vm410, %v4098, 0
  %4147 = vmatprep.subr.bf16.mxu0 0
  %4148 = vmatpush1.bf16.msra.mxu0 0
  %4149 = vmatprep.subr.bf16.mxu0 0
  %4150 = vmatpush1.bf16.msra.mxu0 0
  %4151 = vmatprep.subr.bf16.mxu0 0
  %4152 = vmatpush1.bf16.msra.mxu0 0
  %4153 = vmatprep.subr.bf16.mxu0 0
  %4154 = vmatpush1.bf16.msra.mxu0 0
  %4155 = vmatprep.subr.bf16.mxu0 0
  %4156 = vmatpush1.bf16.msra.mxu0 0
  %4157 = vmatprep.subr.bf16.mxu0 0
  %4158 = vmatpush1.bf16.msra.mxu0 0
  %4159 = vmatprep.subr.bf16.mxu0 0
  %4160 = vmatpush1.bf16.msra.mxu0 0
  %4161 = vmatprep.subr.bf16.mxu0 0
  %4162 = vmatpush1.bf16.msra.mxu0 %v4100
  %4163 = vmatprep.subr.bf16.mxu0 0
  %4164 = vmatpush2.bf16.msra.mxu0 0
  %4165 = vmatprep.subr.bf16.mxu0 0
  %4166 = vmatpush2.bf16.msra.mxu0 0
  %4167 = vmatprep.subr.bf16.mxu0 0
  %4168 = vmatpush2.bf16.msra.mxu0 0
  %4169 = vmatprep.subr.bf16.mxu0 0
  %4170 = vmatpush2.bf16.msra.mxu0 0
  %4171 = vmatprep.subr.bf16.mxu0 0
  %4172 = vmatpush2.bf16.msra.mxu0 0
  %4173 = vmatprep.subr.bf16.mxu0 0
  %4174 = vmatpush2.bf16.msra.mxu0 0
  %4175 = vmatprep.subr.bf16.mxu0 0
  %4176 = vmatpush2.bf16.msra.mxu0 0
  %4177 = vmatprep.subr.bf16.mxu0 0
  %4178 = vmatpush2.bf16.msra.mxu0 0
  %4179 = vmatprep.mubr.bf16.mxu0 0
  %4180 = vmatmul.mubr.bf16.gmra.mxu0 %v4145
  %v4181 = vpop.f32.mrf.mxu0
  %v4182 = vadd.f32 0.0, %v4181
  %v4183 = vpop.f32.mrf.mxu0
  %v4184 = vpop.f32.mrf.mxu0
  %v4185 = vpop.f32.mrf.mxu0
  %4186 = vdwg.mxu0
  %v4187 = vpack.c.bf16 %v4182, %v4139
  %s4188 = scalar_lea.vmem %s8, 28
  %v4189 = vld [vmem:[%s4188] sm:$0xf]
  %v4191 = vsel %vm315, %v4187, 0
  %v4194 = vsel %vm1003, %v4189, 0
  %4196 = vmatprep.subr.bf16.mxu0 0
  %4197 = vmatpush1.bf16.msra.mxu0 0
  %4198 = vmatprep.subr.bf16.mxu0 0
  %4199 = vmatpush1.bf16.msra.mxu0 0
  %4200 = vmatprep.subr.bf16.mxu0 0
  %4201 = vmatpush1.bf16.msra.mxu0 0
  %4202 = vmatprep.subr.bf16.mxu0 0
  %4203 = vmatpush1.bf16.msra.mxu0 0
  %4204 = vmatprep.subr.bf16.mxu0 0
  %4205 = vmatpush1.bf16.msra.mxu0 0
  %4206 = vmatprep.subr.bf16.mxu0 0
  %4207 = vmatpush1.bf16.msra.mxu0 0
  %4208 = vmatprep.subr.bf16.mxu0 0
  %4209 = vmatpush1.bf16.msra.mxu0 0
  %4210 = vmatprep.subr.bf16.mxu0 0
  %4211 = vmatpush1.bf16.msra.mxu0 %v4194
  %4212 = vmatprep.subr.bf16.mxu0 0
  %4213 = vmatpush2.bf16.msra.mxu0 0
  %4214 = vmatprep.subr.bf16.mxu0 0
  %4215 = vmatpush2.bf16.msra.mxu0 0
  %4216 = vmatprep.subr.bf16.mxu0 0
  %4217 = vmatpush2.bf16.msra.mxu0 0
  %4218 = vmatprep.subr.bf16.mxu0 0
  %4219 = vmatpush2.bf16.msra.mxu0 0
  %4220 = vmatprep.subr.bf16.mxu0 0
  %4221 = vmatpush2.bf16.msra.mxu0 0
  %4222 = vmatprep.subr.bf16.mxu0 0
  %4223 = vmatpush2.bf16.msra.mxu0 0
  %4224 = vmatprep.subr.bf16.mxu0 0
  %4225 = vmatpush2.bf16.msra.mxu0 0
  %4226 = vmatprep.subr.bf16.mxu0 0
  %4227 = vmatpush2.bf16.msra.mxu0 0
  %4228 = vmatprep.mubr.bf16.mxu0 0
  %4229 = vmatmul.mubr.bf16.gmra.mxu0 %v4191
  %v4230 = vpop.f32.mrf.mxu0
  %v4231 = vadd.f32 0.0, %v4230
  %v4232 = vpop.f32.mrf.mxu0
  %v4233 = vpop.f32.mrf.mxu0
  %v4234 = vadd.f32 0.0, %v4233
  %v4235 = vpop.f32.mrf.mxu0
  %4236 = vdwg.mxu0
  %v4237 = vadd.f32 %v3713, %v4231
  %v4238 = vadd.f32 %v3714, %v4234
  %v4239 = vld [vmem:[%s9] sm:$0x1]
  %v4241 = vlaneseq
  %v4242 = vshrl.u32 %v4241, 7
  %v4243 = vsub.s32 0, %v4242
  %v4244 = vrot.slane %v4239, %v4243
  %v4246 = vadd.f32 %v4237, %v4244
  %v4247 = vadd.f32 %v4238, %v4244
  %4248 = vst.msk [vmem:[%s10] sm:$0xff] %vm84, %v4246
  %4249 = vst.msk [vmem:[%s10 + $0x8] sm:$0xff] %vm84, %v4247
  // Predicated region
  $region42: #{timbre_block_forward.10} parent=0 // pred_check
    _
  $region43: #{timbre_block_forward.10} parent=0 // pred_check_branch
    %4251 = sbr.rel (0) target = $region45
  $region44: #{timbre_block_forward.10} parent=0 // pred_region
    _
  $region45: #{timbre_block_forward.10} parent=0 // pred_fallthru
    _
  // Predicated region
  $region46: #{timbre_block_forward.10} parent=0 // pred_check
    _
  $region47: #{timbre_block_forward.10} parent=0 // pred_check_branch
    %4253 = sbr.rel (0) target = $region49
  $region48: #{timbre_block_forward.10} parent=0 // pred_region
    _
  $region49: #{timbre_block_forward.10} parent=0 // pred_fallthru
    _

</llo_original>
